<compile_context>
chip_gen: v7x
topology: tpu7x:2x2x1
jax: 0.10.0
libtpu: 0.0.40
codegen_flags: <defaults>
</compile_context>

<pallas_src>
import jax
import jax.numpy as jnp
from jax import lax
from jax.experimental import pallas as pl
from jax.experimental.pallas import tpu as pltpu

KH = KW = 3          # 3x3 conv, stride 1, pad 1
COUT_TILE = 128      # output-channel tile -> 4 grid steps for Cout=512


def conv_relu_kernel(x_ref, w_ref, b_ref, o_ref):
    """One Cout tile of the conv as a single MXU matmul.

    x_ref: (M, K)         bf16 im2col slab (M = H*W, K = KH*KW*Cin)
    w_ref: (K, COUT_TILE) bf16 weight tile
    b_ref: (1, COUT_TILE) f32 bias tile
    o_ref: (M, COUT_TILE) f32 output tile
    """
    acc = jnp.dot(x_ref[...], w_ref[...], preferred_element_type=jnp.float32)
    acc = acc + b_ref[...]                      # broadcast over M rows
    o_ref[...] = jnp.maximum(acc, 0.0).astype(o_ref.dtype)


def conv2d_relu(x_nchw, w_oihw, b):
    """x_nchw: (N, Cin, H, W), w_oihw: (Cout, Cin, KH, KW), b: (Cout,)"""
    N, Cin, H, W = x_nchw.shape
    Cout = w_oihw.shape[0]
    M = H * W
    K = KH * KW * Cin

    # ---- JAX glue: layout conversion, bf16 cast, padding, im2col ----
    x = jnp.transpose(x_nchw, (0, 2, 3, 1)).astype(jnp.bfloat16)     # NHWC bf16
    x_pad = jnp.pad(x, ((0, 0), (1, 1), (1, 1), (0, 0)))             # (N,H+2,W+2,Cin)
    # im2col: column order is (kh, kw, cin) — matches HWIO weight flattening.
    patches = jnp.concatenate(
        [x_pad[:, kh:kh + H, kw:kw + W, :] for kh in range(KH) for kw in range(KW)],
        axis=-1,
    ).reshape(N, M, K)                                               # (N, M, K) bf16

    w = jnp.transpose(w_oihw, (2, 3, 1, 0)).reshape(K, Cout).astype(jnp.bfloat16)
    b2 = b.reshape(1, Cout).astype(jnp.float32)

    out = pl.pallas_call(
        conv_relu_kernel,
        out_shape=jax.ShapeDtypeStruct((N, M, Cout), jnp.float32),
        grid_spec=pltpu.PrefetchScalarGridSpec(
            num_scalar_prefetch=0,
            grid=(N, Cout // COUT_TILE),
            in_specs=[
                pl.BlockSpec((None, M, K), lambda n, c: (n, 0, 0)),
                pl.BlockSpec((K, COUT_TILE), lambda n, c: (0, c)),
                pl.BlockSpec((1, COUT_TILE), lambda n, c: (0, c)),
            ],
            out_specs=pl.BlockSpec((None, M, COUT_TILE), lambda n, c: (n, 0, c)),
        ),
        compiler_params=pltpu.CompilerParams(
            dimension_semantics=("parallel", "parallel"),
            vmem_limit_bytes=32 * 1024 * 1024,
        ),
    )(patches, w, b2)

    out = out.reshape(N, H, W, Cout)
    return jnp.transpose(out, (0, 3, 1, 2)).astype(x_nchw.dtype)     # NCHW


def reference(x_nchw, w_oihw, b):
    y = lax.conv_general_dilated(
        x_nchw, w_oihw, window_strides=(1, 1),
        padding=((1, 1), (1, 1)),
        dimension_numbers=("NCHW", "OIHW", "NCHW"))
    y = y + b.reshape(1, -1, 1, 1)
    return jnp.maximum(y, 0.0)


if __name__ == "__main__":
    # Shapes implied by the module's forward: x30 = randn([1, 512, 14, 14]).
    N, Cin, Cout, H, W = 1, 512, 512, 14, 14

    key = jax.random.PRNGKey(0)
    kx, kw, kb = jax.random.split(key, 3)
    x = jax.random.normal(kx, (N, Cin, H, W), jnp.float32)
    w = jax.random.normal(kw, (Cout, Cin, KH, KW), jnp.float32) * 0.02
    b = jax.random.normal(kb, (Cout,), jnp.float32) * 0.1

    y = conv2d_relu(x, w, b)
    jax.block_until_ready(y)

    y_ref = reference(x, w, b)
    assert y.shape == (N, Cout, H, W), y.shape
    assert jnp.allclose(y, y_ref, rtol=2e-2, atol=2e-2), (
        float(jnp.max(jnp.abs(y - y_ref))))

    print("KERNEL_OK")
</pallas_src>

<mosaic_0001>
module attributes {stable_mosaic.version = 11 : i64} {
  func.func @conv_relu_kernel(%arg0: i32, %arg1: i32, %arg2: memref<1x196x4608xbf16, #tpu.memory_space<vmem>>, %arg3: memref<4608x128xbf16, #tpu.memory_space<vmem>>, %arg4: memref<1x128xf32, #tpu.memory_space<vmem>>, %arg5: memref<1x196x128xf32, #tpu.memory_space<vmem>>) attributes {dimension_semantics = [#tpu.dimension_semantics<parallel>, #tpu.dimension_semantics<parallel>], iteration_bounds = array<i64: 1, 4>, scalar_prefetch = 0 : i64, scratch_operands = 0 : i64, tpu.core_type = #tpu.core_type<tc>, window_params = [{transform_indices = @transform_0, window_bounds = array<i64: 1, 196, 4608>}, {transform_indices = @transform_1, window_bounds = array<i64: 4608, 128>}, {transform_indices = @transform_2, window_bounds = array<i64: 1, 128>}, {transform_indices = @transform_3, window_bounds = array<i64: 1, 196, 128>}]} {
    %c0 = arith.constant 0 : index
    %c0_0 = arith.constant 0 : index
    %c0_1 = arith.constant 0 : index
    %0 = vector.load %arg2[%c0, %c0_0, %c0_1] : memref<1x196x4608xbf16, #tpu.memory_space<vmem>>, vector<1x196x4608xbf16>
    %1 = vector.shape_cast %0 : vector<1x196x4608xbf16> to vector<196x4608xbf16>
    %c0_2 = arith.constant 0 : index
    %c0_3 = arith.constant 0 : index
    %2 = vector.load %arg3[%c0_2, %c0_3] : memref<4608x128xbf16, #tpu.memory_space<vmem>>, vector<4608x128xbf16>
    %cst = arith.constant dense<0.000000e+00> : vector<196x128xf32>
    %3 = tpu.matmul %1, %2, %cst {dimension_numbers = #tpu.dot_dimension_numbers<[1], [0], [0], [1], [0, 0, 1, 1], [], []>} : vector<196x4608xbf16>, vector<4608x128xbf16>, vector<196x128xf32> -> vector<196x128xf32>
    %c0_4 = arith.constant 0 : index
    %c0_5 = arith.constant 0 : index
    %4 = vector.load %arg4[%c0_4, %c0_5] : memref<1x128xf32, #tpu.memory_space<vmem>>, vector<1x128xf32>
    %5 = vector.broadcast %4 : vector<1x128xf32> to vector<196x128xf32>
    %6 = arith.addf %3, %5 : vector<196x128xf32>
    %cst_6 = arith.constant 0.000000e+00 : f32
    %7 = vector.broadcast %cst_6 : f32 to vector<196x128xf32>
    %8 = arith.maximumf %6, %7 : vector<196x128xf32>
    %c0_7 = arith.constant 0 : index
    %c0_8 = arith.constant 0 : index
    %c0_9 = arith.constant 0 : index
    %9 = vector.load %arg5[%c0_7, %c0_8, %c0_9] : memref<1x196x128xf32, #tpu.memory_space<vmem>>, vector<1x196x128xf32>
    %10 = vector.shape_cast %9 : vector<1x196x128xf32> to vector<196x128xf32>
    %11 = vector.shape_cast %8 : vector<196x128xf32> to vector<1x196x128xf32>
    tpu.vector_store %arg5[%c0_7, %c0_8, %c0_9], %11 {strides = array<i32>} : memref<1x196x128xf32, #tpu.memory_space<vmem>>, vector<1x196x128xf32>,
    return
  }
  func.func @transform_0(%arg0: i32, %arg1: i32) -> (i32, i32, i32) {
    %c0_i32 = arith.constant 0 : i32
    %c0_i32_0 = arith.constant 0 : i32
    %c0_i32_1 = arith.constant 0 : i32
    return %arg0, %c0_i32, %c0_i32_0 : i32, i32, i32
  }
  func.func @transform_1(%arg0: i32, %arg1: i32) -> (i32, i32) {
    %c0_i32 = arith.constant 0 : i32
    %c0_i32_0 = arith.constant 0 : i32
    return %c0_i32, %arg1 : i32, i32
  }
  func.func @transform_2(%arg0: i32, %arg1: i32) -> (i32, i32) {
    %c0_i32 = arith.constant 0 : i32
    %c0_i32_0 = arith.constant 0 : i32
    return %c0_i32, %arg1 : i32, i32
  }
  func.func @transform_3(%arg0: i32, %arg1: i32) -> (i32, i32, i32) {
    %c0_i32 = arith.constant 0 : i32
    %c0_i32_0 = arith.constant 0 : i32
    return %arg0, %c0_i32, %arg1 : i32, i32, i32
  }
}

</mosaic_0001>

<llo_original>
// kernel: tpu_custom_call.1
$region0: #{tpu_custom_call.1}
  #allocation0 [shape = 'u32[]', space=smem, size = 0x4, offset = 0x4, fixed_abs, tag = 'smem constant byte address 0x4 - core index']
  #allocation1 [shape = 'u32[144,128]{1,0:T(1,128)}', space=vmem, size = 0x12000, scoped, tag = 'internal scratch']
  %s0 = inlined_call_operand.hbm [shape: bf16[1,196,4608], index: 0, kind: input, shape index: {}]
  %s1 = inlined_call_operand.hbm [shape: bf16[4608,512], index: 1, kind: input, shape index: {}]
  %s2 = inlined_call_operand.hbm [shape: f32[1,512], index: 2, kind: input, shape index: {}]
  %s3 = inlined_call_operand.vmem [shape: f32[1,196,512], index: 3, kind: output, shape index: {}]
  %s4 = sld [smem:[#allocation0]]
  $region91: #{tpu_custom_call.1} parent=0
    _
  %s6 = ssub.s32 1, %s4
  %s7 = scalar_select 0, %s6, %s4
  $region1: #{tpu_custom_call.1} parent=0
    #allocation2 [shape = 'u8[1843200]{0}', space=vmem, size = 0x1c2000, scoped, tag = 'input window, operand 0, single buffered']
    #allocation3 [shape = 's32[2]{0}', space=sflag, size = 0x8, scoped, tag = 'scoped memory for tpu_custom_call.1']
    #allocation4 [shape = 'u8[2359296]{0}', space=vmem, size = 0x240000, scoped, tag = 'input window, operand 1']
    #allocation5 [shape = 's32[2]{0}', space=sflag, size = 0x8, scoped, tag = 'scoped memory for tpu_custom_call.1']
    #allocation6 [shape = 'u8[1024]{0}', space=vmem, size = 0x400, scoped, tag = 'input window, operand 2']
    #allocation7 [shape = 'u8[204800]{0}', space=vmem, size = 0x32000, scoped, tag = 'output window, operand 0']
    %8 = vsyncpa [#allocation3], 0
    %9 = vsyncpa [#allocation5], 0
    %s10 = scalar_lea.sflag [#allocation5], 1
    %11 = vsyncpa %s10, 0
    loop: start=0, step=1, limit=6
    $region2: #{tpu_custom_call.1} parent=1 // loop_pre_header
      _
    $region3: #{tpu_custom_call.1} parent=1 // loop_header
      %s13 = sphi 0, %s17
      %p14 = scmp.ge.s32.totalorder %s13, 6
      %s20 = sphi 0, %s32
      %s21 = sphi 0, %s28
      %s22 = sphi 0, %s20
      %s23 = sphi 0, %s21
      %s24 = sphi 0, %s22
      %s25 = sphi 0, %s23
      %s35 = sphi 0, %s37
      %s38 = sphi 0, %s35
      %s39 = sphi 0, %s38
      %s55 = sphi 0, %s39
      %s61 = sphi 0, %s63
      %s64 = sphi 0, %s61
      %s65 = sphi 0, %s64
      %s81 = sphi 0, %s65
      %s87 = sphi 0, %s89
      %s90 = sphi 0, %s87
      %s91 = sphi 0, %s90
      %s107 = sphi 0, %s91
      %s115 = sphi 0, %s117
      %s118 = sphi 0, %s115
      %s119 = sphi 0, %s118
      %s135 = sphi 0, %s119
    $region4: #{tpu_custom_call.1} parent=1 // loop_header_branch
      %16 = sbr.rel (%p14) target = $region8
    $region5: #{tpu_custom_call.1} parent=1 // loop_body
      %s18 = ssub.s32 %s13, 1
      %s19 = ssub.s32 %s13, 2
      %s26 = sadd.s32 1, %s21
      %p27 = scmp.ge.s32.totalorder %s26, 4
      %s28 = scalar_select %p27, 0, %s26
      %s29 = sadd.s32 1, %s20
      %s30 = scalar_select %p27, %s29, %s20
      %p31 = scmp.ge.s32.totalorder %s30, 1
      %s32 = scalar_select %p31, 0, %s30
      %s33 = ssub.s32 %s20, %s32
      %p34 = scmp.eq.s32.totalorder %s33, 0
      %s36 = sadd.s32 %s35, 1
      %s37 = scalar_select %p34, %s35, %s36
      %p40 = pneg %p34
      %p41 = scmp.eq.s32.totalorder %s13, 3
      %p42 = por %p40, %p41
      %p43 = scmp.ne.s32.totalorder %s35, %s38
      %p44 = scmp.eq.s32.totalorder %s13, 0
      %p45 = por %p43, %p44
      %p46 = scmp.ne.s32.totalorder %s35, %s38
      %p47 = scmp.eq.s32.totalorder %s18, 3
      %p48 = por %p46, %p47
      %p49 = scmp.ne.s32.totalorder %s38, %s39
      %p50 = scmp.eq.s32.totalorder %s18, 0
      %p51 = por %p49, %p50
      %p52 = scmp.ne.s32.totalorder %s38, %s39
      %p53 = scmp.eq.s32.totalorder %s19, 3
      %p54 = por %p52, %p53
      %p56 = scmp.ne.s32.totalorder %s39, %s55
      %p57 = scmp.eq.s32.totalorder %s19, 0
      %p58 = por %p56, %p57
      %s59 = ssub.s32 %s21, %s28
      %p60 = scmp.eq.s32.totalorder %s59, 0
      %s62 = sadd.s32 %s61, 1
      %s63 = scalar_select %p60, %s61, %s62
      %p66 = pneg %p60
      %p67 = scmp.eq.s32.totalorder %s13, 3
      %p68 = por %p66, %p67
      %p69 = scmp.ne.s32.totalorder %s61, %s64
      %p70 = scmp.eq.s32.totalorder %s13, 0
      %p71 = por %p69, %p70
      %p72 = scmp.ne.s32.totalorder %s61, %s64
      %p73 = scmp.eq.s32.totalorder %s18, 3
      %p74 = por %p72, %p73
      %p75 = scmp.ne.s32.totalorder %s64, %s65
      %p76 = scmp.eq.s32.totalorder %s18, 0
      %p77 = por %p75, %p76
      %p78 = scmp.ne.s32.totalorder %s64, %s65
      %p79 = scmp.eq.s32.totalorder %s19, 3
      %p80 = por %p78, %p79
      %p82 = scmp.ne.s32.totalorder %s65, %s81
      %p83 = scmp.eq.s32.totalorder %s19, 0
      %p84 = por %p82, %p83
      %s85 = ssub.s32 %s21, %s28
      %p86 = scmp.eq.s32.totalorder %s85, 0
      %s88 = sadd.s32 %s87, 1
      %s89 = scalar_select %p86, %s87, %s88
      %p92 = pneg %p86
      %p93 = scmp.eq.s32.totalorder %s13, 3
      %p94 = por %p92, %p93
      %p95 = scmp.ne.s32.totalorder %s87, %s90
      %p96 = scmp.eq.s32.totalorder %s13, 0
      %p97 = por %p95, %p96
      %p98 = scmp.ne.s32.totalorder %s87, %s90
      %p99 = scmp.eq.s32.totalorder %s18, 3
      %p100 = por %p98, %p99
      %p101 = scmp.ne.s32.totalorder %s90, %s91
      %p102 = scmp.eq.s32.totalorder %s18, 0
      %p103 = por %p101, %p102
      %p104 = scmp.ne.s32.totalorder %s90, %s91
      %p105 = scmp.eq.s32.totalorder %s19, 3
      %p106 = por %p104, %p105
      %p108 = scmp.ne.s32.totalorder %s91, %s107
      %p109 = scmp.eq.s32.totalorder %s19, 0
      %p110 = por %p108, %p109
      %s111 = ssub.s32 %s20, %s32
      %s112 = ssub.s32 %s21, %s28
      %s113 = sor.u32 %s111, %s112
      %p114 = scmp.eq.s32.totalorder %s113, 0
      %s116 = sadd.s32 %s115, 1
      %s117 = scalar_select %p114, %s115, %s116
      %p120 = pneg %p114
      %p121 = scmp.eq.s32.totalorder %s13, 3
      %p122 = por %p120, %p121
      %p123 = scmp.ne.s32.totalorder %s115, %s118
      %p124 = scmp.eq.s32.totalorder %s13, 0
      %p125 = por %p123, %p124
      %p126 = scmp.ne.s32.totalorder %s115, %s118
      %p127 = scmp.eq.s32.totalorder %s18, 3
      %p128 = por %p126, %p127
      %p129 = scmp.ne.s32.totalorder %s118, %s119
      %p130 = scmp.eq.s32.totalorder %s18, 0
      %p131 = por %p129, %p130
      %p132 = scmp.ne.s32.totalorder %s118, %s119
      %p133 = scmp.eq.s32.totalorder %s19, 3
      %p134 = por %p132, %p133
      %p136 = scmp.ne.s32.totalorder %s119, %s135
      %p137 = scmp.eq.s32.totalorder %s19, 0
      %p138 = por %p136, %p137
      %p139 = scmp.le.s32.totalorder 1, %s13
      %p140 = scmp.lt.s32.totalorder %s13, 5
      %p141 = pnand %p139, %p140
      %p142 = pneg %p141
      // Predicated region
      $region9: #{tpu_custom_call.1} parent=5 // pred_check
        _
      $region10: #{tpu_custom_call.1} parent=5 // pred_check_branch
        %144 = sbr.rel (%p141) target = $region12
      $region11: #{tpu_custom_call.1} parent=5 // pred_region
        %s145 = ssub.s32 %s13, 1
        // Predicated region
        $region13: #{tpu_custom_call.1} parent=11 // pred_check
          %p146 = pneg %p51
        $region14: #{tpu_custom_call.1} parent=11 // pred_check_branch
          %148 = sbr.rel (%p146) target = $region16
        $region15: #{tpu_custom_call.1} parent=11 // pred_region
          %s150 = ssub.s32 57600, 57600
          %151 = vsyncadd [#allocation3], %s150
          %s152 = smul.addr %s22, 900
          %s153 = smul.addr %s152, 64
          %s154 = scalar_lea.hbm %s0, %s153
          %s155 = sshll.u32 [#allocation2], 4
          %s156 = int_to_ptr.vmem [resolvable:$true] %s155
          %161 = dma.hbm_to_vmem [thread:$0]  %s154, 57600, %s156, [#allocation3], 2304, 2304, 144
        $region16: #{tpu_custom_call.1} parent=11 // pred_fallthru
          _
      $region12: #{tpu_custom_call.1} parent=5 // pred_fallthru
        _
      %p162 = scmp.lt.s32.totalorder %s13, 4
      // Predicated region
      $region17: #{tpu_custom_call.1} parent=5 // pred_check
        %p163 = pneg %p162
      $region18: #{tpu_custom_call.1} parent=5 // pred_check_branch
        %165 = sbr.rel (%p163) target = $region20
      $region19: #{tpu_custom_call.1} parent=5 // pred_region
        // Predicated region
        $region21: #{tpu_custom_call.1} parent=19 // pred_check
          %p166 = pneg %p71
        $region22: #{tpu_custom_call.1} parent=19 // pred_check_branch
          %168 = sbr.rel (%p166) target = $region24
        $region23: #{tpu_custom_call.1} parent=19 // pred_region
          %s169 = sand.u32 %s13, 1
          %s170 = scalar_lea.sflag [#allocation5], %s169
          %s171 = sand.u32 %s61, 1
          %s172 = smul.addr %s171, 2304
          %s173 = scalar_lea.vmem [#allocation4], %s172
          %s175 = ssub.s32 36864, 36864
          %176 = vsyncadd %s170, %s175
          %s177 = smul.addr %s21, 64
          %s178 = scalar_lea.hbm %s1, %s177
          %s179 = sshll.u32 %s173, 4
          %s180 = int_to_ptr.vmem [resolvable:$true] %s179
          %185 = dma.hbm_to_vmem [thread:$0]  %s178, 36864, %s180, %s170, 256, 64, 4
        $region24: #{tpu_custom_call.1} parent=19 // pred_fallthru
          _
        // Predicated region
        $region25: #{tpu_custom_call.1} parent=19 // pred_check
          %p186 = pneg %p97
        $region26: #{tpu_custom_call.1} parent=19 // pred_check_branch
          %188 = sbr.rel (%p186) target = $region28
        $region27: #{tpu_custom_call.1} parent=19 // pred_region
          %s189 = sand.u32 %s13, 1
          %s190 = scalar_lea.sflag [#allocation5], %s189
          %s191 = sand.u32 %s87, 1
          %s192 = scalar_lea.vmem [#allocation6], %s191
          %s194 = ssub.s32 16, 16
          %195 = vsyncadd %s190, %s194
          %s196 = smul.addr %s21, 16
          %s197 = scalar_lea.hbm %s2, %s196
          %s199 = sshll.u32 %s192, 4
          %s200 = int_to_ptr.vmem [resolvable:$true] %s199
          %202 = dma.hbm_to_vmem [thread:$0]  %s197, 16, %s200, %s190
        $region28: #{tpu_custom_call.1} parent=19 // pred_fallthru
          _
      $region20: #{tpu_custom_call.1} parent=5 // pred_fallthru
        _
      %p203 = scmp.le.s32.totalorder 1, %s13
      %p204 = scmp.lt.s32.totalorder %s13, 5
      %p205 = pnand %p203, %p204
      %p206 = pneg %p205
      // Predicated region
      $region29: #{tpu_custom_call.1} parent=5 // pred_check
        _
      $region30: #{tpu_custom_call.1} parent=5 // pred_check_branch
        %208 = sbr.rel (%p205) target = $region32
      $region31: #{tpu_custom_call.1} parent=5 // pred_region
        %s209 = ssub.s32 %s13, 1
        // Predicated region
        $region33: #{tpu_custom_call.1} parent=31 // pred_check
          %p210 = pneg %p51
        $region34: #{tpu_custom_call.1} parent=31 // pred_check_branch
          %212 = sbr.rel (%p210) target = $region36
        $region35: #{tpu_custom_call.1} parent=31 // pred_region
          %213 = dma.done [#allocation3], 57600
        $region36: #{tpu_custom_call.1} parent=31 // pred_fallthru
          _
        %s214 = sand.u32 %s18, 1
        %s215 = scalar_lea.sflag [#allocation5], %s214
        %s216 = sand.u32 %s64, 1
        %s217 = smul.addr %s216, 2304
        %s218 = scalar_lea.vmem [#allocation4], %s217
        // Predicated region
        $region37: #{tpu_custom_call.1} parent=31 // pred_check
          %p219 = pneg %p77
        $region38: #{tpu_custom_call.1} parent=31 // pred_check_branch
          %221 = sbr.rel (%p219) target = $region40
        $region39: #{tpu_custom_call.1} parent=31 // pred_region
          %222 = dma.done %s215, 36864
        $region40: #{tpu_custom_call.1} parent=31 // pred_fallthru
          _
        %s223 = sand.u32 %s18, 1
        %s224 = scalar_lea.sflag [#allocation5], %s223
        %s225 = sand.u32 %s90, 1
        %s226 = scalar_lea.vmem [#allocation6], %s225
        // Predicated region
        $region41: #{tpu_custom_call.1} parent=31 // pred_check
          %p227 = pneg %p103
        $region42: #{tpu_custom_call.1} parent=31 // pred_check_branch
          %229 = sbr.rel (%p227) target = $region44
        $region43: #{tpu_custom_call.1} parent=31 // pred_region
          %230 = dma.done %s224, 16
        $region44: #{tpu_custom_call.1} parent=31 // pred_fallthru
          _
        %p231 = pneg %p51
        %p232 = pneg %p48
        %s233 = sand.u32 %s18, 1
        %s234 = scalar_lea.sflag [#allocation5], %s233
        %s235 = sand.u32 %s64, 1
        %s236 = smul.addr %s235, 2304
        %s237 = scalar_lea.vmem [#allocation4], %s236
        %p238 = pneg %p77
        %p239 = pneg %p74
        %s240 = sand.u32 %s18, 1
        %s241 = scalar_lea.sflag [#allocation5], %s240
        %s242 = sand.u32 %s90, 1
        %s243 = scalar_lea.vmem [#allocation6], %s242
        %p244 = pneg %p103
        %p245 = pneg %p100
        %p246 = pneg %p131
        %p247 = pneg %p128
        %s248 = sand.u32 %s118, 1
        %s249 = sand.u32 %s118, 1
        %s250 = smul.addr %s249, 200
        %s251 = scalar_lea.vmem [#allocation7], %s250
        %v253 = vld [vmem:[#allocation2] sm:$0xff]
        %v254 = vld [vmem:[#allocation2 + $0x8] sm:$0xff]
        %v255 = vld [vmem:[#allocation2 + $0x10] sm:$0xff]
        %v256 = vld [vmem:[#allocation2 + $0x18] sm:$0xff]
        %v257 = vld [vmem:[#allocation2 + $0x20] sm:$0xff]
        %v258 = vld [vmem:[#allocation2 + $0x28] sm:$0xff]
        %v259 = vld [vmem:[#allocation2 + $0x30] sm:$0xff]
        %v260 = vld [vmem:[#allocation2 + $0x38] sm:$0xff]
        %v261 = vld [vmem:[#allocation2 + $0x40] sm:$0xff]
        %v262 = vld [vmem:[#allocation2 + $0x48] sm:$0xff]
        %v263 = vld [vmem:[#allocation2 + $0x50] sm:$0xff]
        %v264 = vld [vmem:[#allocation2 + $0x58] sm:$0xff]
        %v265 = vld [vmem:[#allocation2 + $0x60] sm:$0xff]
        %v266 = vld [vmem:[#allocation2 + $0x68] sm:$0xff]
        %v267 = vld [vmem:[#allocation2 + $0x70] sm:$0xff]
        %v268 = vld [vmem:[#allocation2 + $0x78] sm:$0xff]
        %v269 = vld [vmem:[#allocation2 + $0x80] sm:$0xff]
        %v270 = vld [vmem:[#allocation2 + $0x88] sm:$0xff]
        %v271 = vld [vmem:[#allocation2 + $0x90] sm:$0xff]
        %v272 = vld [vmem:[#allocation2 + $0x98] sm:$0xff]
        %v273 = vld [vmem:[#allocation2 + $0xa0] sm:$0xff]
        %v274 = vld [vmem:[#allocation2 + $0xa8] sm:$0xff]
        %v275 = vld [vmem:[#allocation2 + $0xb0] sm:$0xff]
        %v276 = vld [vmem:[#allocation2 + $0xb8] sm:$0xff]
        %v277 = vld [vmem:[#allocation2 + $0xc0] sm:$0xff]
        %v278 = vld [vmem:[#allocation2 + $0xc8] sm:$0xff]
        %v279 = vld [vmem:[#allocation2 + $0xd0] sm:$0xff]
        %v280 = vld [vmem:[#allocation2 + $0xd8] sm:$0xff]
        %v281 = vld [vmem:[#allocation2 + $0xe0] sm:$0xff]
        %v282 = vld [vmem:[#allocation2 + $0xe8] sm:$0xff]
        %v283 = vld [vmem:[#allocation2 + $0xf0] sm:$0xff]
        %v284 = vld [vmem:[#allocation2 + $0xf8] sm:$0xff]
        %v285 = vld [vmem:[#allocation2 + $0x100] sm:$0xff]
        %v286 = vld [vmem:[#allocation2 + $0x108] sm:$0xff]
        %v287 = vld [vmem:[#allocation2 + $0x110] sm:$0xff]
        %v288 = vld [vmem:[#allocation2 + $0x118] sm:$0xff]
        %v289 = vld [vmem:[#allocation2 + $0x120] sm:$0xff]
        %v290 = vld [vmem:[#allocation2 + $0x128] sm:$0xff]
        %v291 = vld [vmem:[#allocation2 + $0x130] sm:$0xff]
        %v292 = vld [vmem:[#allocation2 + $0x138] sm:$0xff]
        %v293 = vld [vmem:[#allocation2 + $0x140] sm:$0xff]
        %v294 = vld [vmem:[#allocation2 + $0x148] sm:$0xff]
        %v295 = vld [vmem:[#allocation2 + $0x150] sm:$0xff]
        %v296 = vld [vmem:[#allocation2 + $0x158] sm:$0xff]
        %v297 = vld [vmem:[#allocation2 + $0x160] sm:$0xff]
        %v298 = vld [vmem:[#allocation2 + $0x168] sm:$0xff]
        %v299 = vld [vmem:[#allocation2 + $0x170] sm:$0xff]
        %v300 = vld [vmem:[#allocation2 + $0x178] sm:$0xff]
        %v301 = vld [vmem:[#allocation2 + $0x180] sm:$0xff]
        %v302 = vld [vmem:[#allocation2 + $0x188] sm:$0xff]
        %v303 = vld [vmem:[#allocation2 + $0x190] sm:$0xff]
        %v304 = vld [vmem:[#allocation2 + $0x198] sm:$0xff]
        %v305 = vld [vmem:[#allocation2 + $0x1a0] sm:$0xff]
        %v306 = vld [vmem:[#allocation2 + $0x1a8] sm:$0xff]
        %v307 = vld [vmem:[#allocation2 + $0x1b0] sm:$0xff]
        %v308 = vld [vmem:[#allocation2 + $0x1b8] sm:$0xff]
        %v309 = vld [vmem:[#allocation2 + $0x1c0] sm:$0xff]
        %v310 = vld [vmem:[#allocation2 + $0x1c8] sm:$0xff]
        %v311 = vld [vmem:[#allocation2 + $0x1d0] sm:$0xff]
        %v312 = vld [vmem:[#allocation2 + $0x1d8] sm:$0xff]
        %v313 = vld [vmem:[#allocation2 + $0x1e0] sm:$0xff]
        %v314 = vld [vmem:[#allocation2 + $0x1e8] sm:$0xff]
        %v315 = vld [vmem:[#allocation2 + $0x1f0] sm:$0xff]
        %v316 = vld [vmem:[#allocation2 + $0x1f8] sm:$0xff]
        %v317 = vld [vmem:[#allocation2 + $0x200] sm:$0xff]
        %v318 = vld [vmem:[#allocation2 + $0x208] sm:$0xff]
        %v319 = vld [vmem:[#allocation2 + $0x210] sm:$0xff]
        %v320 = vld [vmem:[#allocation2 + $0x218] sm:$0xff]
        %v321 = vld [vmem:[#allocation2 + $0x220] sm:$0xff]
        %v322 = vld [vmem:[#allocation2 + $0x228] sm:$0xff]
        %v323 = vld [vmem:[#allocation2 + $0x230] sm:$0xff]
        %v324 = vld [vmem:[#allocation2 + $0x238] sm:$0xff]
        %v325 = vld [vmem:[#allocation2 + $0x240] sm:$0xff]
        %v326 = vld [vmem:[#allocation2 + $0x248] sm:$0xff]
        %v327 = vld [vmem:[#allocation2 + $0x250] sm:$0xff]
        %v328 = vld [vmem:[#allocation2 + $0x258] sm:$0xff]
        %v329 = vld [vmem:[#allocation2 + $0x260] sm:$0xff]
        %v330 = vld [vmem:[#allocation2 + $0x268] sm:$0xff]
        %v331 = vld [vmem:[#allocation2 + $0x270] sm:$0xff]
        %v332 = vld [vmem:[#allocation2 + $0x278] sm:$0xff]
        %v333 = vld [vmem:[#allocation2 + $0x280] sm:$0xff]
        %v334 = vld [vmem:[#allocation2 + $0x288] sm:$0xff]
        %v335 = vld [vmem:[#allocation2 + $0x290] sm:$0xff]
        %v336 = vld [vmem:[#allocation2 + $0x298] sm:$0xff]
        %v337 = vld [vmem:[#allocation2 + $0x2a0] sm:$0xff]
        %v338 = vld [vmem:[#allocation2 + $0x2a8] sm:$0xff]
        %v339 = vld [vmem:[#allocation2 + $0x2b0] sm:$0xff]
        %v340 = vld [vmem:[#allocation2 + $0x2b8] sm:$0xff]
        %v341 = vld [vmem:[#allocation2 + $0x2c0] sm:$0xff]
        %v342 = vld [vmem:[#allocation2 + $0x2c8] sm:$0xff]
        %v343 = vld [vmem:[#allocation2 + $0x2d0] sm:$0xff]
        %v344 = vld [vmem:[#allocation2 + $0x2d8] sm:$0xff]
        %v345 = vld [vmem:[#allocation2 + $0x2e0] sm:$0xff]
        %v346 = vld [vmem:[#allocation2 + $0x2e8] sm:$0xff]
        %v347 = vld [vmem:[#allocation2 + $0x2f0] sm:$0xff]
        %v348 = vld [vmem:[#allocation2 + $0x2f8] sm:$0xff]
        %v349 = vld [vmem:[#allocation2 + $0x300] sm:$0xff]
        %v350 = vld [vmem:[#allocation2 + $0x308] sm:$0xff]
        %v351 = vld [vmem:[#allocation2 + $0x310] sm:$0xff]
        %v352 = vld [vmem:[#allocation2 + $0x318] sm:$0xff]
        %v353 = vld [vmem:[#allocation2 + $0x320] sm:$0xff]
        %v354 = vld [vmem:[#allocation2 + $0x328] sm:$0xff]
        %v355 = vld [vmem:[#allocation2 + $0x330] sm:$0xff]
        %v356 = vld [vmem:[#allocation2 + $0x338] sm:$0xff]
        %v357 = vld [vmem:[#allocation2 + $0x340] sm:$0xff]
        %v358 = vld [vmem:[#allocation2 + $0x348] sm:$0xff]
        %v359 = vld [vmem:[#allocation2 + $0x350] sm:$0xff]
        %v360 = vld [vmem:[#allocation2 + $0x358] sm:$0xff]
        %v361 = vld [vmem:[#allocation2 + $0x360] sm:$0xff]
        %v362 = vld [vmem:[#allocation2 + $0x368] sm:$0xff]
        %v363 = vld [vmem:[#allocation2 + $0x370] sm:$0xff]
        %v364 = vld [vmem:[#allocation2 + $0x378] sm:$0xff]
        %v365 = vld [vmem:[#allocation2 + $0x380] sm:$0xff]
        %v366 = vld [vmem:[#allocation2 + $0x388] sm:$0xff]
        %v367 = vld [vmem:[#allocation2 + $0x390] sm:$0xff]
        %v368 = vld [vmem:[#allocation2 + $0x398] sm:$0xff]
        %v369 = vld [vmem:[#allocation2 + $0x3a0] sm:$0xff]
        %v370 = vld [vmem:[#allocation2 + $0x3a8] sm:$0xff]
        %v371 = vld [vmem:[#allocation2 + $0x3b0] sm:$0xff]
        %v372 = vld [vmem:[#allocation2 + $0x3b8] sm:$0xff]
        %v373 = vld [vmem:[#allocation2 + $0x3c0] sm:$0xff]
        %v374 = vld [vmem:[#allocation2 + $0x3c8] sm:$0xff]
        %v375 = vld [vmem:[#allocation2 + $0x3d0] sm:$0xff]
        %v376 = vld [vmem:[#allocation2 + $0x3d8] sm:$0xff]
        %v377 = vld [vmem:[#allocation2 + $0x3e0] sm:$0xff]
        %v378 = vld [vmem:[#allocation2 + $0x3e8] sm:$0xff]
        %v379 = vld [vmem:[#allocation2 + $0x3f0] sm:$0xff]
        %v380 = vld [vmem:[#allocation2 + $0x3f8] sm:$0xff]
        %v381 = vld [vmem:[#allocation2 + $0x400] sm:$0xff]
        %v382 = vld [vmem:[#allocation2 + $0x408] sm:$0xff]
        %v383 = vld [vmem:[#allocation2 + $0x410] sm:$0xff]
        %v384 = vld [vmem:[#allocation2 + $0x418] sm:$0xff]
        %v385 = vld [vmem:[#allocation2 + $0x420] sm:$0xff]
        %v386 = vld [vmem:[#allocation2 + $0x428] sm:$0xff]
        %v387 = vld [vmem:[#allocation2 + $0x430] sm:$0xff]
        %v388 = vld [vmem:[#allocation2 + $0x438] sm:$0xff]
        %v389 = vld [vmem:[#allocation2 + $0x440] sm:$0xff]
        %v390 = vld [vmem:[#allocation2 + $0x448] sm:$0xff]
        %v391 = vld [vmem:[#allocation2 + $0x450] sm:$0xff]
        %v392 = vld [vmem:[#allocation2 + $0x458] sm:$0xff]
        %v393 = vld [vmem:[#allocation2 + $0x460] sm:$0xff]
        %v394 = vld [vmem:[#allocation2 + $0x468] sm:$0xff]
        %v395 = vld [vmem:[#allocation2 + $0x470] sm:$0xff]
        %v396 = vld [vmem:[#allocation2 + $0x478] sm:$0xff]
        %v397 = vld [vmem:[#allocation2 + $0x480] sm:$0xff]
        %v398 = vld [vmem:[#allocation2 + $0x488] sm:$0xff]
        %v399 = vld [vmem:[#allocation2 + $0x490] sm:$0xff]
        %v400 = vld [vmem:[#allocation2 + $0x498] sm:$0xff]
        %v401 = vld [vmem:[#allocation2 + $0x4a0] sm:$0xff]
        %v402 = vld [vmem:[#allocation2 + $0x4a8] sm:$0xff]
        %v403 = vld [vmem:[#allocation2 + $0x4b0] sm:$0xff]
        %v404 = vld [vmem:[#allocation2 + $0x4b8] sm:$0xff]
        %v405 = vld [vmem:[#allocation2 + $0x4c0] sm:$0xff]
        %v406 = vld [vmem:[#allocation2 + $0x4c8] sm:$0xff]
        %v407 = vld [vmem:[#allocation2 + $0x4d0] sm:$0xff]
        %v408 = vld [vmem:[#allocation2 + $0x4d8] sm:$0xff]
        %v409 = vld [vmem:[#allocation2 + $0x4e0] sm:$0xff]
        %v410 = vld [vmem:[#allocation2 + $0x4e8] sm:$0xff]
        %v411 = vld [vmem:[#allocation2 + $0x4f0] sm:$0xff]
        %v412 = vld [vmem:[#allocation2 + $0x4f8] sm:$0xff]
        %v413 = vld [vmem:[#allocation2 + $0x500] sm:$0xff]
        %v414 = vld [vmem:[#allocation2 + $0x508] sm:$0xff]
        %v415 = vld [vmem:[#allocation2 + $0x510] sm:$0xff]
        %v416 = vld [vmem:[#allocation2 + $0x518] sm:$0xff]
        %v417 = vld [vmem:[#allocation2 + $0x520] sm:$0xff]
        %v418 = vld [vmem:[#allocation2 + $0x528] sm:$0xff]
        %v419 = vld [vmem:[#allocation2 + $0x530] sm:$0xff]
        %v420 = vld [vmem:[#allocation2 + $0x538] sm:$0xff]
        %v421 = vld [vmem:[#allocation2 + $0x540] sm:$0xff]
        %v422 = vld [vmem:[#allocation2 + $0x548] sm:$0xff]
        %v423 = vld [vmem:[#allocation2 + $0x550] sm:$0xff]
        %v424 = vld [vmem:[#allocation2 + $0x558] sm:$0xff]
        %v425 = vld [vmem:[#allocation2 + $0x560] sm:$0xff]
        %v426 = vld [vmem:[#allocation2 + $0x568] sm:$0xff]
        %v427 = vld [vmem:[#allocation2 + $0x570] sm:$0xff]
        %v428 = vld [vmem:[#allocation2 + $0x578] sm:$0xff]
        %v429 = vld [vmem:[#allocation2 + $0x580] sm:$0xff]
        %v430 = vld [vmem:[#allocation2 + $0x588] sm:$0xff]
        %v431 = vld [vmem:[#allocation2 + $0x590] sm:$0xff]
        %v432 = vld [vmem:[#allocation2 + $0x598] sm:$0xff]
        %v433 = vld [vmem:[#allocation2 + $0x5a0] sm:$0xff]
        %v434 = vld [vmem:[#allocation2 + $0x5a8] sm:$0xff]
        %v435 = vld [vmem:[#allocation2 + $0x5b0] sm:$0xff]
        %v436 = vld [vmem:[#allocation2 + $0x5b8] sm:$0xff]
        %v437 = vld [vmem:[#allocation2 + $0x5c0] sm:$0xff]
        %v438 = vld [vmem:[#allocation2 + $0x5c8] sm:$0xff]
        %v439 = vld [vmem:[#allocation2 + $0x5d0] sm:$0xff]
        %v440 = vld [vmem:[#allocation2 + $0x5d8] sm:$0xff]
        %v441 = vld [vmem:[#allocation2 + $0x5e0] sm:$0xff]
        %v442 = vld [vmem:[#allocation2 + $0x5e8] sm:$0xff]
        %v443 = vld [vmem:[#allocation2 + $0x5f0] sm:$0xff]
        %v444 = vld [vmem:[#allocation2 + $0x5f8] sm:$0xff]
        %v445 = vld [vmem:[#allocation2 + $0x600] sm:$0xff]
        %v446 = vld [vmem:[#allocation2 + $0x608] sm:$0xff]
        %v447 = vld [vmem:[#allocation2 + $0x610] sm:$0xff]
        %v448 = vld [vmem:[#allocation2 + $0x618] sm:$0xff]
        %v449 = vld [vmem:[#allocation2 + $0x620] sm:$0xff]
        %v450 = vld [vmem:[#allocation2 + $0x628] sm:$0xff]
        %v451 = vld [vmem:[#allocation2 + $0x630] sm:$0xff]
        %v452 = vld [vmem:[#allocation2 + $0x638] sm:$0xff]
        %v453 = vld [vmem:[#allocation2 + $0x640] sm:$0xff]
        %v454 = vld [vmem:[#allocation2 + $0x648] sm:$0xff]
        %v455 = vld [vmem:[#allocation2 + $0x650] sm:$0xff]
        %v456 = vld [vmem:[#allocation2 + $0x658] sm:$0xff]
        %v457 = vld [vmem:[#allocation2 + $0x660] sm:$0xff]
        %v458 = vld [vmem:[#allocation2 + $0x668] sm:$0xff]
        %v459 = vld [vmem:[#allocation2 + $0x670] sm:$0xff]
        %v460 = vld [vmem:[#allocation2 + $0x678] sm:$0xff]
        %v461 = vld [vmem:[#allocation2 + $0x680] sm:$0xff]
        %v462 = vld [vmem:[#allocation2 + $0x688] sm:$0xff]
        %v463 = vld [vmem:[#allocation2 + $0x690] sm:$0xff]
        %v464 = vld [vmem:[#allocation2 + $0x698] sm:$0xff]
        %v465 = vld [vmem:[#allocation2 + $0x6a0] sm:$0xff]
        %v466 = vld [vmem:[#allocation2 + $0x6a8] sm:$0xff]
        %v467 = vld [vmem:[#allocation2 + $0x6b0] sm:$0xff]
        %v468 = vld [vmem:[#allocation2 + $0x6b8] sm:$0xff]
        %v469 = vld [vmem:[#allocation2 + $0x6c0] sm:$0xff]
        %v470 = vld [vmem:[#allocation2 + $0x6c8] sm:$0xff]
        %v471 = vld [vmem:[#allocation2 + $0x6d0] sm:$0xff]
        %v472 = vld [vmem:[#allocation2 + $0x6d8] sm:$0xff]
        %v473 = vld [vmem:[#allocation2 + $0x6e0] sm:$0xff]
        %v474 = vld [vmem:[#allocation2 + $0x6e8] sm:$0xff]
        %v475 = vld [vmem:[#allocation2 + $0x6f0] sm:$0xff]
        %v476 = vld [vmem:[#allocation2 + $0x6f8] sm:$0xff]
        %v477 = vld [vmem:[#allocation2 + $0x700] sm:$0xff]
        %v478 = vld [vmem:[#allocation2 + $0x708] sm:$0xff]
        %v479 = vld [vmem:[#allocation2 + $0x710] sm:$0xff]
        %v480 = vld [vmem:[#allocation2 + $0x718] sm:$0xff]
        %v481 = vld [vmem:[#allocation2 + $0x720] sm:$0xff]
        %v482 = vld [vmem:[#allocation2 + $0x728] sm:$0xff]
        %v483 = vld [vmem:[#allocation2 + $0x730] sm:$0xff]
        %v484 = vld [vmem:[#allocation2 + $0x738] sm:$0xff]
        %v485 = vld [vmem:[#allocation2 + $0x740] sm:$0xff]
        %v486 = vld [vmem:[#allocation2 + $0x748] sm:$0xff]
        %v487 = vld [vmem:[#allocation2 + $0x750] sm:$0xff]
        %v488 = vld [vmem:[#allocation2 + $0x758] sm:$0xff]
        %v489 = vld [vmem:[#allocation2 + $0x760] sm:$0xff]
        %v490 = vld [vmem:[#allocation2 + $0x768] sm:$0xff]
        %v491 = vld [vmem:[#allocation2 + $0x770] sm:$0xff]
        %v492 = vld [vmem:[#allocation2 + $0x778] sm:$0xff]
        %v493 = vld [vmem:[#allocation2 + $0x780] sm:$0xff]
        %v494 = vld [vmem:[#allocation2 + $0x788] sm:$0xff]
        %v495 = vld [vmem:[#allocation2 + $0x790] sm:$0xff]
        %v496 = vld [vmem:[#allocation2 + $0x798] sm:$0xff]
        %v497 = vld [vmem:[#allocation2 + $0x7a0] sm:$0xff]
        %v498 = vld [vmem:[#allocation2 + $0x7a8] sm:$0xff]
        %v499 = vld [vmem:[#allocation2 + $0x7b0] sm:$0xff]
        %v500 = vld [vmem:[#allocation2 + $0x7b8] sm:$0xff]
        %v501 = vld [vmem:[#allocation2 + $0x7c0] sm:$0xff]
        %v502 = vld [vmem:[#allocation2 + $0x7c8] sm:$0xff]
        %v503 = vld [vmem:[#allocation2 + $0x7d0] sm:$0xff]
        %v504 = vld [vmem:[#allocation2 + $0x7d8] sm:$0xff]
        %v505 = vld [vmem:[#allocation2 + $0x7e0] sm:$0xff]
        %v506 = vld [vmem:[#allocation2 + $0x7e8] sm:$0xff]
        %v507 = vld [vmem:[#allocation2 + $0x7f0] sm:$0xff]
        %v508 = vld [vmem:[#allocation2 + $0x7f8] sm:$0xff]
        %v509 = vld [vmem:[#allocation2 + $0x800] sm:$0xff]
        %v510 = vld [vmem:[#allocation2 + $0x808] sm:$0xff]
        %v511 = vld [vmem:[#allocation2 + $0x810] sm:$0xff]
        %v512 = vld [vmem:[#allocation2 + $0x818] sm:$0xff]
        %v513 = vld [vmem:[#allocation2 + $0x820] sm:$0xff]
        %v514 = vld [vmem:[#allocation2 + $0x828] sm:$0xff]
        %v515 = vld [vmem:[#allocation2 + $0x830] sm:$0xff]
        %v516 = vld [vmem:[#allocation2 + $0x838] sm:$0xff]
        %v517 = vld [vmem:[#allocation2 + $0x840] sm:$0xff]
        %v518 = vld [vmem:[#allocation2 + $0x848] sm:$0xff]
        %v519 = vld [vmem:[#allocation2 + $0x850] sm:$0xff]
        %v520 = vld [vmem:[#allocation2 + $0x858] sm:$0xff]
        %v521 = vld [vmem:[#allocation2 + $0x860] sm:$0xff]
        %v522 = vld [vmem:[#allocation2 + $0x868] sm:$0xff]
        %v523 = vld [vmem:[#allocation2 + $0x870] sm:$0xff]
        %v524 = vld [vmem:[#allocation2 + $0x878] sm:$0xff]
        %v525 = vld [vmem:[#allocation2 + $0x880] sm:$0xff]
        %v526 = vld [vmem:[#allocation2 + $0x888] sm:$0xff]
        %v527 = vld [vmem:[#allocation2 + $0x890] sm:$0xff]
        %v528 = vld [vmem:[#allocation2 + $0x898] sm:$0xff]
        %v529 = vld [vmem:[#allocation2 + $0x8a0] sm:$0xff]
        %v530 = vld [vmem:[#allocation2 + $0x8a8] sm:$0xff]
        %v531 = vld [vmem:[#allocation2 + $0x8b0] sm:$0xff]
        %v532 = vld [vmem:[#allocation2 + $0x8b8] sm:$0xff]
        %v533 = vld [vmem:[#allocation2 + $0x8c0] sm:$0xff]
        %v534 = vld [vmem:[#allocation2 + $0x8c8] sm:$0xff]
        %v535 = vld [vmem:[#allocation2 + $0x8d0] sm:$0xff]
        %v536 = vld [vmem:[#allocation2 + $0x8d8] sm:$0xff]
        %v537 = vld [vmem:[#allocation2 + $0x8e0] sm:$0xff]
        %v538 = vld [vmem:[#allocation2 + $0x8e8] sm:$0xff]
        %v539 = vld [vmem:[#allocation2 + $0x8f0] sm:$0xff]
        %v540 = vld [vmem:[#allocation2 + $0x8f8] sm:$0xff]
        %v541 = vld [vmem:[#allocation2 + $0x900] sm:$0xff]
        %v542 = vld [vmem:[#allocation2 + $0x908] sm:$0xff]
        %v543 = vld [vmem:[#allocation2 + $0x910] sm:$0xff]
        %v544 = vld [vmem:[#allocation2 + $0x918] sm:$0xff]
        %v545 = vld [vmem:[#allocation2 + $0x920] sm:$0xff]
        %v546 = vld [vmem:[#allocation2 + $0x928] sm:$0xff]
        %v547 = vld [vmem:[#allocation2 + $0x930] sm:$0xff]
        %v548 = vld [vmem:[#allocation2 + $0x938] sm:$0xff]
        %v549 = vld [vmem:[#allocation2 + $0x940] sm:$0xff]
        %v550 = vld [vmem:[#allocation2 + $0x948] sm:$0xff]
        %v551 = vld [vmem:[#allocation2 + $0x950] sm:$0xff]
        %v552 = vld [vmem:[#allocation2 + $0x958] sm:$0xff]
        %v553 = vld [vmem:[#allocation2 + $0x960] sm:$0xff]
        %v554 = vld [vmem:[#allocation2 + $0x968] sm:$0xff]
        %v555 = vld [vmem:[#allocation2 + $0x970] sm:$0xff]
        %v556 = vld [vmem:[#allocation2 + $0x978] sm:$0xff]
        %v557 = vld [vmem:[#allocation2 + $0x980] sm:$0xff]
        %v558 = vld [vmem:[#allocation2 + $0x988] sm:$0xff]
        %v559 = vld [vmem:[#allocation2 + $0x990] sm:$0xff]
        %v560 = vld [vmem:[#allocation2 + $0x998] sm:$0xff]
        %v561 = vld [vmem:[#allocation2 + $0x9a0] sm:$0xff]
        %v562 = vld [vmem:[#allocation2 + $0x9a8] sm:$0xff]
        %v563 = vld [vmem:[#allocation2 + $0x9b0] sm:$0xff]
        %v564 = vld [vmem:[#allocation2 + $0x9b8] sm:$0xff]
        %v565 = vld [vmem:[#allocation2 + $0x9c0] sm:$0xff]
        %v566 = vld [vmem:[#allocation2 + $0x9c8] sm:$0xff]
        %v567 = vld [vmem:[#allocation2 + $0x9d0] sm:$0xff]
        %v568 = vld [vmem:[#allocation2 + $0x9d8] sm:$0xff]
        %v569 = vld [vmem:[#allocation2 + $0x9e0] sm:$0xff]
        %v570 = vld [vmem:[#allocation2 + $0x9e8] sm:$0xff]
        %v571 = vld [vmem:[#allocation2 + $0x9f0] sm:$0xff]
        %v572 = vld [vmem:[#allocation2 + $0x9f8] sm:$0xff]
        %v573 = vld [vmem:[#allocation2 + $0xa00] sm:$0xff]
        %v574 = vld [vmem:[#allocation2 + $0xa08] sm:$0xff]
        %v575 = vld [vmem:[#allocation2 + $0xa10] sm:$0xff]
        %v576 = vld [vmem:[#allocation2 + $0xa18] sm:$0xff]
        %v577 = vld [vmem:[#allocation2 + $0xa20] sm:$0xff]
        %v578 = vld [vmem:[#allocation2 + $0xa28] sm:$0xff]
        %v579 = vld [vmem:[#allocation2 + $0xa30] sm:$0xff]
        %v580 = vld [vmem:[#allocation2 + $0xa38] sm:$0xff]
        %v581 = vld [vmem:[#allocation2 + $0xa40] sm:$0xff]
        %v582 = vld [vmem:[#allocation2 + $0xa48] sm:$0xff]
        %v583 = vld [vmem:[#allocation2 + $0xa50] sm:$0xff]
        %v584 = vld [vmem:[#allocation2 + $0xa58] sm:$0xff]
        %v585 = vld [vmem:[#allocation2 + $0xa60] sm:$0xff]
        %v586 = vld [vmem:[#allocation2 + $0xa68] sm:$0xff]
        %v587 = vld [vmem:[#allocation2 + $0xa70] sm:$0xff]
        %v588 = vld [vmem:[#allocation2 + $0xa78] sm:$0xff]
        %v589 = vld [vmem:[#allocation2 + $0xa80] sm:$0xff]
        %v590 = vld [vmem:[#allocation2 + $0xa88] sm:$0xff]
        %v591 = vld [vmem:[#allocation2 + $0xa90] sm:$0xff]
        %v592 = vld [vmem:[#allocation2 + $0xa98] sm:$0xff]
        %v593 = vld [vmem:[#allocation2 + $0xaa0] sm:$0xff]
        %v594 = vld [vmem:[#allocation2 + $0xaa8] sm:$0xff]
        %v595 = vld [vmem:[#allocation2 + $0xab0] sm:$0xff]
        %v596 = vld [vmem:[#allocation2 + $0xab8] sm:$0xff]
        %v597 = vld [vmem:[#allocation2 + $0xac0] sm:$0xff]
        %v598 = vld [vmem:[#allocation2 + $0xac8] sm:$0xff]
        %v599 = vld [vmem:[#allocation2 + $0xad0] sm:$0xff]
        %v600 = vld [vmem:[#allocation2 + $0xad8] sm:$0xff]
        %v601 = vld [vmem:[#allocation2 + $0xae0] sm:$0xff]
        %v602 = vld [vmem:[#allocation2 + $0xae8] sm:$0xff]
        %v603 = vld [vmem:[#allocation2 + $0xaf0] sm:$0xff]
        %v604 = vld [vmem:[#allocation2 + $0xaf8] sm:$0xff]
        %v605 = vld [vmem:[#allocation2 + $0xb00] sm:$0xff]
        %v606 = vld [vmem:[#allocation2 + $0xb08] sm:$0xff]
        %v607 = vld [vmem:[#allocation2 + $0xb10] sm:$0xff]
        %v608 = vld [vmem:[#allocation2 + $0xb18] sm:$0xff]
        %v609 = vld [vmem:[#allocation2 + $0xb20] sm:$0xff]
        %v610 = vld [vmem:[#allocation2 + $0xb28] sm:$0xff]
        %v611 = vld [vmem:[#allocation2 + $0xb30] sm:$0xff]
        %v612 = vld [vmem:[#allocation2 + $0xb38] sm:$0xff]
        %v613 = vld [vmem:[#allocation2 + $0xb40] sm:$0xff]
        %v614 = vld [vmem:[#allocation2 + $0xb48] sm:$0xff]
        %v615 = vld [vmem:[#allocation2 + $0xb50] sm:$0xff]
        %v616 = vld [vmem:[#allocation2 + $0xb58] sm:$0xff]
        %v617 = vld [vmem:[#allocation2 + $0xb60] sm:$0xff]
        %v618 = vld [vmem:[#allocation2 + $0xb68] sm:$0xff]
        %v619 = vld [vmem:[#allocation2 + $0xb70] sm:$0xff]
        %v620 = vld [vmem:[#allocation2 + $0xb78] sm:$0xff]
        %v621 = vld [vmem:[#allocation2 + $0xb80] sm:$0xff]
        %v622 = vld [vmem:[#allocation2 + $0xb88] sm:$0xff]
        %v623 = vld [vmem:[#allocation2 + $0xb90] sm:$0xff]
        %v624 = vld [vmem:[#allocation2 + $0xb98] sm:$0xff]
        %v625 = vld [vmem:[#allocation2 + $0xba0] sm:$0xff]
        %v626 = vld [vmem:[#allocation2 + $0xba8] sm:$0xff]
        %v627 = vld [vmem:[#allocation2 + $0xbb0] sm:$0xff]
        %v628 = vld [vmem:[#allocation2 + $0xbb8] sm:$0xff]
        %v629 = vld [vmem:[#allocation2 + $0xbc0] sm:$0xff]
        %v630 = vld [vmem:[#allocation2 + $0xbc8] sm:$0xff]
        %v631 = vld [vmem:[#allocation2 + $0xbd0] sm:$0xff]
        %v632 = vld [vmem:[#allocation2 + $0xbd8] sm:$0xff]
        %v633 = vld [vmem:[#allocation2 + $0xbe0] sm:$0xff]
        %v634 = vld [vmem:[#allocation2 + $0xbe8] sm:$0xff]
        %v635 = vld [vmem:[#allocation2 + $0xbf0] sm:$0xff]
        %v636 = vld [vmem:[#allocation2 + $0xbf8] sm:$0xff]
        %v637 = vld [vmem:[#allocation2 + $0xc00] sm:$0xff]
        %v638 = vld [vmem:[#allocation2 + $0xc08] sm:$0xff]
        %v639 = vld [vmem:[#allocation2 + $0xc10] sm:$0xff]
        %v640 = vld [vmem:[#allocation2 + $0xc18] sm:$0xff]
        %v641 = vld [vmem:[#allocation2 + $0xc20] sm:$0xff]
        %v642 = vld [vmem:[#allocation2 + $0xc28] sm:$0xff]
        %v643 = vld [vmem:[#allocation2 + $0xc30] sm:$0xff]
        %v644 = vld [vmem:[#allocation2 + $0xc38] sm:$0xff]
        %v645 = vld [vmem:[#allocation2 + $0xc40] sm:$0xff]
        %v646 = vld [vmem:[#allocation2 + $0xc48] sm:$0xff]
        %v647 = vld [vmem:[#allocation2 + $0xc50] sm:$0xff]
        %v648 = vld [vmem:[#allocation2 + $0xc58] sm:$0xff]
        %v649 = vld [vmem:[#allocation2 + $0xc60] sm:$0xff]
        %v650 = vld [vmem:[#allocation2 + $0xc68] sm:$0xff]
        %v651 = vld [vmem:[#allocation2 + $0xc70] sm:$0xff]
        %v652 = vld [vmem:[#allocation2 + $0xc78] sm:$0xff]
        %v653 = vld [vmem:[#allocation2 + $0xc80] sm:$0xff]
        %v654 = vld [vmem:[#allocation2 + $0xc88] sm:$0xff]
        %v655 = vld [vmem:[#allocation2 + $0xc90] sm:$0xff]
        %v656 = vld [vmem:[#allocation2 + $0xc98] sm:$0xff]
        %v657 = vld [vmem:[#allocation2 + $0xca0] sm:$0xff]
        %v658 = vld [vmem:[#allocation2 + $0xca8] sm:$0xff]
        %v659 = vld [vmem:[#allocation2 + $0xcb0] sm:$0xff]
        %v660 = vld [vmem:[#allocation2 + $0xcb8] sm:$0xff]
        %v661 = vld [vmem:[#allocation2 + $0xcc0] sm:$0xff]
        %v662 = vld [vmem:[#allocation2 + $0xcc8] sm:$0xff]
        %v663 = vld [vmem:[#allocation2 + $0xcd0] sm:$0xff]
        %v664 = vld [vmem:[#allocation2 + $0xcd8] sm:$0xff]
        %v665 = vld [vmem:[#allocation2 + $0xce0] sm:$0xff]
        %v666 = vld [vmem:[#allocation2 + $0xce8] sm:$0xff]
        %v667 = vld [vmem:[#allocation2 + $0xcf0] sm:$0xff]
        %v668 = vld [vmem:[#allocation2 + $0xcf8] sm:$0xff]
        %v669 = vld [vmem:[#allocation2 + $0xd00] sm:$0xff]
        %v670 = vld [vmem:[#allocation2 + $0xd08] sm:$0xff]
        %v671 = vld [vmem:[#allocation2 + $0xd10] sm:$0xff]
        %v672 = vld [vmem:[#allocation2 + $0xd18] sm:$0xff]
        %v673 = vld [vmem:[#allocation2 + $0xd20] sm:$0xff]
        %v674 = vld [vmem:[#allocation2 + $0xd28] sm:$0xff]
        %v675 = vld [vmem:[#allocation2 + $0xd30] sm:$0xff]
        %v676 = vld [vmem:[#allocation2 + $0xd38] sm:$0xff]
        %v677 = vld [vmem:[#allocation2 + $0xd40] sm:$0xff]
        %v678 = vld [vmem:[#allocation2 + $0xd48] sm:$0xff]
        %v679 = vld [vmem:[#allocation2 + $0xd50] sm:$0xff]
        %v680 = vld [vmem:[#allocation2 + $0xd58] sm:$0xff]
        %v681 = vld [vmem:[#allocation2 + $0xd60] sm:$0xff]
        %v682 = vld [vmem:[#allocation2 + $0xd68] sm:$0xff]
        %v683 = vld [vmem:[#allocation2 + $0xd70] sm:$0xff]
        %v684 = vld [vmem:[#allocation2 + $0xd78] sm:$0xff]
        %v685 = vld [vmem:[#allocation2 + $0xd80] sm:$0x33]
        %v686 = vld [vmem:[#allocation2 + $0xd88] sm:$0x33]
        %v687 = vld [vmem:[#allocation2 + $0xd90] sm:$0x33]
        %v688 = vld [vmem:[#allocation2 + $0xd98] sm:$0x33]
        %v689 = vld [vmem:[#allocation2 + $0xda0] sm:$0x33]
        %v690 = vld [vmem:[#allocation2 + $0xda8] sm:$0x33]
        %v691 = vld [vmem:[#allocation2 + $0xdb0] sm:$0x33]
        %v692 = vld [vmem:[#allocation2 + $0xdb8] sm:$0x33]
        %v693 = vld [vmem:[#allocation2 + $0xdc0] sm:$0x33]
        %v694 = vld [vmem:[#allocation2 + $0xdc8] sm:$0x33]
        %v695 = vld [vmem:[#allocation2 + $0xdd0] sm:$0x33]
        %v696 = vld [vmem:[#allocation2 + $0xdd8] sm:$0x33]
        %v697 = vld [vmem:[#allocation2 + $0xde0] sm:$0x33]
        %v698 = vld [vmem:[#allocation2 + $0xde8] sm:$0x33]
        %v699 = vld [vmem:[#allocation2 + $0xdf0] sm:$0x33]
        %v700 = vld [vmem:[#allocation2 + $0xdf8] sm:$0x33]
        %v701 = vld [vmem:[#allocation2 + $0xe00] sm:$0x33]
        %v702 = vld [vmem:[#allocation2 + $0xe08] sm:$0x33]
        %v703 = vld [vmem:[%s218] sm:$0xf]
        %v704 = vld [vmem:[%s218 + $0x4] sm:$0xf]
        %v705 = vld [vmem:[%s218 + $0x8] sm:$0xf]
        %v706 = vld [vmem:[%s218 + $0xc] sm:$0xf]
        %v707 = vld [vmem:[%s218 + $0x10] sm:$0xf]
        %v708 = vld [vmem:[%s218 + $0x14] sm:$0xf]
        %v709 = vld [vmem:[%s218 + $0x18] sm:$0xf]
        %v710 = vld [vmem:[%s218 + $0x1c] sm:$0xf]
        %v711 = vld [vmem:[%s218 + $0x20] sm:$0xf]
        %v712 = vld [vmem:[%s218 + $0x24] sm:$0xf]
        %v713 = vld [vmem:[%s218 + $0x28] sm:$0xf]
        %v714 = vld [vmem:[%s218 + $0x2c] sm:$0xf]
        %v715 = vld [vmem:[%s218 + $0x30] sm:$0xf]
        %v716 = vld [vmem:[%s218 + $0x34] sm:$0xf]
        %v717 = vld [vmem:[%s218 + $0x38] sm:$0xf]
        %v718 = vld [vmem:[%s218 + $0x3c] sm:$0xf]
        %v719 = vld [vmem:[%s218 + $0x40] sm:$0xf]
        %v720 = vld [vmem:[%s218 + $0x44] sm:$0xf]
        %v721 = vld [vmem:[%s218 + $0x48] sm:$0xf]
        %v722 = vld [vmem:[%s218 + $0x4c] sm:$0xf]
        %v723 = vld [vmem:[%s218 + $0x50] sm:$0xf]
        %v724 = vld [vmem:[%s218 + $0x54] sm:$0xf]
        %v725 = vld [vmem:[%s218 + $0x58] sm:$0xf]
        %v726 = vld [vmem:[%s218 + $0x5c] sm:$0xf]
        %v727 = vld [vmem:[%s218 + $0x60] sm:$0xf]
        %v728 = vld [vmem:[%s218 + $0x64] sm:$0xf]
        %v729 = vld [vmem:[%s218 + $0x68] sm:$0xf]
        %v730 = vld [vmem:[%s218 + $0x6c] sm:$0xf]
        %v731 = vld [vmem:[%s218 + $0x70] sm:$0xf]
        %v732 = vld [vmem:[%s218 + $0x74] sm:$0xf]
        %v733 = vld [vmem:[%s218 + $0x78] sm:$0xf]
        %v734 = vld [vmem:[%s218 + $0x7c] sm:$0xf]
        %v735 = vld [vmem:[%s218 + $0x80] sm:$0xf]
        %v736 = vld [vmem:[%s218 + $0x84] sm:$0xf]
        %v737 = vld [vmem:[%s218 + $0x88] sm:$0xf]
        %v738 = vld [vmem:[%s218 + $0x8c] sm:$0xf]
        %v739 = vld [vmem:[%s218 + $0x90] sm:$0xf]
        %v740 = vld [vmem:[%s218 + $0x94] sm:$0xf]
        %v741 = vld [vmem:[%s218 + $0x98] sm:$0xf]
        %v742 = vld [vmem:[%s218 + $0x9c] sm:$0xf]
        %v743 = vld [vmem:[%s218 + $0xa0] sm:$0xf]
        %v744 = vld [vmem:[%s218 + $0xa4] sm:$0xf]
        %v745 = vld [vmem:[%s218 + $0xa8] sm:$0xf]
        %v746 = vld [vmem:[%s218 + $0xac] sm:$0xf]
        %v747 = vld [vmem:[%s218 + $0xb0] sm:$0xf]
        %v748 = vld [vmem:[%s218 + $0xb4] sm:$0xf]
        %v749 = vld [vmem:[%s218 + $0xb8] sm:$0xf]
        %v750 = vld [vmem:[%s218 + $0xbc] sm:$0xf]
        %v751 = vld [vmem:[%s218 + $0xc0] sm:$0xf]
        %v752 = vld [vmem:[%s218 + $0xc4] sm:$0xf]
        %v753 = vld [vmem:[%s218 + $0xc8] sm:$0xf]
        %v754 = vld [vmem:[%s218 + $0xcc] sm:$0xf]
        %v755 = vld [vmem:[%s218 + $0xd0] sm:$0xf]
        %v756 = vld [vmem:[%s218 + $0xd4] sm:$0xf]
        %v757 = vld [vmem:[%s218 + $0xd8] sm:$0xf]
        %v758 = vld [vmem:[%s218 + $0xdc] sm:$0xf]
        %v759 = vld [vmem:[%s218 + $0xe0] sm:$0xf]
        %v760 = vld [vmem:[%s218 + $0xe4] sm:$0xf]
        %v761 = vld [vmem:[%s218 + $0xe8] sm:$0xf]
        %v762 = vld [vmem:[%s218 + $0xec] sm:$0xf]
        %v763 = vld [vmem:[%s218 + $0xf0] sm:$0xf]
        %v764 = vld [vmem:[%s218 + $0xf4] sm:$0xf]
        %v765 = vld [vmem:[%s218 + $0xf8] sm:$0xf]
        %v766 = vld [vmem:[%s218 + $0xfc] sm:$0xf]
        %v767 = vld [vmem:[%s218 + $0x100] sm:$0xf]
        %v768 = vld [vmem:[%s218 + $0x104] sm:$0xf]
        %v769 = vld [vmem:[%s218 + $0x108] sm:$0xf]
        %v770 = vld [vmem:[%s218 + $0x10c] sm:$0xf]
        %v771 = vld [vmem:[%s218 + $0x110] sm:$0xf]
        %v772 = vld [vmem:[%s218 + $0x114] sm:$0xf]
        %v773 = vld [vmem:[%s218 + $0x118] sm:$0xf]
        %v774 = vld [vmem:[%s218 + $0x11c] sm:$0xf]
        %v775 = vld [vmem:[%s218 + $0x120] sm:$0xf]
        %v776 = vld [vmem:[%s218 + $0x124] sm:$0xf]
        %v777 = vld [vmem:[%s218 + $0x128] sm:$0xf]
        %v778 = vld [vmem:[%s218 + $0x12c] sm:$0xf]
        %v779 = vld [vmem:[%s218 + $0x130] sm:$0xf]
        %v780 = vld [vmem:[%s218 + $0x134] sm:$0xf]
        %v781 = vld [vmem:[%s218 + $0x138] sm:$0xf]
        %v782 = vld [vmem:[%s218 + $0x13c] sm:$0xf]
        %v783 = vld [vmem:[%s218 + $0x140] sm:$0xf]
        %v784 = vld [vmem:[%s218 + $0x144] sm:$0xf]
        %v785 = vld [vmem:[%s218 + $0x148] sm:$0xf]
        %v786 = vld [vmem:[%s218 + $0x14c] sm:$0xf]
        %v787 = vld [vmem:[%s218 + $0x150] sm:$0xf]
        %v788 = vld [vmem:[%s218 + $0x154] sm:$0xf]
        %v789 = vld [vmem:[%s218 + $0x158] sm:$0xf]
        %v790 = vld [vmem:[%s218 + $0x15c] sm:$0xf]
        %v791 = vld [vmem:[%s218 + $0x160] sm:$0xf]
        %v792 = vld [vmem:[%s218 + $0x164] sm:$0xf]
        %v793 = vld [vmem:[%s218 + $0x168] sm:$0xf]
        %v794 = vld [vmem:[%s218 + $0x16c] sm:$0xf]
        %v795 = vld [vmem:[%s218 + $0x170] sm:$0xf]
        %v796 = vld [vmem:[%s218 + $0x174] sm:$0xf]
        %v797 = vld [vmem:[%s218 + $0x178] sm:$0xf]
        %v798 = vld [vmem:[%s218 + $0x17c] sm:$0xf]
        %v799 = vld [vmem:[%s218 + $0x180] sm:$0xf]
        %v800 = vld [vmem:[%s218 + $0x184] sm:$0xf]
        %v801 = vld [vmem:[%s218 + $0x188] sm:$0xf]
        %v802 = vld [vmem:[%s218 + $0x18c] sm:$0xf]
        %v803 = vld [vmem:[%s218 + $0x190] sm:$0xf]
        %v804 = vld [vmem:[%s218 + $0x194] sm:$0xf]
        %v805 = vld [vmem:[%s218 + $0x198] sm:$0xf]
        %v806 = vld [vmem:[%s218 + $0x19c] sm:$0xf]
        %v807 = vld [vmem:[%s218 + $0x1a0] sm:$0xf]
        %v808 = vld [vmem:[%s218 + $0x1a4] sm:$0xf]
        %v809 = vld [vmem:[%s218 + $0x1a8] sm:$0xf]
        %v810 = vld [vmem:[%s218 + $0x1ac] sm:$0xf]
        %v811 = vld [vmem:[%s218 + $0x1b0] sm:$0xf]
        %v812 = vld [vmem:[%s218 + $0x1b4] sm:$0xf]
        %v813 = vld [vmem:[%s218 + $0x1b8] sm:$0xf]
        %v814 = vld [vmem:[%s218 + $0x1bc] sm:$0xf]
        %v815 = vld [vmem:[%s218 + $0x1c0] sm:$0xf]
        %v816 = vld [vmem:[%s218 + $0x1c4] sm:$0xf]
        %v817 = vld [vmem:[%s218 + $0x1c8] sm:$0xf]
        %v818 = vld [vmem:[%s218 + $0x1cc] sm:$0xf]
        %v819 = vld [vmem:[%s218 + $0x1d0] sm:$0xf]
        %v820 = vld [vmem:[%s218 + $0x1d4] sm:$0xf]
        %v821 = vld [vmem:[%s218 + $0x1d8] sm:$0xf]
        %v822 = vld [vmem:[%s218 + $0x1dc] sm:$0xf]
        %v823 = vld [vmem:[%s218 + $0x1e0] sm:$0xf]
        %v824 = vld [vmem:[%s218 + $0x1e4] sm:$0xf]
        %v825 = vld [vmem:[%s218 + $0x1e8] sm:$0xf]
        %v826 = vld [vmem:[%s218 + $0x1ec] sm:$0xf]
        %v827 = vld [vmem:[%s218 + $0x1f0] sm:$0xf]
        %v828 = vld [vmem:[%s218 + $0x1f4] sm:$0xf]
        %v829 = vld [vmem:[%s218 + $0x1f8] sm:$0xf]
        %v830 = vld [vmem:[%s218 + $0x1fc] sm:$0xf]
        %v831 = vld [vmem:[%s218 + $0x200] sm:$0xf]
        %v832 = vld [vmem:[%s218 + $0x204] sm:$0xf]
        %v833 = vld [vmem:[%s218 + $0x208] sm:$0xf]
        %v834 = vld [vmem:[%s218 + $0x20c] sm:$0xf]
        %v835 = vld [vmem:[%s218 + $0x210] sm:$0xf]
        %v836 = vld [vmem:[%s218 + $0x214] sm:$0xf]
        %v837 = vld [vmem:[%s218 + $0x218] sm:$0xf]
        %v838 = vld [vmem:[%s218 + $0x21c] sm:$0xf]
        %v839 = vld [vmem:[%s218 + $0x220] sm:$0xf]
        %v840 = vld [vmem:[%s218 + $0x224] sm:$0xf]
        %v841 = vld [vmem:[%s218 + $0x228] sm:$0xf]
        %v842 = vld [vmem:[%s218 + $0x22c] sm:$0xf]
        %v843 = vld [vmem:[%s218 + $0x230] sm:$0xf]
        %v844 = vld [vmem:[%s218 + $0x234] sm:$0xf]
        %v845 = vld [vmem:[%s218 + $0x238] sm:$0xf]
        %v846 = vld [vmem:[%s218 + $0x23c] sm:$0xf]
        %v847 = vld [vmem:[%s218 + $0x240] sm:$0xf]
        %v848 = vld [vmem:[%s218 + $0x244] sm:$0xf]
        %v849 = vld [vmem:[%s218 + $0x248] sm:$0xf]
        %v850 = vld [vmem:[%s218 + $0x24c] sm:$0xf]
        %v851 = vld [vmem:[%s218 + $0x250] sm:$0xf]
        %v852 = vld [vmem:[%s218 + $0x254] sm:$0xf]
        %v853 = vld [vmem:[%s218 + $0x258] sm:$0xf]
        %v854 = vld [vmem:[%s218 + $0x25c] sm:$0xf]
        %v855 = vld [vmem:[%s218 + $0x260] sm:$0xf]
        %v856 = vld [vmem:[%s218 + $0x264] sm:$0xf]
        %v857 = vld [vmem:[%s218 + $0x268] sm:$0xf]
        %v858 = vld [vmem:[%s218 + $0x26c] sm:$0xf]
        %v859 = vld [vmem:[%s218 + $0x270] sm:$0xf]
        %v860 = vld [vmem:[%s218 + $0x274] sm:$0xf]
        %v861 = vld [vmem:[%s218 + $0x278] sm:$0xf]
        %v862 = vld [vmem:[%s218 + $0x27c] sm:$0xf]
        %v863 = vld [vmem:[%s218 + $0x280] sm:$0xf]
        %v864 = vld [vmem:[%s218 + $0x284] sm:$0xf]
        %v865 = vld [vmem:[%s218 + $0x288] sm:$0xf]
        %v866 = vld [vmem:[%s218 + $0x28c] sm:$0xf]
        %v867 = vld [vmem:[%s218 + $0x290] sm:$0xf]
        %v868 = vld [vmem:[%s218 + $0x294] sm:$0xf]
        %v869 = vld [vmem:[%s218 + $0x298] sm:$0xf]
        %v870 = vld [vmem:[%s218 + $0x29c] sm:$0xf]
        %v871 = vld [vmem:[%s218 + $0x2a0] sm:$0xf]
        %v872 = vld [vmem:[%s218 + $0x2a4] sm:$0xf]
        %v873 = vld [vmem:[%s218 + $0x2a8] sm:$0xf]
        %v874 = vld [vmem:[%s218 + $0x2ac] sm:$0xf]
        %v875 = vld [vmem:[%s218 + $0x2b0] sm:$0xf]
        %v876 = vld [vmem:[%s218 + $0x2b4] sm:$0xf]
        %v877 = vld [vmem:[%s218 + $0x2b8] sm:$0xf]
        %v878 = vld [vmem:[%s218 + $0x2bc] sm:$0xf]
        %v879 = vld [vmem:[%s218 + $0x2c0] sm:$0xf]
        %v880 = vld [vmem:[%s218 + $0x2c4] sm:$0xf]
        %v881 = vld [vmem:[%s218 + $0x2c8] sm:$0xf]
        %v882 = vld [vmem:[%s218 + $0x2cc] sm:$0xf]
        %v883 = vld [vmem:[%s218 + $0x2d0] sm:$0xf]
        %v884 = vld [vmem:[%s218 + $0x2d4] sm:$0xf]
        %v885 = vld [vmem:[%s218 + $0x2d8] sm:$0xf]
        %v886 = vld [vmem:[%s218 + $0x2dc] sm:$0xf]
        %v887 = vld [vmem:[%s218 + $0x2e0] sm:$0xf]
        %v888 = vld [vmem:[%s218 + $0x2e4] sm:$0xf]
        %v889 = vld [vmem:[%s218 + $0x2e8] sm:$0xf]
        %v890 = vld [vmem:[%s218 + $0x2ec] sm:$0xf]
        %v891 = vld [vmem:[%s218 + $0x2f0] sm:$0xf]
        %v892 = vld [vmem:[%s218 + $0x2f4] sm:$0xf]
        %v893 = vld [vmem:[%s218 + $0x2f8] sm:$0xf]
        %v894 = vld [vmem:[%s218 + $0x2fc] sm:$0xf]
        %v895 = vld [vmem:[%s218 + $0x300] sm:$0xf]
        %v896 = vld [vmem:[%s218 + $0x304] sm:$0xf]
        %v897 = vld [vmem:[%s218 + $0x308] sm:$0xf]
        %v898 = vld [vmem:[%s218 + $0x30c] sm:$0xf]
        %v899 = vld [vmem:[%s218 + $0x310] sm:$0xf]
        %v900 = vld [vmem:[%s218 + $0x314] sm:$0xf]
        %v901 = vld [vmem:[%s218 + $0x318] sm:$0xf]
        %v902 = vld [vmem:[%s218 + $0x31c] sm:$0xf]
        %v903 = vld [vmem:[%s218 + $0x320] sm:$0xf]
        %v904 = vld [vmem:[%s218 + $0x324] sm:$0xf]
        %v905 = vld [vmem:[%s218 + $0x328] sm:$0xf]
        %v906 = vld [vmem:[%s218 + $0x32c] sm:$0xf]
        %v907 = vld [vmem:[%s218 + $0x330] sm:$0xf]
        %v908 = vld [vmem:[%s218 + $0x334] sm:$0xf]
        %v909 = vld [vmem:[%s218 + $0x338] sm:$0xf]
        %v910 = vld [vmem:[%s218 + $0x33c] sm:$0xf]
        %v911 = vld [vmem:[%s218 + $0x340] sm:$0xf]
        %v912 = vld [vmem:[%s218 + $0x344] sm:$0xf]
        %v913 = vld [vmem:[%s218 + $0x348] sm:$0xf]
        %v914 = vld [vmem:[%s218 + $0x34c] sm:$0xf]
        %v915 = vld [vmem:[%s218 + $0x350] sm:$0xf]
        %v916 = vld [vmem:[%s218 + $0x354] sm:$0xf]
        %v917 = vld [vmem:[%s218 + $0x358] sm:$0xf]
        %v918 = vld [vmem:[%s218 + $0x35c] sm:$0xf]
        %v919 = vld [vmem:[%s218 + $0x360] sm:$0xf]
        %v920 = vld [vmem:[%s218 + $0x364] sm:$0xf]
        %v921 = vld [vmem:[%s218 + $0x368] sm:$0xf]
        %v922 = vld [vmem:[%s218 + $0x36c] sm:$0xf]
        %v923 = vld [vmem:[%s218 + $0x370] sm:$0xf]
        %v924 = vld [vmem:[%s218 + $0x374] sm:$0xf]
        %v925 = vld [vmem:[%s218 + $0x378] sm:$0xf]
        %v926 = vld [vmem:[%s218 + $0x37c] sm:$0xf]
        %v927 = vld [vmem:[%s218 + $0x380] sm:$0xf]
        %v928 = vld [vmem:[%s218 + $0x384] sm:$0xf]
        %v929 = vld [vmem:[%s218 + $0x388] sm:$0xf]
        %v930 = vld [vmem:[%s218 + $0x38c] sm:$0xf]
        %v931 = vld [vmem:[%s218 + $0x390] sm:$0xf]
        %v932 = vld [vmem:[%s218 + $0x394] sm:$0xf]
        %v933 = vld [vmem:[%s218 + $0x398] sm:$0xf]
        %v934 = vld [vmem:[%s218 + $0x39c] sm:$0xf]
        %v935 = vld [vmem:[%s218 + $0x3a0] sm:$0xf]
        %v936 = vld [vmem:[%s218 + $0x3a4] sm:$0xf]
        %v937 = vld [vmem:[%s218 + $0x3a8] sm:$0xf]
        %v938 = vld [vmem:[%s218 + $0x3ac] sm:$0xf]
        %v939 = vld [vmem:[%s218 + $0x3b0] sm:$0xf]
        %v940 = vld [vmem:[%s218 + $0x3b4] sm:$0xf]
        %v941 = vld [vmem:[%s218 + $0x3b8] sm:$0xf]
        %v942 = vld [vmem:[%s218 + $0x3bc] sm:$0xf]
        %v943 = vld [vmem:[%s218 + $0x3c0] sm:$0xf]
        %v944 = vld [vmem:[%s218 + $0x3c4] sm:$0xf]
        %v945 = vld [vmem:[%s218 + $0x3c8] sm:$0xf]
        %v946 = vld [vmem:[%s218 + $0x3cc] sm:$0xf]
        %v947 = vld [vmem:[%s218 + $0x3d0] sm:$0xf]
        %v948 = vld [vmem:[%s218 + $0x3d4] sm:$0xf]
        %v949 = vld [vmem:[%s218 + $0x3d8] sm:$0xf]
        %v950 = vld [vmem:[%s218 + $0x3dc] sm:$0xf]
        %v951 = vld [vmem:[%s218 + $0x3e0] sm:$0xf]
        %v952 = vld [vmem:[%s218 + $0x3e4] sm:$0xf]
        %v953 = vld [vmem:[%s218 + $0x3e8] sm:$0xf]
        %v954 = vld [vmem:[%s218 + $0x3ec] sm:$0xf]
        %v955 = vld [vmem:[%s218 + $0x3f0] sm:$0xf]
        %v956 = vld [vmem:[%s218 + $0x3f4] sm:$0xf]
        %v957 = vld [vmem:[%s218 + $0x3f8] sm:$0xf]
        %v958 = vld [vmem:[%s218 + $0x3fc] sm:$0xf]
        %v959 = vld [vmem:[%s218 + $0x400] sm:$0xf]
        %v960 = vld [vmem:[%s218 + $0x404] sm:$0xf]
        %v961 = vld [vmem:[%s218 + $0x408] sm:$0xf]
        %v962 = vld [vmem:[%s218 + $0x40c] sm:$0xf]
        %v963 = vld [vmem:[%s218 + $0x410] sm:$0xf]
        %v964 = vld [vmem:[%s218 + $0x414] sm:$0xf]
        %v965 = vld [vmem:[%s218 + $0x418] sm:$0xf]
        %v966 = vld [vmem:[%s218 + $0x41c] sm:$0xf]
        %v967 = vld [vmem:[%s218 + $0x420] sm:$0xf]
        %v968 = vld [vmem:[%s218 + $0x424] sm:$0xf]
        %v969 = vld [vmem:[%s218 + $0x428] sm:$0xf]
        %v970 = vld [vmem:[%s218 + $0x42c] sm:$0xf]
        %v971 = vld [vmem:[%s218 + $0x430] sm:$0xf]
        %v972 = vld [vmem:[%s218 + $0x434] sm:$0xf]
        %v973 = vld [vmem:[%s218 + $0x438] sm:$0xf]
        %v974 = vld [vmem:[%s218 + $0x43c] sm:$0xf]
        %v975 = vld [vmem:[%s218 + $0x440] sm:$0xf]
        %v976 = vld [vmem:[%s218 + $0x444] sm:$0xf]
        %v977 = vld [vmem:[%s218 + $0x448] sm:$0xf]
        %v978 = vld [vmem:[%s218 + $0x44c] sm:$0xf]
        %v979 = vld [vmem:[%s218 + $0x450] sm:$0xf]
        %v980 = vld [vmem:[%s218 + $0x454] sm:$0xf]
        %v981 = vld [vmem:[%s218 + $0x458] sm:$0xf]
        %v982 = vld [vmem:[%s218 + $0x45c] sm:$0xf]
        %v983 = vld [vmem:[%s218 + $0x460] sm:$0xf]
        %v984 = vld [vmem:[%s218 + $0x464] sm:$0xf]
        %v985 = vld [vmem:[%s218 + $0x468] sm:$0xf]
        %v986 = vld [vmem:[%s218 + $0x46c] sm:$0xf]
        %v987 = vld [vmem:[%s218 + $0x470] sm:$0xf]
        %v988 = vld [vmem:[%s218 + $0x474] sm:$0xf]
        %v989 = vld [vmem:[%s218 + $0x478] sm:$0xf]
        %v990 = vld [vmem:[%s218 + $0x47c] sm:$0xf]
        %v991 = vld [vmem:[%s218 + $0x480] sm:$0xf]
        %v992 = vld [vmem:[%s218 + $0x484] sm:$0xf]
        %v993 = vld [vmem:[%s218 + $0x488] sm:$0xf]
        %v994 = vld [vmem:[%s218 + $0x48c] sm:$0xf]
        %v995 = vld [vmem:[%s218 + $0x490] sm:$0xf]
        %v996 = vld [vmem:[%s218 + $0x494] sm:$0xf]
        %v997 = vld [vmem:[%s218 + $0x498] sm:$0xf]
        %v998 = vld [vmem:[%s218 + $0x49c] sm:$0xf]
        %v999 = vld [vmem:[%s218 + $0x4a0] sm:$0xf]
        %v1000 = vld [vmem:[%s218 + $0x4a4] sm:$0xf]
        %v1001 = vld [vmem:[%s218 + $0x4a8] sm:$0xf]
        %v1002 = vld [vmem:[%s218 + $0x4ac] sm:$0xf]
        %v1003 = vld [vmem:[%s218 + $0x4b0] sm:$0xf]
        %v1004 = vld [vmem:[%s218 + $0x4b4] sm:$0xf]
        %v1005 = vld [vmem:[%s218 + $0x4b8] sm:$0xf]
        %v1006 = vld [vmem:[%s218 + $0x4bc] sm:$0xf]
        %v1007 = vld [vmem:[%s218 + $0x4c0] sm:$0xf]
        %v1008 = vld [vmem:[%s218 + $0x4c4] sm:$0xf]
        %v1009 = vld [vmem:[%s218 + $0x4c8] sm:$0xf]
        %v1010 = vld [vmem:[%s218 + $0x4cc] sm:$0xf]
        %v1011 = vld [vmem:[%s218 + $0x4d0] sm:$0xf]
        %v1012 = vld [vmem:[%s218 + $0x4d4] sm:$0xf]
        %v1013 = vld [vmem:[%s218 + $0x4d8] sm:$0xf]
        %v1014 = vld [vmem:[%s218 + $0x4dc] sm:$0xf]
        %v1015 = vld [vmem:[%s218 + $0x4e0] sm:$0xf]
        %v1016 = vld [vmem:[%s218 + $0x4e4] sm:$0xf]
        %v1017 = vld [vmem:[%s218 + $0x4e8] sm:$0xf]
        %v1018 = vld [vmem:[%s218 + $0x4ec] sm:$0xf]
        %v1019 = vld [vmem:[%s218 + $0x4f0] sm:$0xf]
        %v1020 = vld [vmem:[%s218 + $0x4f4] sm:$0xf]
        %v1021 = vld [vmem:[%s218 + $0x4f8] sm:$0xf]
        %v1022 = vld [vmem:[%s218 + $0x4fc] sm:$0xf]
        %v1023 = vld [vmem:[%s218 + $0x500] sm:$0xf]
        %v1024 = vld [vmem:[%s218 + $0x504] sm:$0xf]
        %v1025 = vld [vmem:[%s218 + $0x508] sm:$0xf]
        %v1026 = vld [vmem:[%s218 + $0x50c] sm:$0xf]
        %v1027 = vld [vmem:[%s218 + $0x510] sm:$0xf]
        %v1028 = vld [vmem:[%s218 + $0x514] sm:$0xf]
        %v1029 = vld [vmem:[%s218 + $0x518] sm:$0xf]
        %v1030 = vld [vmem:[%s218 + $0x51c] sm:$0xf]
        %v1031 = vld [vmem:[%s218 + $0x520] sm:$0xf]
        %v1032 = vld [vmem:[%s218 + $0x524] sm:$0xf]
        %v1033 = vld [vmem:[%s218 + $0x528] sm:$0xf]
        %v1034 = vld [vmem:[%s218 + $0x52c] sm:$0xf]
        %v1035 = vld [vmem:[%s218 + $0x530] sm:$0xf]
        %v1036 = vld [vmem:[%s218 + $0x534] sm:$0xf]
        %v1037 = vld [vmem:[%s218 + $0x538] sm:$0xf]
        %v1038 = vld [vmem:[%s218 + $0x53c] sm:$0xf]
        %v1039 = vld [vmem:[%s218 + $0x540] sm:$0xf]
        %v1040 = vld [vmem:[%s218 + $0x544] sm:$0xf]
        %v1041 = vld [vmem:[%s218 + $0x548] sm:$0xf]
        %v1042 = vld [vmem:[%s218 + $0x54c] sm:$0xf]
        %v1043 = vld [vmem:[%s218 + $0x550] sm:$0xf]
        %v1044 = vld [vmem:[%s218 + $0x554] sm:$0xf]
        %v1045 = vld [vmem:[%s218 + $0x558] sm:$0xf]
        %v1046 = vld [vmem:[%s218 + $0x55c] sm:$0xf]
        %v1047 = vld [vmem:[%s218 + $0x560] sm:$0xf]
        %v1048 = vld [vmem:[%s218 + $0x564] sm:$0xf]
        %v1049 = vld [vmem:[%s218 + $0x568] sm:$0xf]
        %v1050 = vld [vmem:[%s218 + $0x56c] sm:$0xf]
        %v1051 = vld [vmem:[%s218 + $0x570] sm:$0xf]
        %v1052 = vld [vmem:[%s218 + $0x574] sm:$0xf]
        %v1053 = vld [vmem:[%s218 + $0x578] sm:$0xf]
        %v1054 = vld [vmem:[%s218 + $0x57c] sm:$0xf]
        %v1055 = vld [vmem:[%s218 + $0x580] sm:$0xf]
        %v1056 = vld [vmem:[%s218 + $0x584] sm:$0xf]
        %v1057 = vld [vmem:[%s218 + $0x588] sm:$0xf]
        %v1058 = vld [vmem:[%s218 + $0x58c] sm:$0xf]
        %v1059 = vld [vmem:[%s218 + $0x590] sm:$0xf]
        %v1060 = vld [vmem:[%s218 + $0x594] sm:$0xf]
        %v1061 = vld [vmem:[%s218 + $0x598] sm:$0xf]
        %v1062 = vld [vmem:[%s218 + $0x59c] sm:$0xf]
        %v1063 = vld [vmem:[%s218 + $0x5a0] sm:$0xf]
        %v1064 = vld [vmem:[%s218 + $0x5a4] sm:$0xf]
        %v1065 = vld [vmem:[%s218 + $0x5a8] sm:$0xf]
        %v1066 = vld [vmem:[%s218 + $0x5ac] sm:$0xf]
        %v1067 = vld [vmem:[%s218 + $0x5b0] sm:$0xf]
        %v1068 = vld [vmem:[%s218 + $0x5b4] sm:$0xf]
        %v1069 = vld [vmem:[%s218 + $0x5b8] sm:$0xf]
        %v1070 = vld [vmem:[%s218 + $0x5bc] sm:$0xf]
        %v1071 = vld [vmem:[%s218 + $0x5c0] sm:$0xf]
        %v1072 = vld [vmem:[%s218 + $0x5c4] sm:$0xf]
        %v1073 = vld [vmem:[%s218 + $0x5c8] sm:$0xf]
        %v1074 = vld [vmem:[%s218 + $0x5cc] sm:$0xf]
        %v1075 = vld [vmem:[%s218 + $0x5d0] sm:$0xf]
        %v1076 = vld [vmem:[%s218 + $0x5d4] sm:$0xf]
        %v1077 = vld [vmem:[%s218 + $0x5d8] sm:$0xf]
        %v1078 = vld [vmem:[%s218 + $0x5dc] sm:$0xf]
        %v1079 = vld [vmem:[%s218 + $0x5e0] sm:$0xf]
        %v1080 = vld [vmem:[%s218 + $0x5e4] sm:$0xf]
        %v1081 = vld [vmem:[%s218 + $0x5e8] sm:$0xf]
        %v1082 = vld [vmem:[%s218 + $0x5ec] sm:$0xf]
        %v1083 = vld [vmem:[%s218 + $0x5f0] sm:$0xf]
        %v1084 = vld [vmem:[%s218 + $0x5f4] sm:$0xf]
        %v1085 = vld [vmem:[%s218 + $0x5f8] sm:$0xf]
        %v1086 = vld [vmem:[%s218 + $0x5fc] sm:$0xf]
        %v1087 = vld [vmem:[%s218 + $0x600] sm:$0xf]
        %v1088 = vld [vmem:[%s218 + $0x604] sm:$0xf]
        %v1089 = vld [vmem:[%s218 + $0x608] sm:$0xf]
        %v1090 = vld [vmem:[%s218 + $0x60c] sm:$0xf]
        %v1091 = vld [vmem:[%s218 + $0x610] sm:$0xf]
        %v1092 = vld [vmem:[%s218 + $0x614] sm:$0xf]
        %v1093 = vld [vmem:[%s218 + $0x618] sm:$0xf]
        %v1094 = vld [vmem:[%s218 + $0x61c] sm:$0xf]
        %v1095 = vld [vmem:[%s218 + $0x620] sm:$0xf]
        %v1096 = vld [vmem:[%s218 + $0x624] sm:$0xf]
        %v1097 = vld [vmem:[%s218 + $0x628] sm:$0xf]
        %v1098 = vld [vmem:[%s218 + $0x62c] sm:$0xf]
        %v1099 = vld [vmem:[%s218 + $0x630] sm:$0xf]
        %v1100 = vld [vmem:[%s218 + $0x634] sm:$0xf]
        %v1101 = vld [vmem:[%s218 + $0x638] sm:$0xf]
        %v1102 = vld [vmem:[%s218 + $0x63c] sm:$0xf]
        %v1103 = vld [vmem:[%s218 + $0x640] sm:$0xf]
        %v1104 = vld [vmem:[%s218 + $0x644] sm:$0xf]
        %v1105 = vld [vmem:[%s218 + $0x648] sm:$0xf]
        %v1106 = vld [vmem:[%s218 + $0x64c] sm:$0xf]
        %v1107 = vld [vmem:[%s218 + $0x650] sm:$0xf]
        %v1108 = vld [vmem:[%s218 + $0x654] sm:$0xf]
        %v1109 = vld [vmem:[%s218 + $0x658] sm:$0xf]
        %v1110 = vld [vmem:[%s218 + $0x65c] sm:$0xf]
        %v1111 = vld [vmem:[%s218 + $0x660] sm:$0xf]
        %v1112 = vld [vmem:[%s218 + $0x664] sm:$0xf]
        %v1113 = vld [vmem:[%s218 + $0x668] sm:$0xf]
        %v1114 = vld [vmem:[%s218 + $0x66c] sm:$0xf]
        %v1115 = vld [vmem:[%s218 + $0x670] sm:$0xf]
        %v1116 = vld [vmem:[%s218 + $0x674] sm:$0xf]
        %v1117 = vld [vmem:[%s218 + $0x678] sm:$0xf]
        %v1118 = vld [vmem:[%s218 + $0x67c] sm:$0xf]
        %v1119 = vld [vmem:[%s218 + $0x680] sm:$0xf]
        %v1120 = vld [vmem:[%s218 + $0x684] sm:$0xf]
        %v1121 = vld [vmem:[%s218 + $0x688] sm:$0xf]
        %v1122 = vld [vmem:[%s218 + $0x68c] sm:$0xf]
        %v1123 = vld [vmem:[%s218 + $0x690] sm:$0xf]
        %v1124 = vld [vmem:[%s218 + $0x694] sm:$0xf]
        %v1125 = vld [vmem:[%s218 + $0x698] sm:$0xf]
        %v1126 = vld [vmem:[%s218 + $0x69c] sm:$0xf]
        %v1127 = vld [vmem:[%s218 + $0x6a0] sm:$0xf]
        %v1128 = vld [vmem:[%s218 + $0x6a4] sm:$0xf]
        %v1129 = vld [vmem:[%s218 + $0x6a8] sm:$0xf]
        %v1130 = vld [vmem:[%s218 + $0x6ac] sm:$0xf]
        %v1131 = vld [vmem:[%s218 + $0x6b0] sm:$0xf]
        %v1132 = vld [vmem:[%s218 + $0x6b4] sm:$0xf]
        %v1133 = vld [vmem:[%s218 + $0x6b8] sm:$0xf]
        %v1134 = vld [vmem:[%s218 + $0x6bc] sm:$0xf]
        %v1135 = vld [vmem:[%s218 + $0x6c0] sm:$0xf]
        %v1136 = vld [vmem:[%s218 + $0x6c4] sm:$0xf]
        %v1137 = vld [vmem:[%s218 + $0x6c8] sm:$0xf]
        %v1138 = vld [vmem:[%s218 + $0x6cc] sm:$0xf]
        %v1139 = vld [vmem:[%s218 + $0x6d0] sm:$0xf]
        %v1140 = vld [vmem:[%s218 + $0x6d4] sm:$0xf]
        %v1141 = vld [vmem:[%s218 + $0x6d8] sm:$0xf]
        %v1142 = vld [vmem:[%s218 + $0x6dc] sm:$0xf]
        %v1143 = vld [vmem:[%s218 + $0x6e0] sm:$0xf]
        %v1144 = vld [vmem:[%s218 + $0x6e4] sm:$0xf]
        %v1145 = vld [vmem:[%s218 + $0x6e8] sm:$0xf]
        %v1146 = vld [vmem:[%s218 + $0x6ec] sm:$0xf]
        %v1147 = vld [vmem:[%s218 + $0x6f0] sm:$0xf]
        %v1148 = vld [vmem:[%s218 + $0x6f4] sm:$0xf]
        %v1149 = vld [vmem:[%s218 + $0x6f8] sm:$0xf]
        %v1150 = vld [vmem:[%s218 + $0x6fc] sm:$0xf]
        %v1151 = vld [vmem:[%s218 + $0x700] sm:$0xf]
        %v1152 = vld [vmem:[%s218 + $0x704] sm:$0xf]
        %v1153 = vld [vmem:[%s218 + $0x708] sm:$0xf]
        %v1154 = vld [vmem:[%s218 + $0x70c] sm:$0xf]
        %v1155 = vld [vmem:[%s218 + $0x710] sm:$0xf]
        %v1156 = vld [vmem:[%s218 + $0x714] sm:$0xf]
        %v1157 = vld [vmem:[%s218 + $0x718] sm:$0xf]
        %v1158 = vld [vmem:[%s218 + $0x71c] sm:$0xf]
        %v1159 = vld [vmem:[%s218 + $0x720] sm:$0xf]
        %v1160 = vld [vmem:[%s218 + $0x724] sm:$0xf]
        %v1161 = vld [vmem:[%s218 + $0x728] sm:$0xf]
        %v1162 = vld [vmem:[%s218 + $0x72c] sm:$0xf]
        %v1163 = vld [vmem:[%s218 + $0x730] sm:$0xf]
        %v1164 = vld [vmem:[%s218 + $0x734] sm:$0xf]
        %v1165 = vld [vmem:[%s218 + $0x738] sm:$0xf]
        %v1166 = vld [vmem:[%s218 + $0x73c] sm:$0xf]
        %v1167 = vld [vmem:[%s218 + $0x740] sm:$0xf]
        %v1168 = vld [vmem:[%s218 + $0x744] sm:$0xf]
        %v1169 = vld [vmem:[%s218 + $0x748] sm:$0xf]
        %v1170 = vld [vmem:[%s218 + $0x74c] sm:$0xf]
        %v1171 = vld [vmem:[%s218 + $0x750] sm:$0xf]
        %v1172 = vld [vmem:[%s218 + $0x754] sm:$0xf]
        %v1173 = vld [vmem:[%s218 + $0x758] sm:$0xf]
        %v1174 = vld [vmem:[%s218 + $0x75c] sm:$0xf]
        %v1175 = vld [vmem:[%s218 + $0x760] sm:$0xf]
        %v1176 = vld [vmem:[%s218 + $0x764] sm:$0xf]
        %v1177 = vld [vmem:[%s218 + $0x768] sm:$0xf]
        %v1178 = vld [vmem:[%s218 + $0x76c] sm:$0xf]
        %v1179 = vld [vmem:[%s218 + $0x770] sm:$0xf]
        %v1180 = vld [vmem:[%s218 + $0x774] sm:$0xf]
        %v1181 = vld [vmem:[%s218 + $0x778] sm:$0xf]
        %v1182 = vld [vmem:[%s218 + $0x77c] sm:$0xf]
        %v1183 = vld [vmem:[%s218 + $0x780] sm:$0xf]
        %v1184 = vld [vmem:[%s218 + $0x784] sm:$0xf]
        %v1185 = vld [vmem:[%s218 + $0x788] sm:$0xf]
        %v1186 = vld [vmem:[%s218 + $0x78c] sm:$0xf]
        %v1187 = vld [vmem:[%s218 + $0x790] sm:$0xf]
        %v1188 = vld [vmem:[%s218 + $0x794] sm:$0xf]
        %v1189 = vld [vmem:[%s218 + $0x798] sm:$0xf]
        %v1190 = vld [vmem:[%s218 + $0x79c] sm:$0xf]
        %v1191 = vld [vmem:[%s218 + $0x7a0] sm:$0xf]
        %v1192 = vld [vmem:[%s218 + $0x7a4] sm:$0xf]
        %v1193 = vld [vmem:[%s218 + $0x7a8] sm:$0xf]
        %v1194 = vld [vmem:[%s218 + $0x7ac] sm:$0xf]
        %v1195 = vld [vmem:[%s218 + $0x7b0] sm:$0xf]
        %v1196 = vld [vmem:[%s218 + $0x7b4] sm:$0xf]
        %v1197 = vld [vmem:[%s218 + $0x7b8] sm:$0xf]
        %v1198 = vld [vmem:[%s218 + $0x7bc] sm:$0xf]
        %v1199 = vld [vmem:[%s218 + $0x7c0] sm:$0xf]
        %v1200 = vld [vmem:[%s218 + $0x7c4] sm:$0xf]
        %v1201 = vld [vmem:[%s218 + $0x7c8] sm:$0xf]
        %v1202 = vld [vmem:[%s218 + $0x7cc] sm:$0xf]
        %v1203 = vld [vmem:[%s218 + $0x7d0] sm:$0xf]
        %v1204 = vld [vmem:[%s218 + $0x7d4] sm:$0xf]
        %v1205 = vld [vmem:[%s218 + $0x7d8] sm:$0xf]
        %v1206 = vld [vmem:[%s218 + $0x7dc] sm:$0xf]
        %v1207 = vld [vmem:[%s218 + $0x7e0] sm:$0xf]
        %v1208 = vld [vmem:[%s218 + $0x7e4] sm:$0xf]
        %v1209 = vld [vmem:[%s218 + $0x7e8] sm:$0xf]
        %v1210 = vld [vmem:[%s218 + $0x7ec] sm:$0xf]
        %v1211 = vld [vmem:[%s218 + $0x7f0] sm:$0xf]
        %v1212 = vld [vmem:[%s218 + $0x7f4] sm:$0xf]
        %v1213 = vld [vmem:[%s218 + $0x7f8] sm:$0xf]
        %v1214 = vld [vmem:[%s218 + $0x7fc] sm:$0xf]
        %v1215 = vld [vmem:[%s218 + $0x800] sm:$0xf]
        %v1216 = vld [vmem:[%s218 + $0x804] sm:$0xf]
        %v1217 = vld [vmem:[%s218 + $0x808] sm:$0xf]
        %v1218 = vld [vmem:[%s218 + $0x80c] sm:$0xf]
        %v1219 = vld [vmem:[%s218 + $0x810] sm:$0xf]
        %v1220 = vld [vmem:[%s218 + $0x814] sm:$0xf]
        %v1221 = vld [vmem:[%s218 + $0x818] sm:$0xf]
        %v1222 = vld [vmem:[%s218 + $0x81c] sm:$0xf]
        %v1223 = vld [vmem:[%s218 + $0x820] sm:$0xf]
        %v1224 = vld [vmem:[%s218 + $0x824] sm:$0xf]
        %v1225 = vld [vmem:[%s218 + $0x828] sm:$0xf]
        %v1226 = vld [vmem:[%s218 + $0x82c] sm:$0xf]
        %v1227 = vld [vmem:[%s218 + $0x830] sm:$0xf]
        %v1228 = vld [vmem:[%s218 + $0x834] sm:$0xf]
        %v1229 = vld [vmem:[%s218 + $0x838] sm:$0xf]
        %v1230 = vld [vmem:[%s218 + $0x83c] sm:$0xf]
        %v1231 = vld [vmem:[%s218 + $0x840] sm:$0xf]
        %v1232 = vld [vmem:[%s218 + $0x844] sm:$0xf]
        %v1233 = vld [vmem:[%s218 + $0x848] sm:$0xf]
        %v1234 = vld [vmem:[%s218 + $0x84c] sm:$0xf]
        %v1235 = vld [vmem:[%s218 + $0x850] sm:$0xf]
        %v1236 = vld [vmem:[%s218 + $0x854] sm:$0xf]
        %v1237 = vld [vmem:[%s218 + $0x858] sm:$0xf]
        %v1238 = vld [vmem:[%s218 + $0x85c] sm:$0xf]
        %v1239 = vld [vmem:[%s218 + $0x860] sm:$0xf]
        %v1240 = vld [vmem:[%s218 + $0x864] sm:$0xf]
        %v1241 = vld [vmem:[%s218 + $0x868] sm:$0xf]
        %v1242 = vld [vmem:[%s218 + $0x86c] sm:$0xf]
        %v1243 = vld [vmem:[%s218 + $0x870] sm:$0xf]
        %v1244 = vld [vmem:[%s218 + $0x874] sm:$0xf]
        %v1245 = vld [vmem:[%s218 + $0x878] sm:$0xf]
        %v1246 = vld [vmem:[%s218 + $0x87c] sm:$0xf]
        %v1247 = vld [vmem:[%s218 + $0x880] sm:$0xf]
        %v1248 = vld [vmem:[%s218 + $0x884] sm:$0xf]
        %v1249 = vld [vmem:[%s218 + $0x888] sm:$0xf]
        %v1250 = vld [vmem:[%s218 + $0x88c] sm:$0xf]
        %v1251 = vld [vmem:[%s218 + $0x890] sm:$0xf]
        %v1252 = vld [vmem:[%s218 + $0x894] sm:$0xf]
        %v1253 = vld [vmem:[%s218 + $0x898] sm:$0xf]
        %v1254 = vld [vmem:[%s218 + $0x89c] sm:$0xf]
        %v1255 = vld [vmem:[%s218 + $0x8a0] sm:$0xf]
        %v1256 = vld [vmem:[%s218 + $0x8a4] sm:$0xf]
        %v1257 = vld [vmem:[%s218 + $0x8a8] sm:$0xf]
        %v1258 = vld [vmem:[%s218 + $0x8ac] sm:$0xf]
        %v1259 = vld [vmem:[%s218 + $0x8b0] sm:$0xf]
        %v1260 = vld [vmem:[%s218 + $0x8b4] sm:$0xf]
        %v1261 = vld [vmem:[%s218 + $0x8b8] sm:$0xf]
        %v1262 = vld [vmem:[%s218 + $0x8bc] sm:$0xf]
        %v1263 = vld [vmem:[%s218 + $0x8c0] sm:$0xf]
        %v1264 = vld [vmem:[%s218 + $0x8c4] sm:$0xf]
        %v1265 = vld [vmem:[%s218 + $0x8c8] sm:$0xf]
        %v1266 = vld [vmem:[%s218 + $0x8cc] sm:$0xf]
        %v1267 = vld [vmem:[%s218 + $0x8d0] sm:$0xf]
        %v1268 = vld [vmem:[%s218 + $0x8d4] sm:$0xf]
        %v1269 = vld [vmem:[%s218 + $0x8d8] sm:$0xf]
        %v1270 = vld [vmem:[%s218 + $0x8dc] sm:$0xf]
        %v1271 = vld [vmem:[%s218 + $0x8e0] sm:$0xf]
        %v1272 = vld [vmem:[%s218 + $0x8e4] sm:$0xf]
        %v1273 = vld [vmem:[%s218 + $0x8e8] sm:$0xf]
        %v1274 = vld [vmem:[%s218 + $0x8ec] sm:$0xf]
        %v1275 = vld [vmem:[%s218 + $0x8f0] sm:$0xf]
        %v1276 = vld [vmem:[%s218 + $0x8f4] sm:$0xf]
        %v1277 = vld [vmem:[%s218 + $0x8f8] sm:$0xf]
        %v1278 = vld [vmem:[%s218 + $0x8fc] sm:$0xf]
        %v1279 = vld [vmem:[%s226] sm:$0x1]
        %v1281 = vlaneseq
        %v1282 = vshrl.u32 %v1281, 7
        %v1283 = vsub.s32 0, %v1282
        %v1284 = vrot.slane %v1279, %v1283
        %v1736 = vunpack.c.l.b16 %v253
        %v1737 = vunpack.c.h.b16 %v253
        %v1738 = vunpack.c.l.b16 %v254
        %v1739 = vunpack.c.h.b16 %v254
        %v1740 = vunpack.c.l.b16 %v255
        %v1741 = vunpack.c.h.b16 %v255
        %v1742 = vunpack.c.l.b16 %v256
        %v1743 = vunpack.c.h.b16 %v256
        %v1744 = vunpack.c.l.b16 %v257
        %v1745 = vunpack.c.h.b16 %v257
        %v1746 = vunpack.c.l.b16 %v258
        %v1747 = vunpack.c.h.b16 %v258
        %v1748 = vunpack.c.l.b16 %v259
        %v1749 = vunpack.c.h.b16 %v259
        %v1750 = vunpack.c.l.b16 %v260
        %v1751 = vunpack.c.h.b16 %v260
        %v1752 = vunpack.c.l.b16 %v261
        %v1753 = vunpack.c.h.b16 %v261
        %v1754 = vunpack.c.l.b16 %v262
        %v1755 = vunpack.c.h.b16 %v262
        %v1756 = vunpack.c.l.b16 %v263
        %v1757 = vunpack.c.h.b16 %v263
        %v1758 = vunpack.c.l.b16 %v264
        %v1759 = vunpack.c.h.b16 %v264
        %v1760 = vunpack.c.l.b16 %v265
        %v1761 = vunpack.c.h.b16 %v265
        %v1762 = vunpack.c.l.b16 %v266
        %v1763 = vunpack.c.h.b16 %v266
        %v1764 = vunpack.c.l.b16 %v267
        %v1765 = vunpack.c.h.b16 %v267
        %v1766 = vunpack.c.l.b16 %v268
        %v1767 = vunpack.c.h.b16 %v268
        %v1768 = vunpack.c.l.b16 %v269
        %v1769 = vunpack.c.h.b16 %v269
        %v1770 = vunpack.c.l.b16 %v270
        %v1771 = vunpack.c.h.b16 %v270
        %v1772 = vunpack.c.l.b16 %v271
        %v1773 = vunpack.c.h.b16 %v271
        %v1774 = vunpack.c.l.b16 %v272
        %v1775 = vunpack.c.h.b16 %v272
        %v1776 = vunpack.c.l.b16 %v273
        %v1777 = vunpack.c.h.b16 %v273
        %v1778 = vunpack.c.l.b16 %v274
        %v1779 = vunpack.c.h.b16 %v274
        %v1780 = vunpack.c.l.b16 %v275
        %v1781 = vunpack.c.h.b16 %v275
        %v1782 = vunpack.c.l.b16 %v276
        %v1783 = vunpack.c.h.b16 %v276
        %v1784 = vunpack.c.l.b16 %v277
        %v1785 = vunpack.c.h.b16 %v277
        %v1786 = vunpack.c.l.b16 %v278
        %v1787 = vunpack.c.h.b16 %v278
        %v1788 = vunpack.c.l.b16 %v279
        %v1789 = vunpack.c.h.b16 %v279
        %v1790 = vunpack.c.l.b16 %v280
        %v1791 = vunpack.c.h.b16 %v280
        %v1792 = vunpack.c.l.b16 %v281
        %v1793 = vunpack.c.h.b16 %v281
        %v1794 = vunpack.c.l.b16 %v282
        %v1795 = vunpack.c.h.b16 %v282
        %v1796 = vunpack.c.l.b16 %v283
        %v1797 = vunpack.c.h.b16 %v283
        %v1798 = vunpack.c.l.b16 %v284
        %v1799 = vunpack.c.h.b16 %v284
        %v1800 = vunpack.c.l.b16 %v285
        %v1801 = vunpack.c.h.b16 %v285
        %v1802 = vunpack.c.l.b16 %v286
        %v1803 = vunpack.c.h.b16 %v286
        %v1804 = vunpack.c.l.b16 %v287
        %v1805 = vunpack.c.h.b16 %v287
        %v1806 = vunpack.c.l.b16 %v288
        %v1807 = vunpack.c.h.b16 %v288
        %v1808 = vunpack.c.l.b16 %v289
        %v1809 = vunpack.c.h.b16 %v289
        %v1810 = vunpack.c.l.b16 %v290
        %v1811 = vunpack.c.h.b16 %v290
        %v1812 = vunpack.c.l.b16 %v291
        %v1813 = vunpack.c.h.b16 %v291
        %v1814 = vunpack.c.l.b16 %v292
        %v1815 = vunpack.c.h.b16 %v292
        %v1816 = vunpack.c.l.b16 %v293
        %v1817 = vunpack.c.h.b16 %v293
        %v1818 = vunpack.c.l.b16 %v294
        %v1819 = vunpack.c.h.b16 %v294
        %v1820 = vunpack.c.l.b16 %v295
        %v1821 = vunpack.c.h.b16 %v295
        %v1822 = vunpack.c.l.b16 %v296
        %v1823 = vunpack.c.h.b16 %v296
        %v1824 = vunpack.c.l.b16 %v297
        %v1825 = vunpack.c.h.b16 %v297
        %v1826 = vunpack.c.l.b16 %v298
        %v1827 = vunpack.c.h.b16 %v298
        %v1828 = vunpack.c.l.b16 %v299
        %v1829 = vunpack.c.h.b16 %v299
        %v1830 = vunpack.c.l.b16 %v300
        %v1831 = vunpack.c.h.b16 %v300
        %v1832 = vunpack.c.l.b16 %v301
        %v1833 = vunpack.c.h.b16 %v301
        %v1834 = vunpack.c.l.b16 %v302
        %v1835 = vunpack.c.h.b16 %v302
        %v1836 = vunpack.c.l.b16 %v303
        %v1837 = vunpack.c.h.b16 %v303
        %v1838 = vunpack.c.l.b16 %v304
        %v1839 = vunpack.c.h.b16 %v304
        %v1840 = vunpack.c.l.b16 %v305
        %v1841 = vunpack.c.h.b16 %v305
        %v1842 = vunpack.c.l.b16 %v306
        %v1843 = vunpack.c.h.b16 %v306
        %v1844 = vunpack.c.l.b16 %v307
        %v1845 = vunpack.c.h.b16 %v307
        %v1846 = vunpack.c.l.b16 %v308
        %v1847 = vunpack.c.h.b16 %v308
        %v1848 = vunpack.c.l.b16 %v309
        %v1849 = vunpack.c.h.b16 %v309
        %v1850 = vunpack.c.l.b16 %v310
        %v1851 = vunpack.c.h.b16 %v310
        %v1852 = vunpack.c.l.b16 %v311
        %v1853 = vunpack.c.h.b16 %v311
        %v1854 = vunpack.c.l.b16 %v312
        %v1855 = vunpack.c.h.b16 %v312
        %v1856 = vunpack.c.l.b16 %v313
        %v1857 = vunpack.c.h.b16 %v313
        %v1858 = vunpack.c.l.b16 %v314
        %v1859 = vunpack.c.h.b16 %v314
        %v1860 = vunpack.c.l.b16 %v315
        %v1861 = vunpack.c.h.b16 %v315
        %v1862 = vunpack.c.l.b16 %v316
        %v1863 = vunpack.c.h.b16 %v316
        %v1864 = vunpack.c.l.b16 %v317
        %v1865 = vunpack.c.h.b16 %v317
        %v1866 = vunpack.c.l.b16 %v318
        %v1867 = vunpack.c.h.b16 %v318
        %v1868 = vunpack.c.l.b16 %v319
        %v1869 = vunpack.c.h.b16 %v319
        %v1870 = vunpack.c.l.b16 %v320
        %v1871 = vunpack.c.h.b16 %v320
        %v1872 = vunpack.c.l.b16 %v321
        %v1873 = vunpack.c.h.b16 %v321
        %v1874 = vunpack.c.l.b16 %v322
        %v1875 = vunpack.c.h.b16 %v322
        %v1876 = vunpack.c.l.b16 %v323
        %v1877 = vunpack.c.h.b16 %v323
        %v1878 = vunpack.c.l.b16 %v324
        %v1879 = vunpack.c.h.b16 %v324
        %v1880 = vunpack.c.l.b16 %v325
        %v1881 = vunpack.c.h.b16 %v325
        %v1882 = vunpack.c.l.b16 %v326
        %v1883 = vunpack.c.h.b16 %v326
        %v1884 = vunpack.c.l.b16 %v327
        %v1885 = vunpack.c.h.b16 %v327
        %v1886 = vunpack.c.l.b16 %v328
        %v1887 = vunpack.c.h.b16 %v328
        %v1888 = vunpack.c.l.b16 %v329
        %v1889 = vunpack.c.h.b16 %v329
        %v1890 = vunpack.c.l.b16 %v330
        %v1891 = vunpack.c.h.b16 %v330
        %v1892 = vunpack.c.l.b16 %v331
        %v1893 = vunpack.c.h.b16 %v331
        %v1894 = vunpack.c.l.b16 %v332
        %v1895 = vunpack.c.h.b16 %v332
        %v1896 = vunpack.c.l.b16 %v333
        %v1897 = vunpack.c.h.b16 %v333
        %v1898 = vunpack.c.l.b16 %v334
        %v1899 = vunpack.c.h.b16 %v334
        %v1900 = vunpack.c.l.b16 %v335
        %v1901 = vunpack.c.h.b16 %v335
        %v1902 = vunpack.c.l.b16 %v336
        %v1903 = vunpack.c.h.b16 %v336
        %v1904 = vunpack.c.l.b16 %v337
        %v1905 = vunpack.c.h.b16 %v337
        %v1906 = vunpack.c.l.b16 %v338
        %v1907 = vunpack.c.h.b16 %v338
        %v1908 = vunpack.c.l.b16 %v339
        %v1909 = vunpack.c.h.b16 %v339
        %v1910 = vunpack.c.l.b16 %v340
        %v1911 = vunpack.c.h.b16 %v340
        %v1912 = vunpack.c.l.b16 %v341
        %v1913 = vunpack.c.h.b16 %v341
        %v1914 = vunpack.c.l.b16 %v342
        %v1915 = vunpack.c.h.b16 %v342
        %v1916 = vunpack.c.l.b16 %v343
        %v1917 = vunpack.c.h.b16 %v343
        %v1918 = vunpack.c.l.b16 %v344
        %v1919 = vunpack.c.h.b16 %v344
        %v1920 = vunpack.c.l.b16 %v345
        %v1921 = vunpack.c.h.b16 %v345
        %v1922 = vunpack.c.l.b16 %v346
        %v1923 = vunpack.c.h.b16 %v346
        %v1924 = vunpack.c.l.b16 %v347
        %v1925 = vunpack.c.h.b16 %v347
        %v1926 = vunpack.c.l.b16 %v348
        %v1927 = vunpack.c.h.b16 %v348
        %v1928 = vunpack.c.l.b16 %v349
        %v1929 = vunpack.c.h.b16 %v349
        %v1930 = vunpack.c.l.b16 %v350
        %v1931 = vunpack.c.h.b16 %v350
        %v1932 = vunpack.c.l.b16 %v351
        %v1933 = vunpack.c.h.b16 %v351
        %v1934 = vunpack.c.l.b16 %v352
        %v1935 = vunpack.c.h.b16 %v352
        %v1936 = vunpack.c.l.b16 %v353
        %v1937 = vunpack.c.h.b16 %v353
        %v1938 = vunpack.c.l.b16 %v354
        %v1939 = vunpack.c.h.b16 %v354
        %v1940 = vunpack.c.l.b16 %v355
        %v1941 = vunpack.c.h.b16 %v355
        %v1942 = vunpack.c.l.b16 %v356
        %v1943 = vunpack.c.h.b16 %v356
        %v1944 = vunpack.c.l.b16 %v357
        %v1945 = vunpack.c.h.b16 %v357
        %v1946 = vunpack.c.l.b16 %v358
        %v1947 = vunpack.c.h.b16 %v358
        %v1948 = vunpack.c.l.b16 %v359
        %v1949 = vunpack.c.h.b16 %v359
        %v1950 = vunpack.c.l.b16 %v360
        %v1951 = vunpack.c.h.b16 %v360
        %v1952 = vunpack.c.l.b16 %v361
        %v1953 = vunpack.c.h.b16 %v361
        %v1954 = vunpack.c.l.b16 %v362
        %v1955 = vunpack.c.h.b16 %v362
        %v1956 = vunpack.c.l.b16 %v363
        %v1957 = vunpack.c.h.b16 %v363
        %v1958 = vunpack.c.l.b16 %v364
        %v1959 = vunpack.c.h.b16 %v364
        %v1960 = vunpack.c.l.b16 %v365
        %v1961 = vunpack.c.h.b16 %v365
        %v1962 = vunpack.c.l.b16 %v366
        %v1963 = vunpack.c.h.b16 %v366
        %v1964 = vunpack.c.l.b16 %v367
        %v1965 = vunpack.c.h.b16 %v367
        %v1966 = vunpack.c.l.b16 %v368
        %v1967 = vunpack.c.h.b16 %v368
        %v1968 = vunpack.c.l.b16 %v369
        %v1969 = vunpack.c.h.b16 %v369
        %v1970 = vunpack.c.l.b16 %v370
        %v1971 = vunpack.c.h.b16 %v370
        %v1972 = vunpack.c.l.b16 %v371
        %v1973 = vunpack.c.h.b16 %v371
        %v1974 = vunpack.c.l.b16 %v372
        %v1975 = vunpack.c.h.b16 %v372
        %v1976 = vunpack.c.l.b16 %v373
        %v1977 = vunpack.c.h.b16 %v373
        %v1978 = vunpack.c.l.b16 %v374
        %v1979 = vunpack.c.h.b16 %v374
        %v1980 = vunpack.c.l.b16 %v375
        %v1981 = vunpack.c.h.b16 %v375
        %v1982 = vunpack.c.l.b16 %v376
        %v1983 = vunpack.c.h.b16 %v376
        %v1984 = vunpack.c.l.b16 %v377
        %v1985 = vunpack.c.h.b16 %v377
        %v1986 = vunpack.c.l.b16 %v378
        %v1987 = vunpack.c.h.b16 %v378
        %v1988 = vunpack.c.l.b16 %v379
        %v1989 = vunpack.c.h.b16 %v379
        %v1990 = vunpack.c.l.b16 %v380
        %v1991 = vunpack.c.h.b16 %v380
        %v1992 = vunpack.c.l.b16 %v381
        %v1993 = vunpack.c.h.b16 %v381
        %v1994 = vunpack.c.l.b16 %v382
        %v1995 = vunpack.c.h.b16 %v382
        %v1996 = vunpack.c.l.b16 %v383
        %v1997 = vunpack.c.h.b16 %v383
        %v1998 = vunpack.c.l.b16 %v384
        %v1999 = vunpack.c.h.b16 %v384
        %v2000 = vunpack.c.l.b16 %v385
        %v2001 = vunpack.c.h.b16 %v385
        %v2002 = vunpack.c.l.b16 %v386
        %v2003 = vunpack.c.h.b16 %v386
        %v2004 = vunpack.c.l.b16 %v387
        %v2005 = vunpack.c.h.b16 %v387
        %v2006 = vunpack.c.l.b16 %v388
        %v2007 = vunpack.c.h.b16 %v388
        %v2008 = vunpack.c.l.b16 %v389
        %v2009 = vunpack.c.h.b16 %v389
        %v2010 = vunpack.c.l.b16 %v390
        %v2011 = vunpack.c.h.b16 %v390
        %v2012 = vunpack.c.l.b16 %v391
        %v2013 = vunpack.c.h.b16 %v391
        %v2014 = vunpack.c.l.b16 %v392
        %v2015 = vunpack.c.h.b16 %v392
        %v2016 = vunpack.c.l.b16 %v393
        %v2017 = vunpack.c.h.b16 %v393
        %v2018 = vunpack.c.l.b16 %v394
        %v2019 = vunpack.c.h.b16 %v394
        %v2020 = vunpack.c.l.b16 %v395
        %v2021 = vunpack.c.h.b16 %v395
        %v2022 = vunpack.c.l.b16 %v396
        %v2023 = vunpack.c.h.b16 %v396
        %v2024 = vunpack.c.l.b16 %v397
        %v2025 = vunpack.c.h.b16 %v397
        %v2026 = vunpack.c.l.b16 %v398
        %v2027 = vunpack.c.h.b16 %v398
        %v2028 = vunpack.c.l.b16 %v399
        %v2029 = vunpack.c.h.b16 %v399
        %v2030 = vunpack.c.l.b16 %v400
        %v2031 = vunpack.c.h.b16 %v400
        %v2032 = vunpack.c.l.b16 %v401
        %v2033 = vunpack.c.h.b16 %v401
        %v2034 = vunpack.c.l.b16 %v402
        %v2035 = vunpack.c.h.b16 %v402
        %v2036 = vunpack.c.l.b16 %v403
        %v2037 = vunpack.c.h.b16 %v403
        %v2038 = vunpack.c.l.b16 %v404
        %v2039 = vunpack.c.h.b16 %v404
        %v2040 = vunpack.c.l.b16 %v405
        %v2041 = vunpack.c.h.b16 %v405
        %v2042 = vunpack.c.l.b16 %v406
        %v2043 = vunpack.c.h.b16 %v406
        %v2044 = vunpack.c.l.b16 %v407
        %v2045 = vunpack.c.h.b16 %v407
        %v2046 = vunpack.c.l.b16 %v408
        %v2047 = vunpack.c.h.b16 %v408
        %v2048 = vunpack.c.l.b16 %v409
        %v2049 = vunpack.c.h.b16 %v409
        %v2050 = vunpack.c.l.b16 %v410
        %v2051 = vunpack.c.h.b16 %v410
        %v2052 = vunpack.c.l.b16 %v411
        %v2053 = vunpack.c.h.b16 %v411
        %v2054 = vunpack.c.l.b16 %v412
        %v2055 = vunpack.c.h.b16 %v412
        %v2056 = vunpack.c.l.b16 %v413
        %v2057 = vunpack.c.h.b16 %v413
        %v2058 = vunpack.c.l.b16 %v414
        %v2059 = vunpack.c.h.b16 %v414
        %v2060 = vunpack.c.l.b16 %v415
        %v2061 = vunpack.c.h.b16 %v415
        %v2062 = vunpack.c.l.b16 %v416
        %v2063 = vunpack.c.h.b16 %v416
        %v2064 = vunpack.c.l.b16 %v417
        %v2065 = vunpack.c.h.b16 %v417
        %v2066 = vunpack.c.l.b16 %v418
        %v2067 = vunpack.c.h.b16 %v418
        %v2068 = vunpack.c.l.b16 %v419
        %v2069 = vunpack.c.h.b16 %v419
        %v2070 = vunpack.c.l.b16 %v420
        %v2071 = vunpack.c.h.b16 %v420
        %v2072 = vunpack.c.l.b16 %v421
        %v2073 = vunpack.c.h.b16 %v421
        %v2074 = vunpack.c.l.b16 %v422
        %v2075 = vunpack.c.h.b16 %v422
        %v2076 = vunpack.c.l.b16 %v423
        %v2077 = vunpack.c.h.b16 %v423
        %v2078 = vunpack.c.l.b16 %v424
        %v2079 = vunpack.c.h.b16 %v424
        %v2080 = vunpack.c.l.b16 %v425
        %v2081 = vunpack.c.h.b16 %v425
        %v2082 = vunpack.c.l.b16 %v426
        %v2083 = vunpack.c.h.b16 %v426
        %v2084 = vunpack.c.l.b16 %v427
        %v2085 = vunpack.c.h.b16 %v427
        %v2086 = vunpack.c.l.b16 %v428
        %v2087 = vunpack.c.h.b16 %v428
        %v2088 = vunpack.c.l.b16 %v429
        %v2089 = vunpack.c.h.b16 %v429
        %v2090 = vunpack.c.l.b16 %v430
        %v2091 = vunpack.c.h.b16 %v430
        %v2092 = vunpack.c.l.b16 %v431
        %v2093 = vunpack.c.h.b16 %v431
        %v2094 = vunpack.c.l.b16 %v432
        %v2095 = vunpack.c.h.b16 %v432
        %v2096 = vunpack.c.l.b16 %v433
        %v2097 = vunpack.c.h.b16 %v433
        %v2098 = vunpack.c.l.b16 %v434
        %v2099 = vunpack.c.h.b16 %v434
        %v2100 = vunpack.c.l.b16 %v435
        %v2101 = vunpack.c.h.b16 %v435
        %v2102 = vunpack.c.l.b16 %v436
        %v2103 = vunpack.c.h.b16 %v436
        %v2104 = vunpack.c.l.b16 %v437
        %v2105 = vunpack.c.h.b16 %v437
        %v2106 = vunpack.c.l.b16 %v438
        %v2107 = vunpack.c.h.b16 %v438
        %v2108 = vunpack.c.l.b16 %v439
        %v2109 = vunpack.c.h.b16 %v439
        %v2110 = vunpack.c.l.b16 %v440
        %v2111 = vunpack.c.h.b16 %v440
        %v2112 = vunpack.c.l.b16 %v441
        %v2113 = vunpack.c.h.b16 %v441
        %v2114 = vunpack.c.l.b16 %v442
        %v2115 = vunpack.c.h.b16 %v442
        %v2116 = vunpack.c.l.b16 %v443
        %v2117 = vunpack.c.h.b16 %v443
        %v2118 = vunpack.c.l.b16 %v444
        %v2119 = vunpack.c.h.b16 %v444
        %v2120 = vunpack.c.l.b16 %v445
        %v2121 = vunpack.c.h.b16 %v445
        %v2122 = vunpack.c.l.b16 %v446
        %v2123 = vunpack.c.h.b16 %v446
        %v2124 = vunpack.c.l.b16 %v447
        %v2125 = vunpack.c.h.b16 %v447
        %v2126 = vunpack.c.l.b16 %v448
        %v2127 = vunpack.c.h.b16 %v448
        %v2128 = vunpack.c.l.b16 %v449
        %v2129 = vunpack.c.h.b16 %v449
        %v2130 = vunpack.c.l.b16 %v450
        %v2131 = vunpack.c.h.b16 %v450
        %v2132 = vunpack.c.l.b16 %v451
        %v2133 = vunpack.c.h.b16 %v451
        %v2134 = vunpack.c.l.b16 %v452
        %v2135 = vunpack.c.h.b16 %v452
        %v2136 = vunpack.c.l.b16 %v453
        %v2137 = vunpack.c.h.b16 %v453
        %v2138 = vunpack.c.l.b16 %v454
        %v2139 = vunpack.c.h.b16 %v454
        %v2140 = vunpack.c.l.b16 %v455
        %v2141 = vunpack.c.h.b16 %v455
        %v2142 = vunpack.c.l.b16 %v456
        %v2143 = vunpack.c.h.b16 %v456
        %v2144 = vunpack.c.l.b16 %v457
        %v2145 = vunpack.c.h.b16 %v457
        %v2146 = vunpack.c.l.b16 %v458
        %v2147 = vunpack.c.h.b16 %v458
        %v2148 = vunpack.c.l.b16 %v459
        %v2149 = vunpack.c.h.b16 %v459
        %v2150 = vunpack.c.l.b16 %v460
        %v2151 = vunpack.c.h.b16 %v460
        %v2152 = vunpack.c.l.b16 %v461
        %v2153 = vunpack.c.h.b16 %v461
        %v2154 = vunpack.c.l.b16 %v462
        %v2155 = vunpack.c.h.b16 %v462
        %v2156 = vunpack.c.l.b16 %v463
        %v2157 = vunpack.c.h.b16 %v463
        %v2158 = vunpack.c.l.b16 %v464
        %v2159 = vunpack.c.h.b16 %v464
        %v2160 = vunpack.c.l.b16 %v465
        %v2161 = vunpack.c.h.b16 %v465
        %v2162 = vunpack.c.l.b16 %v466
        %v2163 = vunpack.c.h.b16 %v466
        %v2164 = vunpack.c.l.b16 %v467
        %v2165 = vunpack.c.h.b16 %v467
        %v2166 = vunpack.c.l.b16 %v468
        %v2167 = vunpack.c.h.b16 %v468
        %v2168 = vunpack.c.l.b16 %v469
        %v2169 = vunpack.c.h.b16 %v469
        %v2170 = vunpack.c.l.b16 %v470
        %v2171 = vunpack.c.h.b16 %v470
        %v2172 = vunpack.c.l.b16 %v471
        %v2173 = vunpack.c.h.b16 %v471
        %v2174 = vunpack.c.l.b16 %v472
        %v2175 = vunpack.c.h.b16 %v472
        %v2176 = vunpack.c.l.b16 %v473
        %v2177 = vunpack.c.h.b16 %v473
        %v2178 = vunpack.c.l.b16 %v474
        %v2179 = vunpack.c.h.b16 %v474
        %v2180 = vunpack.c.l.b16 %v475
        %v2181 = vunpack.c.h.b16 %v475
        %v2182 = vunpack.c.l.b16 %v476
        %v2183 = vunpack.c.h.b16 %v476
        %v2184 = vunpack.c.l.b16 %v477
        %v2185 = vunpack.c.h.b16 %v477
        %v2186 = vunpack.c.l.b16 %v478
        %v2187 = vunpack.c.h.b16 %v478
        %v2188 = vunpack.c.l.b16 %v479
        %v2189 = vunpack.c.h.b16 %v479
        %v2190 = vunpack.c.l.b16 %v480
        %v2191 = vunpack.c.h.b16 %v480
        %v2192 = vunpack.c.l.b16 %v481
        %v2193 = vunpack.c.h.b16 %v481
        %v2194 = vunpack.c.l.b16 %v482
        %v2195 = vunpack.c.h.b16 %v482
        %v2196 = vunpack.c.l.b16 %v483
        %v2197 = vunpack.c.h.b16 %v483
        %v2198 = vunpack.c.l.b16 %v484
        %v2199 = vunpack.c.h.b16 %v484
        %v2200 = vunpack.c.l.b16 %v485
        %v2201 = vunpack.c.h.b16 %v485
        %v2202 = vunpack.c.l.b16 %v486
        %v2203 = vunpack.c.h.b16 %v486
        %v2204 = vunpack.c.l.b16 %v487
        %v2205 = vunpack.c.h.b16 %v487
        %v2206 = vunpack.c.l.b16 %v488
        %v2207 = vunpack.c.h.b16 %v488
        %v2208 = vunpack.c.l.b16 %v489
        %v2209 = vunpack.c.h.b16 %v489
        %v2210 = vunpack.c.l.b16 %v490
        %v2211 = vunpack.c.h.b16 %v490
        %v2212 = vunpack.c.l.b16 %v491
        %v2213 = vunpack.c.h.b16 %v491
        %v2214 = vunpack.c.l.b16 %v492
        %v2215 = vunpack.c.h.b16 %v492
        %v2216 = vunpack.c.l.b16 %v493
        %v2217 = vunpack.c.h.b16 %v493
        %v2218 = vunpack.c.l.b16 %v494
        %v2219 = vunpack.c.h.b16 %v494
        %v2220 = vunpack.c.l.b16 %v495
        %v2221 = vunpack.c.h.b16 %v495
        %v2222 = vunpack.c.l.b16 %v496
        %v2223 = vunpack.c.h.b16 %v496
        %v2224 = vunpack.c.l.b16 %v497
        %v2225 = vunpack.c.h.b16 %v497
        %v2226 = vunpack.c.l.b16 %v498
        %v2227 = vunpack.c.h.b16 %v498
        %v2228 = vunpack.c.l.b16 %v499
        %v2229 = vunpack.c.h.b16 %v499
        %v2230 = vunpack.c.l.b16 %v500
        %v2231 = vunpack.c.h.b16 %v500
        %v2232 = vunpack.c.l.b16 %v501
        %v2233 = vunpack.c.h.b16 %v501
        %v2234 = vunpack.c.l.b16 %v502
        %v2235 = vunpack.c.h.b16 %v502
        %v2236 = vunpack.c.l.b16 %v503
        %v2237 = vunpack.c.h.b16 %v503
        %v2238 = vunpack.c.l.b16 %v504
        %v2239 = vunpack.c.h.b16 %v504
        %v2240 = vunpack.c.l.b16 %v505
        %v2241 = vunpack.c.h.b16 %v505
        %v2242 = vunpack.c.l.b16 %v506
        %v2243 = vunpack.c.h.b16 %v506
        %v2244 = vunpack.c.l.b16 %v507
        %v2245 = vunpack.c.h.b16 %v507
        %v2246 = vunpack.c.l.b16 %v508
        %v2247 = vunpack.c.h.b16 %v508
        %v2248 = vunpack.c.l.b16 %v509
        %v2249 = vunpack.c.h.b16 %v509
        %v2250 = vunpack.c.l.b16 %v510
        %v2251 = vunpack.c.h.b16 %v510
        %v2252 = vunpack.c.l.b16 %v511
        %v2253 = vunpack.c.h.b16 %v511
        %v2254 = vunpack.c.l.b16 %v512
        %v2255 = vunpack.c.h.b16 %v512
        %v2256 = vunpack.c.l.b16 %v513
        %v2257 = vunpack.c.h.b16 %v513
        %v2258 = vunpack.c.l.b16 %v514
        %v2259 = vunpack.c.h.b16 %v514
        %v2260 = vunpack.c.l.b16 %v515
        %v2261 = vunpack.c.h.b16 %v515
        %v2262 = vunpack.c.l.b16 %v516
        %v2263 = vunpack.c.h.b16 %v516
        %v2264 = vunpack.c.l.b16 %v517
        %v2265 = vunpack.c.h.b16 %v517
        %v2266 = vunpack.c.l.b16 %v518
        %v2267 = vunpack.c.h.b16 %v518
        %v2268 = vunpack.c.l.b16 %v519
        %v2269 = vunpack.c.h.b16 %v519
        %v2270 = vunpack.c.l.b16 %v520
        %v2271 = vunpack.c.h.b16 %v520
        %v2272 = vunpack.c.l.b16 %v521
        %v2273 = vunpack.c.h.b16 %v521
        %v2274 = vunpack.c.l.b16 %v522
        %v2275 = vunpack.c.h.b16 %v522
        %v2276 = vunpack.c.l.b16 %v523
        %v2277 = vunpack.c.h.b16 %v523
        %v2278 = vunpack.c.l.b16 %v524
        %v2279 = vunpack.c.h.b16 %v524
        %v2280 = vunpack.c.l.b16 %v525
        %v2281 = vunpack.c.h.b16 %v525
        %v2282 = vunpack.c.l.b16 %v526
        %v2283 = vunpack.c.h.b16 %v526
        %v2284 = vunpack.c.l.b16 %v527
        %v2285 = vunpack.c.h.b16 %v527
        %v2286 = vunpack.c.l.b16 %v528
        %v2287 = vunpack.c.h.b16 %v528
        %v2288 = vunpack.c.l.b16 %v529
        %v2289 = vunpack.c.h.b16 %v529
        %v2290 = vunpack.c.l.b16 %v530
        %v2291 = vunpack.c.h.b16 %v530
        %v2292 = vunpack.c.l.b16 %v531
        %v2293 = vunpack.c.h.b16 %v531
        %v2294 = vunpack.c.l.b16 %v532
        %v2295 = vunpack.c.h.b16 %v532
        %v2296 = vunpack.c.l.b16 %v533
        %v2297 = vunpack.c.h.b16 %v533
        %v2298 = vunpack.c.l.b16 %v534
        %v2299 = vunpack.c.h.b16 %v534
        %v2300 = vunpack.c.l.b16 %v535
        %v2301 = vunpack.c.h.b16 %v535
        %v2302 = vunpack.c.l.b16 %v536
        %v2303 = vunpack.c.h.b16 %v536
        %v2304 = vunpack.c.l.b16 %v537
        %v2305 = vunpack.c.h.b16 %v537
        %v2306 = vunpack.c.l.b16 %v538
        %v2307 = vunpack.c.h.b16 %v538
        %v2308 = vunpack.c.l.b16 %v539
        %v2309 = vunpack.c.h.b16 %v539
        %v2310 = vunpack.c.l.b16 %v540
        %v2311 = vunpack.c.h.b16 %v540
        %v2312 = vunpack.c.l.b16 %v541
        %v2313 = vunpack.c.h.b16 %v541
        %v2314 = vunpack.c.l.b16 %v542
        %v2315 = vunpack.c.h.b16 %v542
        %v2316 = vunpack.c.l.b16 %v543
        %v2317 = vunpack.c.h.b16 %v543
        %v2318 = vunpack.c.l.b16 %v544
        %v2319 = vunpack.c.h.b16 %v544
        %v2320 = vunpack.c.l.b16 %v545
        %v2321 = vunpack.c.h.b16 %v545
        %v2322 = vunpack.c.l.b16 %v546
        %v2323 = vunpack.c.h.b16 %v546
        %v2324 = vunpack.c.l.b16 %v547
        %v2325 = vunpack.c.h.b16 %v547
        %v2326 = vunpack.c.l.b16 %v548
        %v2327 = vunpack.c.h.b16 %v548
        %v2328 = vunpack.c.l.b16 %v549
        %v2329 = vunpack.c.h.b16 %v549
        %v2330 = vunpack.c.l.b16 %v550
        %v2331 = vunpack.c.h.b16 %v550
        %v2332 = vunpack.c.l.b16 %v551
        %v2333 = vunpack.c.h.b16 %v551
        %v2334 = vunpack.c.l.b16 %v552
        %v2335 = vunpack.c.h.b16 %v552
        %v2336 = vunpack.c.l.b16 %v553
        %v2337 = vunpack.c.h.b16 %v553
        %v2338 = vunpack.c.l.b16 %v554
        %v2339 = vunpack.c.h.b16 %v554
        %v2340 = vunpack.c.l.b16 %v555
        %v2341 = vunpack.c.h.b16 %v555
        %v2342 = vunpack.c.l.b16 %v556
        %v2343 = vunpack.c.h.b16 %v556
        %v2344 = vunpack.c.l.b16 %v557
        %v2345 = vunpack.c.h.b16 %v557
        %v2346 = vunpack.c.l.b16 %v558
        %v2347 = vunpack.c.h.b16 %v558
        %v2348 = vunpack.c.l.b16 %v559
        %v2349 = vunpack.c.h.b16 %v559
        %v2350 = vunpack.c.l.b16 %v560
        %v2351 = vunpack.c.h.b16 %v560
        %v2352 = vunpack.c.l.b16 %v561
        %v2353 = vunpack.c.h.b16 %v561
        %v2354 = vunpack.c.l.b16 %v562
        %v2355 = vunpack.c.h.b16 %v562
        %v2356 = vunpack.c.l.b16 %v563
        %v2357 = vunpack.c.h.b16 %v563
        %v2358 = vunpack.c.l.b16 %v564
        %v2359 = vunpack.c.h.b16 %v564
        %v2360 = vunpack.c.l.b16 %v565
        %v2361 = vunpack.c.h.b16 %v565
        %v2362 = vunpack.c.l.b16 %v566
        %v2363 = vunpack.c.h.b16 %v566
        %v2364 = vunpack.c.l.b16 %v567
        %v2365 = vunpack.c.h.b16 %v567
        %v2366 = vunpack.c.l.b16 %v568
        %v2367 = vunpack.c.h.b16 %v568
        %v2368 = vunpack.c.l.b16 %v569
        %v2369 = vunpack.c.h.b16 %v569
        %v2370 = vunpack.c.l.b16 %v570
        %v2371 = vunpack.c.h.b16 %v570
        %v2372 = vunpack.c.l.b16 %v571
        %v2373 = vunpack.c.h.b16 %v571
        %v2374 = vunpack.c.l.b16 %v572
        %v2375 = vunpack.c.h.b16 %v572
        %v2376 = vunpack.c.l.b16 %v573
        %v2377 = vunpack.c.h.b16 %v573
        %v2378 = vunpack.c.l.b16 %v574
        %v2379 = vunpack.c.h.b16 %v574
        %v2380 = vunpack.c.l.b16 %v575
        %v2381 = vunpack.c.h.b16 %v575
        %v2382 = vunpack.c.l.b16 %v576
        %v2383 = vunpack.c.h.b16 %v576
        %v2384 = vunpack.c.l.b16 %v577
        %v2385 = vunpack.c.h.b16 %v577
        %v2386 = vunpack.c.l.b16 %v578
        %v2387 = vunpack.c.h.b16 %v578
        %v2388 = vunpack.c.l.b16 %v579
        %v2389 = vunpack.c.h.b16 %v579
        %v2390 = vunpack.c.l.b16 %v580
        %v2391 = vunpack.c.h.b16 %v580
        %v2392 = vunpack.c.l.b16 %v581
        %v2393 = vunpack.c.h.b16 %v581
        %v2394 = vunpack.c.l.b16 %v582
        %v2395 = vunpack.c.h.b16 %v582
        %v2396 = vunpack.c.l.b16 %v583
        %v2397 = vunpack.c.h.b16 %v583
        %v2398 = vunpack.c.l.b16 %v584
        %v2399 = vunpack.c.h.b16 %v584
        %v2400 = vunpack.c.l.b16 %v585
        %v2401 = vunpack.c.h.b16 %v585
        %v2402 = vunpack.c.l.b16 %v586
        %v2403 = vunpack.c.h.b16 %v586
        %v2404 = vunpack.c.l.b16 %v587
        %v2405 = vunpack.c.h.b16 %v587
        %v2406 = vunpack.c.l.b16 %v588
        %v2407 = vunpack.c.h.b16 %v588
        %v2408 = vunpack.c.l.b16 %v589
        %v2409 = vunpack.c.h.b16 %v589
        %v2410 = vunpack.c.l.b16 %v590
        %v2411 = vunpack.c.h.b16 %v590
        %v2412 = vunpack.c.l.b16 %v591
        %v2413 = vunpack.c.h.b16 %v591
        %v2414 = vunpack.c.l.b16 %v592
        %v2415 = vunpack.c.h.b16 %v592
        %v2416 = vunpack.c.l.b16 %v593
        %v2417 = vunpack.c.h.b16 %v593
        %v2418 = vunpack.c.l.b16 %v594
        %v2419 = vunpack.c.h.b16 %v594
        %v2420 = vunpack.c.l.b16 %v595
        %v2421 = vunpack.c.h.b16 %v595
        %v2422 = vunpack.c.l.b16 %v596
        %v2423 = vunpack.c.h.b16 %v596
        %v2424 = vunpack.c.l.b16 %v597
        %v2425 = vunpack.c.h.b16 %v597
        %v2426 = vunpack.c.l.b16 %v598
        %v2427 = vunpack.c.h.b16 %v598
        %v2428 = vunpack.c.l.b16 %v599
        %v2429 = vunpack.c.h.b16 %v599
        %v2430 = vunpack.c.l.b16 %v600
        %v2431 = vunpack.c.h.b16 %v600
        %v2432 = vunpack.c.l.b16 %v601
        %v2433 = vunpack.c.h.b16 %v601
        %v2434 = vunpack.c.l.b16 %v602
        %v2435 = vunpack.c.h.b16 %v602
        %v2436 = vunpack.c.l.b16 %v603
        %v2437 = vunpack.c.h.b16 %v603
        %v2438 = vunpack.c.l.b16 %v604
        %v2439 = vunpack.c.h.b16 %v604
        %v2440 = vunpack.c.l.b16 %v605
        %v2441 = vunpack.c.h.b16 %v605
        %v2442 = vunpack.c.l.b16 %v606
        %v2443 = vunpack.c.h.b16 %v606
        %v2444 = vunpack.c.l.b16 %v607
        %v2445 = vunpack.c.h.b16 %v607
        %v2446 = vunpack.c.l.b16 %v608
        %v2447 = vunpack.c.h.b16 %v608
        %v2448 = vunpack.c.l.b16 %v609
        %v2449 = vunpack.c.h.b16 %v609
        %v2450 = vunpack.c.l.b16 %v610
        %v2451 = vunpack.c.h.b16 %v610
        %v2452 = vunpack.c.l.b16 %v611
        %v2453 = vunpack.c.h.b16 %v611
        %v2454 = vunpack.c.l.b16 %v612
        %v2455 = vunpack.c.h.b16 %v612
        %v2456 = vunpack.c.l.b16 %v613
        %v2457 = vunpack.c.h.b16 %v613
        %v2458 = vunpack.c.l.b16 %v614
        %v2459 = vunpack.c.h.b16 %v614
        %v2460 = vunpack.c.l.b16 %v615
        %v2461 = vunpack.c.h.b16 %v615
        %v2462 = vunpack.c.l.b16 %v616
        %v2463 = vunpack.c.h.b16 %v616
        %v2464 = vunpack.c.l.b16 %v617
        %v2465 = vunpack.c.h.b16 %v617
        %v2466 = vunpack.c.l.b16 %v618
        %v2467 = vunpack.c.h.b16 %v618
        %v2468 = vunpack.c.l.b16 %v619
        %v2469 = vunpack.c.h.b16 %v619
        %v2470 = vunpack.c.l.b16 %v620
        %v2471 = vunpack.c.h.b16 %v620
        %v2472 = vunpack.c.l.b16 %v621
        %v2473 = vunpack.c.h.b16 %v621
        %v2474 = vunpack.c.l.b16 %v622
        %v2475 = vunpack.c.h.b16 %v622
        %v2476 = vunpack.c.l.b16 %v623
        %v2477 = vunpack.c.h.b16 %v623
        %v2478 = vunpack.c.l.b16 %v624
        %v2479 = vunpack.c.h.b16 %v624
        %v2480 = vunpack.c.l.b16 %v625
        %v2481 = vunpack.c.h.b16 %v625
        %v2482 = vunpack.c.l.b16 %v626
        %v2483 = vunpack.c.h.b16 %v626
        %v2484 = vunpack.c.l.b16 %v627
        %v2485 = vunpack.c.h.b16 %v627
        %v2486 = vunpack.c.l.b16 %v628
        %v2487 = vunpack.c.h.b16 %v628
        %v2488 = vunpack.c.l.b16 %v629
        %v2489 = vunpack.c.h.b16 %v629
        %v2490 = vunpack.c.l.b16 %v630
        %v2491 = vunpack.c.h.b16 %v630
        %v2492 = vunpack.c.l.b16 %v631
        %v2493 = vunpack.c.h.b16 %v631
        %v2494 = vunpack.c.l.b16 %v632
        %v2495 = vunpack.c.h.b16 %v632
        %v2496 = vunpack.c.l.b16 %v633
        %v2497 = vunpack.c.h.b16 %v633
        %v2498 = vunpack.c.l.b16 %v634
        %v2499 = vunpack.c.h.b16 %v634
        %v2500 = vunpack.c.l.b16 %v635
        %v2501 = vunpack.c.h.b16 %v635
        %v2502 = vunpack.c.l.b16 %v636
        %v2503 = vunpack.c.h.b16 %v636
        %v2504 = vunpack.c.l.b16 %v637
        %v2505 = vunpack.c.h.b16 %v637
        %v2506 = vunpack.c.l.b16 %v638
        %v2507 = vunpack.c.h.b16 %v638
        %v2508 = vunpack.c.l.b16 %v639
        %v2509 = vunpack.c.h.b16 %v639
        %v2510 = vunpack.c.l.b16 %v640
        %v2511 = vunpack.c.h.b16 %v640
        %v2512 = vunpack.c.l.b16 %v641
        %v2513 = vunpack.c.h.b16 %v641
        %v2514 = vunpack.c.l.b16 %v642
        %v2515 = vunpack.c.h.b16 %v642
        %v2516 = vunpack.c.l.b16 %v643
        %v2517 = vunpack.c.h.b16 %v643
        %v2518 = vunpack.c.l.b16 %v644
        %v2519 = vunpack.c.h.b16 %v644
        %v2520 = vunpack.c.l.b16 %v645
        %v2521 = vunpack.c.h.b16 %v645
        %v2522 = vunpack.c.l.b16 %v646
        %v2523 = vunpack.c.h.b16 %v646
        %v2524 = vunpack.c.l.b16 %v647
        %v2525 = vunpack.c.h.b16 %v647
        %v2526 = vunpack.c.l.b16 %v648
        %v2527 = vunpack.c.h.b16 %v648
        %v2528 = vunpack.c.l.b16 %v649
        %v2529 = vunpack.c.h.b16 %v649
        %v2530 = vunpack.c.l.b16 %v650
        %v2531 = vunpack.c.h.b16 %v650
        %v2532 = vunpack.c.l.b16 %v651
        %v2533 = vunpack.c.h.b16 %v651
        %v2534 = vunpack.c.l.b16 %v652
        %v2535 = vunpack.c.h.b16 %v652
        %v2536 = vunpack.c.l.b16 %v653
        %v2537 = vunpack.c.h.b16 %v653
        %v2538 = vunpack.c.l.b16 %v654
        %v2539 = vunpack.c.h.b16 %v654
        %v2540 = vunpack.c.l.b16 %v655
        %v2541 = vunpack.c.h.b16 %v655
        %v2542 = vunpack.c.l.b16 %v656
        %v2543 = vunpack.c.h.b16 %v656
        %v2544 = vunpack.c.l.b16 %v657
        %v2545 = vunpack.c.h.b16 %v657
        %v2546 = vunpack.c.l.b16 %v658
        %v2547 = vunpack.c.h.b16 %v658
        %v2548 = vunpack.c.l.b16 %v659
        %v2549 = vunpack.c.h.b16 %v659
        %v2550 = vunpack.c.l.b16 %v660
        %v2551 = vunpack.c.h.b16 %v660
        %v2552 = vunpack.c.l.b16 %v661
        %v2553 = vunpack.c.h.b16 %v661
        %v2554 = vunpack.c.l.b16 %v662
        %v2555 = vunpack.c.h.b16 %v662
        %v2556 = vunpack.c.l.b16 %v663
        %v2557 = vunpack.c.h.b16 %v663
        %v2558 = vunpack.c.l.b16 %v664
        %v2559 = vunpack.c.h.b16 %v664
        %v2560 = vunpack.c.l.b16 %v665
        %v2561 = vunpack.c.h.b16 %v665
        %v2562 = vunpack.c.l.b16 %v666
        %v2563 = vunpack.c.h.b16 %v666
        %v2564 = vunpack.c.l.b16 %v667
        %v2565 = vunpack.c.h.b16 %v667
        %v2566 = vunpack.c.l.b16 %v668
        %v2567 = vunpack.c.h.b16 %v668
        %v2568 = vunpack.c.l.b16 %v669
        %v2569 = vunpack.c.h.b16 %v669
        %v2570 = vunpack.c.l.b16 %v670
        %v2571 = vunpack.c.h.b16 %v670
        %v2572 = vunpack.c.l.b16 %v671
        %v2573 = vunpack.c.h.b16 %v671
        %v2574 = vunpack.c.l.b16 %v672
        %v2575 = vunpack.c.h.b16 %v672
        %v2576 = vunpack.c.l.b16 %v673
        %v2577 = vunpack.c.h.b16 %v673
        %v2578 = vunpack.c.l.b16 %v674
        %v2579 = vunpack.c.h.b16 %v674
        %v2580 = vunpack.c.l.b16 %v675
        %v2581 = vunpack.c.h.b16 %v675
        %v2582 = vunpack.c.l.b16 %v676
        %v2583 = vunpack.c.h.b16 %v676
        %v2584 = vunpack.c.l.b16 %v677
        %v2585 = vunpack.c.h.b16 %v677
        %v2586 = vunpack.c.l.b16 %v678
        %v2587 = vunpack.c.h.b16 %v678
        %v2588 = vunpack.c.l.b16 %v679
        %v2589 = vunpack.c.h.b16 %v679
        %v2590 = vunpack.c.l.b16 %v680
        %v2591 = vunpack.c.h.b16 %v680
        %v2592 = vunpack.c.l.b16 %v681
        %v2593 = vunpack.c.h.b16 %v681
        %v2594 = vunpack.c.l.b16 %v682
        %v2595 = vunpack.c.h.b16 %v682
        %v2596 = vunpack.c.l.b16 %v683
        %v2597 = vunpack.c.h.b16 %v683
        %v2598 = vunpack.c.l.b16 %v684
        %v2599 = vunpack.c.h.b16 %v684
        %v2600 = vunpack.c.l.b16 %v685
        %v2601 = vunpack.c.h.b16 %v685
        %v2602 = vunpack.c.l.b16 %v686
        %v2603 = vunpack.c.h.b16 %v686
        %v2604 = vunpack.c.l.b16 %v687
        %v2605 = vunpack.c.h.b16 %v687
        %v2606 = vunpack.c.l.b16 %v688
        %v2607 = vunpack.c.h.b16 %v688
        %v2608 = vunpack.c.l.b16 %v689
        %v2609 = vunpack.c.h.b16 %v689
        %v2610 = vunpack.c.l.b16 %v690
        %v2611 = vunpack.c.h.b16 %v690
        %v2612 = vunpack.c.l.b16 %v691
        %v2613 = vunpack.c.h.b16 %v691
        %v2614 = vunpack.c.l.b16 %v692
        %v2615 = vunpack.c.h.b16 %v692
        %v2616 = vunpack.c.l.b16 %v693
        %v2617 = vunpack.c.h.b16 %v693
        %v2618 = vunpack.c.l.b16 %v694
        %v2619 = vunpack.c.h.b16 %v694
        %v2620 = vunpack.c.l.b16 %v695
        %v2621 = vunpack.c.h.b16 %v695
        %v2622 = vunpack.c.l.b16 %v696
        %v2623 = vunpack.c.h.b16 %v696
        %v2624 = vunpack.c.l.b16 %v697
        %v2625 = vunpack.c.h.b16 %v697
        %v2626 = vunpack.c.l.b16 %v698
        %v2627 = vunpack.c.h.b16 %v698
        %v2628 = vunpack.c.l.b16 %v699
        %v2629 = vunpack.c.h.b16 %v699
        %v2630 = vunpack.c.l.b16 %v700
        %v2631 = vunpack.c.h.b16 %v700
        %v2632 = vunpack.c.l.b16 %v701
        %v2633 = vunpack.c.h.b16 %v701
        %v2634 = vunpack.c.l.b16 %v702
        %v2635 = vunpack.c.h.b16 %v702
        %v2636 = vpack.c.b16 %v1772, %v1736
        %v2637 = vpack.c.b16 %v1773, %v1737
        %v2638 = vpack.c.b16 %v1774, %v1738
        %v2639 = vpack.c.b16 %v1775, %v1739
        %v2640 = vpack.c.b16 %v1776, %v1740
        %v2641 = vpack.c.b16 %v1777, %v1741
        %v2642 = vpack.c.b16 %v1778, %v1742
        %v2643 = vpack.c.b16 %v1779, %v1743
        %v2644 = vpack.c.b16 %v1780, %v1744
        %v2645 = vpack.c.b16 %v1781, %v1745
        %v2646 = vpack.c.b16 %v1782, %v1746
        %v2647 = vpack.c.b16 %v1783, %v1747
        %v2648 = vpack.c.b16 %v1784, %v1748
        %v2649 = vpack.c.b16 %v1785, %v1749
        %v2650 = vpack.c.b16 %v1786, %v1750
        %v2651 = vpack.c.b16 %v1787, %v1751
        %v2652 = vpack.c.b16 %v1788, %v1752
        %v2653 = vpack.c.b16 %v1789, %v1753
        %v2654 = vpack.c.b16 %v1790, %v1754
        %v2655 = vpack.c.b16 %v1791, %v1755
        %v2656 = vpack.c.b16 %v1792, %v1756
        %v2657 = vpack.c.b16 %v1793, %v1757
        %v2658 = vpack.c.b16 %v1794, %v1758
        %v2659 = vpack.c.b16 %v1795, %v1759
        %v2660 = vpack.c.b16 %v1796, %v1760
        %v2661 = vpack.c.b16 %v1797, %v1761
        %v2662 = vpack.c.b16 %v1798, %v1762
        %v2663 = vpack.c.b16 %v1799, %v1763
        %v2664 = vpack.c.b16 %v1800, %v1764
        %v2665 = vpack.c.b16 %v1801, %v1765
        %v2666 = vpack.c.b16 %v1802, %v1766
        %v2667 = vpack.c.b16 %v1803, %v1767
        %v2668 = vpack.c.b16 %v1804, %v1768
        %v2669 = vpack.c.b16 %v1805, %v1769
        %v2670 = vpack.c.b16 %v1806, %v1770
        %v2671 = vpack.c.b16 %v1807, %v1771
        %v2672 = vpack.c.b16 %v1844, %v1808
        %v2673 = vpack.c.b16 %v1845, %v1809
        %v2674 = vpack.c.b16 %v1846, %v1810
        %v2675 = vpack.c.b16 %v1847, %v1811
        %v2676 = vpack.c.b16 %v1848, %v1812
        %v2677 = vpack.c.b16 %v1849, %v1813
        %v2678 = vpack.c.b16 %v1850, %v1814
        %v2679 = vpack.c.b16 %v1851, %v1815
        %v2680 = vpack.c.b16 %v1852, %v1816
        %v2681 = vpack.c.b16 %v1853, %v1817
        %v2682 = vpack.c.b16 %v1854, %v1818
        %v2683 = vpack.c.b16 %v1855, %v1819
        %v2684 = vpack.c.b16 %v1856, %v1820
        %v2685 = vpack.c.b16 %v1857, %v1821
        %v2686 = vpack.c.b16 %v1858, %v1822
        %v2687 = vpack.c.b16 %v1859, %v1823
        %v2688 = vpack.c.b16 %v1860, %v1824
        %v2689 = vpack.c.b16 %v1861, %v1825
        %v2690 = vpack.c.b16 %v1862, %v1826
        %v2691 = vpack.c.b16 %v1863, %v1827
        %v2692 = vpack.c.b16 %v1864, %v1828
        %v2693 = vpack.c.b16 %v1865, %v1829
        %v2694 = vpack.c.b16 %v1866, %v1830
        %v2695 = vpack.c.b16 %v1867, %v1831
        %v2696 = vpack.c.b16 %v1868, %v1832
        %v2697 = vpack.c.b16 %v1869, %v1833
        %v2698 = vpack.c.b16 %v1870, %v1834
        %v2699 = vpack.c.b16 %v1871, %v1835
        %v2700 = vpack.c.b16 %v1872, %v1836
        %v2701 = vpack.c.b16 %v1873, %v1837
        %v2702 = vpack.c.b16 %v1874, %v1838
        %v2703 = vpack.c.b16 %v1875, %v1839
        %v2704 = vpack.c.b16 %v1876, %v1840
        %v2705 = vpack.c.b16 %v1877, %v1841
        %v2706 = vpack.c.b16 %v1878, %v1842
        %v2707 = vpack.c.b16 %v1879, %v1843
        %v2708 = vpack.c.b16 %v1916, %v1880
        %v2709 = vpack.c.b16 %v1917, %v1881
        %v2710 = vpack.c.b16 %v1918, %v1882
        %v2711 = vpack.c.b16 %v1919, %v1883
        %v2712 = vpack.c.b16 %v1920, %v1884
        %v2713 = vpack.c.b16 %v1921, %v1885
        %v2714 = vpack.c.b16 %v1922, %v1886
        %v2715 = vpack.c.b16 %v1923, %v1887
        %v2716 = vpack.c.b16 %v1924, %v1888
        %v2717 = vpack.c.b16 %v1925, %v1889
        %v2718 = vpack.c.b16 %v1926, %v1890
        %v2719 = vpack.c.b16 %v1927, %v1891
        %v2720 = vpack.c.b16 %v1928, %v1892
        %v2721 = vpack.c.b16 %v1929, %v1893
        %v2722 = vpack.c.b16 %v1930, %v1894
        %v2723 = vpack.c.b16 %v1931, %v1895
        %v2724 = vpack.c.b16 %v1932, %v1896
        %v2725 = vpack.c.b16 %v1933, %v1897
        %v2726 = vpack.c.b16 %v1934, %v1898
        %v2727 = vpack.c.b16 %v1935, %v1899
        %v2728 = vpack.c.b16 %v1936, %v1900
        %v2729 = vpack.c.b16 %v1937, %v1901
        %v2730 = vpack.c.b16 %v1938, %v1902
        %v2731 = vpack.c.b16 %v1939, %v1903
        %v2732 = vpack.c.b16 %v1940, %v1904
        %v2733 = vpack.c.b16 %v1941, %v1905
        %v2734 = vpack.c.b16 %v1942, %v1906
        %v2735 = vpack.c.b16 %v1943, %v1907
        %v2736 = vpack.c.b16 %v1944, %v1908
        %v2737 = vpack.c.b16 %v1945, %v1909
        %v2738 = vpack.c.b16 %v1946, %v1910
        %v2739 = vpack.c.b16 %v1947, %v1911
        %v2740 = vpack.c.b16 %v1948, %v1912
        %v2741 = vpack.c.b16 %v1949, %v1913
        %v2742 = vpack.c.b16 %v1950, %v1914
        %v2743 = vpack.c.b16 %v1951, %v1915
        %v2744 = vpack.c.b16 %v1988, %v1952
        %v2745 = vpack.c.b16 %v1989, %v1953
        %v2746 = vpack.c.b16 %v1990, %v1954
        %v2747 = vpack.c.b16 %v1991, %v1955
        %v2748 = vpack.c.b16 %v1992, %v1956
        %v2749 = vpack.c.b16 %v1993, %v1957
        %v2750 = vpack.c.b16 %v1994, %v1958
        %v2751 = vpack.c.b16 %v1995, %v1959
        %v2752 = vpack.c.b16 %v1996, %v1960
        %v2753 = vpack.c.b16 %v1997, %v1961
        %v2754 = vpack.c.b16 %v1998, %v1962
        %v2755 = vpack.c.b16 %v1999, %v1963
        %v2756 = vpack.c.b16 %v2000, %v1964
        %v2757 = vpack.c.b16 %v2001, %v1965
        %v2758 = vpack.c.b16 %v2002, %v1966
        %v2759 = vpack.c.b16 %v2003, %v1967
        %v2760 = vpack.c.b16 %v2004, %v1968
        %v2761 = vpack.c.b16 %v2005, %v1969
        %v2762 = vpack.c.b16 %v2006, %v1970
        %v2763 = vpack.c.b16 %v2007, %v1971
        %v2764 = vpack.c.b16 %v2008, %v1972
        %v2765 = vpack.c.b16 %v2009, %v1973
        %v2766 = vpack.c.b16 %v2010, %v1974
        %v2767 = vpack.c.b16 %v2011, %v1975
        %v2768 = vpack.c.b16 %v2012, %v1976
        %v2769 = vpack.c.b16 %v2013, %v1977
        %v2770 = vpack.c.b16 %v2014, %v1978
        %v2771 = vpack.c.b16 %v2015, %v1979
        %v2772 = vpack.c.b16 %v2016, %v1980
        %v2773 = vpack.c.b16 %v2017, %v1981
        %v2774 = vpack.c.b16 %v2018, %v1982
        %v2775 = vpack.c.b16 %v2019, %v1983
        %v2776 = vpack.c.b16 %v2020, %v1984
        %v2777 = vpack.c.b16 %v2021, %v1985
        %v2778 = vpack.c.b16 %v2022, %v1986
        %v2779 = vpack.c.b16 %v2023, %v1987
        %v2780 = vpack.c.b16 %v2060, %v2024
        %v2781 = vpack.c.b16 %v2061, %v2025
        %v2782 = vpack.c.b16 %v2062, %v2026
        %v2783 = vpack.c.b16 %v2063, %v2027
        %v2784 = vpack.c.b16 %v2064, %v2028
        %v2785 = vpack.c.b16 %v2065, %v2029
        %v2786 = vpack.c.b16 %v2066, %v2030
        %v2787 = vpack.c.b16 %v2067, %v2031
        %v2788 = vpack.c.b16 %v2068, %v2032
        %v2789 = vpack.c.b16 %v2069, %v2033
        %v2790 = vpack.c.b16 %v2070, %v2034
        %v2791 = vpack.c.b16 %v2071, %v2035
        %v2792 = vpack.c.b16 %v2072, %v2036
        %v2793 = vpack.c.b16 %v2073, %v2037
        %v2794 = vpack.c.b16 %v2074, %v2038
        %v2795 = vpack.c.b16 %v2075, %v2039
        %v2796 = vpack.c.b16 %v2076, %v2040
        %v2797 = vpack.c.b16 %v2077, %v2041
        %v2798 = vpack.c.b16 %v2078, %v2042
        %v2799 = vpack.c.b16 %v2079, %v2043
        %v2800 = vpack.c.b16 %v2080, %v2044
        %v2801 = vpack.c.b16 %v2081, %v2045
        %v2802 = vpack.c.b16 %v2082, %v2046
        %v2803 = vpack.c.b16 %v2083, %v2047
        %v2804 = vpack.c.b16 %v2084, %v2048
        %v2805 = vpack.c.b16 %v2085, %v2049
        %v2806 = vpack.c.b16 %v2086, %v2050
        %v2807 = vpack.c.b16 %v2087, %v2051
        %v2808 = vpack.c.b16 %v2088, %v2052
        %v2809 = vpack.c.b16 %v2089, %v2053
        %v2810 = vpack.c.b16 %v2090, %v2054
        %v2811 = vpack.c.b16 %v2091, %v2055
        %v2812 = vpack.c.b16 %v2092, %v2056
        %v2813 = vpack.c.b16 %v2093, %v2057
        %v2814 = vpack.c.b16 %v2094, %v2058
        %v2815 = vpack.c.b16 %v2095, %v2059
        %v2816 = vpack.c.b16 %v2132, %v2096
        %v2817 = vpack.c.b16 %v2133, %v2097
        %v2818 = vpack.c.b16 %v2134, %v2098
        %v2819 = vpack.c.b16 %v2135, %v2099
        %v2820 = vpack.c.b16 %v2136, %v2100
        %v2821 = vpack.c.b16 %v2137, %v2101
        %v2822 = vpack.c.b16 %v2138, %v2102
        %v2823 = vpack.c.b16 %v2139, %v2103
        %v2824 = vpack.c.b16 %v2140, %v2104
        %v2825 = vpack.c.b16 %v2141, %v2105
        %v2826 = vpack.c.b16 %v2142, %v2106
        %v2827 = vpack.c.b16 %v2143, %v2107
        %v2828 = vpack.c.b16 %v2144, %v2108
        %v2829 = vpack.c.b16 %v2145, %v2109
        %v2830 = vpack.c.b16 %v2146, %v2110
        %v2831 = vpack.c.b16 %v2147, %v2111
        %v2832 = vpack.c.b16 %v2148, %v2112
        %v2833 = vpack.c.b16 %v2149, %v2113
        %v2834 = vpack.c.b16 %v2150, %v2114
        %v2835 = vpack.c.b16 %v2151, %v2115
        %v2836 = vpack.c.b16 %v2152, %v2116
        %v2837 = vpack.c.b16 %v2153, %v2117
        %v2838 = vpack.c.b16 %v2154, %v2118
        %v2839 = vpack.c.b16 %v2155, %v2119
        %v2840 = vpack.c.b16 %v2156, %v2120
        %v2841 = vpack.c.b16 %v2157, %v2121
        %v2842 = vpack.c.b16 %v2158, %v2122
        %v2843 = vpack.c.b16 %v2159, %v2123
        %v2844 = vpack.c.b16 %v2160, %v2124
        %v2845 = vpack.c.b16 %v2161, %v2125
        %v2846 = vpack.c.b16 %v2162, %v2126
        %v2847 = vpack.c.b16 %v2163, %v2127
        %v2848 = vpack.c.b16 %v2164, %v2128
        %v2849 = vpack.c.b16 %v2165, %v2129
        %v2850 = vpack.c.b16 %v2166, %v2130
        %v2851 = vpack.c.b16 %v2167, %v2131
        %v2852 = vpack.c.b16 %v2204, %v2168
        %v2853 = vpack.c.b16 %v2205, %v2169
        %v2854 = vpack.c.b16 %v2206, %v2170
        %v2855 = vpack.c.b16 %v2207, %v2171
        %v2856 = vpack.c.b16 %v2208, %v2172
        %v2857 = vpack.c.b16 %v2209, %v2173
        %v2858 = vpack.c.b16 %v2210, %v2174
        %v2859 = vpack.c.b16 %v2211, %v2175
        %v2860 = vpack.c.b16 %v2212, %v2176
        %v2861 = vpack.c.b16 %v2213, %v2177
        %v2862 = vpack.c.b16 %v2214, %v2178
        %v2863 = vpack.c.b16 %v2215, %v2179
        %v2864 = vpack.c.b16 %v2216, %v2180
        %v2865 = vpack.c.b16 %v2217, %v2181
        %v2866 = vpack.c.b16 %v2218, %v2182
        %v2867 = vpack.c.b16 %v2219, %v2183
        %v2868 = vpack.c.b16 %v2220, %v2184
        %v2869 = vpack.c.b16 %v2221, %v2185
        %v2870 = vpack.c.b16 %v2222, %v2186
        %v2871 = vpack.c.b16 %v2223, %v2187
        %v2872 = vpack.c.b16 %v2224, %v2188
        %v2873 = vpack.c.b16 %v2225, %v2189
        %v2874 = vpack.c.b16 %v2226, %v2190
        %v2875 = vpack.c.b16 %v2227, %v2191
        %v2876 = vpack.c.b16 %v2228, %v2192
        %v2877 = vpack.c.b16 %v2229, %v2193
        %v2878 = vpack.c.b16 %v2230, %v2194
        %v2879 = vpack.c.b16 %v2231, %v2195
        %v2880 = vpack.c.b16 %v2232, %v2196
        %v2881 = vpack.c.b16 %v2233, %v2197
        %v2882 = vpack.c.b16 %v2234, %v2198
        %v2883 = vpack.c.b16 %v2235, %v2199
        %v2884 = vpack.c.b16 %v2236, %v2200
        %v2885 = vpack.c.b16 %v2237, %v2201
        %v2886 = vpack.c.b16 %v2238, %v2202
        %v2887 = vpack.c.b16 %v2239, %v2203
        %v2888 = vpack.c.b16 %v2276, %v2240
        %v2889 = vpack.c.b16 %v2277, %v2241
        %v2890 = vpack.c.b16 %v2278, %v2242
        %v2891 = vpack.c.b16 %v2279, %v2243
        %v2892 = vpack.c.b16 %v2280, %v2244
        %v2893 = vpack.c.b16 %v2281, %v2245
        %v2894 = vpack.c.b16 %v2282, %v2246
        %v2895 = vpack.c.b16 %v2283, %v2247
        %v2896 = vpack.c.b16 %v2284, %v2248
        %v2897 = vpack.c.b16 %v2285, %v2249
        %v2898 = vpack.c.b16 %v2286, %v2250
        %v2899 = vpack.c.b16 %v2287, %v2251
        %v2900 = vpack.c.b16 %v2288, %v2252
        %v2901 = vpack.c.b16 %v2289, %v2253
        %v2902 = vpack.c.b16 %v2290, %v2254
        %v2903 = vpack.c.b16 %v2291, %v2255
        %v2904 = vpack.c.b16 %v2292, %v2256
        %v2905 = vpack.c.b16 %v2293, %v2257
        %v2906 = vpack.c.b16 %v2294, %v2258
        %v2907 = vpack.c.b16 %v2295, %v2259
        %v2908 = vpack.c.b16 %v2296, %v2260
        %v2909 = vpack.c.b16 %v2297, %v2261
        %v2910 = vpack.c.b16 %v2298, %v2262
        %v2911 = vpack.c.b16 %v2299, %v2263
        %v2912 = vpack.c.b16 %v2300, %v2264
        %v2913 = vpack.c.b16 %v2301, %v2265
        %v2914 = vpack.c.b16 %v2302, %v2266
        %v2915 = vpack.c.b16 %v2303, %v2267
        %v2916 = vpack.c.b16 %v2304, %v2268
        %v2917 = vpack.c.b16 %v2305, %v2269
        %v2918 = vpack.c.b16 %v2306, %v2270
        %v2919 = vpack.c.b16 %v2307, %v2271
        %v2920 = vpack.c.b16 %v2308, %v2272
        %v2921 = vpack.c.b16 %v2309, %v2273
        %v2922 = vpack.c.b16 %v2310, %v2274
        %v2923 = vpack.c.b16 %v2311, %v2275
        %v2924 = vpack.c.b16 %v2348, %v2312
        %v2925 = vpack.c.b16 %v2349, %v2313
        %v2926 = vpack.c.b16 %v2350, %v2314
        %v2927 = vpack.c.b16 %v2351, %v2315
        %v2928 = vpack.c.b16 %v2352, %v2316
        %v2929 = vpack.c.b16 %v2353, %v2317
        %v2930 = vpack.c.b16 %v2354, %v2318
        %v2931 = vpack.c.b16 %v2355, %v2319
        %v2932 = vpack.c.b16 %v2356, %v2320
        %v2933 = vpack.c.b16 %v2357, %v2321
        %v2934 = vpack.c.b16 %v2358, %v2322
        %v2935 = vpack.c.b16 %v2359, %v2323
        %v2936 = vpack.c.b16 %v2360, %v2324
        %v2937 = vpack.c.b16 %v2361, %v2325
        %v2938 = vpack.c.b16 %v2362, %v2326
        %v2939 = vpack.c.b16 %v2363, %v2327
        %v2940 = vpack.c.b16 %v2364, %v2328
        %v2941 = vpack.c.b16 %v2365, %v2329
        %v2942 = vpack.c.b16 %v2366, %v2330
        %v2943 = vpack.c.b16 %v2367, %v2331
        %v2944 = vpack.c.b16 %v2368, %v2332
        %v2945 = vpack.c.b16 %v2369, %v2333
        %v2946 = vpack.c.b16 %v2370, %v2334
        %v2947 = vpack.c.b16 %v2371, %v2335
        %v2948 = vpack.c.b16 %v2372, %v2336
        %v2949 = vpack.c.b16 %v2373, %v2337
        %v2950 = vpack.c.b16 %v2374, %v2338
        %v2951 = vpack.c.b16 %v2375, %v2339
        %v2952 = vpack.c.b16 %v2376, %v2340
        %v2953 = vpack.c.b16 %v2377, %v2341
        %v2954 = vpack.c.b16 %v2378, %v2342
        %v2955 = vpack.c.b16 %v2379, %v2343
        %v2956 = vpack.c.b16 %v2380, %v2344
        %v2957 = vpack.c.b16 %v2381, %v2345
        %v2958 = vpack.c.b16 %v2382, %v2346
        %v2959 = vpack.c.b16 %v2383, %v2347
        %v2960 = vpack.c.b16 %v2420, %v2384
        %v2961 = vpack.c.b16 %v2421, %v2385
        %v2962 = vpack.c.b16 %v2422, %v2386
        %v2963 = vpack.c.b16 %v2423, %v2387
        %v2964 = vpack.c.b16 %v2424, %v2388
        %v2965 = vpack.c.b16 %v2425, %v2389
        %v2966 = vpack.c.b16 %v2426, %v2390
        %v2967 = vpack.c.b16 %v2427, %v2391
        %v2968 = vpack.c.b16 %v2428, %v2392
        %v2969 = vpack.c.b16 %v2429, %v2393
        %v2970 = vpack.c.b16 %v2430, %v2394
        %v2971 = vpack.c.b16 %v2431, %v2395
        %v2972 = vpack.c.b16 %v2432, %v2396
        %v2973 = vpack.c.b16 %v2433, %v2397
        %v2974 = vpack.c.b16 %v2434, %v2398
        %v2975 = vpack.c.b16 %v2435, %v2399
        %v2976 = vpack.c.b16 %v2436, %v2400
        %v2977 = vpack.c.b16 %v2437, %v2401
        %v2978 = vpack.c.b16 %v2438, %v2402
        %v2979 = vpack.c.b16 %v2439, %v2403
        %v2980 = vpack.c.b16 %v2440, %v2404
        %v2981 = vpack.c.b16 %v2441, %v2405
        %v2982 = vpack.c.b16 %v2442, %v2406
        %v2983 = vpack.c.b16 %v2443, %v2407
        %v2984 = vpack.c.b16 %v2444, %v2408
        %v2985 = vpack.c.b16 %v2445, %v2409
        %v2986 = vpack.c.b16 %v2446, %v2410
        %v2987 = vpack.c.b16 %v2447, %v2411
        %v2988 = vpack.c.b16 %v2448, %v2412
        %v2989 = vpack.c.b16 %v2449, %v2413
        %v2990 = vpack.c.b16 %v2450, %v2414
        %v2991 = vpack.c.b16 %v2451, %v2415
        %v2992 = vpack.c.b16 %v2452, %v2416
        %v2993 = vpack.c.b16 %v2453, %v2417
        %v2994 = vpack.c.b16 %v2454, %v2418
        %v2995 = vpack.c.b16 %v2455, %v2419
        %v2996 = vpack.c.b16 %v2492, %v2456
        %v2997 = vpack.c.b16 %v2493, %v2457
        %v2998 = vpack.c.b16 %v2494, %v2458
        %v2999 = vpack.c.b16 %v2495, %v2459
        %v3000 = vpack.c.b16 %v2496, %v2460
        %v3001 = vpack.c.b16 %v2497, %v2461
        %v3002 = vpack.c.b16 %v2498, %v2462
        %v3003 = vpack.c.b16 %v2499, %v2463
        %v3004 = vpack.c.b16 %v2500, %v2464
        %v3005 = vpack.c.b16 %v2501, %v2465
        %v3006 = vpack.c.b16 %v2502, %v2466
        %v3007 = vpack.c.b16 %v2503, %v2467
        %v3008 = vpack.c.b16 %v2504, %v2468
        %v3009 = vpack.c.b16 %v2505, %v2469
        %v3010 = vpack.c.b16 %v2506, %v2470
        %v3011 = vpack.c.b16 %v2507, %v2471
        %v3012 = vpack.c.b16 %v2508, %v2472
        %v3013 = vpack.c.b16 %v2509, %v2473
        %v3014 = vpack.c.b16 %v2510, %v2474
        %v3015 = vpack.c.b16 %v2511, %v2475
        %v3016 = vpack.c.b16 %v2512, %v2476
        %v3017 = vpack.c.b16 %v2513, %v2477
        %v3018 = vpack.c.b16 %v2514, %v2478
        %v3019 = vpack.c.b16 %v2515, %v2479
        %v3020 = vpack.c.b16 %v2516, %v2480
        %v3021 = vpack.c.b16 %v2517, %v2481
        %v3022 = vpack.c.b16 %v2518, %v2482
        %v3023 = vpack.c.b16 %v2519, %v2483
        %v3024 = vpack.c.b16 %v2520, %v2484
        %v3025 = vpack.c.b16 %v2521, %v2485
        %v3026 = vpack.c.b16 %v2522, %v2486
        %v3027 = vpack.c.b16 %v2523, %v2487
        %v3028 = vpack.c.b16 %v2524, %v2488
        %v3029 = vpack.c.b16 %v2525, %v2489
        %v3030 = vpack.c.b16 %v2526, %v2490
        %v3031 = vpack.c.b16 %v2527, %v2491
        %v3032 = vpack.c.b16 %v2564, %v2528
        %v3033 = vpack.c.b16 %v2565, %v2529
        %v3034 = vpack.c.b16 %v2566, %v2530
        %v3035 = vpack.c.b16 %v2567, %v2531
        %v3036 = vpack.c.b16 %v2568, %v2532
        %v3037 = vpack.c.b16 %v2569, %v2533
        %v3038 = vpack.c.b16 %v2570, %v2534
        %v3039 = vpack.c.b16 %v2571, %v2535
        %v3040 = vpack.c.b16 %v2572, %v2536
        %v3041 = vpack.c.b16 %v2573, %v2537
        %v3042 = vpack.c.b16 %v2574, %v2538
        %v3043 = vpack.c.b16 %v2575, %v2539
        %v3044 = vpack.c.b16 %v2576, %v2540
        %v3045 = vpack.c.b16 %v2577, %v2541
        %v3046 = vpack.c.b16 %v2578, %v2542
        %v3047 = vpack.c.b16 %v2579, %v2543
        %v3048 = vpack.c.b16 %v2580, %v2544
        %v3049 = vpack.c.b16 %v2581, %v2545
        %v3050 = vpack.c.b16 %v2582, %v2546
        %v3051 = vpack.c.b16 %v2583, %v2547
        %v3052 = vpack.c.b16 %v2584, %v2548
        %v3053 = vpack.c.b16 %v2585, %v2549
        %v3054 = vpack.c.b16 %v2586, %v2550
        %v3055 = vpack.c.b16 %v2587, %v2551
        %v3056 = vpack.c.b16 %v2588, %v2552
        %v3057 = vpack.c.b16 %v2589, %v2553
        %v3058 = vpack.c.b16 %v2590, %v2554
        %v3059 = vpack.c.b16 %v2591, %v2555
        %v3060 = vpack.c.b16 %v2592, %v2556
        %v3061 = vpack.c.b16 %v2593, %v2557
        %v3062 = vpack.c.b16 %v2594, %v2558
        %v3063 = vpack.c.b16 %v2595, %v2559
        %v3064 = vpack.c.b16 %v2596, %v2560
        %v3065 = vpack.c.b16 %v2597, %v2561
        %v3066 = vpack.c.b16 %v2598, %v2562
        %v3067 = vpack.c.b16 %v2599, %v2563
        %v3068 = vpack.c.b16 %v2600, %v2600
        %v3069 = vpack.c.b16 %v2601, %v2601
        %v3070 = vpack.c.b16 %v2602, %v2602
        %v3071 = vpack.c.b16 %v2603, %v2603
        %v3072 = vpack.c.b16 %v2604, %v2604
        %v3073 = vpack.c.b16 %v2605, %v2605
        %v3074 = vpack.c.b16 %v2606, %v2606
        %v3075 = vpack.c.b16 %v2607, %v2607
        %v3076 = vpack.c.b16 %v2608, %v2608
        %v3077 = vpack.c.b16 %v2609, %v2609
        %v3078 = vpack.c.b16 %v2610, %v2610
        %v3079 = vpack.c.b16 %v2611, %v2611
        %v3080 = vpack.c.b16 %v2612, %v2612
        %v3081 = vpack.c.b16 %v2613, %v2613
        %v3082 = vpack.c.b16 %v2614, %v2614
        %v3083 = vpack.c.b16 %v2615, %v2615
        %v3084 = vpack.c.b16 %v2616, %v2616
        %v3085 = vpack.c.b16 %v2617, %v2617
        %v3086 = vpack.c.b16 %v2618, %v2618
        %v3087 = vpack.c.b16 %v2619, %v2619
        %v3088 = vpack.c.b16 %v2620, %v2620
        %v3089 = vpack.c.b16 %v2621, %v2621
        %v3090 = vpack.c.b16 %v2622, %v2622
        %v3091 = vpack.c.b16 %v2623, %v2623
        %v3092 = vpack.c.b16 %v2624, %v2624
        %v3093 = vpack.c.b16 %v2625, %v2625
        %v3094 = vpack.c.b16 %v2626, %v2626
        %v3095 = vpack.c.b16 %v2627, %v2627
        %v3096 = vpack.c.b16 %v2628, %v2628
        %v3097 = vpack.c.b16 %v2629, %v2629
        %v3098 = vpack.c.b16 %v2630, %v2630
        %v3099 = vpack.c.b16 %v2631, %v2631
        %v3100 = vpack.c.b16 %v2632, %v2632
        %v3101 = vpack.c.b16 %v2633, %v2633
        %v3102 = vpack.c.b16 %v2634, %v2634
        %v3103 = vpack.c.b16 %v2635, %v2635
        %v4148 = vunpack.c.l.b16 %v703
        %v4149 = vunpack.c.l.b16 %v704
        %v4150 = vunpack.c.l.b16 %v705
        %v4151 = vunpack.c.l.b16 %v706
        %v4152 = vunpack.c.l.b16 %v707
        %v4153 = vunpack.c.l.b16 %v708
        %v4154 = vunpack.c.l.b16 %v709
        %v4155 = vunpack.c.l.b16 %v710
        %v4156 = vunpack.c.l.b16 %v711
        %v4157 = vunpack.c.l.b16 %v712
        %v4158 = vunpack.c.l.b16 %v713
        %v4159 = vunpack.c.l.b16 %v714
        %v4160 = vunpack.c.l.b16 %v715
        %v4161 = vunpack.c.l.b16 %v716
        %v4162 = vunpack.c.l.b16 %v717
        %v4163 = vunpack.c.l.b16 %v718
        %v4164 = vunpack.c.l.b16 %v719
        %v4165 = vunpack.c.l.b16 %v720
        %v4166 = vunpack.c.l.b16 %v721
        %v4167 = vunpack.c.l.b16 %v722
        %v4168 = vunpack.c.l.b16 %v723
        %v4169 = vunpack.c.l.b16 %v724
        %v4170 = vunpack.c.l.b16 %v725
        %v4171 = vunpack.c.l.b16 %v726
        %v4172 = vunpack.c.l.b16 %v727
        %v4173 = vunpack.c.l.b16 %v728
        %v4174 = vunpack.c.l.b16 %v729
        %v4175 = vunpack.c.l.b16 %v730
        %v4176 = vunpack.c.l.b16 %v731
        %v4177 = vunpack.c.l.b16 %v732
        %v4178 = vunpack.c.l.b16 %v733
        %v4179 = vunpack.c.l.b16 %v734
        %v4180 = vunpack.c.l.b16 %v735
        %v4181 = vunpack.c.l.b16 %v736
        %v4182 = vunpack.c.l.b16 %v737
        %v4183 = vunpack.c.l.b16 %v738
        %v4184 = vunpack.c.l.b16 %v739
        %v4185 = vunpack.c.l.b16 %v740
        %v4186 = vunpack.c.l.b16 %v741
        %v4187 = vunpack.c.l.b16 %v742
        %v4188 = vunpack.c.l.b16 %v743
        %v4189 = vunpack.c.l.b16 %v744
        %v4190 = vunpack.c.l.b16 %v745
        %v4191 = vunpack.c.l.b16 %v746
        %v4192 = vunpack.c.l.b16 %v747
        %v4193 = vunpack.c.l.b16 %v748
        %v4194 = vunpack.c.l.b16 %v749
        %v4195 = vunpack.c.l.b16 %v750
        %v4196 = vunpack.c.l.b16 %v751
        %v4197 = vunpack.c.l.b16 %v752
        %v4198 = vunpack.c.l.b16 %v753
        %v4199 = vunpack.c.l.b16 %v754
        %v4200 = vunpack.c.l.b16 %v755
        %v4201 = vunpack.c.l.b16 %v756
        %v4202 = vunpack.c.l.b16 %v757
        %v4203 = vunpack.c.l.b16 %v758
        %v4204 = vunpack.c.l.b16 %v759
        %v4205 = vunpack.c.l.b16 %v760
        %v4206 = vunpack.c.l.b16 %v761
        %v4207 = vunpack.c.l.b16 %v762
        %v4208 = vunpack.c.l.b16 %v763
        %v4209 = vunpack.c.l.b16 %v764
        %v4210 = vunpack.c.l.b16 %v765
        %v4211 = vunpack.c.l.b16 %v766
        %v4212 = vunpack.c.l.b16 %v767
        %v4213 = vunpack.c.l.b16 %v768
        %v4214 = vunpack.c.l.b16 %v769
        %v4215 = vunpack.c.l.b16 %v770
        %v4216 = vunpack.c.l.b16 %v771
        %v4217 = vunpack.c.l.b16 %v772
        %v4218 = vunpack.c.l.b16 %v773
        %v4219 = vunpack.c.l.b16 %v774
        %v4220 = vunpack.c.l.b16 %v775
        %v4221 = vunpack.c.l.b16 %v776
        %v4222 = vunpack.c.l.b16 %v777
        %v4223 = vunpack.c.l.b16 %v778
        %v4224 = vunpack.c.l.b16 %v779
        %v4225 = vunpack.c.l.b16 %v780
        %v4226 = vunpack.c.l.b16 %v781
        %v4227 = vunpack.c.l.b16 %v782
        %v4228 = vunpack.c.l.b16 %v783
        %v4229 = vunpack.c.l.b16 %v784
        %v4230 = vunpack.c.l.b16 %v785
        %v4231 = vunpack.c.l.b16 %v786
        %v4232 = vunpack.c.l.b16 %v787
        %v4233 = vunpack.c.l.b16 %v788
        %v4234 = vunpack.c.l.b16 %v789
        %v4235 = vunpack.c.l.b16 %v790
        %v4236 = vunpack.c.l.b16 %v791
        %v4237 = vunpack.c.l.b16 %v792
        %v4238 = vunpack.c.l.b16 %v793
        %v4239 = vunpack.c.l.b16 %v794
        %v4240 = vunpack.c.l.b16 %v795
        %v4241 = vunpack.c.l.b16 %v796
        %v4242 = vunpack.c.l.b16 %v797
        %v4243 = vunpack.c.l.b16 %v798
        %v4244 = vunpack.c.l.b16 %v799
        %v4245 = vunpack.c.l.b16 %v800
        %v4246 = vunpack.c.l.b16 %v801
        %v4247 = vunpack.c.l.b16 %v802
        %v4248 = vunpack.c.l.b16 %v803
        %v4249 = vunpack.c.l.b16 %v804
        %v4250 = vunpack.c.l.b16 %v805
        %v4251 = vunpack.c.l.b16 %v806
        %v4252 = vunpack.c.l.b16 %v807
        %v4253 = vunpack.c.l.b16 %v808
        %v4254 = vunpack.c.l.b16 %v809
        %v4255 = vunpack.c.l.b16 %v810
        %v4256 = vunpack.c.l.b16 %v811
        %v4257 = vunpack.c.l.b16 %v812
        %v4258 = vunpack.c.l.b16 %v813
        %v4259 = vunpack.c.l.b16 %v814
        %v4260 = vunpack.c.l.b16 %v815
        %v4261 = vunpack.c.l.b16 %v816
        %v4262 = vunpack.c.l.b16 %v817
        %v4263 = vunpack.c.l.b16 %v818
        %v4264 = vunpack.c.l.b16 %v819
        %v4265 = vunpack.c.l.b16 %v820
        %v4266 = vunpack.c.l.b16 %v821
        %v4267 = vunpack.c.l.b16 %v822
        %v4268 = vunpack.c.l.b16 %v823
        %v4269 = vunpack.c.l.b16 %v824
        %v4270 = vunpack.c.l.b16 %v825
        %v4271 = vunpack.c.l.b16 %v826
        %v4272 = vunpack.c.l.b16 %v827
        %v4273 = vunpack.c.l.b16 %v828
        %v4274 = vunpack.c.l.b16 %v829
        %v4275 = vunpack.c.l.b16 %v830
        %v4276 = vunpack.c.l.b16 %v831
        %v4277 = vunpack.c.l.b16 %v832
        %v4278 = vunpack.c.l.b16 %v833
        %v4279 = vunpack.c.l.b16 %v834
        %v4280 = vunpack.c.l.b16 %v835
        %v4281 = vunpack.c.l.b16 %v836
        %v4282 = vunpack.c.l.b16 %v837
        %v4283 = vunpack.c.l.b16 %v838
        %v4284 = vunpack.c.l.b16 %v839
        %v4285 = vunpack.c.l.b16 %v840
        %v4286 = vunpack.c.l.b16 %v841
        %v4287 = vunpack.c.l.b16 %v842
        %v4288 = vunpack.c.l.b16 %v843
        %v4289 = vunpack.c.l.b16 %v844
        %v4290 = vunpack.c.l.b16 %v845
        %v4291 = vunpack.c.l.b16 %v846
        %v4292 = vunpack.c.l.b16 %v847
        %v4293 = vunpack.c.l.b16 %v848
        %v4294 = vunpack.c.l.b16 %v849
        %v4295 = vunpack.c.l.b16 %v850
        %v4296 = vunpack.c.l.b16 %v851
        %v4297 = vunpack.c.l.b16 %v852
        %v4298 = vunpack.c.l.b16 %v853
        %v4299 = vunpack.c.l.b16 %v854
        %v4300 = vunpack.c.l.b16 %v855
        %v4301 = vunpack.c.l.b16 %v856
        %v4302 = vunpack.c.l.b16 %v857
        %v4303 = vunpack.c.l.b16 %v858
        %v4304 = vunpack.c.l.b16 %v859
        %v4305 = vunpack.c.l.b16 %v860
        %v4306 = vunpack.c.l.b16 %v861
        %v4307 = vunpack.c.l.b16 %v862
        %v4308 = vunpack.c.l.b16 %v863
        %v4309 = vunpack.c.l.b16 %v864
        %v4310 = vunpack.c.l.b16 %v865
        %v4311 = vunpack.c.l.b16 %v866
        %v4312 = vunpack.c.l.b16 %v867
        %v4313 = vunpack.c.l.b16 %v868
        %v4314 = vunpack.c.l.b16 %v869
        %v4315 = vunpack.c.l.b16 %v870
        %v4316 = vunpack.c.l.b16 %v871
        %v4317 = vunpack.c.l.b16 %v872
        %v4318 = vunpack.c.l.b16 %v873
        %v4319 = vunpack.c.l.b16 %v874
        %v4320 = vunpack.c.l.b16 %v875
        %v4321 = vunpack.c.l.b16 %v876
        %v4322 = vunpack.c.l.b16 %v877
        %v4323 = vunpack.c.l.b16 %v878
        %v4324 = vunpack.c.l.b16 %v879
        %v4325 = vunpack.c.l.b16 %v880
        %v4326 = vunpack.c.l.b16 %v881
        %v4327 = vunpack.c.l.b16 %v882
        %v4328 = vunpack.c.l.b16 %v883
        %v4329 = vunpack.c.l.b16 %v884
        %v4330 = vunpack.c.l.b16 %v885
        %v4331 = vunpack.c.l.b16 %v886
        %v4332 = vunpack.c.l.b16 %v887
        %v4333 = vunpack.c.l.b16 %v888
        %v4334 = vunpack.c.l.b16 %v889
        %v4335 = vunpack.c.l.b16 %v890
        %v4336 = vunpack.c.l.b16 %v891
        %v4337 = vunpack.c.l.b16 %v892
        %v4338 = vunpack.c.l.b16 %v893
        %v4339 = vunpack.c.l.b16 %v894
        %v4340 = vunpack.c.l.b16 %v895
        %v4341 = vunpack.c.l.b16 %v896
        %v4342 = vunpack.c.l.b16 %v897
        %v4343 = vunpack.c.l.b16 %v898
        %v4344 = vunpack.c.l.b16 %v899
        %v4345 = vunpack.c.l.b16 %v900
        %v4346 = vunpack.c.l.b16 %v901
        %v4347 = vunpack.c.l.b16 %v902
        %v4348 = vunpack.c.l.b16 %v903
        %v4349 = vunpack.c.l.b16 %v904
        %v4350 = vunpack.c.l.b16 %v905
        %v4351 = vunpack.c.l.b16 %v906
        %v4352 = vunpack.c.l.b16 %v907
        %v4353 = vunpack.c.l.b16 %v908
        %v4354 = vunpack.c.l.b16 %v909
        %v4355 = vunpack.c.l.b16 %v910
        %v4356 = vunpack.c.l.b16 %v911
        %v4357 = vunpack.c.l.b16 %v912
        %v4358 = vunpack.c.l.b16 %v913
        %v4359 = vunpack.c.l.b16 %v914
        %v4360 = vunpack.c.l.b16 %v915
        %v4361 = vunpack.c.l.b16 %v916
        %v4362 = vunpack.c.l.b16 %v917
        %v4363 = vunpack.c.l.b16 %v918
        %v4364 = vunpack.c.l.b16 %v919
        %v4365 = vunpack.c.l.b16 %v920
        %v4366 = vunpack.c.l.b16 %v921
        %v4367 = vunpack.c.l.b16 %v922
        %v4368 = vunpack.c.l.b16 %v923
        %v4369 = vunpack.c.l.b16 %v924
        %v4370 = vunpack.c.l.b16 %v925
        %v4371 = vunpack.c.l.b16 %v926
        %v4372 = vunpack.c.l.b16 %v927
        %v4373 = vunpack.c.l.b16 %v928
        %v4374 = vunpack.c.l.b16 %v929
        %v4375 = vunpack.c.l.b16 %v930
        %v4376 = vunpack.c.l.b16 %v931
        %v4377 = vunpack.c.l.b16 %v932
        %v4378 = vunpack.c.l.b16 %v933
        %v4379 = vunpack.c.l.b16 %v934
        %v4380 = vunpack.c.l.b16 %v935
        %v4381 = vunpack.c.l.b16 %v936
        %v4382 = vunpack.c.l.b16 %v937
        %v4383 = vunpack.c.l.b16 %v938
        %v4384 = vunpack.c.l.b16 %v939
        %v4385 = vunpack.c.l.b16 %v940
        %v4386 = vunpack.c.l.b16 %v941
        %v4387 = vunpack.c.l.b16 %v942
        %v4388 = vunpack.c.l.b16 %v943
        %v4389 = vunpack.c.l.b16 %v944
        %v4390 = vunpack.c.l.b16 %v945
        %v4391 = vunpack.c.l.b16 %v946
        %v4392 = vunpack.c.l.b16 %v947
        %v4393 = vunpack.c.l.b16 %v948
        %v4394 = vunpack.c.l.b16 %v949
        %v4395 = vunpack.c.l.b16 %v950
        %v4396 = vunpack.c.l.b16 %v951
        %v4397 = vunpack.c.l.b16 %v952
        %v4398 = vunpack.c.l.b16 %v953
        %v4399 = vunpack.c.l.b16 %v954
        %v4400 = vunpack.c.l.b16 %v955
        %v4401 = vunpack.c.l.b16 %v956
        %v4402 = vunpack.c.l.b16 %v957
        %v4403 = vunpack.c.l.b16 %v958
        %v4404 = vunpack.c.l.b16 %v959
        %v4405 = vunpack.c.l.b16 %v960
        %v4406 = vunpack.c.l.b16 %v961
        %v4407 = vunpack.c.l.b16 %v962
        %v4408 = vunpack.c.l.b16 %v963
        %v4409 = vunpack.c.l.b16 %v964
        %v4410 = vunpack.c.l.b16 %v965
        %v4411 = vunpack.c.l.b16 %v966
        %v4412 = vunpack.c.l.b16 %v967
        %v4413 = vunpack.c.l.b16 %v968
        %v4414 = vunpack.c.l.b16 %v969
        %v4415 = vunpack.c.l.b16 %v970
        %v4416 = vunpack.c.l.b16 %v971
        %v4417 = vunpack.c.l.b16 %v972
        %v4418 = vunpack.c.l.b16 %v973
        %v4419 = vunpack.c.l.b16 %v974
        %v4420 = vunpack.c.l.b16 %v975
        %v4421 = vunpack.c.l.b16 %v976
        %v4422 = vunpack.c.l.b16 %v977
        %v4423 = vunpack.c.l.b16 %v978
        %v4424 = vunpack.c.l.b16 %v979
        %v4425 = vunpack.c.l.b16 %v980
        %v4426 = vunpack.c.l.b16 %v981
        %v4427 = vunpack.c.l.b16 %v982
        %v4428 = vunpack.c.l.b16 %v983
        %v4429 = vunpack.c.l.b16 %v984
        %v4430 = vunpack.c.l.b16 %v985
        %v4431 = vunpack.c.l.b16 %v986
        %v4432 = vunpack.c.l.b16 %v987
        %v4433 = vunpack.c.l.b16 %v988
        %v4434 = vunpack.c.l.b16 %v989
        %v4435 = vunpack.c.l.b16 %v990
        %v4436 = vunpack.c.l.b16 %v991
        %v4437 = vunpack.c.l.b16 %v992
        %v4438 = vunpack.c.l.b16 %v993
        %v4439 = vunpack.c.l.b16 %v994
        %v4440 = vunpack.c.l.b16 %v995
        %v4441 = vunpack.c.l.b16 %v996
        %v4442 = vunpack.c.l.b16 %v997
        %v4443 = vunpack.c.l.b16 %v998
        %v4444 = vunpack.c.l.b16 %v999
        %v4445 = vunpack.c.l.b16 %v1000
        %v4446 = vunpack.c.l.b16 %v1001
        %v4447 = vunpack.c.l.b16 %v1002
        %v4448 = vunpack.c.l.b16 %v1003
        %v4449 = vunpack.c.l.b16 %v1004
        %v4450 = vunpack.c.l.b16 %v1005
        %v4451 = vunpack.c.l.b16 %v1006
        %v4452 = vunpack.c.l.b16 %v1007
        %v4453 = vunpack.c.l.b16 %v1008
        %v4454 = vunpack.c.l.b16 %v1009
        %v4455 = vunpack.c.l.b16 %v1010
        %v4456 = vunpack.c.l.b16 %v1011
        %v4457 = vunpack.c.l.b16 %v1012
        %v4458 = vunpack.c.l.b16 %v1013
        %v4459 = vunpack.c.l.b16 %v1014
        %v4460 = vunpack.c.l.b16 %v1015
        %v4461 = vunpack.c.l.b16 %v1016
        %v4462 = vunpack.c.l.b16 %v1017
        %v4463 = vunpack.c.l.b16 %v1018
        %v4464 = vunpack.c.l.b16 %v1019
        %v4465 = vunpack.c.l.b16 %v1020
        %v4466 = vunpack.c.l.b16 %v1021
        %v4467 = vunpack.c.l.b16 %v1022
        %v4468 = vunpack.c.l.b16 %v1023
        %v4469 = vunpack.c.l.b16 %v1024
        %v4470 = vunpack.c.l.b16 %v1025
        %v4471 = vunpack.c.l.b16 %v1026
        %v4472 = vunpack.c.l.b16 %v1027
        %v4473 = vunpack.c.l.b16 %v1028
        %v4474 = vunpack.c.l.b16 %v1029
        %v4475 = vunpack.c.l.b16 %v1030
        %v4476 = vunpack.c.l.b16 %v1031
        %v4477 = vunpack.c.l.b16 %v1032
        %v4478 = vunpack.c.l.b16 %v1033
        %v4479 = vunpack.c.l.b16 %v1034
        %v4480 = vunpack.c.l.b16 %v1035
        %v4481 = vunpack.c.l.b16 %v1036
        %v4482 = vunpack.c.l.b16 %v1037
        %v4483 = vunpack.c.l.b16 %v1038
        %v4484 = vunpack.c.l.b16 %v1039
        %v4485 = vunpack.c.l.b16 %v1040
        %v4486 = vunpack.c.l.b16 %v1041
        %v4487 = vunpack.c.l.b16 %v1042
        %v4488 = vunpack.c.l.b16 %v1043
        %v4489 = vunpack.c.l.b16 %v1044
        %v4490 = vunpack.c.l.b16 %v1045
        %v4491 = vunpack.c.l.b16 %v1046
        %v4492 = vunpack.c.l.b16 %v1047
        %v4493 = vunpack.c.l.b16 %v1048
        %v4494 = vunpack.c.l.b16 %v1049
        %v4495 = vunpack.c.l.b16 %v1050
        %v4496 = vunpack.c.l.b16 %v1051
        %v4497 = vunpack.c.l.b16 %v1052
        %v4498 = vunpack.c.l.b16 %v1053
        %v4499 = vunpack.c.l.b16 %v1054
        %v4500 = vunpack.c.l.b16 %v1055
        %v4501 = vunpack.c.l.b16 %v1056
        %v4502 = vunpack.c.l.b16 %v1057
        %v4503 = vunpack.c.l.b16 %v1058
        %v4504 = vunpack.c.l.b16 %v1059
        %v4505 = vunpack.c.l.b16 %v1060
        %v4506 = vunpack.c.l.b16 %v1061
        %v4507 = vunpack.c.l.b16 %v1062
        %v4508 = vunpack.c.l.b16 %v1063
        %v4509 = vunpack.c.l.b16 %v1064
        %v4510 = vunpack.c.l.b16 %v1065
        %v4511 = vunpack.c.l.b16 %v1066
        %v4512 = vunpack.c.l.b16 %v1067
        %v4513 = vunpack.c.l.b16 %v1068
        %v4514 = vunpack.c.l.b16 %v1069
        %v4515 = vunpack.c.l.b16 %v1070
        %v4516 = vunpack.c.l.b16 %v1071
        %v4517 = vunpack.c.l.b16 %v1072
        %v4518 = vunpack.c.l.b16 %v1073
        %v4519 = vunpack.c.l.b16 %v1074
        %v4520 = vunpack.c.l.b16 %v1075
        %v4521 = vunpack.c.l.b16 %v1076
        %v4522 = vunpack.c.l.b16 %v1077
        %v4523 = vunpack.c.l.b16 %v1078
        %v4524 = vunpack.c.l.b16 %v1079
        %v4525 = vunpack.c.l.b16 %v1080
        %v4526 = vunpack.c.l.b16 %v1081
        %v4527 = vunpack.c.l.b16 %v1082
        %v4528 = vunpack.c.l.b16 %v1083
        %v4529 = vunpack.c.l.b16 %v1084
        %v4530 = vunpack.c.l.b16 %v1085
        %v4531 = vunpack.c.l.b16 %v1086
        %v4532 = vunpack.c.l.b16 %v1087
        %v4533 = vunpack.c.l.b16 %v1088
        %v4534 = vunpack.c.l.b16 %v1089
        %v4535 = vunpack.c.l.b16 %v1090
        %v4536 = vunpack.c.l.b16 %v1091
        %v4537 = vunpack.c.l.b16 %v1092
        %v4538 = vunpack.c.l.b16 %v1093
        %v4539 = vunpack.c.l.b16 %v1094
        %v4540 = vunpack.c.l.b16 %v1095
        %v4541 = vunpack.c.l.b16 %v1096
        %v4542 = vunpack.c.l.b16 %v1097
        %v4543 = vunpack.c.l.b16 %v1098
        %v4544 = vunpack.c.l.b16 %v1099
        %v4545 = vunpack.c.l.b16 %v1100
        %v4546 = vunpack.c.l.b16 %v1101
        %v4547 = vunpack.c.l.b16 %v1102
        %v4548 = vunpack.c.l.b16 %v1103
        %v4549 = vunpack.c.l.b16 %v1104
        %v4550 = vunpack.c.l.b16 %v1105
        %v4551 = vunpack.c.l.b16 %v1106
        %v4552 = vunpack.c.l.b16 %v1107
        %v4553 = vunpack.c.l.b16 %v1108
        %v4554 = vunpack.c.l.b16 %v1109
        %v4555 = vunpack.c.l.b16 %v1110
        %v4556 = vunpack.c.l.b16 %v1111
        %v4557 = vunpack.c.l.b16 %v1112
        %v4558 = vunpack.c.l.b16 %v1113
        %v4559 = vunpack.c.l.b16 %v1114
        %v4560 = vunpack.c.l.b16 %v1115
        %v4561 = vunpack.c.l.b16 %v1116
        %v4562 = vunpack.c.l.b16 %v1117
        %v4563 = vunpack.c.l.b16 %v1118
        %v4564 = vunpack.c.l.b16 %v1119
        %v4565 = vunpack.c.l.b16 %v1120
        %v4566 = vunpack.c.l.b16 %v1121
        %v4567 = vunpack.c.l.b16 %v1122
        %v4568 = vunpack.c.l.b16 %v1123
        %v4569 = vunpack.c.l.b16 %v1124
        %v4570 = vunpack.c.l.b16 %v1125
        %v4571 = vunpack.c.l.b16 %v1126
        %v4572 = vunpack.c.l.b16 %v1127
        %v4573 = vunpack.c.l.b16 %v1128
        %v4574 = vunpack.c.l.b16 %v1129
        %v4575 = vunpack.c.l.b16 %v1130
        %v4576 = vunpack.c.l.b16 %v1131
        %v4577 = vunpack.c.l.b16 %v1132
        %v4578 = vunpack.c.l.b16 %v1133
        %v4579 = vunpack.c.l.b16 %v1134
        %v4580 = vunpack.c.l.b16 %v1135
        %v4581 = vunpack.c.l.b16 %v1136
        %v4582 = vunpack.c.l.b16 %v1137
        %v4583 = vunpack.c.l.b16 %v1138
        %v4584 = vunpack.c.l.b16 %v1139
        %v4585 = vunpack.c.l.b16 %v1140
        %v4586 = vunpack.c.l.b16 %v1141
        %v4587 = vunpack.c.l.b16 %v1142
        %v4588 = vunpack.c.l.b16 %v1143
        %v4589 = vunpack.c.l.b16 %v1144
        %v4590 = vunpack.c.l.b16 %v1145
        %v4591 = vunpack.c.l.b16 %v1146
        %v4592 = vunpack.c.l.b16 %v1147
        %v4593 = vunpack.c.l.b16 %v1148
        %v4594 = vunpack.c.l.b16 %v1149
        %v4595 = vunpack.c.l.b16 %v1150
        %v4596 = vunpack.c.l.b16 %v1151
        %v4597 = vunpack.c.l.b16 %v1152
        %v4598 = vunpack.c.l.b16 %v1153
        %v4599 = vunpack.c.l.b16 %v1154
        %v4600 = vunpack.c.l.b16 %v1155
        %v4601 = vunpack.c.l.b16 %v1156
        %v4602 = vunpack.c.l.b16 %v1157
        %v4603 = vunpack.c.l.b16 %v1158
        %v4604 = vunpack.c.l.b16 %v1159
        %v4605 = vunpack.c.l.b16 %v1160
        %v4606 = vunpack.c.l.b16 %v1161
        %v4607 = vunpack.c.l.b16 %v1162
        %v4608 = vunpack.c.l.b16 %v1163
        %v4609 = vunpack.c.l.b16 %v1164
        %v4610 = vunpack.c.l.b16 %v1165
        %v4611 = vunpack.c.l.b16 %v1166
        %v4612 = vunpack.c.l.b16 %v1167
        %v4613 = vunpack.c.l.b16 %v1168
        %v4614 = vunpack.c.l.b16 %v1169
        %v4615 = vunpack.c.l.b16 %v1170
        %v4616 = vunpack.c.l.b16 %v1171
        %v4617 = vunpack.c.l.b16 %v1172
        %v4618 = vunpack.c.l.b16 %v1173
        %v4619 = vunpack.c.l.b16 %v1174
        %v4620 = vunpack.c.l.b16 %v1175
        %v4621 = vunpack.c.l.b16 %v1176
        %v4622 = vunpack.c.l.b16 %v1177
        %v4623 = vunpack.c.l.b16 %v1178
        %v4624 = vunpack.c.l.b16 %v1179
        %v4625 = vunpack.c.l.b16 %v1180
        %v4626 = vunpack.c.l.b16 %v1181
        %v4627 = vunpack.c.l.b16 %v1182
        %v4628 = vunpack.c.l.b16 %v1183
        %v4629 = vunpack.c.l.b16 %v1184
        %v4630 = vunpack.c.l.b16 %v1185
        %v4631 = vunpack.c.l.b16 %v1186
        %v4632 = vunpack.c.l.b16 %v1187
        %v4633 = vunpack.c.l.b16 %v1188
        %v4634 = vunpack.c.l.b16 %v1189
        %v4635 = vunpack.c.l.b16 %v1190
        %v4636 = vunpack.c.l.b16 %v1191
        %v4637 = vunpack.c.l.b16 %v1192
        %v4638 = vunpack.c.l.b16 %v1193
        %v4639 = vunpack.c.l.b16 %v1194
        %v4640 = vunpack.c.l.b16 %v1195
        %v4641 = vunpack.c.l.b16 %v1196
        %v4642 = vunpack.c.l.b16 %v1197
        %v4643 = vunpack.c.l.b16 %v1198
        %v4644 = vunpack.c.l.b16 %v1199
        %v4645 = vunpack.c.l.b16 %v1200
        %v4646 = vunpack.c.l.b16 %v1201
        %v4647 = vunpack.c.l.b16 %v1202
        %v4648 = vunpack.c.l.b16 %v1203
        %v4649 = vunpack.c.l.b16 %v1204
        %v4650 = vunpack.c.l.b16 %v1205
        %v4651 = vunpack.c.l.b16 %v1206
        %v4652 = vunpack.c.l.b16 %v1207
        %v4653 = vunpack.c.l.b16 %v1208
        %v4654 = vunpack.c.l.b16 %v1209
        %v4655 = vunpack.c.l.b16 %v1210
        %v4656 = vunpack.c.l.b16 %v1211
        %v4657 = vunpack.c.l.b16 %v1212
        %v4658 = vunpack.c.l.b16 %v1213
        %v4659 = vunpack.c.l.b16 %v1214
        %v4660 = vunpack.c.l.b16 %v1215
        %v4661 = vunpack.c.l.b16 %v1216
        %v4662 = vunpack.c.l.b16 %v1217
        %v4663 = vunpack.c.l.b16 %v1218
        %v4664 = vunpack.c.l.b16 %v1219
        %v4665 = vunpack.c.l.b16 %v1220
        %v4666 = vunpack.c.l.b16 %v1221
        %v4667 = vunpack.c.l.b16 %v1222
        %v4668 = vunpack.c.l.b16 %v1223
        %v4669 = vunpack.c.l.b16 %v1224
        %v4670 = vunpack.c.l.b16 %v1225
        %v4671 = vunpack.c.l.b16 %v1226
        %v4672 = vunpack.c.l.b16 %v1227
        %v4673 = vunpack.c.l.b16 %v1228
        %v4674 = vunpack.c.l.b16 %v1229
        %v4675 = vunpack.c.l.b16 %v1230
        %v4676 = vunpack.c.l.b16 %v1231
        %v4677 = vunpack.c.l.b16 %v1232
        %v4678 = vunpack.c.l.b16 %v1233
        %v4679 = vunpack.c.l.b16 %v1234
        %v4680 = vunpack.c.l.b16 %v1235
        %v4681 = vunpack.c.l.b16 %v1236
        %v4682 = vunpack.c.l.b16 %v1237
        %v4683 = vunpack.c.l.b16 %v1238
        %v4684 = vunpack.c.l.b16 %v1239
        %v4685 = vunpack.c.l.b16 %v1240
        %v4686 = vunpack.c.l.b16 %v1241
        %v4687 = vunpack.c.l.b16 %v1242
        %v4688 = vunpack.c.l.b16 %v1243
        %v4689 = vunpack.c.l.b16 %v1244
        %v4690 = vunpack.c.l.b16 %v1245
        %v4691 = vunpack.c.l.b16 %v1246
        %v4692 = vunpack.c.l.b16 %v1247
        %v4693 = vunpack.c.l.b16 %v1248
        %v4694 = vunpack.c.l.b16 %v1249
        %v4695 = vunpack.c.l.b16 %v1250
        %v4696 = vunpack.c.l.b16 %v1251
        %v4697 = vunpack.c.l.b16 %v1252
        %v4698 = vunpack.c.l.b16 %v1253
        %v4699 = vunpack.c.l.b16 %v1254
        %v4700 = vunpack.c.l.b16 %v1255
        %v4701 = vunpack.c.l.b16 %v1256
        %v4702 = vunpack.c.l.b16 %v1257
        %v4703 = vunpack.c.l.b16 %v1258
        %v4704 = vunpack.c.l.b16 %v1259
        %v4705 = vunpack.c.l.b16 %v1260
        %v4706 = vunpack.c.l.b16 %v1261
        %v4707 = vunpack.c.l.b16 %v1262
        %v4708 = vunpack.c.l.b16 %v1263
        %v4709 = vunpack.c.l.b16 %v1264
        %v4710 = vunpack.c.l.b16 %v1265
        %v4711 = vunpack.c.l.b16 %v1266
        %v4712 = vunpack.c.l.b16 %v1267
        %v4713 = vunpack.c.l.b16 %v1268
        %v4714 = vunpack.c.l.b16 %v1269
        %v4715 = vunpack.c.l.b16 %v1270
        %v4716 = vunpack.c.l.b16 %v1271
        %v4717 = vunpack.c.l.b16 %v1272
        %v4718 = vunpack.c.l.b16 %v1273
        %v4719 = vunpack.c.l.b16 %v1274
        %v4720 = vunpack.c.l.b16 %v1275
        %v4721 = vunpack.c.l.b16 %v1276
        %v4722 = vunpack.c.l.b16 %v1277
        %v4723 = vunpack.c.l.b16 %v1278
        %v4724 = vpack.c.b16 %v4149, %v4148
        %v4725 = vpack.c.b16 %v4151, %v4150
        %v4726 = vpack.c.b16 %v4153, %v4152
        %v4727 = vpack.c.b16 %v4155, %v4154
        %v4728 = vpack.c.b16 %v4157, %v4156
        %v4729 = vpack.c.b16 %v4159, %v4158
        %v4730 = vpack.c.b16 %v4161, %v4160
        %v4731 = vpack.c.b16 %v4163, %v4162
        %v4732 = vpack.c.b16 %v4165, %v4164
        %v4733 = vpack.c.b16 %v4167, %v4166
        %v4734 = vpack.c.b16 %v4169, %v4168
        %v4735 = vpack.c.b16 %v4171, %v4170
        %v4736 = vpack.c.b16 %v4173, %v4172
        %v4737 = vpack.c.b16 %v4175, %v4174
        %v4738 = vpack.c.b16 %v4177, %v4176
        %v4739 = vpack.c.b16 %v4179, %v4178
        %v4740 = vpack.c.b16 %v4181, %v4180
        %v4741 = vpack.c.b16 %v4183, %v4182
        %v4742 = vpack.c.b16 %v4185, %v4184
        %v4743 = vpack.c.b16 %v4187, %v4186
        %v4744 = vpack.c.b16 %v4189, %v4188
        %v4745 = vpack.c.b16 %v4191, %v4190
        %v4746 = vpack.c.b16 %v4193, %v4192
        %v4747 = vpack.c.b16 %v4195, %v4194
        %v4748 = vpack.c.b16 %v4197, %v4196
        %v4749 = vpack.c.b16 %v4199, %v4198
        %v4750 = vpack.c.b16 %v4201, %v4200
        %v4751 = vpack.c.b16 %v4203, %v4202
        %v4752 = vpack.c.b16 %v4205, %v4204
        %v4753 = vpack.c.b16 %v4207, %v4206
        %v4754 = vpack.c.b16 %v4209, %v4208
        %v4755 = vpack.c.b16 %v4211, %v4210
        %v4756 = vpack.c.b16 %v4213, %v4212
        %v4757 = vpack.c.b16 %v4215, %v4214
        %v4758 = vpack.c.b16 %v4217, %v4216
        %v4759 = vpack.c.b16 %v4219, %v4218
        %v4760 = vpack.c.b16 %v4221, %v4220
        %v4761 = vpack.c.b16 %v4223, %v4222
        %v4762 = vpack.c.b16 %v4225, %v4224
        %v4763 = vpack.c.b16 %v4227, %v4226
        %v4764 = vpack.c.b16 %v4229, %v4228
        %v4765 = vpack.c.b16 %v4231, %v4230
        %v4766 = vpack.c.b16 %v4233, %v4232
        %v4767 = vpack.c.b16 %v4235, %v4234
        %v4768 = vpack.c.b16 %v4237, %v4236
        %v4769 = vpack.c.b16 %v4239, %v4238
        %v4770 = vpack.c.b16 %v4241, %v4240
        %v4771 = vpack.c.b16 %v4243, %v4242
        %v4772 = vpack.c.b16 %v4245, %v4244
        %v4773 = vpack.c.b16 %v4247, %v4246
        %v4774 = vpack.c.b16 %v4249, %v4248
        %v4775 = vpack.c.b16 %v4251, %v4250
        %v4776 = vpack.c.b16 %v4253, %v4252
        %v4777 = vpack.c.b16 %v4255, %v4254
        %v4778 = vpack.c.b16 %v4257, %v4256
        %v4779 = vpack.c.b16 %v4259, %v4258
        %v4780 = vpack.c.b16 %v4261, %v4260
        %v4781 = vpack.c.b16 %v4263, %v4262
        %v4782 = vpack.c.b16 %v4265, %v4264
        %v4783 = vpack.c.b16 %v4267, %v4266
        %v4784 = vpack.c.b16 %v4269, %v4268
        %v4785 = vpack.c.b16 %v4271, %v4270
        %v4786 = vpack.c.b16 %v4273, %v4272
        %v4787 = vpack.c.b16 %v4275, %v4274
        %v4788 = vpack.c.b16 %v4277, %v4276
        %v4789 = vpack.c.b16 %v4279, %v4278
        %v4790 = vpack.c.b16 %v4281, %v4280
        %v4791 = vpack.c.b16 %v4283, %v4282
        %v4792 = vpack.c.b16 %v4285, %v4284
        %v4793 = vpack.c.b16 %v4287, %v4286
        %v4794 = vpack.c.b16 %v4289, %v4288
        %v4795 = vpack.c.b16 %v4291, %v4290
        %v4796 = vpack.c.b16 %v4293, %v4292
        %v4797 = vpack.c.b16 %v4295, %v4294
        %v4798 = vpack.c.b16 %v4297, %v4296
        %v4799 = vpack.c.b16 %v4299, %v4298
        %v4800 = vpack.c.b16 %v4301, %v4300
        %v4801 = vpack.c.b16 %v4303, %v4302
        %v4802 = vpack.c.b16 %v4305, %v4304
        %v4803 = vpack.c.b16 %v4307, %v4306
        %v4804 = vpack.c.b16 %v4309, %v4308
        %v4805 = vpack.c.b16 %v4311, %v4310
        %v4806 = vpack.c.b16 %v4313, %v4312
        %v4807 = vpack.c.b16 %v4315, %v4314
        %v4808 = vpack.c.b16 %v4317, %v4316
        %v4809 = vpack.c.b16 %v4319, %v4318
        %v4810 = vpack.c.b16 %v4321, %v4320
        %v4811 = vpack.c.b16 %v4323, %v4322
        %v4812 = vpack.c.b16 %v4325, %v4324
        %v4813 = vpack.c.b16 %v4327, %v4326
        %v4814 = vpack.c.b16 %v4329, %v4328
        %v4815 = vpack.c.b16 %v4331, %v4330
        %v4816 = vpack.c.b16 %v4333, %v4332
        %v4817 = vpack.c.b16 %v4335, %v4334
        %v4818 = vpack.c.b16 %v4337, %v4336
        %v4819 = vpack.c.b16 %v4339, %v4338
        %v4820 = vpack.c.b16 %v4341, %v4340
        %v4821 = vpack.c.b16 %v4343, %v4342
        %v4822 = vpack.c.b16 %v4345, %v4344
        %v4823 = vpack.c.b16 %v4347, %v4346
        %v4824 = vpack.c.b16 %v4349, %v4348
        %v4825 = vpack.c.b16 %v4351, %v4350
        %v4826 = vpack.c.b16 %v4353, %v4352
        %v4827 = vpack.c.b16 %v4355, %v4354
        %v4828 = vpack.c.b16 %v4357, %v4356
        %v4829 = vpack.c.b16 %v4359, %v4358
        %v4830 = vpack.c.b16 %v4361, %v4360
        %v4831 = vpack.c.b16 %v4363, %v4362
        %v4832 = vpack.c.b16 %v4365, %v4364
        %v4833 = vpack.c.b16 %v4367, %v4366
        %v4834 = vpack.c.b16 %v4369, %v4368
        %v4835 = vpack.c.b16 %v4371, %v4370
        %v4836 = vpack.c.b16 %v4373, %v4372
        %v4837 = vpack.c.b16 %v4375, %v4374
        %v4838 = vpack.c.b16 %v4377, %v4376
        %v4839 = vpack.c.b16 %v4379, %v4378
        %v4840 = vpack.c.b16 %v4381, %v4380
        %v4841 = vpack.c.b16 %v4383, %v4382
        %v4842 = vpack.c.b16 %v4385, %v4384
        %v4843 = vpack.c.b16 %v4387, %v4386
        %v4844 = vpack.c.b16 %v4389, %v4388
        %v4845 = vpack.c.b16 %v4391, %v4390
        %v4846 = vpack.c.b16 %v4393, %v4392
        %v4847 = vpack.c.b16 %v4395, %v4394
        %v4848 = vpack.c.b16 %v4397, %v4396
        %v4849 = vpack.c.b16 %v4399, %v4398
        %v4850 = vpack.c.b16 %v4401, %v4400
        %v4851 = vpack.c.b16 %v4403, %v4402
        %v4852 = vpack.c.b16 %v4405, %v4404
        %v4853 = vpack.c.b16 %v4407, %v4406
        %v4854 = vpack.c.b16 %v4409, %v4408
        %v4855 = vpack.c.b16 %v4411, %v4410
        %v4856 = vpack.c.b16 %v4413, %v4412
        %v4857 = vpack.c.b16 %v4415, %v4414
        %v4858 = vpack.c.b16 %v4417, %v4416
        %v4859 = vpack.c.b16 %v4419, %v4418
        %v4860 = vpack.c.b16 %v4421, %v4420
        %v4861 = vpack.c.b16 %v4423, %v4422
        %v4862 = vpack.c.b16 %v4425, %v4424
        %v4863 = vpack.c.b16 %v4427, %v4426
        %v4864 = vpack.c.b16 %v4429, %v4428
        %v4865 = vpack.c.b16 %v4431, %v4430
        %v4866 = vpack.c.b16 %v4433, %v4432
        %v4867 = vpack.c.b16 %v4435, %v4434
        %v4868 = vpack.c.b16 %v4437, %v4436
        %v4869 = vpack.c.b16 %v4439, %v4438
        %v4870 = vpack.c.b16 %v4441, %v4440
        %v4871 = vpack.c.b16 %v4443, %v4442
        %v4872 = vpack.c.b16 %v4445, %v4444
        %v4873 = vpack.c.b16 %v4447, %v4446
        %v4874 = vpack.c.b16 %v4449, %v4448
        %v4875 = vpack.c.b16 %v4451, %v4450
        %v4876 = vpack.c.b16 %v4453, %v4452
        %v4877 = vpack.c.b16 %v4455, %v4454
        %v4878 = vpack.c.b16 %v4457, %v4456
        %v4879 = vpack.c.b16 %v4459, %v4458
        %v4880 = vpack.c.b16 %v4461, %v4460
        %v4881 = vpack.c.b16 %v4463, %v4462
        %v4882 = vpack.c.b16 %v4465, %v4464
        %v4883 = vpack.c.b16 %v4467, %v4466
        %v4884 = vpack.c.b16 %v4469, %v4468
        %v4885 = vpack.c.b16 %v4471, %v4470
        %v4886 = vpack.c.b16 %v4473, %v4472
        %v4887 = vpack.c.b16 %v4475, %v4474
        %v4888 = vpack.c.b16 %v4477, %v4476
        %v4889 = vpack.c.b16 %v4479, %v4478
        %v4890 = vpack.c.b16 %v4481, %v4480
        %v4891 = vpack.c.b16 %v4483, %v4482
        %v4892 = vpack.c.b16 %v4485, %v4484
        %v4893 = vpack.c.b16 %v4487, %v4486
        %v4894 = vpack.c.b16 %v4489, %v4488
        %v4895 = vpack.c.b16 %v4491, %v4490
        %v4896 = vpack.c.b16 %v4493, %v4492
        %v4897 = vpack.c.b16 %v4495, %v4494
        %v4898 = vpack.c.b16 %v4497, %v4496
        %v4899 = vpack.c.b16 %v4499, %v4498
        %v4900 = vpack.c.b16 %v4501, %v4500
        %v4901 = vpack.c.b16 %v4503, %v4502
        %v4902 = vpack.c.b16 %v4505, %v4504
        %v4903 = vpack.c.b16 %v4507, %v4506
        %v4904 = vpack.c.b16 %v4509, %v4508
        %v4905 = vpack.c.b16 %v4511, %v4510
        %v4906 = vpack.c.b16 %v4513, %v4512
        %v4907 = vpack.c.b16 %v4515, %v4514
        %v4908 = vpack.c.b16 %v4517, %v4516
        %v4909 = vpack.c.b16 %v4519, %v4518
        %v4910 = vpack.c.b16 %v4521, %v4520
        %v4911 = vpack.c.b16 %v4523, %v4522
        %v4912 = vpack.c.b16 %v4525, %v4524
        %v4913 = vpack.c.b16 %v4527, %v4526
        %v4914 = vpack.c.b16 %v4529, %v4528
        %v4915 = vpack.c.b16 %v4531, %v4530
        %v4916 = vpack.c.b16 %v4533, %v4532
        %v4917 = vpack.c.b16 %v4535, %v4534
        %v4918 = vpack.c.b16 %v4537, %v4536
        %v4919 = vpack.c.b16 %v4539, %v4538
        %v4920 = vpack.c.b16 %v4541, %v4540
        %v4921 = vpack.c.b16 %v4543, %v4542
        %v4922 = vpack.c.b16 %v4545, %v4544
        %v4923 = vpack.c.b16 %v4547, %v4546
        %v4924 = vpack.c.b16 %v4549, %v4548
        %v4925 = vpack.c.b16 %v4551, %v4550
        %v4926 = vpack.c.b16 %v4553, %v4552
        %v4927 = vpack.c.b16 %v4555, %v4554
        %v4928 = vpack.c.b16 %v4557, %v4556
        %v4929 = vpack.c.b16 %v4559, %v4558
        %v4930 = vpack.c.b16 %v4561, %v4560
        %v4931 = vpack.c.b16 %v4563, %v4562
        %v4932 = vpack.c.b16 %v4565, %v4564
        %v4933 = vpack.c.b16 %v4567, %v4566
        %v4934 = vpack.c.b16 %v4569, %v4568
        %v4935 = vpack.c.b16 %v4571, %v4570
        %v4936 = vpack.c.b16 %v4573, %v4572
        %v4937 = vpack.c.b16 %v4575, %v4574
        %v4938 = vpack.c.b16 %v4577, %v4576
        %v4939 = vpack.c.b16 %v4579, %v4578
        %v4940 = vpack.c.b16 %v4581, %v4580
        %v4941 = vpack.c.b16 %v4583, %v4582
        %v4942 = vpack.c.b16 %v4585, %v4584
        %v4943 = vpack.c.b16 %v4587, %v4586
        %v4944 = vpack.c.b16 %v4589, %v4588
        %v4945 = vpack.c.b16 %v4591, %v4590
        %v4946 = vpack.c.b16 %v4593, %v4592
        %v4947 = vpack.c.b16 %v4595, %v4594
        %v4948 = vpack.c.b16 %v4597, %v4596
        %v4949 = vpack.c.b16 %v4599, %v4598
        %v4950 = vpack.c.b16 %v4601, %v4600
        %v4951 = vpack.c.b16 %v4603, %v4602
        %v4952 = vpack.c.b16 %v4605, %v4604
        %v4953 = vpack.c.b16 %v4607, %v4606
        %v4954 = vpack.c.b16 %v4609, %v4608
        %v4955 = vpack.c.b16 %v4611, %v4610
        %v4956 = vpack.c.b16 %v4613, %v4612
        %v4957 = vpack.c.b16 %v4615, %v4614
        %v4958 = vpack.c.b16 %v4617, %v4616
        %v4959 = vpack.c.b16 %v4619, %v4618
        %v4960 = vpack.c.b16 %v4621, %v4620
        %v4961 = vpack.c.b16 %v4623, %v4622
        %v4962 = vpack.c.b16 %v4625, %v4624
        %v4963 = vpack.c.b16 %v4627, %v4626
        %v4964 = vpack.c.b16 %v4629, %v4628
        %v4965 = vpack.c.b16 %v4631, %v4630
        %v4966 = vpack.c.b16 %v4633, %v4632
        %v4967 = vpack.c.b16 %v4635, %v4634
        %v4968 = vpack.c.b16 %v4637, %v4636
        %v4969 = vpack.c.b16 %v4639, %v4638
        %v4970 = vpack.c.b16 %v4641, %v4640
        %v4971 = vpack.c.b16 %v4643, %v4642
        %v4972 = vpack.c.b16 %v4645, %v4644
        %v4973 = vpack.c.b16 %v4647, %v4646
        %v4974 = vpack.c.b16 %v4649, %v4648
        %v4975 = vpack.c.b16 %v4651, %v4650
        %v4976 = vpack.c.b16 %v4653, %v4652
        %v4977 = vpack.c.b16 %v4655, %v4654
        %v4978 = vpack.c.b16 %v4657, %v4656
        %v4979 = vpack.c.b16 %v4659, %v4658
        %v4980 = vpack.c.b16 %v4661, %v4660
        %v4981 = vpack.c.b16 %v4663, %v4662
        %v4982 = vpack.c.b16 %v4665, %v4664
        %v4983 = vpack.c.b16 %v4667, %v4666
        %v4984 = vpack.c.b16 %v4669, %v4668
        %v4985 = vpack.c.b16 %v4671, %v4670
        %v4986 = vpack.c.b16 %v4673, %v4672
        %v4987 = vpack.c.b16 %v4675, %v4674
        %v4988 = vpack.c.b16 %v4677, %v4676
        %v4989 = vpack.c.b16 %v4679, %v4678
        %v4990 = vpack.c.b16 %v4681, %v4680
        %v4991 = vpack.c.b16 %v4683, %v4682
        %v4992 = vpack.c.b16 %v4685, %v4684
        %v4993 = vpack.c.b16 %v4687, %v4686
        %v4994 = vpack.c.b16 %v4689, %v4688
        %v4995 = vpack.c.b16 %v4691, %v4690
        %v4996 = vpack.c.b16 %v4693, %v4692
        %v4997 = vpack.c.b16 %v4695, %v4694
        %v4998 = vpack.c.b16 %v4697, %v4696
        %v4999 = vpack.c.b16 %v4699, %v4698
        %v5000 = vpack.c.b16 %v4701, %v4700
        %v5001 = vpack.c.b16 %v4703, %v4702
        %v5002 = vpack.c.b16 %v4705, %v4704
        %v5003 = vpack.c.b16 %v4707, %v4706
        %v5004 = vpack.c.b16 %v4709, %v4708
        %v5005 = vpack.c.b16 %v4711, %v4710
        %v5006 = vpack.c.b16 %v4713, %v4712
        %v5007 = vpack.c.b16 %v4715, %v4714
        %v5008 = vpack.c.b16 %v4717, %v4716
        %v5009 = vpack.c.b16 %v4719, %v4718
        %v5010 = vpack.c.b16 %v4721, %v4720
        %v5011 = vpack.c.b16 %v4723, %v4722
        %5300 = vmatprep.subr.bf16.mxu0 0
        %5301 = vmatpush1.bf16.msra.mxu0 %v4724
        %5302 = vmatprep.subr.bf16.mxu0 0
        %5303 = vmatpush1.bf16.msra.mxu0 %v4725
        %5304 = vmatprep.subr.bf16.mxu0 0
        %5305 = vmatpush1.bf16.msra.mxu0 %v4726
        %5306 = vmatprep.subr.bf16.mxu0 0
        %5307 = vmatpush1.bf16.msra.mxu0 %v4727
        %5308 = vmatprep.subr.bf16.mxu0 0
        %5309 = vmatpush1.bf16.msra.mxu0 %v4728
        %5310 = vmatprep.subr.bf16.mxu0 0
        %5311 = vmatpush1.bf16.msra.mxu0 %v4729
        %5312 = vmatprep.subr.bf16.mxu0 0
        %5313 = vmatpush1.bf16.msra.mxu0 %v4730
        %5314 = vmatprep.subr.bf16.mxu0 0
        %5315 = vmatpush1.bf16.msra.mxu0 %v4731
        %5316 = vmatprep.subr.bf16.mxu0 0
        %5317 = vmatpush1.bf16.msra.mxu0 %v4732
        %5318 = vmatprep.subr.bf16.mxu0 0
        %5319 = vmatpush1.bf16.msra.mxu0 %v4733
        %5320 = vmatprep.subr.bf16.mxu0 0
        %5321 = vmatpush1.bf16.msra.mxu0 %v4734
        %5322 = vmatprep.subr.bf16.mxu0 0
        %5323 = vmatpush1.bf16.msra.mxu0 %v4735
        %5324 = vmatprep.subr.bf16.mxu0 0
        %5325 = vmatpush1.bf16.msra.mxu0 %v4736
        %5326 = vmatprep.subr.bf16.mxu0 0
        %5327 = vmatpush1.bf16.msra.mxu0 %v4737
        %5328 = vmatprep.subr.bf16.mxu0 0
        %5329 = vmatpush1.bf16.msra.mxu0 %v4738
        %5330 = vmatprep.subr.bf16.mxu0 0
        %5331 = vmatpush1.bf16.msra.mxu0 %v4739
        %5332 = vmatprep.mubr.bf16.mxu0 %v2637
        %5333 = vmatmul.mubr.bf16.gmra.mrb[0].mxu0 %v2636
        %v5334 = vpop.f32.mrb[0].mxu0
        %v5335 = vadd.f32 %v1284, %v5334
        %v5336 = vpop.f32.mrb[0].mxu0
        %v5337 = vpop.f32.mrb[0].mxu0
        %v5338 = vadd.f32 %v1284, %v5337
        %v5339 = vpop.f32.mrb[0].mxu0
        %5340 = vmatprep.mubr.bf16.mxu0 %v2673
        %5341 = vmatmul.mubr.bf16.gmra.mrb[0].mxu0 %v2672
        %v5342 = vpop.f32.mrb[0].mxu0
        %v5343 = vadd.f32 %v1284, %v5342
        %v5344 = vpop.f32.mrb[0].mxu0
        %v5345 = vpop.f32.mrb[0].mxu0
        %v5346 = vadd.f32 %v1284, %v5345
        %v5347 = vpop.f32.mrb[0].mxu0
        %5348 = vmatprep.mubr.bf16.mxu0 %v2709
        %5349 = vmatmul.mubr.bf16.gmra.mrb[0].mxu0 %v2708
        %v5350 = vpop.f32.mrb[0].mxu0
        %v5351 = vadd.f32 %v1284, %v5350
        %v5352 = vpop.f32.mrb[0].mxu0
        %v5353 = vpop.f32.mrb[0].mxu0
        %v5354 = vadd.f32 %v1284, %v5353
        %v5355 = vpop.f32.mrb[0].mxu0
        %5356 = vmatprep.mubr.bf16.mxu0 %v2745
        %5357 = vmatmul.mubr.bf16.gmra.mrb[0].mxu0 %v2744
        %v5358 = vpop.f32.mrb[0].mxu0
        %v5359 = vadd.f32 %v1284, %v5358
        %v5360 = vpop.f32.mrb[0].mxu0
        %v5361 = vpop.f32.mrb[0].mxu0
        %v5362 = vadd.f32 %v1284, %v5361
        %v5363 = vpop.f32.mrb[0].mxu0
        %5364 = vmatprep.mubr.bf16.mxu0 %v2781
        %5365 = vmatmul.mubr.bf16.gmra.mrb[0].mxu0 %v2780
        %v5366 = vpop.f32.mrb[0].mxu0
        %v5367 = vadd.f32 %v1284, %v5366
        %v5368 = vpop.f32.mrb[0].mxu0
        %v5369 = vpop.f32.mrb[0].mxu0
        %v5370 = vadd.f32 %v1284, %v5369
        %v5371 = vpop.f32.mrb[0].mxu0
        %5372 = vmatprep.mubr.bf16.mxu0 %v2817
        %5373 = vmatmul.mubr.bf16.gmra.mrb[0].mxu0 %v2816
        %v5374 = vpop.f32.mrb[0].mxu0
        %v5375 = vadd.f32 %v1284, %v5374
        %v5376 = vpop.f32.mrb[0].mxu0
        %v5377 = vpop.f32.mrb[0].mxu0
        %v5378 = vadd.f32 %v1284, %v5377
        %v5379 = vpop.f32.mrb[0].mxu0
        %5380 = vmatprep.mubr.bf16.mxu0 %v2853
        %5381 = vmatmul.mubr.bf16.gmra.mrb[0].mxu0 %v2852
        %v5382 = vpop.f32.mrb[0].mxu0
        %v5383 = vadd.f32 %v1284, %v5382
        %v5384 = vpop.f32.mrb[0].mxu0
        %v5385 = vpop.f32.mrb[0].mxu0
        %v5386 = vadd.f32 %v1284, %v5385
        %v5387 = vpop.f32.mrb[0].mxu0
        %5388 = vmatprep.mubr.bf16.mxu0 %v2889
        %5389 = vmatmul.mubr.bf16.gmra.mrb[0].mxu0 %v2888
        %v5390 = vpop.f32.mrb[0].mxu0
        %v5391 = vadd.f32 %v1284, %v5390
        %v5392 = vpop.f32.mrb[0].mxu0
        %v5393 = vpop.f32.mrb[0].mxu0
        %v5394 = vadd.f32 %v1284, %v5393
        %v5395 = vpop.f32.mrb[0].mxu0
        %5396 = vmatprep.mubr.bf16.mxu0 %v2925
        %5397 = vmatmul.mubr.bf16.gmra.mrb[0].mxu0 %v2924
        %v5398 = vpop.f32.mrb[0].mxu0
        %v5399 = vadd.f32 %v1284, %v5398
        %v5400 = vpop.f32.mrb[0].mxu0
        %v5401 = vpop.f32.mrb[0].mxu0
        %v5402 = vadd.f32 %v1284, %v5401
        %v5403 = vpop.f32.mrb[0].mxu0
        %5404 = vmatprep.mubr.bf16.mxu0 %v2961
        %5405 = vmatmul.mubr.bf16.gmra.mrb[0].mxu0 %v2960
        %v5406 = vpop.f32.mrb[0].mxu0
        %v5407 = vadd.f32 %v1284, %v5406
        %v5408 = vpop.f32.mrb[0].mxu0
        %v5409 = vpop.f32.mrb[0].mxu0
        %v5410 = vadd.f32 %v1284, %v5409
        %v5411 = vpop.f32.mrb[0].mxu0
        %5412 = vmatprep.mubr.bf16.mxu0 %v2997
        %5413 = vmatmul.mubr.bf16.gmra.mrb[0].mxu0 %v2996
        %v5414 = vpop.f32.mrb[0].mxu0
        %v5415 = vadd.f32 %v1284, %v5414
        %v5416 = vpop.f32.mrb[0].mxu0
        %v5417 = vpop.f32.mrb[0].mxu0
        %v5418 = vadd.f32 %v1284, %v5417
        %v5419 = vpop.f32.mrb[0].mxu0
        %5420 = vmatprep.mubr.bf16.mxu0 %v3033
        %5421 = vmatmul.mubr.bf16.gmra.mrb[0].mxu0 %v3032
        %v5422 = vpop.f32.mrb[0].mxu0
        %v5423 = vadd.f32 %v1284, %v5422
        %v5424 = vpop.f32.mrb[0].mxu0
        %v5425 = vpop.f32.mrb[0].mxu0
        %v5426 = vadd.f32 %v1284, %v5425
        %v5427 = vpop.f32.mrb[0].mxu0
        %5428 = vmatprep.mubr.bf16.mxu0 %v3069
        %5429 = vmatmul.mubr.bf16.gmra.mrb[0].mxu0 %v3068
        %v5430 = vpop.f32.mrb[0].mxu0
        %v5431 = vadd.f32 %v1284, %v5430
        %v5432 = vpop.f32.mrb[0].mxu0
        %v5433 = vpop.f32.mrb[0].mxu0
        %v5434 = vpop.f32.mrb[0].mxu0
        %5435 = vdwg.mxu0
        %5436 = vmatprep.subr.bf16.mxu0 0
        %5437 = vmatpush1.bf16.msra.mxu0 %v4740
        %5438 = vmatprep.subr.bf16.mxu0 0
        %5439 = vmatpush1.bf16.msra.mxu0 %v4741
        %5440 = vmatprep.subr.bf16.mxu0 0
        %5441 = vmatpush1.bf16.msra.mxu0 %v4742
        %5442 = vmatprep.subr.bf16.mxu0 0
        %5443 = vmatpush1.bf16.msra.mxu0 %v4743
        %5444 = vmatprep.subr.bf16.mxu0 0
        %5445 = vmatpush1.bf16.msra.mxu0 %v4744
        %5446 = vmatprep.subr.bf16.mxu0 0
        %5447 = vmatpush1.bf16.msra.mxu0 %v4745
        %5448 = vmatprep.subr.bf16.mxu0 0
        %5449 = vmatpush1.bf16.msra.mxu0 %v4746
        %5450 = vmatprep.subr.bf16.mxu0 0
        %5451 = vmatpush1.bf16.msra.mxu0 %v4747
        %5452 = vmatprep.subr.bf16.mxu0 0
        %5453 = vmatpush1.bf16.msra.mxu0 %v4748
        %5454 = vmatprep.subr.bf16.mxu0 0
        %5455 = vmatpush1.bf16.msra.mxu0 %v4749
        %5456 = vmatprep.subr.bf16.mxu0 0
        %5457 = vmatpush1.bf16.msra.mxu0 %v4750
        %5458 = vmatprep.subr.bf16.mxu0 0
        %5459 = vmatpush1.bf16.msra.mxu0 %v4751
        %5460 = vmatprep.subr.bf16.mxu0 0
        %5461 = vmatpush1.bf16.msra.mxu0 %v4752
        %5462 = vmatprep.subr.bf16.mxu0 0
        %5463 = vmatpush1.bf16.msra.mxu0 %v4753
        %5464 = vmatprep.subr.bf16.mxu0 0
        %5465 = vmatpush1.bf16.msra.mxu0 %v4754
        %5466 = vmatprep.subr.bf16.mxu0 0
        %5467 = vmatpush1.bf16.msra.mxu0 %v4755
        %5468 = vmatprep.mubr.bf16.mxu0 %v2639
        %5469 = vmatmul.mubr.bf16.gmra.mrb[0].mxu0 %v2638
        %v5470 = vpop.f32.mrb[0].mxu0
        %v5471 = vadd.f32 %v5335, %v5470
        %v5472 = vpop.f32.mrb[0].mxu0
        %v5473 = vpop.f32.mrb[0].mxu0
        %v5474 = vadd.f32 %v5338, %v5473
        %v5475 = vpop.f32.mrb[0].mxu0
        %5476 = vmatprep.mubr.bf16.mxu0 %v2675
        %5477 = vmatmul.mubr.bf16.gmra.mrb[0].mxu0 %v2674
        %v5478 = vpop.f32.mrb[0].mxu0
        %v5479 = vadd.f32 %v5343, %v5478
        %v5480 = vpop.f32.mrb[0].mxu0
        %v5481 = vpop.f32.mrb[0].mxu0
        %v5482 = vadd.f32 %v5346, %v5481
        %v5483 = vpop.f32.mrb[0].mxu0
        %5484 = vmatprep.mubr.bf16.mxu0 %v2711
        %5485 = vmatmul.mubr.bf16.gmra.mrb[0].mxu0 %v2710
        %v5486 = vpop.f32.mrb[0].mxu0
        %v5487 = vadd.f32 %v5351, %v5486
        %v5488 = vpop.f32.mrb[0].mxu0
        %v5489 = vpop.f32.mrb[0].mxu0
        %v5490 = vadd.f32 %v5354, %v5489
        %v5491 = vpop.f32.mrb[0].mxu0
        %5492 = vmatprep.mubr.bf16.mxu0 %v2747
        %5493 = vmatmul.mubr.bf16.gmra.mrb[0].mxu0 %v2746
        %v5494 = vpop.f32.mrb[0].mxu0
        %v5495 = vadd.f32 %v5359, %v5494
        %v5496 = vpop.f32.mrb[0].mxu0
        %v5497 = vpop.f32.mrb[0].mxu0
        %v5498 = vadd.f32 %v5362, %v5497
        %v5499 = vpop.f32.mrb[0].mxu0
        %5500 = vmatprep.mubr.bf16.mxu0 %v2783
        %5501 = vmatmul.mubr.bf16.gmra.mrb[0].mxu0 %v2782
        %v5502 = vpop.f32.mrb[0].mxu0
        %v5503 = vadd.f32 %v5367, %v5502
        %v5504 = vpop.f32.mrb[0].mxu0
        %v5505 = vpop.f32.mrb[0].mxu0
        %v5506 = vadd.f32 %v5370, %v5505
        %v5507 = vpop.f32.mrb[0].mxu0
        %5508 = vmatprep.mubr.bf16.mxu0 %v2819
        %5509 = vmatmul.mubr.bf16.gmra.mrb[0].mxu0 %v2818
        %v5510 = vpop.f32.mrb[0].mxu0
        %v5511 = vadd.f32 %v5375, %v5510
        %v5512 = vpop.f32.mrb[0].mxu0
        %v5513 = vpop.f32.mrb[0].mxu0
        %v5514 = vadd.f32 %v5378, %v5513
        %v5515 = vpop.f32.mrb[0].mxu0
        %5516 = vmatprep.mubr.bf16.mxu0 %v2855
        %5517 = vmatmul.mubr.bf16.gmra.mrb[0].mxu0 %v2854
        %v5518 = vpop.f32.mrb[0].mxu0
        %v5519 = vadd.f32 %v5383, %v5518
        %v5520 = vpop.f32.mrb[0].mxu0
        %v5521 = vpop.f32.mrb[0].mxu0
        %v5522 = vadd.f32 %v5386, %v5521
        %v5523 = vpop.f32.mrb[0].mxu0
        %5524 = vmatprep.mubr.bf16.mxu0 %v2891
        %5525 = vmatmul.mubr.bf16.gmra.mrb[0].mxu0 %v2890
        %v5526 = vpop.f32.mrb[0].mxu0
        %v5527 = vadd.f32 %v5391, %v5526
        %v5528 = vpop.f32.mrb[0].mxu0
        %v5529 = vpop.f32.mrb[0].mxu0
        %v5530 = vadd.f32 %v5394, %v5529
        %v5531 = vpop.f32.mrb[0].mxu0
        %5532 = vmatprep.mubr.bf16.mxu0 %v2927
        %5533 = vmatmul.mubr.bf16.gmra.mrb[0].mxu0 %v2926
        %v5534 = vpop.f32.mrb[0].mxu0
        %v5535 = vadd.f32 %v5399, %v5534
        %v5536 = vpop.f32.mrb[0].mxu0
        %v5537 = vpop.f32.mrb[0].mxu0
        %v5538 = vadd.f32 %v5402, %v5537
        %v5539 = vpop.f32.mrb[0].mxu0
        %5540 = vmatprep.mubr.bf16.mxu0 %v2963
        %5541 = vmatmul.mubr.bf16.gmra.mrb[0].mxu0 %v2962
        %v5542 = vpop.f32.mrb[0].mxu0
        %v5543 = vadd.f32 %v5407, %v5542
        %v5544 = vpop.f32.mrb[0].mxu0
        %v5545 = vpop.f32.mrb[0].mxu0
        %v5546 = vadd.f32 %v5410, %v5545
        %v5547 = vpop.f32.mrb[0].mxu0
        %5548 = vmatprep.mubr.bf16.mxu0 %v2999
        %5549 = vmatmul.mubr.bf16.gmra.mrb[0].mxu0 %v2998
        %v5550 = vpop.f32.mrb[0].mxu0
        %v5551 = vadd.f32 %v5415, %v5550
        %v5552 = vpop.f32.mrb[0].mxu0
        %v5553 = vpop.f32.mrb[0].mxu0
        %v5554 = vadd.f32 %v5418, %v5553
        %v5555 = vpop.f32.mrb[0].mxu0
        %5556 = vmatprep.mubr.bf16.mxu0 %v3035
        %5557 = vmatmul.mubr.bf16.gmra.mrb[0].mxu0 %v3034
        %v5558 = vpop.f32.mrb[0].mxu0
        %v5559 = vadd.f32 %v5423, %v5558
        %v5560 = vpop.f32.mrb[0].mxu0
        %v5561 = vpop.f32.mrb[0].mxu0
        %v5562 = vadd.f32 %v5426, %v5561
        %v5563 = vpop.f32.mrb[0].mxu0
        %5564 = vmatprep.mubr.bf16.mxu0 %v3071
        %5565 = vmatmul.mubr.bf16.gmra.mrb[0].mxu0 %v3070
        %v5566 = vpop.f32.mrb[0].mxu0
        %v5567 = vadd.f32 %v5431, %v5566
        %v5568 = vpop.f32.mrb[0].mxu0
        %v5569 = vpop.f32.mrb[0].mxu0
        %v5570 = vpop.f32.mrb[0].mxu0
        %5571 = vdwg.mxu0
        %5572 = vmatprep.subr.bf16.mxu0 0
        %5573 = vmatpush1.bf16.msra.mxu0 %v4756
        %5574 = vmatprep.subr.bf16.mxu0 0
        %5575 = vmatpush1.bf16.msra.mxu0 %v4757
        %5576 = vmatprep.subr.bf16.mxu0 0
        %5577 = vmatpush1.bf16.msra.mxu0 %v4758
        %5578 = vmatprep.subr.bf16.mxu0 0
        %5579 = vmatpush1.bf16.msra.mxu0 %v4759
        %5580 = vmatprep.subr.bf16.mxu0 0
        %5581 = vmatpush1.bf16.msra.mxu0 %v4760
        %5582 = vmatprep.subr.bf16.mxu0 0
        %5583 = vmatpush1.bf16.msra.mxu0 %v4761
        %5584 = vmatprep.subr.bf16.mxu0 0
        %5585 = vmatpush1.bf16.msra.mxu0 %v4762
        %5586 = vmatprep.subr.bf16.mxu0 0
        %5587 = vmatpush1.bf16.msra.mxu0 %v4763
        %5588 = vmatprep.subr.bf16.mxu0 0
        %5589 = vmatpush1.bf16.msra.mxu0 %v4764
        %5590 = vmatprep.subr.bf16.mxu0 0
        %5591 = vmatpush1.bf16.msra.mxu0 %v4765
        %5592 = vmatprep.subr.bf16.mxu0 0
        %5593 = vmatpush1.bf16.msra.mxu0 %v4766
        %5594 = vmatprep.subr.bf16.mxu0 0
        %5595 = vmatpush1.bf16.msra.mxu0 %v4767
        %5596 = vmatprep.subr.bf16.mxu0 0
        %5597 = vmatpush1.bf16.msra.mxu0 %v4768
        %5598 = vmatprep.subr.bf16.mxu0 0
        %5599 = vmatpush1.bf16.msra.mxu0 %v4769
        %5600 = vmatprep.subr.bf16.mxu0 0
        %5601 = vmatpush1.bf16.msra.mxu0 %v4770
        %5602 = vmatprep.subr.bf16.mxu0 0
        %5603 = vmatpush1.bf16.msra.mxu0 %v4771
        %5604 = vmatprep.mubr.bf16.mxu0 %v2641
        %5605 = vmatmul.mubr.bf16.gmra.mrb[0].mxu0 %v2640
        %v5606 = vpop.f32.mrb[0].mxu0
        %v5607 = vadd.f32 %v5471, %v5606
        %v5608 = vpop.f32.mrb[0].mxu0
        %v5609 = vpop.f32.mrb[0].mxu0
        %v5610 = vadd.f32 %v5474, %v5609
        %v5611 = vpop.f32.mrb[0].mxu0
        %5612 = vmatprep.mubr.bf16.mxu0 %v2677
        %5613 = vmatmul.mubr.bf16.gmra.mrb[0].mxu0 %v2676
        %v5614 = vpop.f32.mrb[0].mxu0
        %v5615 = vadd.f32 %v5479, %v5614
        %v5616 = vpop.f32.mrb[0].mxu0
        %v5617 = vpop.f32.mrb[0].mxu0
        %v5618 = vadd.f32 %v5482, %v5617
        %v5619 = vpop.f32.mrb[0].mxu0
        %5620 = vmatprep.mubr.bf16.mxu0 %v2713
        %5621 = vmatmul.mubr.bf16.gmra.mrb[0].mxu0 %v2712
        %v5622 = vpop.f32.mrb[0].mxu0
        %v5623 = vadd.f32 %v5487, %v5622
        %v5624 = vpop.f32.mrb[0].mxu0
        %v5625 = vpop.f32.mrb[0].mxu0
        %v5626 = vadd.f32 %v5490, %v5625
        %v5627 = vpop.f32.mrb[0].mxu0
        %5628 = vmatprep.mubr.bf16.mxu0 %v2749
        %5629 = vmatmul.mubr.bf16.gmra.mrb[0].mxu0 %v2748
        %v5630 = vpop.f32.mrb[0].mxu0
        %v5631 = vadd.f32 %v5495, %v5630
        %v5632 = vpop.f32.mrb[0].mxu0
        %v5633 = vpop.f32.mrb[0].mxu0
        %v5634 = vadd.f32 %v5498, %v5633
        %v5635 = vpop.f32.mrb[0].mxu0
        %5636 = vmatprep.mubr.bf16.mxu0 %v2785
        %5637 = vmatmul.mubr.bf16.gmra.mrb[0].mxu0 %v2784
        %v5638 = vpop.f32.mrb[0].mxu0
        %v5639 = vadd.f32 %v5503, %v5638
        %v5640 = vpop.f32.mrb[0].mxu0
        %v5641 = vpop.f32.mrb[0].mxu0
        %v5642 = vadd.f32 %v5506, %v5641
        %v5643 = vpop.f32.mrb[0].mxu0
        %5644 = vmatprep.mubr.bf16.mxu0 %v2821
        %5645 = vmatmul.mubr.bf16.gmra.mrb[0].mxu0 %v2820
        %v5646 = vpop.f32.mrb[0].mxu0
        %v5647 = vadd.f32 %v5511, %v5646
        %v5648 = vpop.f32.mrb[0].mxu0
        %v5649 = vpop.f32.mrb[0].mxu0
        %v5650 = vadd.f32 %v5514, %v5649
        %v5651 = vpop.f32.mrb[0].mxu0
        %5652 = vmatprep.mubr.bf16.mxu0 %v2857
        %5653 = vmatmul.mubr.bf16.gmra.mrb[0].mxu0 %v2856
        %v5654 = vpop.f32.mrb[0].mxu0
        %v5655 = vadd.f32 %v5519, %v5654
        %v5656 = vpop.f32.mrb[0].mxu0
        %v5657 = vpop.f32.mrb[0].mxu0
        %v5658 = vadd.f32 %v5522, %v5657
        %v5659 = vpop.f32.mrb[0].mxu0
        %5660 = vmatprep.mubr.bf16.mxu0 %v2893
        %5661 = vmatmul.mubr.bf16.gmra.mrb[0].mxu0 %v2892
        %v5662 = vpop.f32.mrb[0].mxu0
        %v5663 = vadd.f32 %v5527, %v5662
        %v5664 = vpop.f32.mrb[0].mxu0
        %v5665 = vpop.f32.mrb[0].mxu0
        %v5666 = vadd.f32 %v5530, %v5665
        %v5667 = vpop.f32.mrb[0].mxu0
        %5668 = vmatprep.mubr.bf16.mxu0 %v2929
        %5669 = vmatmul.mubr.bf16.gmra.mrb[0].mxu0 %v2928
        %v5670 = vpop.f32.mrb[0].mxu0
        %v5671 = vadd.f32 %v5535, %v5670
        %v5672 = vpop.f32.mrb[0].mxu0
        %v5673 = vpop.f32.mrb[0].mxu0
        %v5674 = vadd.f32 %v5538, %v5673
        %v5675 = vpop.f32.mrb[0].mxu0
        %5676 = vmatprep.mubr.bf16.mxu0 %v2965
        %5677 = vmatmul.mubr.bf16.gmra.mrb[0].mxu0 %v2964
        %v5678 = vpop.f32.mrb[0].mxu0
        %v5679 = vadd.f32 %v5543, %v5678
        %v5680 = vpop.f32.mrb[0].mxu0
        %v5681 = vpop.f32.mrb[0].mxu0
        %v5682 = vadd.f32 %v5546, %v5681
        %v5683 = vpop.f32.mrb[0].mxu0
        %5684 = vmatprep.mubr.bf16.mxu0 %v3001
        %5685 = vmatmul.mubr.bf16.gmra.mrb[0].mxu0 %v3000
        %v5686 = vpop.f32.mrb[0].mxu0
        %v5687 = vadd.f32 %v5551, %v5686
        %v5688 = vpop.f32.mrb[0].mxu0
        %v5689 = vpop.f32.mrb[0].mxu0
        %v5690 = vadd.f32 %v5554, %v5689
        %v5691 = vpop.f32.mrb[0].mxu0
        %5692 = vmatprep.mubr.bf16.mxu0 %v3037
        %5693 = vmatmul.mubr.bf16.gmra.mrb[0].mxu0 %v3036
        %v5694 = vpop.f32.mrb[0].mxu0
        %v5695 = vadd.f32 %v5559, %v5694
        %v5696 = vpop.f32.mrb[0].mxu0
        %v5697 = vpop.f32.mrb[0].mxu0
        %v5698 = vadd.f32 %v5562, %v5697
        %v5699 = vpop.f32.mrb[0].mxu0
        %5700 = vmatprep.mubr.bf16.mxu0 %v3073
        %5701 = vmatmul.mubr.bf16.gmra.mrb[0].mxu0 %v3072
        %v5702 = vpop.f32.mrb[0].mxu0
        %v5703 = vadd.f32 %v5567, %v5702
        %v5704 = vpop.f32.mrb[0].mxu0
        %v5705 = vpop.f32.mrb[0].mxu0
        %v5706 = vpop.f32.mrb[0].mxu0
        %5707 = vdwg.mxu0
        %5708 = vmatprep.subr.bf16.mxu0 0
        %5709 = vmatpush1.bf16.msra.mxu0 %v4772
        %5710 = vmatprep.subr.bf16.mxu0 0
        %5711 = vmatpush1.bf16.msra.mxu0 %v4773
        %5712 = vmatprep.subr.bf16.mxu0 0
        %5713 = vmatpush1.bf16.msra.mxu0 %v4774
        %5714 = vmatprep.subr.bf16.mxu0 0
        %5715 = vmatpush1.bf16.msra.mxu0 %v4775
        %5716 = vmatprep.subr.bf16.mxu0 0
        %5717 = vmatpush1.bf16.msra.mxu0 %v4776
        %5718 = vmatprep.subr.bf16.mxu0 0
        %5719 = vmatpush1.bf16.msra.mxu0 %v4777
        %5720 = vmatprep.subr.bf16.mxu0 0
        %5721 = vmatpush1.bf16.msra.mxu0 %v4778
        %5722 = vmatprep.subr.bf16.mxu0 0
        %5723 = vmatpush1.bf16.msra.mxu0 %v4779
        %5724 = vmatprep.subr.bf16.mxu0 0
        %5725 = vmatpush1.bf16.msra.mxu0 %v4780
        %5726 = vmatprep.subr.bf16.mxu0 0
        %5727 = vmatpush1.bf16.msra.mxu0 %v4781
        %5728 = vmatprep.subr.bf16.mxu0 0
        %5729 = vmatpush1.bf16.msra.mxu0 %v4782
        %5730 = vmatprep.subr.bf16.mxu0 0
        %5731 = vmatpush1.bf16.msra.mxu0 %v4783
        %5732 = vmatprep.subr.bf16.mxu0 0
        %5733 = vmatpush1.bf16.msra.mxu0 %v4784
        %5734 = vmatprep.subr.bf16.mxu0 0
        %5735 = vmatpush1.bf16.msra.mxu0 %v4785
        %5736 = vmatprep.subr.bf16.mxu0 0
        %5737 = vmatpush1.bf16.msra.mxu0 %v4786
        %5738 = vmatprep.subr.bf16.mxu0 0
        %5739 = vmatpush1.bf16.msra.mxu0 %v4787
        %5740 = vmatprep.mubr.bf16.mxu0 %v2643
        %5741 = vmatmul.mubr.bf16.gmra.mrb[0].mxu0 %v2642
        %v5742 = vpop.f32.mrb[0].mxu0
        %v5743 = vadd.f32 %v5607, %v5742
        %v5744 = vpop.f32.mrb[0].mxu0
        %v5745 = vpop.f32.mrb[0].mxu0
        %v5746 = vadd.f32 %v5610, %v5745
        %v5747 = vpop.f32.mrb[0].mxu0
        %5748 = vmatprep.mubr.bf16.mxu0 %v2679
        %5749 = vmatmul.mubr.bf16.gmra.mrb[0].mxu0 %v2678
        %v5750 = vpop.f32.mrb[0].mxu0
        %v5751 = vadd.f32 %v5615, %v5750
        %v5752 = vpop.f32.mrb[0].mxu0
        %v5753 = vpop.f32.mrb[0].mxu0
        %v5754 = vadd.f32 %v5618, %v5753
        %v5755 = vpop.f32.mrb[0].mxu0
        %5756 = vmatprep.mubr.bf16.mxu0 %v2715
        %5757 = vmatmul.mubr.bf16.gmra.mrb[0].mxu0 %v2714
        %v5758 = vpop.f32.mrb[0].mxu0
        %v5759 = vadd.f32 %v5623, %v5758
        %v5760 = vpop.f32.mrb[0].mxu0
        %v5761 = vpop.f32.mrb[0].mxu0
        %v5762 = vadd.f32 %v5626, %v5761
        %v5763 = vpop.f32.mrb[0].mxu0
        %5764 = vmatprep.mubr.bf16.mxu0 %v2751
        %5765 = vmatmul.mubr.bf16.gmra.mrb[0].mxu0 %v2750
        %v5766 = vpop.f32.mrb[0].mxu0
        %v5767 = vadd.f32 %v5631, %v5766
        %v5768 = vpop.f32.mrb[0].mxu0
        %v5769 = vpop.f32.mrb[0].mxu0
        %v5770 = vadd.f32 %v5634, %v5769
        %v5771 = vpop.f32.mrb[0].mxu0
        %5772 = vmatprep.mubr.bf16.mxu0 %v2787
        %5773 = vmatmul.mubr.bf16.gmra.mrb[0].mxu0 %v2786
        %v5774 = vpop.f32.mrb[0].mxu0
        %v5775 = vadd.f32 %v5639, %v5774
        %v5776 = vpop.f32.mrb[0].mxu0
        %v5777 = vpop.f32.mrb[0].mxu0
        %v5778 = vadd.f32 %v5642, %v5777
        %v5779 = vpop.f32.mrb[0].mxu0
        %5780 = vmatprep.mubr.bf16.mxu0 %v2823
        %5781 = vmatmul.mubr.bf16.gmra.mrb[0].mxu0 %v2822
        %v5782 = vpop.f32.mrb[0].mxu0
        %v5783 = vadd.f32 %v5647, %v5782
        %v5784 = vpop.f32.mrb[0].mxu0
        %v5785 = vpop.f32.mrb[0].mxu0
        %v5786 = vadd.f32 %v5650, %v5785
        %v5787 = vpop.f32.mrb[0].mxu0
        %5788 = vmatprep.mubr.bf16.mxu0 %v2859
        %5789 = vmatmul.mubr.bf16.gmra.mrb[0].mxu0 %v2858
        %v5790 = vpop.f32.mrb[0].mxu0
        %v5791 = vadd.f32 %v5655, %v5790
        %v5792 = vpop.f32.mrb[0].mxu0
        %v5793 = vpop.f32.mrb[0].mxu0
        %v5794 = vadd.f32 %v5658, %v5793
        %v5795 = vpop.f32.mrb[0].mxu0
        %5796 = vmatprep.mubr.bf16.mxu0 %v2895
        %5797 = vmatmul.mubr.bf16.gmra.mrb[0].mxu0 %v2894
        %v5798 = vpop.f32.mrb[0].mxu0
        %v5799 = vadd.f32 %v5663, %v5798
        %v5800 = vpop.f32.mrb[0].mxu0
        %v5801 = vpop.f32.mrb[0].mxu0
        %v5802 = vadd.f32 %v5666, %v5801
        %v5803 = vpop.f32.mrb[0].mxu0
        %5804 = vmatprep.mubr.bf16.mxu0 %v2931
        %5805 = vmatmul.mubr.bf16.gmra.mrb[0].mxu0 %v2930
        %v5806 = vpop.f32.mrb[0].mxu0
        %v5807 = vadd.f32 %v5671, %v5806
        %v5808 = vpop.f32.mrb[0].mxu0
        %v5809 = vpop.f32.mrb[0].mxu0
        %v5810 = vadd.f32 %v5674, %v5809
        %v5811 = vpop.f32.mrb[0].mxu0
        %5812 = vmatprep.mubr.bf16.mxu0 %v2967
        %5813 = vmatmul.mubr.bf16.gmra.mrb[0].mxu0 %v2966
        %v5814 = vpop.f32.mrb[0].mxu0
        %v5815 = vadd.f32 %v5679, %v5814
        %v5816 = vpop.f32.mrb[0].mxu0
        %v5817 = vpop.f32.mrb[0].mxu0
        %v5818 = vadd.f32 %v5682, %v5817
        %v5819 = vpop.f32.mrb[0].mxu0
        %5820 = vmatprep.mubr.bf16.mxu0 %v3003
        %5821 = vmatmul.mubr.bf16.gmra.mrb[0].mxu0 %v3002
        %v5822 = vpop.f32.mrb[0].mxu0
        %v5823 = vadd.f32 %v5687, %v5822
        %v5824 = vpop.f32.mrb[0].mxu0
        %v5825 = vpop.f32.mrb[0].mxu0
        %v5826 = vadd.f32 %v5690, %v5825
        %v5827 = vpop.f32.mrb[0].mxu0
        %5828 = vmatprep.mubr.bf16.mxu0 %v3039
        %5829 = vmatmul.mubr.bf16.gmra.mrb[0].mxu0 %v3038
        %v5830 = vpop.f32.mrb[0].mxu0
        %v5831 = vadd.f32 %v5695, %v5830
        %v5832 = vpop.f32.mrb[0].mxu0
        %v5833 = vpop.f32.mrb[0].mxu0
        %v5834 = vadd.f32 %v5698, %v5833
        %v5835 = vpop.f32.mrb[0].mxu0
        %5836 = vmatprep.mubr.bf16.mxu0 %v3075
        %5837 = vmatmul.mubr.bf16.gmra.mrb[0].mxu0 %v3074
        %v5838 = vpop.f32.mrb[0].mxu0
        %v5839 = vadd.f32 %v5703, %v5838
        %v5840 = vpop.f32.mrb[0].mxu0
        %v5841 = vpop.f32.mrb[0].mxu0
        %v5842 = vpop.f32.mrb[0].mxu0
        %5843 = vdwg.mxu0
        %5844 = vmatprep.subr.bf16.mxu0 0
        %5845 = vmatpush1.bf16.msra.mxu0 %v4788
        %5846 = vmatprep.subr.bf16.mxu0 0
        %5847 = vmatpush1.bf16.msra.mxu0 %v4789
        %5848 = vmatprep.subr.bf16.mxu0 0
        %5849 = vmatpush1.bf16.msra.mxu0 %v4790
        %5850 = vmatprep.subr.bf16.mxu0 0
        %5851 = vmatpush1.bf16.msra.mxu0 %v4791
        %5852 = vmatprep.subr.bf16.mxu0 0
        %5853 = vmatpush1.bf16.msra.mxu0 %v4792
        %5854 = vmatprep.subr.bf16.mxu0 0
        %5855 = vmatpush1.bf16.msra.mxu0 %v4793
        %5856 = vmatprep.subr.bf16.mxu0 0
        %5857 = vmatpush1.bf16.msra.mxu0 %v4794
        %5858 = vmatprep.subr.bf16.mxu0 0
        %5859 = vmatpush1.bf16.msra.mxu0 %v4795
        %5860 = vmatprep.subr.bf16.mxu0 0
        %5861 = vmatpush1.bf16.msra.mxu0 %v4796
        %5862 = vmatprep.subr.bf16.mxu0 0
        %5863 = vmatpush1.bf16.msra.mxu0 %v4797
        %5864 = vmatprep.subr.bf16.mxu0 0
        %5865 = vmatpush1.bf16.msra.mxu0 %v4798
        %5866 = vmatprep.subr.bf16.mxu0 0
        %5867 = vmatpush1.bf16.msra.mxu0 %v4799
        %5868 = vmatprep.subr.bf16.mxu0 0
        %5869 = vmatpush1.bf16.msra.mxu0 %v4800
        %5870 = vmatprep.subr.bf16.mxu0 0
        %5871 = vmatpush1.bf16.msra.mxu0 %v4801
        %5872 = vmatprep.subr.bf16.mxu0 0
        %5873 = vmatpush1.bf16.msra.mxu0 %v4802
        %5874 = vmatprep.subr.bf16.mxu0 0
        %5875 = vmatpush1.bf16.msra.mxu0 %v4803
        %5876 = vmatprep.mubr.bf16.mxu0 %v2645
        %5877 = vmatmul.mubr.bf16.gmra.mrb[0].mxu0 %v2644
        %v5878 = vpop.f32.mrb[0].mxu0
        %v5879 = vadd.f32 %v5743, %v5878
        %v5880 = vpop.f32.mrb[0].mxu0
        %v5881 = vpop.f32.mrb[0].mxu0
        %v5882 = vadd.f32 %v5746, %v5881
        %v5883 = vpop.f32.mrb[0].mxu0
        %5884 = vmatprep.mubr.bf16.mxu0 %v2681
        %5885 = vmatmul.mubr.bf16.gmra.mrb[0].mxu0 %v2680
        %v5886 = vpop.f32.mrb[0].mxu0
        %v5887 = vadd.f32 %v5751, %v5886
        %v5888 = vpop.f32.mrb[0].mxu0
        %v5889 = vpop.f32.mrb[0].mxu0
        %v5890 = vadd.f32 %v5754, %v5889
        %v5891 = vpop.f32.mrb[0].mxu0
        %5892 = vmatprep.mubr.bf16.mxu0 %v2717
        %5893 = vmatmul.mubr.bf16.gmra.mrb[0].mxu0 %v2716
        %v5894 = vpop.f32.mrb[0].mxu0
        %v5895 = vadd.f32 %v5759, %v5894
        %v5896 = vpop.f32.mrb[0].mxu0
        %v5897 = vpop.f32.mrb[0].mxu0
        %v5898 = vadd.f32 %v5762, %v5897
        %v5899 = vpop.f32.mrb[0].mxu0
        %5900 = vmatprep.mubr.bf16.mxu0 %v2753
        %5901 = vmatmul.mubr.bf16.gmra.mrb[0].mxu0 %v2752
        %v5902 = vpop.f32.mrb[0].mxu0
        %v5903 = vadd.f32 %v5767, %v5902
        %v5904 = vpop.f32.mrb[0].mxu0
        %v5905 = vpop.f32.mrb[0].mxu0
        %v5906 = vadd.f32 %v5770, %v5905
        %v5907 = vpop.f32.mrb[0].mxu0
        %5908 = vmatprep.mubr.bf16.mxu0 %v2789
        %5909 = vmatmul.mubr.bf16.gmra.mrb[0].mxu0 %v2788
        %v5910 = vpop.f32.mrb[0].mxu0
        %v5911 = vadd.f32 %v5775, %v5910
        %v5912 = vpop.f32.mrb[0].mxu0
        %v5913 = vpop.f32.mrb[0].mxu0
        %v5914 = vadd.f32 %v5778, %v5913
        %v5915 = vpop.f32.mrb[0].mxu0
        %5916 = vmatprep.mubr.bf16.mxu0 %v2825
        %5917 = vmatmul.mubr.bf16.gmra.mrb[0].mxu0 %v2824
        %v5918 = vpop.f32.mrb[0].mxu0
        %v5919 = vadd.f32 %v5783, %v5918
        %v5920 = vpop.f32.mrb[0].mxu0
        %v5921 = vpop.f32.mrb[0].mxu0
        %v5922 = vadd.f32 %v5786, %v5921
        %v5923 = vpop.f32.mrb[0].mxu0
        %5924 = vmatprep.mubr.bf16.mxu0 %v2861
        %5925 = vmatmul.mubr.bf16.gmra.mrb[0].mxu0 %v2860
        %v5926 = vpop.f32.mrb[0].mxu0
        %v5927 = vadd.f32 %v5791, %v5926
        %v5928 = vpop.f32.mrb[0].mxu0
        %v5929 = vpop.f32.mrb[0].mxu0
        %v5930 = vadd.f32 %v5794, %v5929
        %v5931 = vpop.f32.mrb[0].mxu0
        %5932 = vmatprep.mubr.bf16.mxu0 %v2897
        %5933 = vmatmul.mubr.bf16.gmra.mrb[0].mxu0 %v2896
        %v5934 = vpop.f32.mrb[0].mxu0
        %v5935 = vadd.f32 %v5799, %v5934
        %v5936 = vpop.f32.mrb[0].mxu0
        %v5937 = vpop.f32.mrb[0].mxu0
        %v5938 = vadd.f32 %v5802, %v5937
        %v5939 = vpop.f32.mrb[0].mxu0
        %5940 = vmatprep.mubr.bf16.mxu0 %v2933
        %5941 = vmatmul.mubr.bf16.gmra.mrb[0].mxu0 %v2932
        %v5942 = vpop.f32.mrb[0].mxu0
        %v5943 = vadd.f32 %v5807, %v5942
        %v5944 = vpop.f32.mrb[0].mxu0
        %v5945 = vpop.f32.mrb[0].mxu0
        %v5946 = vadd.f32 %v5810, %v5945
        %v5947 = vpop.f32.mrb[0].mxu0
        %5948 = vmatprep.mubr.bf16.mxu0 %v2969
        %5949 = vmatmul.mubr.bf16.gmra.mrb[0].mxu0 %v2968
        %v5950 = vpop.f32.mrb[0].mxu0
        %v5951 = vadd.f32 %v5815, %v5950
        %v5952 = vpop.f32.mrb[0].mxu0
        %v5953 = vpop.f32.mrb[0].mxu0
        %v5954 = vadd.f32 %v5818, %v5953
        %v5955 = vpop.f32.mrb[0].mxu0
        %5956 = vmatprep.mubr.bf16.mxu0 %v3005
        %5957 = vmatmul.mubr.bf16.gmra.mrb[0].mxu0 %v3004
        %v5958 = vpop.f32.mrb[0].mxu0
        %v5959 = vadd.f32 %v5823, %v5958
        %v5960 = vpop.f32.mrb[0].mxu0
        %v5961 = vpop.f32.mrb[0].mxu0
        %v5962 = vadd.f32 %v5826, %v5961
        %v5963 = vpop.f32.mrb[0].mxu0
        %5964 = vmatprep.mubr.bf16.mxu0 %v3041
        %5965 = vmatmul.mubr.bf16.gmra.mrb[0].mxu0 %v3040
        %v5966 = vpop.f32.mrb[0].mxu0
        %v5967 = vadd.f32 %v5831, %v5966
        %v5968 = vpop.f32.mrb[0].mxu0
        %v5969 = vpop.f32.mrb[0].mxu0
        %v5970 = vadd.f32 %v5834, %v5969
        %v5971 = vpop.f32.mrb[0].mxu0
        %5972 = vmatprep.mubr.bf16.mxu0 %v3077
        %5973 = vmatmul.mubr.bf16.gmra.mrb[0].mxu0 %v3076
        %v5974 = vpop.f32.mrb[0].mxu0
        %v5975 = vadd.f32 %v5839, %v5974
        %v5976 = vpop.f32.mrb[0].mxu0
        %v5977 = vpop.f32.mrb[0].mxu0
        %v5978 = vpop.f32.mrb[0].mxu0
        %5979 = vdwg.mxu0
        %5980 = vmatprep.subr.bf16.mxu0 0
        %5981 = vmatpush1.bf16.msra.mxu0 %v4804
        %5982 = vmatprep.subr.bf16.mxu0 0
        %5983 = vmatpush1.bf16.msra.mxu0 %v4805
        %5984 = vmatprep.subr.bf16.mxu0 0
        %5985 = vmatpush1.bf16.msra.mxu0 %v4806
        %5986 = vmatprep.subr.bf16.mxu0 0
        %5987 = vmatpush1.bf16.msra.mxu0 %v4807
        %5988 = vmatprep.subr.bf16.mxu0 0
        %5989 = vmatpush1.bf16.msra.mxu0 %v4808
        %5990 = vmatprep.subr.bf16.mxu0 0
        %5991 = vmatpush1.bf16.msra.mxu0 %v4809
        %5992 = vmatprep.subr.bf16.mxu0 0
        %5993 = vmatpush1.bf16.msra.mxu0 %v4810
        %5994 = vmatprep.subr.bf16.mxu0 0
        %5995 = vmatpush1.bf16.msra.mxu0 %v4811
        %5996 = vmatprep.subr.bf16.mxu0 0
        %5997 = vmatpush1.bf16.msra.mxu0 %v4812
        %5998 = vmatprep.subr.bf16.mxu0 0
        %5999 = vmatpush1.bf16.msra.mxu0 %v4813
        %6000 = vmatprep.subr.bf16.mxu0 0
        %6001 = vmatpush1.bf16.msra.mxu0 %v4814
        %6002 = vmatprep.subr.bf16.mxu0 0
        %6003 = vmatpush1.bf16.msra.mxu0 %v4815
        %6004 = vmatprep.subr.bf16.mxu0 0
        %6005 = vmatpush1.bf16.msra.mxu0 %v4816
        %6006 = vmatprep.subr.bf16.mxu0 0
        %6007 = vmatpush1.bf16.msra.mxu0 %v4817
        %6008 = vmatprep.subr.bf16.mxu0 0
        %6009 = vmatpush1.bf16.msra.mxu0 %v4818
        %6010 = vmatprep.subr.bf16.mxu0 0
        %6011 = vmatpush1.bf16.msra.mxu0 %v4819
        %6012 = vmatprep.mubr.bf16.mxu0 %v2647
        %6013 = vmatmul.mubr.bf16.gmra.mrb[0].mxu0 %v2646
        %v6014 = vpop.f32.mrb[0].mxu0
        %v6015 = vadd.f32 %v5879, %v6014
        %v6016 = vpop.f32.mrb[0].mxu0
        %v6017 = vpop.f32.mrb[0].mxu0
        %v6018 = vadd.f32 %v5882, %v6017
        %v6019 = vpop.f32.mrb[0].mxu0
        %6020 = vmatprep.mubr.bf16.mxu0 %v2683
        %6021 = vmatmul.mubr.bf16.gmra.mrb[0].mxu0 %v2682
        %v6022 = vpop.f32.mrb[0].mxu0
        %v6023 = vadd.f32 %v5887, %v6022
        %v6024 = vpop.f32.mrb[0].mxu0
        %v6025 = vpop.f32.mrb[0].mxu0
        %v6026 = vadd.f32 %v5890, %v6025
        %v6027 = vpop.f32.mrb[0].mxu0
        %6028 = vmatprep.mubr.bf16.mxu0 %v2719
        %6029 = vmatmul.mubr.bf16.gmra.mrb[0].mxu0 %v2718
        %v6030 = vpop.f32.mrb[0].mxu0
        %v6031 = vadd.f32 %v5895, %v6030
        %v6032 = vpop.f32.mrb[0].mxu0
        %v6033 = vpop.f32.mrb[0].mxu0
        %v6034 = vadd.f32 %v5898, %v6033
        %v6035 = vpop.f32.mrb[0].mxu0
        %6036 = vmatprep.mubr.bf16.mxu0 %v2755
        %6037 = vmatmul.mubr.bf16.gmra.mrb[0].mxu0 %v2754
        %v6038 = vpop.f32.mrb[0].mxu0
        %v6039 = vadd.f32 %v5903, %v6038
        %v6040 = vpop.f32.mrb[0].mxu0
        %v6041 = vpop.f32.mrb[0].mxu0
        %v6042 = vadd.f32 %v5906, %v6041
        %v6043 = vpop.f32.mrb[0].mxu0
        %6044 = vmatprep.mubr.bf16.mxu0 %v2791
        %6045 = vmatmul.mubr.bf16.gmra.mrb[0].mxu0 %v2790
        %v6046 = vpop.f32.mrb[0].mxu0
        %v6047 = vadd.f32 %v5911, %v6046
        %v6048 = vpop.f32.mrb[0].mxu0
        %v6049 = vpop.f32.mrb[0].mxu0
        %v6050 = vadd.f32 %v5914, %v6049
        %v6051 = vpop.f32.mrb[0].mxu0
        %6052 = vmatprep.mubr.bf16.mxu0 %v2827
        %6053 = vmatmul.mubr.bf16.gmra.mrb[0].mxu0 %v2826
        %v6054 = vpop.f32.mrb[0].mxu0
        %v6055 = vadd.f32 %v5919, %v6054
        %v6056 = vpop.f32.mrb[0].mxu0
        %v6057 = vpop.f32.mrb[0].mxu0
        %v6058 = vadd.f32 %v5922, %v6057
        %v6059 = vpop.f32.mrb[0].mxu0
        %6060 = vmatprep.mubr.bf16.mxu0 %v2863
        %6061 = vmatmul.mubr.bf16.gmra.mrb[0].mxu0 %v2862
        %v6062 = vpop.f32.mrb[0].mxu0
        %v6063 = vadd.f32 %v5927, %v6062
        %v6064 = vpop.f32.mrb[0].mxu0
        %v6065 = vpop.f32.mrb[0].mxu0
        %v6066 = vadd.f32 %v5930, %v6065
        %v6067 = vpop.f32.mrb[0].mxu0
        %6068 = vmatprep.mubr.bf16.mxu0 %v2899
        %6069 = vmatmul.mubr.bf16.gmra.mrb[0].mxu0 %v2898
        %v6070 = vpop.f32.mrb[0].mxu0
        %v6071 = vadd.f32 %v5935, %v6070
        %v6072 = vpop.f32.mrb[0].mxu0
        %v6073 = vpop.f32.mrb[0].mxu0
        %v6074 = vadd.f32 %v5938, %v6073
        %v6075 = vpop.f32.mrb[0].mxu0
        %6076 = vmatprep.mubr.bf16.mxu0 %v2935
        %6077 = vmatmul.mubr.bf16.gmra.mrb[0].mxu0 %v2934
        %v6078 = vpop.f32.mrb[0].mxu0
        %v6079 = vadd.f32 %v5943, %v6078
        %v6080 = vpop.f32.mrb[0].mxu0
        %v6081 = vpop.f32.mrb[0].mxu0
        %v6082 = vadd.f32 %v5946, %v6081
        %v6083 = vpop.f32.mrb[0].mxu0
        %6084 = vmatprep.mubr.bf16.mxu0 %v2971
        %6085 = vmatmul.mubr.bf16.gmra.mrb[0].mxu0 %v2970
        %v6086 = vpop.f32.mrb[0].mxu0
        %v6087 = vadd.f32 %v5951, %v6086
        %v6088 = vpop.f32.mrb[0].mxu0
        %v6089 = vpop.f32.mrb[0].mxu0
        %v6090 = vadd.f32 %v5954, %v6089
        %v6091 = vpop.f32.mrb[0].mxu0
        %6092 = vmatprep.mubr.bf16.mxu0 %v3007
        %6093 = vmatmul.mubr.bf16.gmra.mrb[0].mxu0 %v3006
        %v6094 = vpop.f32.mrb[0].mxu0
        %v6095 = vadd.f32 %v5959, %v6094
        %v6096 = vpop.f32.mrb[0].mxu0
        %v6097 = vpop.f32.mrb[0].mxu0
        %v6098 = vadd.f32 %v5962, %v6097
        %v6099 = vpop.f32.mrb[0].mxu0
        %6100 = vmatprep.mubr.bf16.mxu0 %v3043
        %6101 = vmatmul.mubr.bf16.gmra.mrb[0].mxu0 %v3042
        %v6102 = vpop.f32.mrb[0].mxu0
        %v6103 = vadd.f32 %v5967, %v6102
        %v6104 = vpop.f32.mrb[0].mxu0
        %v6105 = vpop.f32.mrb[0].mxu0
        %v6106 = vadd.f32 %v5970, %v6105
        %v6107 = vpop.f32.mrb[0].mxu0
        %6108 = vmatprep.mubr.bf16.mxu0 %v3079
        %6109 = vmatmul.mubr.bf16.gmra.mrb[0].mxu0 %v3078
        %v6110 = vpop.f32.mrb[0].mxu0
        %v6111 = vadd.f32 %v5975, %v6110
        %v6112 = vpop.f32.mrb[0].mxu0
        %v6113 = vpop.f32.mrb[0].mxu0
        %v6114 = vpop.f32.mrb[0].mxu0
        %6115 = vdwg.mxu0
        %6116 = vmatprep.subr.bf16.mxu0 0
        %6117 = vmatpush1.bf16.msra.mxu0 %v4820
        %6118 = vmatprep.subr.bf16.mxu0 0
        %6119 = vmatpush1.bf16.msra.mxu0 %v4821
        %6120 = vmatprep.subr.bf16.mxu0 0
        %6121 = vmatpush1.bf16.msra.mxu0 %v4822
        %6122 = vmatprep.subr.bf16.mxu0 0
        %6123 = vmatpush1.bf16.msra.mxu0 %v4823
        %6124 = vmatprep.subr.bf16.mxu0 0
        %6125 = vmatpush1.bf16.msra.mxu0 %v4824
        %6126 = vmatprep.subr.bf16.mxu0 0
        %6127 = vmatpush1.bf16.msra.mxu0 %v4825
        %6128 = vmatprep.subr.bf16.mxu0 0
        %6129 = vmatpush1.bf16.msra.mxu0 %v4826
        %6130 = vmatprep.subr.bf16.mxu0 0
        %6131 = vmatpush1.bf16.msra.mxu0 %v4827
        %6132 = vmatprep.subr.bf16.mxu0 0
        %6133 = vmatpush1.bf16.msra.mxu0 %v4828
        %6134 = vmatprep.subr.bf16.mxu0 0
        %6135 = vmatpush1.bf16.msra.mxu0 %v4829
        %6136 = vmatprep.subr.bf16.mxu0 0
        %6137 = vmatpush1.bf16.msra.mxu0 %v4830
        %6138 = vmatprep.subr.bf16.mxu0 0
        %6139 = vmatpush1.bf16.msra.mxu0 %v4831
        %6140 = vmatprep.subr.bf16.mxu0 0
        %6141 = vmatpush1.bf16.msra.mxu0 %v4832
        %6142 = vmatprep.subr.bf16.mxu0 0
        %6143 = vmatpush1.bf16.msra.mxu0 %v4833
        %6144 = vmatprep.subr.bf16.mxu0 0
        %6145 = vmatpush1.bf16.msra.mxu0 %v4834
        %6146 = vmatprep.subr.bf16.mxu0 0
        %6147 = vmatpush1.bf16.msra.mxu0 %v4835
        %6148 = vmatprep.mubr.bf16.mxu0 %v2649
        %6149 = vmatmul.mubr.bf16.gmra.mrb[0].mxu0 %v2648
        %v6150 = vpop.f32.mrb[0].mxu0
        %v6151 = vadd.f32 %v6015, %v6150
        %v6152 = vpop.f32.mrb[0].mxu0
        %v6153 = vpop.f32.mrb[0].mxu0
        %v6154 = vadd.f32 %v6018, %v6153
        %v6155 = vpop.f32.mrb[0].mxu0
        %6156 = vmatprep.mubr.bf16.mxu0 %v2685
        %6157 = vmatmul.mubr.bf16.gmra.mrb[0].mxu0 %v2684
        %v6158 = vpop.f32.mrb[0].mxu0
        %v6159 = vadd.f32 %v6023, %v6158
        %v6160 = vpop.f32.mrb[0].mxu0
        %v6161 = vpop.f32.mrb[0].mxu0
        %v6162 = vadd.f32 %v6026, %v6161
        %v6163 = vpop.f32.mrb[0].mxu0
        %6164 = vmatprep.mubr.bf16.mxu0 %v2721
        %6165 = vmatmul.mubr.bf16.gmra.mrb[0].mxu0 %v2720
        %v6166 = vpop.f32.mrb[0].mxu0
        %v6167 = vadd.f32 %v6031, %v6166
        %v6168 = vpop.f32.mrb[0].mxu0
        %v6169 = vpop.f32.mrb[0].mxu0
        %v6170 = vadd.f32 %v6034, %v6169
        %v6171 = vpop.f32.mrb[0].mxu0
        %6172 = vmatprep.mubr.bf16.mxu0 %v2757
        %6173 = vmatmul.mubr.bf16.gmra.mrb[0].mxu0 %v2756
        %v6174 = vpop.f32.mrb[0].mxu0
        %v6175 = vadd.f32 %v6039, %v6174
        %v6176 = vpop.f32.mrb[0].mxu0
        %v6177 = vpop.f32.mrb[0].mxu0
        %v6178 = vadd.f32 %v6042, %v6177
        %v6179 = vpop.f32.mrb[0].mxu0
        %6180 = vmatprep.mubr.bf16.mxu0 %v2793
        %6181 = vmatmul.mubr.bf16.gmra.mrb[0].mxu0 %v2792
        %v6182 = vpop.f32.mrb[0].mxu0
        %v6183 = vadd.f32 %v6047, %v6182
        %v6184 = vpop.f32.mrb[0].mxu0
        %v6185 = vpop.f32.mrb[0].mxu0
        %v6186 = vadd.f32 %v6050, %v6185
        %v6187 = vpop.f32.mrb[0].mxu0
        %6188 = vmatprep.mubr.bf16.mxu0 %v2829
        %6189 = vmatmul.mubr.bf16.gmra.mrb[0].mxu0 %v2828
        %v6190 = vpop.f32.mrb[0].mxu0
        %v6191 = vadd.f32 %v6055, %v6190
        %v6192 = vpop.f32.mrb[0].mxu0
        %v6193 = vpop.f32.mrb[0].mxu0
        %v6194 = vadd.f32 %v6058, %v6193
        %v6195 = vpop.f32.mrb[0].mxu0
        %6196 = vmatprep.mubr.bf16.mxu0 %v2865
        %6197 = vmatmul.mubr.bf16.gmra.mrb[0].mxu0 %v2864
        %v6198 = vpop.f32.mrb[0].mxu0
        %v6199 = vadd.f32 %v6063, %v6198
        %v6200 = vpop.f32.mrb[0].mxu0
        %v6201 = vpop.f32.mrb[0].mxu0
        %v6202 = vadd.f32 %v6066, %v6201
        %v6203 = vpop.f32.mrb[0].mxu0
        %6204 = vmatprep.mubr.bf16.mxu0 %v2901
        %6205 = vmatmul.mubr.bf16.gmra.mrb[0].mxu0 %v2900
        %v6206 = vpop.f32.mrb[0].mxu0
        %v6207 = vadd.f32 %v6071, %v6206
        %v6208 = vpop.f32.mrb[0].mxu0
        %v6209 = vpop.f32.mrb[0].mxu0
        %v6210 = vadd.f32 %v6074, %v6209
        %v6211 = vpop.f32.mrb[0].mxu0
        %6212 = vmatprep.mubr.bf16.mxu0 %v2937
        %6213 = vmatmul.mubr.bf16.gmra.mrb[0].mxu0 %v2936
        %v6214 = vpop.f32.mrb[0].mxu0
        %v6215 = vadd.f32 %v6079, %v6214
        %v6216 = vpop.f32.mrb[0].mxu0
        %v6217 = vpop.f32.mrb[0].mxu0
        %v6218 = vadd.f32 %v6082, %v6217
        %v6219 = vpop.f32.mrb[0].mxu0
        %6220 = vmatprep.mubr.bf16.mxu0 %v2973
        %6221 = vmatmul.mubr.bf16.gmra.mrb[0].mxu0 %v2972
        %v6222 = vpop.f32.mrb[0].mxu0
        %v6223 = vadd.f32 %v6087, %v6222
        %v6224 = vpop.f32.mrb[0].mxu0
        %v6225 = vpop.f32.mrb[0].mxu0
        %v6226 = vadd.f32 %v6090, %v6225
        %v6227 = vpop.f32.mrb[0].mxu0
        %6228 = vmatprep.mubr.bf16.mxu0 %v3009
        %6229 = vmatmul.mubr.bf16.gmra.mrb[0].mxu0 %v3008
        %v6230 = vpop.f32.mrb[0].mxu0
        %v6231 = vadd.f32 %v6095, %v6230
        %v6232 = vpop.f32.mrb[0].mxu0
        %v6233 = vpop.f32.mrb[0].mxu0
        %v6234 = vadd.f32 %v6098, %v6233
        %v6235 = vpop.f32.mrb[0].mxu0
        %6236 = vmatprep.mubr.bf16.mxu0 %v3045
        %6237 = vmatmul.mubr.bf16.gmra.mrb[0].mxu0 %v3044
        %v6238 = vpop.f32.mrb[0].mxu0
        %v6239 = vadd.f32 %v6103, %v6238
        %v6240 = vpop.f32.mrb[0].mxu0
        %v6241 = vpop.f32.mrb[0].mxu0
        %v6242 = vadd.f32 %v6106, %v6241
        %v6243 = vpop.f32.mrb[0].mxu0
        %6244 = vmatprep.mubr.bf16.mxu0 %v3081
        %6245 = vmatmul.mubr.bf16.gmra.mrb[0].mxu0 %v3080
        %v6246 = vpop.f32.mrb[0].mxu0
        %v6247 = vadd.f32 %v6111, %v6246
        %v6248 = vpop.f32.mrb[0].mxu0
        %v6249 = vpop.f32.mrb[0].mxu0
        %v6250 = vpop.f32.mrb[0].mxu0
        %6251 = vdwg.mxu0
        %6252 = vmatprep.subr.bf16.mxu0 0
        %6253 = vmatpush1.bf16.msra.mxu0 %v4836
        %6254 = vmatprep.subr.bf16.mxu0 0
        %6255 = vmatpush1.bf16.msra.mxu0 %v4837
        %6256 = vmatprep.subr.bf16.mxu0 0
        %6257 = vmatpush1.bf16.msra.mxu0 %v4838
        %6258 = vmatprep.subr.bf16.mxu0 0
        %6259 = vmatpush1.bf16.msra.mxu0 %v4839
        %6260 = vmatprep.subr.bf16.mxu0 0
        %6261 = vmatpush1.bf16.msra.mxu0 %v4840
        %6262 = vmatprep.subr.bf16.mxu0 0
        %6263 = vmatpush1.bf16.msra.mxu0 %v4841
        %6264 = vmatprep.subr.bf16.mxu0 0
        %6265 = vmatpush1.bf16.msra.mxu0 %v4842
        %6266 = vmatprep.subr.bf16.mxu0 0
        %6267 = vmatpush1.bf16.msra.mxu0 %v4843
        %6268 = vmatprep.subr.bf16.mxu0 0
        %6269 = vmatpush1.bf16.msra.mxu0 %v4844
        %6270 = vmatprep.subr.bf16.mxu0 0
        %6271 = vmatpush1.bf16.msra.mxu0 %v4845
        %6272 = vmatprep.subr.bf16.mxu0 0
        %6273 = vmatpush1.bf16.msra.mxu0 %v4846
        %6274 = vmatprep.subr.bf16.mxu0 0
        %6275 = vmatpush1.bf16.msra.mxu0 %v4847
        %6276 = vmatprep.subr.bf16.mxu0 0
        %6277 = vmatpush1.bf16.msra.mxu0 %v4848
        %6278 = vmatprep.subr.bf16.mxu0 0
        %6279 = vmatpush1.bf16.msra.mxu0 %v4849
        %6280 = vmatprep.subr.bf16.mxu0 0
        %6281 = vmatpush1.bf16.msra.mxu0 %v4850
        %6282 = vmatprep.subr.bf16.mxu0 0
        %6283 = vmatpush1.bf16.msra.mxu0 %v4851
        %6284 = vmatprep.mubr.bf16.mxu0 %v2651
        %6285 = vmatmul.mubr.bf16.gmra.mrb[0].mxu0 %v2650
        %v6286 = vpop.f32.mrb[0].mxu0
        %v6287 = vadd.f32 %v6151, %v6286
        %v6288 = vpop.f32.mrb[0].mxu0
        %v6289 = vpop.f32.mrb[0].mxu0
        %v6290 = vadd.f32 %v6154, %v6289
        %v6291 = vpop.f32.mrb[0].mxu0
        %6292 = vmatprep.mubr.bf16.mxu0 %v2687
        %6293 = vmatmul.mubr.bf16.gmra.mrb[0].mxu0 %v2686
        %v6294 = vpop.f32.mrb[0].mxu0
        %v6295 = vadd.f32 %v6159, %v6294
        %v6296 = vpop.f32.mrb[0].mxu0
        %v6297 = vpop.f32.mrb[0].mxu0
        %v6298 = vadd.f32 %v6162, %v6297
        %v6299 = vpop.f32.mrb[0].mxu0
        %6300 = vmatprep.mubr.bf16.mxu0 %v2723
        %6301 = vmatmul.mubr.bf16.gmra.mrb[0].mxu0 %v2722
        %v6302 = vpop.f32.mrb[0].mxu0
        %v6303 = vadd.f32 %v6167, %v6302
        %v6304 = vpop.f32.mrb[0].mxu0
        %v6305 = vpop.f32.mrb[0].mxu0
        %v6306 = vadd.f32 %v6170, %v6305
        %v6307 = vpop.f32.mrb[0].mxu0
        %6308 = vmatprep.mubr.bf16.mxu0 %v2759
        %6309 = vmatmul.mubr.bf16.gmra.mrb[0].mxu0 %v2758
        %v6310 = vpop.f32.mrb[0].mxu0
        %v6311 = vadd.f32 %v6175, %v6310
        %v6312 = vpop.f32.mrb[0].mxu0
        %v6313 = vpop.f32.mrb[0].mxu0
        %v6314 = vadd.f32 %v6178, %v6313
        %v6315 = vpop.f32.mrb[0].mxu0
        %6316 = vmatprep.mubr.bf16.mxu0 %v2795
        %6317 = vmatmul.mubr.bf16.gmra.mrb[0].mxu0 %v2794
        %v6318 = vpop.f32.mrb[0].mxu0
        %v6319 = vadd.f32 %v6183, %v6318
        %v6320 = vpop.f32.mrb[0].mxu0
        %v6321 = vpop.f32.mrb[0].mxu0
        %v6322 = vadd.f32 %v6186, %v6321
        %v6323 = vpop.f32.mrb[0].mxu0
        %6324 = vmatprep.mubr.bf16.mxu0 %v2831
        %6325 = vmatmul.mubr.bf16.gmra.mrb[0].mxu0 %v2830
        %v6326 = vpop.f32.mrb[0].mxu0
        %v6327 = vadd.f32 %v6191, %v6326
        %v6328 = vpop.f32.mrb[0].mxu0
        %v6329 = vpop.f32.mrb[0].mxu0
        %v6330 = vadd.f32 %v6194, %v6329
        %v6331 = vpop.f32.mrb[0].mxu0
        %6332 = vmatprep.mubr.bf16.mxu0 %v2867
        %6333 = vmatmul.mubr.bf16.gmra.mrb[0].mxu0 %v2866
        %v6334 = vpop.f32.mrb[0].mxu0
        %v6335 = vadd.f32 %v6199, %v6334
        %v6336 = vpop.f32.mrb[0].mxu0
        %v6337 = vpop.f32.mrb[0].mxu0
        %v6338 = vadd.f32 %v6202, %v6337
        %v6339 = vpop.f32.mrb[0].mxu0
        %6340 = vmatprep.mubr.bf16.mxu0 %v2903
        %6341 = vmatmul.mubr.bf16.gmra.mrb[0].mxu0 %v2902
        %v6342 = vpop.f32.mrb[0].mxu0
        %v6343 = vadd.f32 %v6207, %v6342
        %v6344 = vpop.f32.mrb[0].mxu0
        %v6345 = vpop.f32.mrb[0].mxu0
        %v6346 = vadd.f32 %v6210, %v6345
        %v6347 = vpop.f32.mrb[0].mxu0
        %6348 = vmatprep.mubr.bf16.mxu0 %v2939
        %6349 = vmatmul.mubr.bf16.gmra.mrb[0].mxu0 %v2938
        %v6350 = vpop.f32.mrb[0].mxu0
        %v6351 = vadd.f32 %v6215, %v6350
        %v6352 = vpop.f32.mrb[0].mxu0
        %v6353 = vpop.f32.mrb[0].mxu0
        %v6354 = vadd.f32 %v6218, %v6353
        %v6355 = vpop.f32.mrb[0].mxu0
        %6356 = vmatprep.mubr.bf16.mxu0 %v2975
        %6357 = vmatmul.mubr.bf16.gmra.mrb[0].mxu0 %v2974
        %v6358 = vpop.f32.mrb[0].mxu0
        %v6359 = vadd.f32 %v6223, %v6358
        %v6360 = vpop.f32.mrb[0].mxu0
        %v6361 = vpop.f32.mrb[0].mxu0
        %v6362 = vadd.f32 %v6226, %v6361
        %v6363 = vpop.f32.mrb[0].mxu0
        %6364 = vmatprep.mubr.bf16.mxu0 %v3011
        %6365 = vmatmul.mubr.bf16.gmra.mrb[0].mxu0 %v3010
        %v6366 = vpop.f32.mrb[0].mxu0
        %v6367 = vadd.f32 %v6231, %v6366
        %v6368 = vpop.f32.mrb[0].mxu0
        %v6369 = vpop.f32.mrb[0].mxu0
        %v6370 = vadd.f32 %v6234, %v6369
        %v6371 = vpop.f32.mrb[0].mxu0
        %6372 = vmatprep.mubr.bf16.mxu0 %v3047
        %6373 = vmatmul.mubr.bf16.gmra.mrb[0].mxu0 %v3046
        %v6374 = vpop.f32.mrb[0].mxu0
        %v6375 = vadd.f32 %v6239, %v6374
        %v6376 = vpop.f32.mrb[0].mxu0
        %v6377 = vpop.f32.mrb[0].mxu0
        %v6378 = vadd.f32 %v6242, %v6377
        %v6379 = vpop.f32.mrb[0].mxu0
        %6380 = vmatprep.mubr.bf16.mxu0 %v3083
        %6381 = vmatmul.mubr.bf16.gmra.mrb[0].mxu0 %v3082
        %v6382 = vpop.f32.mrb[0].mxu0
        %v6383 = vadd.f32 %v6247, %v6382
        %v6384 = vpop.f32.mrb[0].mxu0
        %v6385 = vpop.f32.mrb[0].mxu0
        %v6386 = vpop.f32.mrb[0].mxu0
        %6387 = vdwg.mxu0
        %6388 = vmatprep.subr.bf16.mxu0 0
        %6389 = vmatpush1.bf16.msra.mxu0 %v4852
        %6390 = vmatprep.subr.bf16.mxu0 0
        %6391 = vmatpush1.bf16.msra.mxu0 %v4853
        %6392 = vmatprep.subr.bf16.mxu0 0
        %6393 = vmatpush1.bf16.msra.mxu0 %v4854
        %6394 = vmatprep.subr.bf16.mxu0 0
        %6395 = vmatpush1.bf16.msra.mxu0 %v4855
        %6396 = vmatprep.subr.bf16.mxu0 0
        %6397 = vmatpush1.bf16.msra.mxu0 %v4856
        %6398 = vmatprep.subr.bf16.mxu0 0
        %6399 = vmatpush1.bf16.msra.mxu0 %v4857
        %6400 = vmatprep.subr.bf16.mxu0 0
        %6401 = vmatpush1.bf16.msra.mxu0 %v4858
        %6402 = vmatprep.subr.bf16.mxu0 0
        %6403 = vmatpush1.bf16.msra.mxu0 %v4859
        %6404 = vmatprep.subr.bf16.mxu0 0
        %6405 = vmatpush1.bf16.msra.mxu0 %v4860
        %6406 = vmatprep.subr.bf16.mxu0 0
        %6407 = vmatpush1.bf16.msra.mxu0 %v4861
        %6408 = vmatprep.subr.bf16.mxu0 0
        %6409 = vmatpush1.bf16.msra.mxu0 %v4862
        %6410 = vmatprep.subr.bf16.mxu0 0
        %6411 = vmatpush1.bf16.msra.mxu0 %v4863
        %6412 = vmatprep.subr.bf16.mxu0 0
        %6413 = vmatpush1.bf16.msra.mxu0 %v4864
        %6414 = vmatprep.subr.bf16.mxu0 0
        %6415 = vmatpush1.bf16.msra.mxu0 %v4865
        %6416 = vmatprep.subr.bf16.mxu0 0
        %6417 = vmatpush1.bf16.msra.mxu0 %v4866
        %6418 = vmatprep.subr.bf16.mxu0 0
        %6419 = vmatpush1.bf16.msra.mxu0 %v4867
        %6420 = vmatprep.mubr.bf16.mxu0 %v2653
        %6421 = vmatmul.mubr.bf16.gmra.mrb[0].mxu0 %v2652
        %v6422 = vpop.f32.mrb[0].mxu0
        %v6423 = vadd.f32 %v6287, %v6422
        %v6424 = vpop.f32.mrb[0].mxu0
        %v6425 = vpop.f32.mrb[0].mxu0
        %v6426 = vadd.f32 %v6290, %v6425
        %v6427 = vpop.f32.mrb[0].mxu0
        %6428 = vmatprep.mubr.bf16.mxu0 %v2689
        %6429 = vmatmul.mubr.bf16.gmra.mrb[0].mxu0 %v2688
        %v6430 = vpop.f32.mrb[0].mxu0
        %v6431 = vadd.f32 %v6295, %v6430
        %v6432 = vpop.f32.mrb[0].mxu0
        %v6433 = vpop.f32.mrb[0].mxu0
        %v6434 = vadd.f32 %v6298, %v6433
        %v6435 = vpop.f32.mrb[0].mxu0
        %6436 = vmatprep.mubr.bf16.mxu0 %v2725
        %6437 = vmatmul.mubr.bf16.gmra.mrb[0].mxu0 %v2724
        %v6438 = vpop.f32.mrb[0].mxu0
        %v6439 = vadd.f32 %v6303, %v6438
        %v6440 = vpop.f32.mrb[0].mxu0
        %v6441 = vpop.f32.mrb[0].mxu0
        %v6442 = vadd.f32 %v6306, %v6441
        %v6443 = vpop.f32.mrb[0].mxu0
        %6444 = vmatprep.mubr.bf16.mxu0 %v2761
        %6445 = vmatmul.mubr.bf16.gmra.mrb[0].mxu0 %v2760
        %v6446 = vpop.f32.mrb[0].mxu0
        %v6447 = vadd.f32 %v6311, %v6446
        %v6448 = vpop.f32.mrb[0].mxu0
        %v6449 = vpop.f32.mrb[0].mxu0
        %v6450 = vadd.f32 %v6314, %v6449
        %v6451 = vpop.f32.mrb[0].mxu0
        %6452 = vmatprep.mubr.bf16.mxu0 %v2797
        %6453 = vmatmul.mubr.bf16.gmra.mrb[0].mxu0 %v2796
        %v6454 = vpop.f32.mrb[0].mxu0
        %v6455 = vadd.f32 %v6319, %v6454
        %v6456 = vpop.f32.mrb[0].mxu0
        %v6457 = vpop.f32.mrb[0].mxu0
        %v6458 = vadd.f32 %v6322, %v6457
        %v6459 = vpop.f32.mrb[0].mxu0
        %6460 = vmatprep.mubr.bf16.mxu0 %v2833
        %6461 = vmatmul.mubr.bf16.gmra.mrb[0].mxu0 %v2832
        %v6462 = vpop.f32.mrb[0].mxu0
        %v6463 = vadd.f32 %v6327, %v6462
        %v6464 = vpop.f32.mrb[0].mxu0
        %v6465 = vpop.f32.mrb[0].mxu0
        %v6466 = vadd.f32 %v6330, %v6465
        %v6467 = vpop.f32.mrb[0].mxu0
        %6468 = vmatprep.mubr.bf16.mxu0 %v2869
        %6469 = vmatmul.mubr.bf16.gmra.mrb[0].mxu0 %v2868
        %v6470 = vpop.f32.mrb[0].mxu0
        %v6471 = vadd.f32 %v6335, %v6470
        %v6472 = vpop.f32.mrb[0].mxu0
        %v6473 = vpop.f32.mrb[0].mxu0
        %v6474 = vadd.f32 %v6338, %v6473
        %v6475 = vpop.f32.mrb[0].mxu0
        %6476 = vmatprep.mubr.bf16.mxu0 %v2905
        %6477 = vmatmul.mubr.bf16.gmra.mrb[0].mxu0 %v2904
        %v6478 = vpop.f32.mrb[0].mxu0
        %v6479 = vadd.f32 %v6343, %v6478
        %v6480 = vpop.f32.mrb[0].mxu0
        %v6481 = vpop.f32.mrb[0].mxu0
        %v6482 = vadd.f32 %v6346, %v6481
        %v6483 = vpop.f32.mrb[0].mxu0
        %6484 = vmatprep.mubr.bf16.mxu0 %v2941
        %6485 = vmatmul.mubr.bf16.gmra.mrb[0].mxu0 %v2940
        %v6486 = vpop.f32.mrb[0].mxu0
        %v6487 = vadd.f32 %v6351, %v6486
        %v6488 = vpop.f32.mrb[0].mxu0
        %v6489 = vpop.f32.mrb[0].mxu0
        %v6490 = vadd.f32 %v6354, %v6489
        %v6491 = vpop.f32.mrb[0].mxu0
        %6492 = vmatprep.mubr.bf16.mxu0 %v2977
        %6493 = vmatmul.mubr.bf16.gmra.mrb[0].mxu0 %v2976
        %v6494 = vpop.f32.mrb[0].mxu0
        %v6495 = vadd.f32 %v6359, %v6494
        %v6496 = vpop.f32.mrb[0].mxu0
        %v6497 = vpop.f32.mrb[0].mxu0
        %v6498 = vadd.f32 %v6362, %v6497
        %v6499 = vpop.f32.mrb[0].mxu0
        %6500 = vmatprep.mubr.bf16.mxu0 %v3013
        %6501 = vmatmul.mubr.bf16.gmra.mrb[0].mxu0 %v3012
        %v6502 = vpop.f32.mrb[0].mxu0
        %v6503 = vadd.f32 %v6367, %v6502
        %v6504 = vpop.f32.mrb[0].mxu0
        %v6505 = vpop.f32.mrb[0].mxu0
        %v6506 = vadd.f32 %v6370, %v6505
        %v6507 = vpop.f32.mrb[0].mxu0
        %6508 = vmatprep.mubr.bf16.mxu0 %v3049
        %6509 = vmatmul.mubr.bf16.gmra.mrb[0].mxu0 %v3048
        %v6510 = vpop.f32.mrb[0].mxu0
        %v6511 = vadd.f32 %v6375, %v6510
        %v6512 = vpop.f32.mrb[0].mxu0
        %v6513 = vpop.f32.mrb[0].mxu0
        %v6514 = vadd.f32 %v6378, %v6513
        %v6515 = vpop.f32.mrb[0].mxu0
        %6516 = vmatprep.mubr.bf16.mxu0 %v3085
        %6517 = vmatmul.mubr.bf16.gmra.mrb[0].mxu0 %v3084
        %v6518 = vpop.f32.mrb[0].mxu0
        %v6519 = vadd.f32 %v6383, %v6518
        %v6520 = vpop.f32.mrb[0].mxu0
        %v6521 = vpop.f32.mrb[0].mxu0
        %v6522 = vpop.f32.mrb[0].mxu0
        %6523 = vdwg.mxu0
        %6524 = vmatprep.subr.bf16.mxu0 0
        %6525 = vmatpush1.bf16.msra.mxu0 %v4868
        %6526 = vmatprep.subr.bf16.mxu0 0
        %6527 = vmatpush1.bf16.msra.mxu0 %v4869
        %6528 = vmatprep.subr.bf16.mxu0 0
        %6529 = vmatpush1.bf16.msra.mxu0 %v4870
        %6530 = vmatprep.subr.bf16.mxu0 0
        %6531 = vmatpush1.bf16.msra.mxu0 %v4871
        %6532 = vmatprep.subr.bf16.mxu0 0
        %6533 = vmatpush1.bf16.msra.mxu0 %v4872
        %6534 = vmatprep.subr.bf16.mxu0 0
        %6535 = vmatpush1.bf16.msra.mxu0 %v4873
        %6536 = vmatprep.subr.bf16.mxu0 0
        %6537 = vmatpush1.bf16.msra.mxu0 %v4874
        %6538 = vmatprep.subr.bf16.mxu0 0
        %6539 = vmatpush1.bf16.msra.mxu0 %v4875
        %6540 = vmatprep.subr.bf16.mxu0 0
        %6541 = vmatpush1.bf16.msra.mxu0 %v4876
        %6542 = vmatprep.subr.bf16.mxu0 0
        %6543 = vmatpush1.bf16.msra.mxu0 %v4877
        %6544 = vmatprep.subr.bf16.mxu0 0
        %6545 = vmatpush1.bf16.msra.mxu0 %v4878
        %6546 = vmatprep.subr.bf16.mxu0 0
        %6547 = vmatpush1.bf16.msra.mxu0 %v4879
        %6548 = vmatprep.subr.bf16.mxu0 0
        %6549 = vmatpush1.bf16.msra.mxu0 %v4880
        %6550 = vmatprep.subr.bf16.mxu0 0
        %6551 = vmatpush1.bf16.msra.mxu0 %v4881
        %6552 = vmatprep.subr.bf16.mxu0 0
        %6553 = vmatpush1.bf16.msra.mxu0 %v4882
        %6554 = vmatprep.subr.bf16.mxu0 0
        %6555 = vmatpush1.bf16.msra.mxu0 %v4883
        %6556 = vmatprep.mubr.bf16.mxu0 %v2655
        %6557 = vmatmul.mubr.bf16.gmra.mrb[0].mxu0 %v2654
        %v6558 = vpop.f32.mrb[0].mxu0
        %v6559 = vadd.f32 %v6423, %v6558
        %v6560 = vpop.f32.mrb[0].mxu0
        %v6561 = vpop.f32.mrb[0].mxu0
        %v6562 = vadd.f32 %v6426, %v6561
        %v6563 = vpop.f32.mrb[0].mxu0
        %6564 = vmatprep.mubr.bf16.mxu0 %v2691
        %6565 = vmatmul.mubr.bf16.gmra.mrb[0].mxu0 %v2690
        %v6566 = vpop.f32.mrb[0].mxu0
        %v6567 = vadd.f32 %v6431, %v6566
        %v6568 = vpop.f32.mrb[0].mxu0
        %v6569 = vpop.f32.mrb[0].mxu0
        %v6570 = vadd.f32 %v6434, %v6569
        %v6571 = vpop.f32.mrb[0].mxu0
        %6572 = vmatprep.mubr.bf16.mxu0 %v2727
        %6573 = vmatmul.mubr.bf16.gmra.mrb[0].mxu0 %v2726
        %v6574 = vpop.f32.mrb[0].mxu0
        %v6575 = vadd.f32 %v6439, %v6574
        %v6576 = vpop.f32.mrb[0].mxu0
        %v6577 = vpop.f32.mrb[0].mxu0
        %v6578 = vadd.f32 %v6442, %v6577
        %v6579 = vpop.f32.mrb[0].mxu0
        %6580 = vmatprep.mubr.bf16.mxu0 %v2763
        %6581 = vmatmul.mubr.bf16.gmra.mrb[0].mxu0 %v2762
        %v6582 = vpop.f32.mrb[0].mxu0
        %v6583 = vadd.f32 %v6447, %v6582
        %v6584 = vpop.f32.mrb[0].mxu0
        %v6585 = vpop.f32.mrb[0].mxu0
        %v6586 = vadd.f32 %v6450, %v6585
        %v6587 = vpop.f32.mrb[0].mxu0
        %6588 = vmatprep.mubr.bf16.mxu0 %v2799
        %6589 = vmatmul.mubr.bf16.gmra.mrb[0].mxu0 %v2798
        %v6590 = vpop.f32.mrb[0].mxu0
        %v6591 = vadd.f32 %v6455, %v6590
        %v6592 = vpop.f32.mrb[0].mxu0
        %v6593 = vpop.f32.mrb[0].mxu0
        %v6594 = vadd.f32 %v6458, %v6593
        %v6595 = vpop.f32.mrb[0].mxu0
        %6596 = vmatprep.mubr.bf16.mxu0 %v2835
        %6597 = vmatmul.mubr.bf16.gmra.mrb[0].mxu0 %v2834
        %v6598 = vpop.f32.mrb[0].mxu0
        %v6599 = vadd.f32 %v6463, %v6598
        %v6600 = vpop.f32.mrb[0].mxu0
        %v6601 = vpop.f32.mrb[0].mxu0
        %v6602 = vadd.f32 %v6466, %v6601
        %v6603 = vpop.f32.mrb[0].mxu0
        %6604 = vmatprep.mubr.bf16.mxu0 %v2871
        %6605 = vmatmul.mubr.bf16.gmra.mrb[0].mxu0 %v2870
        %v6606 = vpop.f32.mrb[0].mxu0
        %v6607 = vadd.f32 %v6471, %v6606
        %v6608 = vpop.f32.mrb[0].mxu0
        %v6609 = vpop.f32.mrb[0].mxu0
        %v6610 = vadd.f32 %v6474, %v6609
        %v6611 = vpop.f32.mrb[0].mxu0
        %6612 = vmatprep.mubr.bf16.mxu0 %v2907
        %6613 = vmatmul.mubr.bf16.gmra.mrb[0].mxu0 %v2906
        %v6614 = vpop.f32.mrb[0].mxu0
        %v6615 = vadd.f32 %v6479, %v6614
        %v6616 = vpop.f32.mrb[0].mxu0
        %v6617 = vpop.f32.mrb[0].mxu0
        %v6618 = vadd.f32 %v6482, %v6617
        %v6619 = vpop.f32.mrb[0].mxu0
        %6620 = vmatprep.mubr.bf16.mxu0 %v2943
        %6621 = vmatmul.mubr.bf16.gmra.mrb[0].mxu0 %v2942
        %v6622 = vpop.f32.mrb[0].mxu0
        %v6623 = vadd.f32 %v6487, %v6622
        %v6624 = vpop.f32.mrb[0].mxu0
        %v6625 = vpop.f32.mrb[0].mxu0
        %v6626 = vadd.f32 %v6490, %v6625
        %v6627 = vpop.f32.mrb[0].mxu0
        %6628 = vmatprep.mubr.bf16.mxu0 %v2979
        %6629 = vmatmul.mubr.bf16.gmra.mrb[0].mxu0 %v2978
        %v6630 = vpop.f32.mrb[0].mxu0
        %v6631 = vadd.f32 %v6495, %v6630
        %v6632 = vpop.f32.mrb[0].mxu0
        %v6633 = vpop.f32.mrb[0].mxu0
        %v6634 = vadd.f32 %v6498, %v6633
        %v6635 = vpop.f32.mrb[0].mxu0
        %6636 = vmatprep.mubr.bf16.mxu0 %v3015
        %6637 = vmatmul.mubr.bf16.gmra.mrb[0].mxu0 %v3014
        %v6638 = vpop.f32.mrb[0].mxu0
        %v6639 = vadd.f32 %v6503, %v6638
        %v6640 = vpop.f32.mrb[0].mxu0
        %v6641 = vpop.f32.mrb[0].mxu0
        %v6642 = vadd.f32 %v6506, %v6641
        %v6643 = vpop.f32.mrb[0].mxu0
        %6644 = vmatprep.mubr.bf16.mxu0 %v3051
        %6645 = vmatmul.mubr.bf16.gmra.mrb[0].mxu0 %v3050
        %v6646 = vpop.f32.mrb[0].mxu0
        %v6647 = vadd.f32 %v6511, %v6646
        %v6648 = vpop.f32.mrb[0].mxu0
        %v6649 = vpop.f32.mrb[0].mxu0
        %v6650 = vadd.f32 %v6514, %v6649
        %v6651 = vpop.f32.mrb[0].mxu0
        %6652 = vmatprep.mubr.bf16.mxu0 %v3087
        %6653 = vmatmul.mubr.bf16.gmra.mrb[0].mxu0 %v3086
        %v6654 = vpop.f32.mrb[0].mxu0
        %v6655 = vadd.f32 %v6519, %v6654
        %v6656 = vpop.f32.mrb[0].mxu0
        %v6657 = vpop.f32.mrb[0].mxu0
        %v6658 = vpop.f32.mrb[0].mxu0
        %6659 = vdwg.mxu0
        %6660 = vmatprep.subr.bf16.mxu0 0
        %6661 = vmatpush1.bf16.msra.mxu0 %v4884
        %6662 = vmatprep.subr.bf16.mxu0 0
        %6663 = vmatpush1.bf16.msra.mxu0 %v4885
        %6664 = vmatprep.subr.bf16.mxu0 0
        %6665 = vmatpush1.bf16.msra.mxu0 %v4886
        %6666 = vmatprep.subr.bf16.mxu0 0
        %6667 = vmatpush1.bf16.msra.mxu0 %v4887
        %6668 = vmatprep.subr.bf16.mxu0 0
        %6669 = vmatpush1.bf16.msra.mxu0 %v4888
        %6670 = vmatprep.subr.bf16.mxu0 0
        %6671 = vmatpush1.bf16.msra.mxu0 %v4889
        %6672 = vmatprep.subr.bf16.mxu0 0
        %6673 = vmatpush1.bf16.msra.mxu0 %v4890
        %6674 = vmatprep.subr.bf16.mxu0 0
        %6675 = vmatpush1.bf16.msra.mxu0 %v4891
        %6676 = vmatprep.subr.bf16.mxu0 0
        %6677 = vmatpush1.bf16.msra.mxu0 %v4892
        %6678 = vmatprep.subr.bf16.mxu0 0
        %6679 = vmatpush1.bf16.msra.mxu0 %v4893
        %6680 = vmatprep.subr.bf16.mxu0 0
        %6681 = vmatpush1.bf16.msra.mxu0 %v4894
        %6682 = vmatprep.subr.bf16.mxu0 0
        %6683 = vmatpush1.bf16.msra.mxu0 %v4895
        %6684 = vmatprep.subr.bf16.mxu0 0
        %6685 = vmatpush1.bf16.msra.mxu0 %v4896
        %6686 = vmatprep.subr.bf16.mxu0 0
        %6687 = vmatpush1.bf16.msra.mxu0 %v4897
        %6688 = vmatprep.subr.bf16.mxu0 0
        %6689 = vmatpush1.bf16.msra.mxu0 %v4898
        %6690 = vmatprep.subr.bf16.mxu0 0
        %6691 = vmatpush1.bf16.msra.mxu0 %v4899
        %6692 = vmatprep.mubr.bf16.mxu0 %v2657
        %6693 = vmatmul.mubr.bf16.gmra.mrb[0].mxu0 %v2656
        %v6694 = vpop.f32.mrb[0].mxu0
        %v6695 = vadd.f32 %v6559, %v6694
        %v6696 = vpop.f32.mrb[0].mxu0
        %v6697 = vpop.f32.mrb[0].mxu0
        %v6698 = vadd.f32 %v6562, %v6697
        %v6699 = vpop.f32.mrb[0].mxu0
        %6700 = vmatprep.mubr.bf16.mxu0 %v2693
        %6701 = vmatmul.mubr.bf16.gmra.mrb[0].mxu0 %v2692
        %v6702 = vpop.f32.mrb[0].mxu0
        %v6703 = vadd.f32 %v6567, %v6702
        %v6704 = vpop.f32.mrb[0].mxu0
        %v6705 = vpop.f32.mrb[0].mxu0
        %v6706 = vadd.f32 %v6570, %v6705
        %v6707 = vpop.f32.mrb[0].mxu0
        %6708 = vmatprep.mubr.bf16.mxu0 %v2729
        %6709 = vmatmul.mubr.bf16.gmra.mrb[0].mxu0 %v2728
        %v6710 = vpop.f32.mrb[0].mxu0
        %v6711 = vadd.f32 %v6575, %v6710
        %v6712 = vpop.f32.mrb[0].mxu0
        %v6713 = vpop.f32.mrb[0].mxu0
        %v6714 = vadd.f32 %v6578, %v6713
        %v6715 = vpop.f32.mrb[0].mxu0
        %6716 = vmatprep.mubr.bf16.mxu0 %v2765
        %6717 = vmatmul.mubr.bf16.gmra.mrb[0].mxu0 %v2764
        %v6718 = vpop.f32.mrb[0].mxu0
        %v6719 = vadd.f32 %v6583, %v6718
        %v6720 = vpop.f32.mrb[0].mxu0
        %v6721 = vpop.f32.mrb[0].mxu0
        %v6722 = vadd.f32 %v6586, %v6721
        %v6723 = vpop.f32.mrb[0].mxu0
        %6724 = vmatprep.mubr.bf16.mxu0 %v2801
        %6725 = vmatmul.mubr.bf16.gmra.mrb[0].mxu0 %v2800
        %v6726 = vpop.f32.mrb[0].mxu0
        %v6727 = vadd.f32 %v6591, %v6726
        %v6728 = vpop.f32.mrb[0].mxu0
        %v6729 = vpop.f32.mrb[0].mxu0
        %v6730 = vadd.f32 %v6594, %v6729
        %v6731 = vpop.f32.mrb[0].mxu0
        %6732 = vmatprep.mubr.bf16.mxu0 %v2837
        %6733 = vmatmul.mubr.bf16.gmra.mrb[0].mxu0 %v2836
        %v6734 = vpop.f32.mrb[0].mxu0
        %v6735 = vadd.f32 %v6599, %v6734
        %v6736 = vpop.f32.mrb[0].mxu0
        %v6737 = vpop.f32.mrb[0].mxu0
        %v6738 = vadd.f32 %v6602, %v6737
        %v6739 = vpop.f32.mrb[0].mxu0
        %6740 = vmatprep.mubr.bf16.mxu0 %v2873
        %6741 = vmatmul.mubr.bf16.gmra.mrb[0].mxu0 %v2872
        %v6742 = vpop.f32.mrb[0].mxu0
        %v6743 = vadd.f32 %v6607, %v6742
        %v6744 = vpop.f32.mrb[0].mxu0
        %v6745 = vpop.f32.mrb[0].mxu0
        %v6746 = vadd.f32 %v6610, %v6745
        %v6747 = vpop.f32.mrb[0].mxu0
        %6748 = vmatprep.mubr.bf16.mxu0 %v2909
        %6749 = vmatmul.mubr.bf16.gmra.mrb[0].mxu0 %v2908
        %v6750 = vpop.f32.mrb[0].mxu0
        %v6751 = vadd.f32 %v6615, %v6750
        %v6752 = vpop.f32.mrb[0].mxu0
        %v6753 = vpop.f32.mrb[0].mxu0
        %v6754 = vadd.f32 %v6618, %v6753
        %v6755 = vpop.f32.mrb[0].mxu0
        %6756 = vmatprep.mubr.bf16.mxu0 %v2945
        %6757 = vmatmul.mubr.bf16.gmra.mrb[0].mxu0 %v2944
        %v6758 = vpop.f32.mrb[0].mxu0
        %v6759 = vadd.f32 %v6623, %v6758
        %v6760 = vpop.f32.mrb[0].mxu0
        %v6761 = vpop.f32.mrb[0].mxu0
        %v6762 = vadd.f32 %v6626, %v6761
        %v6763 = vpop.f32.mrb[0].mxu0
        %6764 = vmatprep.mubr.bf16.mxu0 %v2981
        %6765 = vmatmul.mubr.bf16.gmra.mrb[0].mxu0 %v2980
        %v6766 = vpop.f32.mrb[0].mxu0
        %v6767 = vadd.f32 %v6631, %v6766
        %v6768 = vpop.f32.mrb[0].mxu0
        %v6769 = vpop.f32.mrb[0].mxu0
        %v6770 = vadd.f32 %v6634, %v6769
        %v6771 = vpop.f32.mrb[0].mxu0
        %6772 = vmatprep.mubr.bf16.mxu0 %v3017
        %6773 = vmatmul.mubr.bf16.gmra.mrb[0].mxu0 %v3016
        %v6774 = vpop.f32.mrb[0].mxu0
        %v6775 = vadd.f32 %v6639, %v6774
        %v6776 = vpop.f32.mrb[0].mxu0
        %v6777 = vpop.f32.mrb[0].mxu0
        %v6778 = vadd.f32 %v6642, %v6777
        %v6779 = vpop.f32.mrb[0].mxu0
        %6780 = vmatprep.mubr.bf16.mxu0 %v3053
        %6781 = vmatmul.mubr.bf16.gmra.mrb[0].mxu0 %v3052
        %v6782 = vpop.f32.mrb[0].mxu0
        %v6783 = vadd.f32 %v6647, %v6782
        %v6784 = vpop.f32.mrb[0].mxu0
        %v6785 = vpop.f32.mrb[0].mxu0
        %v6786 = vadd.f32 %v6650, %v6785
        %v6787 = vpop.f32.mrb[0].mxu0
        %6788 = vmatprep.mubr.bf16.mxu0 %v3089
        %6789 = vmatmul.mubr.bf16.gmra.mrb[0].mxu0 %v3088
        %v6790 = vpop.f32.mrb[0].mxu0
        %v6791 = vadd.f32 %v6655, %v6790
        %v6792 = vpop.f32.mrb[0].mxu0
        %v6793 = vpop.f32.mrb[0].mxu0
        %v6794 = vpop.f32.mrb[0].mxu0
        %6795 = vdwg.mxu0
        %6796 = vmatprep.subr.bf16.mxu0 0
        %6797 = vmatpush1.bf16.msra.mxu0 %v4900
        %6798 = vmatprep.subr.bf16.mxu0 0
        %6799 = vmatpush1.bf16.msra.mxu0 %v4901
        %6800 = vmatprep.subr.bf16.mxu0 0
        %6801 = vmatpush1.bf16.msra.mxu0 %v4902
        %6802 = vmatprep.subr.bf16.mxu0 0
        %6803 = vmatpush1.bf16.msra.mxu0 %v4903
        %6804 = vmatprep.subr.bf16.mxu0 0
        %6805 = vmatpush1.bf16.msra.mxu0 %v4904
        %6806 = vmatprep.subr.bf16.mxu0 0
        %6807 = vmatpush1.bf16.msra.mxu0 %v4905
        %6808 = vmatprep.subr.bf16.mxu0 0
        %6809 = vmatpush1.bf16.msra.mxu0 %v4906
        %6810 = vmatprep.subr.bf16.mxu0 0
        %6811 = vmatpush1.bf16.msra.mxu0 %v4907
        %6812 = vmatprep.subr.bf16.mxu0 0
        %6813 = vmatpush1.bf16.msra.mxu0 %v4908
        %6814 = vmatprep.subr.bf16.mxu0 0
        %6815 = vmatpush1.bf16.msra.mxu0 %v4909
        %6816 = vmatprep.subr.bf16.mxu0 0
        %6817 = vmatpush1.bf16.msra.mxu0 %v4910
        %6818 = vmatprep.subr.bf16.mxu0 0
        %6819 = vmatpush1.bf16.msra.mxu0 %v4911
        %6820 = vmatprep.subr.bf16.mxu0 0
        %6821 = vmatpush1.bf16.msra.mxu0 %v4912
        %6822 = vmatprep.subr.bf16.mxu0 0
        %6823 = vmatpush1.bf16.msra.mxu0 %v4913
        %6824 = vmatprep.subr.bf16.mxu0 0
        %6825 = vmatpush1.bf16.msra.mxu0 %v4914
        %6826 = vmatprep.subr.bf16.mxu0 0
        %6827 = vmatpush1.bf16.msra.mxu0 %v4915
        %6828 = vmatprep.mubr.bf16.mxu0 %v2659
        %6829 = vmatmul.mubr.bf16.gmra.mrb[0].mxu0 %v2658
        %v6830 = vpop.f32.mrb[0].mxu0
        %v6831 = vadd.f32 %v6695, %v6830
        %v6832 = vpop.f32.mrb[0].mxu0
        %v6833 = vpop.f32.mrb[0].mxu0
        %v6834 = vadd.f32 %v6698, %v6833
        %v6835 = vpop.f32.mrb[0].mxu0
        %6836 = vmatprep.mubr.bf16.mxu0 %v2695
        %6837 = vmatmul.mubr.bf16.gmra.mrb[0].mxu0 %v2694
        %v6838 = vpop.f32.mrb[0].mxu0
        %v6839 = vadd.f32 %v6703, %v6838
        %v6840 = vpop.f32.mrb[0].mxu0
        %v6841 = vpop.f32.mrb[0].mxu0
        %v6842 = vadd.f32 %v6706, %v6841
        %v6843 = vpop.f32.mrb[0].mxu0
        %6844 = vmatprep.mubr.bf16.mxu0 %v2731
        %6845 = vmatmul.mubr.bf16.gmra.mrb[0].mxu0 %v2730
        %v6846 = vpop.f32.mrb[0].mxu0
        %v6847 = vadd.f32 %v6711, %v6846
        %v6848 = vpop.f32.mrb[0].mxu0
        %v6849 = vpop.f32.mrb[0].mxu0
        %v6850 = vadd.f32 %v6714, %v6849
        %v6851 = vpop.f32.mrb[0].mxu0
        %6852 = vmatprep.mubr.bf16.mxu0 %v2767
        %6853 = vmatmul.mubr.bf16.gmra.mrb[0].mxu0 %v2766
        %v6854 = vpop.f32.mrb[0].mxu0
        %v6855 = vadd.f32 %v6719, %v6854
        %v6856 = vpop.f32.mrb[0].mxu0
        %v6857 = vpop.f32.mrb[0].mxu0
        %v6858 = vadd.f32 %v6722, %v6857
        %v6859 = vpop.f32.mrb[0].mxu0
        %6860 = vmatprep.mubr.bf16.mxu0 %v2803
        %6861 = vmatmul.mubr.bf16.gmra.mrb[0].mxu0 %v2802
        %v6862 = vpop.f32.mrb[0].mxu0
        %v6863 = vadd.f32 %v6727, %v6862
        %v6864 = vpop.f32.mrb[0].mxu0
        %v6865 = vpop.f32.mrb[0].mxu0
        %v6866 = vadd.f32 %v6730, %v6865
        %v6867 = vpop.f32.mrb[0].mxu0
        %6868 = vmatprep.mubr.bf16.mxu0 %v2839
        %6869 = vmatmul.mubr.bf16.gmra.mrb[0].mxu0 %v2838
        %v6870 = vpop.f32.mrb[0].mxu0
        %v6871 = vadd.f32 %v6735, %v6870
        %v6872 = vpop.f32.mrb[0].mxu0
        %v6873 = vpop.f32.mrb[0].mxu0
        %v6874 = vadd.f32 %v6738, %v6873
        %v6875 = vpop.f32.mrb[0].mxu0
        %6876 = vmatprep.mubr.bf16.mxu0 %v2875
        %6877 = vmatmul.mubr.bf16.gmra.mrb[0].mxu0 %v2874
        %v6878 = vpop.f32.mrb[0].mxu0
        %v6879 = vadd.f32 %v6743, %v6878
        %v6880 = vpop.f32.mrb[0].mxu0
        %v6881 = vpop.f32.mrb[0].mxu0
        %v6882 = vadd.f32 %v6746, %v6881
        %v6883 = vpop.f32.mrb[0].mxu0
        %6884 = vmatprep.mubr.bf16.mxu0 %v2911
        %6885 = vmatmul.mubr.bf16.gmra.mrb[0].mxu0 %v2910
        %v6886 = vpop.f32.mrb[0].mxu0
        %v6887 = vadd.f32 %v6751, %v6886
        %v6888 = vpop.f32.mrb[0].mxu0
        %v6889 = vpop.f32.mrb[0].mxu0
        %v6890 = vadd.f32 %v6754, %v6889
        %v6891 = vpop.f32.mrb[0].mxu0
        %6892 = vmatprep.mubr.bf16.mxu0 %v2947
        %6893 = vmatmul.mubr.bf16.gmra.mrb[0].mxu0 %v2946
        %v6894 = vpop.f32.mrb[0].mxu0
        %v6895 = vadd.f32 %v6759, %v6894
        %v6896 = vpop.f32.mrb[0].mxu0
        %v6897 = vpop.f32.mrb[0].mxu0
        %v6898 = vadd.f32 %v6762, %v6897
        %v6899 = vpop.f32.mrb[0].mxu0
        %6900 = vmatprep.mubr.bf16.mxu0 %v2983
        %6901 = vmatmul.mubr.bf16.gmra.mrb[0].mxu0 %v2982
        %v6902 = vpop.f32.mrb[0].mxu0
        %v6903 = vadd.f32 %v6767, %v6902
        %v6904 = vpop.f32.mrb[0].mxu0
        %v6905 = vpop.f32.mrb[0].mxu0
        %v6906 = vadd.f32 %v6770, %v6905
        %v6907 = vpop.f32.mrb[0].mxu0
        %6908 = vmatprep.mubr.bf16.mxu0 %v3019
        %6909 = vmatmul.mubr.bf16.gmra.mrb[0].mxu0 %v3018
        %v6910 = vpop.f32.mrb[0].mxu0
        %v6911 = vadd.f32 %v6775, %v6910
        %v6912 = vpop.f32.mrb[0].mxu0
        %v6913 = vpop.f32.mrb[0].mxu0
        %v6914 = vadd.f32 %v6778, %v6913
        %v6915 = vpop.f32.mrb[0].mxu0
        %6916 = vmatprep.mubr.bf16.mxu0 %v3055
        %6917 = vmatmul.mubr.bf16.gmra.mrb[0].mxu0 %v3054
        %v6918 = vpop.f32.mrb[0].mxu0
        %v6919 = vadd.f32 %v6783, %v6918
        %v6920 = vpop.f32.mrb[0].mxu0
        %v6921 = vpop.f32.mrb[0].mxu0
        %v6922 = vadd.f32 %v6786, %v6921
        %v6923 = vpop.f32.mrb[0].mxu0
        %6924 = vmatprep.mubr.bf16.mxu0 %v3091
        %6925 = vmatmul.mubr.bf16.gmra.mrb[0].mxu0 %v3090
        %v6926 = vpop.f32.mrb[0].mxu0
        %v6927 = vadd.f32 %v6791, %v6926
        %v6928 = vpop.f32.mrb[0].mxu0
        %v6929 = vpop.f32.mrb[0].mxu0
        %v6930 = vpop.f32.mrb[0].mxu0
        %6931 = vdwg.mxu0
        %6932 = vmatprep.subr.bf16.mxu0 0
        %6933 = vmatpush1.bf16.msra.mxu0 %v4916
        %6934 = vmatprep.subr.bf16.mxu0 0
        %6935 = vmatpush1.bf16.msra.mxu0 %v4917
        %6936 = vmatprep.subr.bf16.mxu0 0
        %6937 = vmatpush1.bf16.msra.mxu0 %v4918
        %6938 = vmatprep.subr.bf16.mxu0 0
        %6939 = vmatpush1.bf16.msra.mxu0 %v4919
        %6940 = vmatprep.subr.bf16.mxu0 0
        %6941 = vmatpush1.bf16.msra.mxu0 %v4920
        %6942 = vmatprep.subr.bf16.mxu0 0
        %6943 = vmatpush1.bf16.msra.mxu0 %v4921
        %6944 = vmatprep.subr.bf16.mxu0 0
        %6945 = vmatpush1.bf16.msra.mxu0 %v4922
        %6946 = vmatprep.subr.bf16.mxu0 0
        %6947 = vmatpush1.bf16.msra.mxu0 %v4923
        %6948 = vmatprep.subr.bf16.mxu0 0
        %6949 = vmatpush1.bf16.msra.mxu0 %v4924
        %6950 = vmatprep.subr.bf16.mxu0 0
        %6951 = vmatpush1.bf16.msra.mxu0 %v4925
        %6952 = vmatprep.subr.bf16.mxu0 0
        %6953 = vmatpush1.bf16.msra.mxu0 %v4926
        %6954 = vmatprep.subr.bf16.mxu0 0
        %6955 = vmatpush1.bf16.msra.mxu0 %v4927
        %6956 = vmatprep.subr.bf16.mxu0 0
        %6957 = vmatpush1.bf16.msra.mxu0 %v4928
        %6958 = vmatprep.subr.bf16.mxu0 0
        %6959 = vmatpush1.bf16.msra.mxu0 %v4929
        %6960 = vmatprep.subr.bf16.mxu0 0
        %6961 = vmatpush1.bf16.msra.mxu0 %v4930
        %6962 = vmatprep.subr.bf16.mxu0 0
        %6963 = vmatpush1.bf16.msra.mxu0 %v4931
        %6964 = vmatprep.mubr.bf16.mxu0 %v2661
        %6965 = vmatmul.mubr.bf16.gmra.mrb[0].mxu0 %v2660
        %v6966 = vpop.f32.mrb[0].mxu0
        %v6967 = vadd.f32 %v6831, %v6966
        %v6968 = vpop.f32.mrb[0].mxu0
        %v6969 = vpop.f32.mrb[0].mxu0
        %v6970 = vadd.f32 %v6834, %v6969
        %v6971 = vpop.f32.mrb[0].mxu0
        %6972 = vmatprep.mubr.bf16.mxu0 %v2697
        %6973 = vmatmul.mubr.bf16.gmra.mrb[0].mxu0 %v2696
        %v6974 = vpop.f32.mrb[0].mxu0
        %v6975 = vadd.f32 %v6839, %v6974
        %v6976 = vpop.f32.mrb[0].mxu0
        %v6977 = vpop.f32.mrb[0].mxu0
        %v6978 = vadd.f32 %v6842, %v6977
        %v6979 = vpop.f32.mrb[0].mxu0
        %6980 = vmatprep.mubr.bf16.mxu0 %v2733
        %6981 = vmatmul.mubr.bf16.gmra.mrb[0].mxu0 %v2732
        %v6982 = vpop.f32.mrb[0].mxu0
        %v6983 = vadd.f32 %v6847, %v6982
        %v6984 = vpop.f32.mrb[0].mxu0
        %v6985 = vpop.f32.mrb[0].mxu0
        %v6986 = vadd.f32 %v6850, %v6985
        %v6987 = vpop.f32.mrb[0].mxu0
        %6988 = vmatprep.mubr.bf16.mxu0 %v2769
        %6989 = vmatmul.mubr.bf16.gmra.mrb[0].mxu0 %v2768
        %v6990 = vpop.f32.mrb[0].mxu0
        %v6991 = vadd.f32 %v6855, %v6990
        %v6992 = vpop.f32.mrb[0].mxu0
        %v6993 = vpop.f32.mrb[0].mxu0
        %v6994 = vadd.f32 %v6858, %v6993
        %v6995 = vpop.f32.mrb[0].mxu0
        %6996 = vmatprep.mubr.bf16.mxu0 %v2805
        %6997 = vmatmul.mubr.bf16.gmra.mrb[0].mxu0 %v2804
        %v6998 = vpop.f32.mrb[0].mxu0
        %v6999 = vadd.f32 %v6863, %v6998
        %v7000 = vpop.f32.mrb[0].mxu0
        %v7001 = vpop.f32.mrb[0].mxu0
        %v7002 = vadd.f32 %v6866, %v7001
        %v7003 = vpop.f32.mrb[0].mxu0
        %7004 = vmatprep.mubr.bf16.mxu0 %v2841
        %7005 = vmatmul.mubr.bf16.gmra.mrb[0].mxu0 %v2840
        %v7006 = vpop.f32.mrb[0].mxu0
        %v7007 = vadd.f32 %v6871, %v7006
        %v7008 = vpop.f32.mrb[0].mxu0
        %v7009 = vpop.f32.mrb[0].mxu0
        %v7010 = vadd.f32 %v6874, %v7009
        %v7011 = vpop.f32.mrb[0].mxu0
        %7012 = vmatprep.mubr.bf16.mxu0 %v2877
        %7013 = vmatmul.mubr.bf16.gmra.mrb[0].mxu0 %v2876
        %v7014 = vpop.f32.mrb[0].mxu0
        %v7015 = vadd.f32 %v6879, %v7014
        %v7016 = vpop.f32.mrb[0].mxu0
        %v7017 = vpop.f32.mrb[0].mxu0
        %v7018 = vadd.f32 %v6882, %v7017
        %v7019 = vpop.f32.mrb[0].mxu0
        %7020 = vmatprep.mubr.bf16.mxu0 %v2913
        %7021 = vmatmul.mubr.bf16.gmra.mrb[0].mxu0 %v2912
        %v7022 = vpop.f32.mrb[0].mxu0
        %v7023 = vadd.f32 %v6887, %v7022
        %v7024 = vpop.f32.mrb[0].mxu0
        %v7025 = vpop.f32.mrb[0].mxu0
        %v7026 = vadd.f32 %v6890, %v7025
        %v7027 = vpop.f32.mrb[0].mxu0
        %7028 = vmatprep.mubr.bf16.mxu0 %v2949
        %7029 = vmatmul.mubr.bf16.gmra.mrb[0].mxu0 %v2948
        %v7030 = vpop.f32.mrb[0].mxu0
        %v7031 = vadd.f32 %v6895, %v7030
        %v7032 = vpop.f32.mrb[0].mxu0
        %v7033 = vpop.f32.mrb[0].mxu0
        %v7034 = vadd.f32 %v6898, %v7033
        %v7035 = vpop.f32.mrb[0].mxu0
        %7036 = vmatprep.mubr.bf16.mxu0 %v2985
        %7037 = vmatmul.mubr.bf16.gmra.mrb[0].mxu0 %v2984
        %v7038 = vpop.f32.mrb[0].mxu0
        %v7039 = vadd.f32 %v6903, %v7038
        %v7040 = vpop.f32.mrb[0].mxu0
        %v7041 = vpop.f32.mrb[0].mxu0
        %v7042 = vadd.f32 %v6906, %v7041
        %v7043 = vpop.f32.mrb[0].mxu0
        %7044 = vmatprep.mubr.bf16.mxu0 %v3021
        %7045 = vmatmul.mubr.bf16.gmra.mrb[0].mxu0 %v3020
        %v7046 = vpop.f32.mrb[0].mxu0
        %v7047 = vadd.f32 %v6911, %v7046
        %v7048 = vpop.f32.mrb[0].mxu0
        %v7049 = vpop.f32.mrb[0].mxu0
        %v7050 = vadd.f32 %v6914, %v7049
        %v7051 = vpop.f32.mrb[0].mxu0
        %7052 = vmatprep.mubr.bf16.mxu0 %v3057
        %7053 = vmatmul.mubr.bf16.gmra.mrb[0].mxu0 %v3056
        %v7054 = vpop.f32.mrb[0].mxu0
        %v7055 = vadd.f32 %v6919, %v7054
        %v7056 = vpop.f32.mrb[0].mxu0
        %v7057 = vpop.f32.mrb[0].mxu0
        %v7058 = vadd.f32 %v6922, %v7057
        %v7059 = vpop.f32.mrb[0].mxu0
        %7060 = vmatprep.mubr.bf16.mxu0 %v3093
        %7061 = vmatmul.mubr.bf16.gmra.mrb[0].mxu0 %v3092
        %v7062 = vpop.f32.mrb[0].mxu0
        %v7063 = vadd.f32 %v6927, %v7062
        %v7064 = vpop.f32.mrb[0].mxu0
        %v7065 = vpop.f32.mrb[0].mxu0
        %v7066 = vpop.f32.mrb[0].mxu0
        %7067 = vdwg.mxu0
        %7068 = vmatprep.subr.bf16.mxu0 0
        %7069 = vmatpush1.bf16.msra.mxu0 %v4932
        %7070 = vmatprep.subr.bf16.mxu0 0
        %7071 = vmatpush1.bf16.msra.mxu0 %v4933
        %7072 = vmatprep.subr.bf16.mxu0 0
        %7073 = vmatpush1.bf16.msra.mxu0 %v4934
        %7074 = vmatprep.subr.bf16.mxu0 0
        %7075 = vmatpush1.bf16.msra.mxu0 %v4935
        %7076 = vmatprep.subr.bf16.mxu0 0
        %7077 = vmatpush1.bf16.msra.mxu0 %v4936
        %7078 = vmatprep.subr.bf16.mxu0 0
        %7079 = vmatpush1.bf16.msra.mxu0 %v4937
        %7080 = vmatprep.subr.bf16.mxu0 0
        %7081 = vmatpush1.bf16.msra.mxu0 %v4938
        %7082 = vmatprep.subr.bf16.mxu0 0
        %7083 = vmatpush1.bf16.msra.mxu0 %v4939
        %7084 = vmatprep.subr.bf16.mxu0 0
        %7085 = vmatpush1.bf16.msra.mxu0 %v4940
        %7086 = vmatprep.subr.bf16.mxu0 0
        %7087 = vmatpush1.bf16.msra.mxu0 %v4941
        %7088 = vmatprep.subr.bf16.mxu0 0
        %7089 = vmatpush1.bf16.msra.mxu0 %v4942
        %7090 = vmatprep.subr.bf16.mxu0 0
        %7091 = vmatpush1.bf16.msra.mxu0 %v4943
        %7092 = vmatprep.subr.bf16.mxu0 0
        %7093 = vmatpush1.bf16.msra.mxu0 %v4944
        %7094 = vmatprep.subr.bf16.mxu0 0
        %7095 = vmatpush1.bf16.msra.mxu0 %v4945
        %7096 = vmatprep.subr.bf16.mxu0 0
        %7097 = vmatpush1.bf16.msra.mxu0 %v4946
        %7098 = vmatprep.subr.bf16.mxu0 0
        %7099 = vmatpush1.bf16.msra.mxu0 %v4947
        %7100 = vmatprep.mubr.bf16.mxu0 %v2663
        %7101 = vmatmul.mubr.bf16.gmra.mrb[0].mxu0 %v2662
        %v7102 = vpop.f32.mrb[0].mxu0
        %v7103 = vadd.f32 %v6967, %v7102
        %v7104 = vpop.f32.mrb[0].mxu0
        %v7105 = vpop.f32.mrb[0].mxu0
        %v7106 = vadd.f32 %v6970, %v7105
        %v7107 = vpop.f32.mrb[0].mxu0
        %7108 = vmatprep.mubr.bf16.mxu0 %v2699
        %7109 = vmatmul.mubr.bf16.gmra.mrb[0].mxu0 %v2698
        %v7110 = vpop.f32.mrb[0].mxu0
        %v7111 = vadd.f32 %v6975, %v7110
        %v7112 = vpop.f32.mrb[0].mxu0
        %v7113 = vpop.f32.mrb[0].mxu0
        %v7114 = vadd.f32 %v6978, %v7113
        %v7115 = vpop.f32.mrb[0].mxu0
        %7116 = vmatprep.mubr.bf16.mxu0 %v2735
        %7117 = vmatmul.mubr.bf16.gmra.mrb[0].mxu0 %v2734
        %v7118 = vpop.f32.mrb[0].mxu0
        %v7119 = vadd.f32 %v6983, %v7118
        %v7120 = vpop.f32.mrb[0].mxu0
        %v7121 = vpop.f32.mrb[0].mxu0
        %v7122 = vadd.f32 %v6986, %v7121
        %v7123 = vpop.f32.mrb[0].mxu0
        %7124 = vmatprep.mubr.bf16.mxu0 %v2771
        %7125 = vmatmul.mubr.bf16.gmra.mrb[0].mxu0 %v2770
        %v7126 = vpop.f32.mrb[0].mxu0
        %v7127 = vadd.f32 %v6991, %v7126
        %v7128 = vpop.f32.mrb[0].mxu0
        %v7129 = vpop.f32.mrb[0].mxu0
        %v7130 = vadd.f32 %v6994, %v7129
        %v7131 = vpop.f32.mrb[0].mxu0
        %7132 = vmatprep.mubr.bf16.mxu0 %v2807
        %7133 = vmatmul.mubr.bf16.gmra.mrb[0].mxu0 %v2806
        %v7134 = vpop.f32.mrb[0].mxu0
        %v7135 = vadd.f32 %v6999, %v7134
        %v7136 = vpop.f32.mrb[0].mxu0
        %v7137 = vpop.f32.mrb[0].mxu0
        %v7138 = vadd.f32 %v7002, %v7137
        %v7139 = vpop.f32.mrb[0].mxu0
        %7140 = vmatprep.mubr.bf16.mxu0 %v2843
        %7141 = vmatmul.mubr.bf16.gmra.mrb[0].mxu0 %v2842
        %v7142 = vpop.f32.mrb[0].mxu0
        %v7143 = vadd.f32 %v7007, %v7142
        %v7144 = vpop.f32.mrb[0].mxu0
        %v7145 = vpop.f32.mrb[0].mxu0
        %v7146 = vadd.f32 %v7010, %v7145
        %v7147 = vpop.f32.mrb[0].mxu0
        %7148 = vmatprep.mubr.bf16.mxu0 %v2879
        %7149 = vmatmul.mubr.bf16.gmra.mrb[0].mxu0 %v2878
        %v7150 = vpop.f32.mrb[0].mxu0
        %v7151 = vadd.f32 %v7015, %v7150
        %v7152 = vpop.f32.mrb[0].mxu0
        %v7153 = vpop.f32.mrb[0].mxu0
        %v7154 = vadd.f32 %v7018, %v7153
        %v7155 = vpop.f32.mrb[0].mxu0
        %7156 = vmatprep.mubr.bf16.mxu0 %v2915
        %7157 = vmatmul.mubr.bf16.gmra.mrb[0].mxu0 %v2914
        %v7158 = vpop.f32.mrb[0].mxu0
        %v7159 = vadd.f32 %v7023, %v7158
        %v7160 = vpop.f32.mrb[0].mxu0
        %v7161 = vpop.f32.mrb[0].mxu0
        %v7162 = vadd.f32 %v7026, %v7161
        %v7163 = vpop.f32.mrb[0].mxu0
        %7164 = vmatprep.mubr.bf16.mxu0 %v2951
        %7165 = vmatmul.mubr.bf16.gmra.mrb[0].mxu0 %v2950
        %v7166 = vpop.f32.mrb[0].mxu0
        %v7167 = vadd.f32 %v7031, %v7166
        %v7168 = vpop.f32.mrb[0].mxu0
        %v7169 = vpop.f32.mrb[0].mxu0
        %v7170 = vadd.f32 %v7034, %v7169
        %v7171 = vpop.f32.mrb[0].mxu0
        %7172 = vmatprep.mubr.bf16.mxu0 %v2987
        %7173 = vmatmul.mubr.bf16.gmra.mrb[0].mxu0 %v2986
        %v7174 = vpop.f32.mrb[0].mxu0
        %v7175 = vadd.f32 %v7039, %v7174
        %v7176 = vpop.f32.mrb[0].mxu0
        %v7177 = vpop.f32.mrb[0].mxu0
        %v7178 = vadd.f32 %v7042, %v7177
        %v7179 = vpop.f32.mrb[0].mxu0
        %7180 = vmatprep.mubr.bf16.mxu0 %v3023
        %7181 = vmatmul.mubr.bf16.gmra.mrb[0].mxu0 %v3022
        %v7182 = vpop.f32.mrb[0].mxu0
        %v7183 = vadd.f32 %v7047, %v7182
        %v7184 = vpop.f32.mrb[0].mxu0
        %v7185 = vpop.f32.mrb[0].mxu0
        %v7186 = vadd.f32 %v7050, %v7185
        %v7187 = vpop.f32.mrb[0].mxu0
        %7188 = vmatprep.mubr.bf16.mxu0 %v3059
        %7189 = vmatmul.mubr.bf16.gmra.mrb[0].mxu0 %v3058
        %v7190 = vpop.f32.mrb[0].mxu0
        %v7191 = vadd.f32 %v7055, %v7190
        %v7192 = vpop.f32.mrb[0].mxu0
        %v7193 = vpop.f32.mrb[0].mxu0
        %v7194 = vadd.f32 %v7058, %v7193
        %v7195 = vpop.f32.mrb[0].mxu0
        %7196 = vmatprep.mubr.bf16.mxu0 %v3095
        %7197 = vmatmul.mubr.bf16.gmra.mrb[0].mxu0 %v3094
        %v7198 = vpop.f32.mrb[0].mxu0
        %v7199 = vadd.f32 %v7063, %v7198
        %v7200 = vpop.f32.mrb[0].mxu0
        %v7201 = vpop.f32.mrb[0].mxu0
        %v7202 = vpop.f32.mrb[0].mxu0
        %7203 = vdwg.mxu0
        %7204 = vmatprep.subr.bf16.mxu0 0
        %7205 = vmatpush1.bf16.msra.mxu0 %v4948
        %7206 = vmatprep.subr.bf16.mxu0 0
        %7207 = vmatpush1.bf16.msra.mxu0 %v4949
        %7208 = vmatprep.subr.bf16.mxu0 0
        %7209 = vmatpush1.bf16.msra.mxu0 %v4950
        %7210 = vmatprep.subr.bf16.mxu0 0
        %7211 = vmatpush1.bf16.msra.mxu0 %v4951
        %7212 = vmatprep.subr.bf16.mxu0 0
        %7213 = vmatpush1.bf16.msra.mxu0 %v4952
        %7214 = vmatprep.subr.bf16.mxu0 0
        %7215 = vmatpush1.bf16.msra.mxu0 %v4953
        %7216 = vmatprep.subr.bf16.mxu0 0
        %7217 = vmatpush1.bf16.msra.mxu0 %v4954
        %7218 = vmatprep.subr.bf16.mxu0 0
        %7219 = vmatpush1.bf16.msra.mxu0 %v4955
        %7220 = vmatprep.subr.bf16.mxu0 0
        %7221 = vmatpush1.bf16.msra.mxu0 %v4956
        %7222 = vmatprep.subr.bf16.mxu0 0
        %7223 = vmatpush1.bf16.msra.mxu0 %v4957
        %7224 = vmatprep.subr.bf16.mxu0 0
        %7225 = vmatpush1.bf16.msra.mxu0 %v4958
        %7226 = vmatprep.subr.bf16.mxu0 0
        %7227 = vmatpush1.bf16.msra.mxu0 %v4959
        %7228 = vmatprep.subr.bf16.mxu0 0
        %7229 = vmatpush1.bf16.msra.mxu0 %v4960
        %7230 = vmatprep.subr.bf16.mxu0 0
        %7231 = vmatpush1.bf16.msra.mxu0 %v4961
        %7232 = vmatprep.subr.bf16.mxu0 0
        %7233 = vmatpush1.bf16.msra.mxu0 %v4962
        %7234 = vmatprep.subr.bf16.mxu0 0
        %7235 = vmatpush1.bf16.msra.mxu0 %v4963
        %7236 = vmatprep.mubr.bf16.mxu0 %v2665
        %7237 = vmatmul.mubr.bf16.gmra.mrb[0].mxu0 %v2664
        %v7238 = vpop.f32.mrb[0].mxu0
        %v7239 = vadd.f32 %v7103, %v7238
        %v7240 = vpop.f32.mrb[0].mxu0
        %v7241 = vpop.f32.mrb[0].mxu0
        %v7242 = vadd.f32 %v7106, %v7241
        %v7243 = vpop.f32.mrb[0].mxu0
        %7244 = vmatprep.mubr.bf16.mxu0 %v2701
        %7245 = vmatmul.mubr.bf16.gmra.mrb[0].mxu0 %v2700
        %v7246 = vpop.f32.mrb[0].mxu0
        %v7247 = vadd.f32 %v7111, %v7246
        %v7248 = vpop.f32.mrb[0].mxu0
        %v7249 = vpop.f32.mrb[0].mxu0
        %v7250 = vadd.f32 %v7114, %v7249
        %v7251 = vpop.f32.mrb[0].mxu0
        %7252 = vmatprep.mubr.bf16.mxu0 %v2737
        %7253 = vmatmul.mubr.bf16.gmra.mrb[0].mxu0 %v2736
        %v7254 = vpop.f32.mrb[0].mxu0
        %v7255 = vadd.f32 %v7119, %v7254
        %v7256 = vpop.f32.mrb[0].mxu0
        %v7257 = vpop.f32.mrb[0].mxu0
        %v7258 = vadd.f32 %v7122, %v7257
        %v7259 = vpop.f32.mrb[0].mxu0
        %7260 = vmatprep.mubr.bf16.mxu0 %v2773
        %7261 = vmatmul.mubr.bf16.gmra.mrb[0].mxu0 %v2772
        %v7262 = vpop.f32.mrb[0].mxu0
        %v7263 = vadd.f32 %v7127, %v7262
        %v7264 = vpop.f32.mrb[0].mxu0
        %v7265 = vpop.f32.mrb[0].mxu0
        %v7266 = vadd.f32 %v7130, %v7265
        %v7267 = vpop.f32.mrb[0].mxu0
        %7268 = vmatprep.mubr.bf16.mxu0 %v2809
        %7269 = vmatmul.mubr.bf16.gmra.mrb[0].mxu0 %v2808
        %v7270 = vpop.f32.mrb[0].mxu0
        %v7271 = vadd.f32 %v7135, %v7270
        %v7272 = vpop.f32.mrb[0].mxu0
        %v7273 = vpop.f32.mrb[0].mxu0
        %v7274 = vadd.f32 %v7138, %v7273
        %v7275 = vpop.f32.mrb[0].mxu0
        %7276 = vmatprep.mubr.bf16.mxu0 %v2845
        %7277 = vmatmul.mubr.bf16.gmra.mrb[0].mxu0 %v2844
        %v7278 = vpop.f32.mrb[0].mxu0
        %v7279 = vadd.f32 %v7143, %v7278
        %v7280 = vpop.f32.mrb[0].mxu0
        %v7281 = vpop.f32.mrb[0].mxu0
        %v7282 = vadd.f32 %v7146, %v7281
        %v7283 = vpop.f32.mrb[0].mxu0
        %7284 = vmatprep.mubr.bf16.mxu0 %v2881
        %7285 = vmatmul.mubr.bf16.gmra.mrb[0].mxu0 %v2880
        %v7286 = vpop.f32.mrb[0].mxu0
        %v7287 = vadd.f32 %v7151, %v7286
        %v7288 = vpop.f32.mrb[0].mxu0
        %v7289 = vpop.f32.mrb[0].mxu0
        %v7290 = vadd.f32 %v7154, %v7289
        %v7291 = vpop.f32.mrb[0].mxu0
        %7292 = vmatprep.mubr.bf16.mxu0 %v2917
        %7293 = vmatmul.mubr.bf16.gmra.mrb[0].mxu0 %v2916
        %v7294 = vpop.f32.mrb[0].mxu0
        %v7295 = vadd.f32 %v7159, %v7294
        %v7296 = vpop.f32.mrb[0].mxu0
        %v7297 = vpop.f32.mrb[0].mxu0
        %v7298 = vadd.f32 %v7162, %v7297
        %v7299 = vpop.f32.mrb[0].mxu0
        %7300 = vmatprep.mubr.bf16.mxu0 %v2953
        %7301 = vmatmul.mubr.bf16.gmra.mrb[0].mxu0 %v2952
        %v7302 = vpop.f32.mrb[0].mxu0
        %v7303 = vadd.f32 %v7167, %v7302
        %v7304 = vpop.f32.mrb[0].mxu0
        %v7305 = vpop.f32.mrb[0].mxu0
        %v7306 = vadd.f32 %v7170, %v7305
        %v7307 = vpop.f32.mrb[0].mxu0
        %7308 = vmatprep.mubr.bf16.mxu0 %v2989
        %7309 = vmatmul.mubr.bf16.gmra.mrb[0].mxu0 %v2988
        %v7310 = vpop.f32.mrb[0].mxu0
        %v7311 = vadd.f32 %v7175, %v7310
        %v7312 = vpop.f32.mrb[0].mxu0
        %v7313 = vpop.f32.mrb[0].mxu0
        %v7314 = vadd.f32 %v7178, %v7313
        %v7315 = vpop.f32.mrb[0].mxu0
        %7316 = vmatprep.mubr.bf16.mxu0 %v3025
        %7317 = vmatmul.mubr.bf16.gmra.mrb[0].mxu0 %v3024
        %v7318 = vpop.f32.mrb[0].mxu0
        %v7319 = vadd.f32 %v7183, %v7318
        %v7320 = vpop.f32.mrb[0].mxu0
        %v7321 = vpop.f32.mrb[0].mxu0
        %v7322 = vadd.f32 %v7186, %v7321
        %v7323 = vpop.f32.mrb[0].mxu0
        %7324 = vmatprep.mubr.bf16.mxu0 %v3061
        %7325 = vmatmul.mubr.bf16.gmra.mrb[0].mxu0 %v3060
        %v7326 = vpop.f32.mrb[0].mxu0
        %v7327 = vadd.f32 %v7191, %v7326
        %v7328 = vpop.f32.mrb[0].mxu0
        %v7329 = vpop.f32.mrb[0].mxu0
        %v7330 = vadd.f32 %v7194, %v7329
        %v7331 = vpop.f32.mrb[0].mxu0
        %7332 = vmatprep.mubr.bf16.mxu0 %v3097
        %7333 = vmatmul.mubr.bf16.gmra.mrb[0].mxu0 %v3096
        %v7334 = vpop.f32.mrb[0].mxu0
        %v7335 = vadd.f32 %v7199, %v7334
        %v7336 = vpop.f32.mrb[0].mxu0
        %v7337 = vpop.f32.mrb[0].mxu0
        %v7338 = vpop.f32.mrb[0].mxu0
        %7339 = vdwg.mxu0
        %7340 = vmatprep.subr.bf16.mxu0 0
        %7341 = vmatpush1.bf16.msra.mxu0 %v4964
        %7342 = vmatprep.subr.bf16.mxu0 0
        %7343 = vmatpush1.bf16.msra.mxu0 %v4965
        %7344 = vmatprep.subr.bf16.mxu0 0
        %7345 = vmatpush1.bf16.msra.mxu0 %v4966
        %7346 = vmatprep.subr.bf16.mxu0 0
        %7347 = vmatpush1.bf16.msra.mxu0 %v4967
        %7348 = vmatprep.subr.bf16.mxu0 0
        %7349 = vmatpush1.bf16.msra.mxu0 %v4968
        %7350 = vmatprep.subr.bf16.mxu0 0
        %7351 = vmatpush1.bf16.msra.mxu0 %v4969
        %7352 = vmatprep.subr.bf16.mxu0 0
        %7353 = vmatpush1.bf16.msra.mxu0 %v4970
        %7354 = vmatprep.subr.bf16.mxu0 0
        %7355 = vmatpush1.bf16.msra.mxu0 %v4971
        %7356 = vmatprep.subr.bf16.mxu0 0
        %7357 = vmatpush1.bf16.msra.mxu0 %v4972
        %7358 = vmatprep.subr.bf16.mxu0 0
        %7359 = vmatpush1.bf16.msra.mxu0 %v4973
        %7360 = vmatprep.subr.bf16.mxu0 0
        %7361 = vmatpush1.bf16.msra.mxu0 %v4974
        %7362 = vmatprep.subr.bf16.mxu0 0
        %7363 = vmatpush1.bf16.msra.mxu0 %v4975
        %7364 = vmatprep.subr.bf16.mxu0 0
        %7365 = vmatpush1.bf16.msra.mxu0 %v4976
        %7366 = vmatprep.subr.bf16.mxu0 0
        %7367 = vmatpush1.bf16.msra.mxu0 %v4977
        %7368 = vmatprep.subr.bf16.mxu0 0
        %7369 = vmatpush1.bf16.msra.mxu0 %v4978
        %7370 = vmatprep.subr.bf16.mxu0 0
        %7371 = vmatpush1.bf16.msra.mxu0 %v4979
        %7372 = vmatprep.mubr.bf16.mxu0 %v2667
        %7373 = vmatmul.mubr.bf16.gmra.mrb[0].mxu0 %v2666
        %v7374 = vpop.f32.mrb[0].mxu0
        %v7375 = vadd.f32 %v7239, %v7374
        %v7376 = vpop.f32.mrb[0].mxu0
        %v7377 = vpop.f32.mrb[0].mxu0
        %v7378 = vadd.f32 %v7242, %v7377
        %v7379 = vpop.f32.mrb[0].mxu0
        %7380 = vmatprep.mubr.bf16.mxu0 %v2703
        %7381 = vmatmul.mubr.bf16.gmra.mrb[0].mxu0 %v2702
        %v7382 = vpop.f32.mrb[0].mxu0
        %v7383 = vadd.f32 %v7247, %v7382
        %v7384 = vpop.f32.mrb[0].mxu0
        %v7385 = vpop.f32.mrb[0].mxu0
        %v7386 = vadd.f32 %v7250, %v7385
        %v7387 = vpop.f32.mrb[0].mxu0
        %7388 = vmatprep.mubr.bf16.mxu0 %v2739
        %7389 = vmatmul.mubr.bf16.gmra.mrb[0].mxu0 %v2738
        %v7390 = vpop.f32.mrb[0].mxu0
        %v7391 = vadd.f32 %v7255, %v7390
        %v7392 = vpop.f32.mrb[0].mxu0
        %v7393 = vpop.f32.mrb[0].mxu0
        %v7394 = vadd.f32 %v7258, %v7393
        %v7395 = vpop.f32.mrb[0].mxu0
        %7396 = vmatprep.mubr.bf16.mxu0 %v2775
        %7397 = vmatmul.mubr.bf16.gmra.mrb[0].mxu0 %v2774
        %v7398 = vpop.f32.mrb[0].mxu0
        %v7399 = vadd.f32 %v7263, %v7398
        %v7400 = vpop.f32.mrb[0].mxu0
        %v7401 = vpop.f32.mrb[0].mxu0
        %v7402 = vadd.f32 %v7266, %v7401
        %v7403 = vpop.f32.mrb[0].mxu0
        %7404 = vmatprep.mubr.bf16.mxu0 %v2811
        %7405 = vmatmul.mubr.bf16.gmra.mrb[0].mxu0 %v2810
        %v7406 = vpop.f32.mrb[0].mxu0
        %v7407 = vadd.f32 %v7271, %v7406
        %v7408 = vpop.f32.mrb[0].mxu0
        %v7409 = vpop.f32.mrb[0].mxu0
        %v7410 = vadd.f32 %v7274, %v7409
        %v7411 = vpop.f32.mrb[0].mxu0
        %7412 = vmatprep.mubr.bf16.mxu0 %v2847
        %7413 = vmatmul.mubr.bf16.gmra.mrb[0].mxu0 %v2846
        %v7414 = vpop.f32.mrb[0].mxu0
        %v7415 = vadd.f32 %v7279, %v7414
        %v7416 = vpop.f32.mrb[0].mxu0
        %v7417 = vpop.f32.mrb[0].mxu0
        %v7418 = vadd.f32 %v7282, %v7417
        %v7419 = vpop.f32.mrb[0].mxu0
        %7420 = vmatprep.mubr.bf16.mxu0 %v2883
        %7421 = vmatmul.mubr.bf16.gmra.mrb[0].mxu0 %v2882
        %v7422 = vpop.f32.mrb[0].mxu0
        %v7423 = vadd.f32 %v7287, %v7422
        %v7424 = vpop.f32.mrb[0].mxu0
        %v7425 = vpop.f32.mrb[0].mxu0
        %v7426 = vadd.f32 %v7290, %v7425
        %v7427 = vpop.f32.mrb[0].mxu0
        %7428 = vmatprep.mubr.bf16.mxu0 %v2919
        %7429 = vmatmul.mubr.bf16.gmra.mrb[0].mxu0 %v2918
        %v7430 = vpop.f32.mrb[0].mxu0
        %v7431 = vadd.f32 %v7295, %v7430
        %v7432 = vpop.f32.mrb[0].mxu0
        %v7433 = vpop.f32.mrb[0].mxu0
        %v7434 = vadd.f32 %v7298, %v7433
        %v7435 = vpop.f32.mrb[0].mxu0
        %7436 = vmatprep.mubr.bf16.mxu0 %v2955
        %7437 = vmatmul.mubr.bf16.gmra.mrb[0].mxu0 %v2954
        %v7438 = vpop.f32.mrb[0].mxu0
        %v7439 = vadd.f32 %v7303, %v7438
        %v7440 = vpop.f32.mrb[0].mxu0
        %v7441 = vpop.f32.mrb[0].mxu0
        %v7442 = vadd.f32 %v7306, %v7441
        %v7443 = vpop.f32.mrb[0].mxu0
        %7444 = vmatprep.mubr.bf16.mxu0 %v2991
        %7445 = vmatmul.mubr.bf16.gmra.mrb[0].mxu0 %v2990
        %v7446 = vpop.f32.mrb[0].mxu0
        %v7447 = vadd.f32 %v7311, %v7446
        %v7448 = vpop.f32.mrb[0].mxu0
        %v7449 = vpop.f32.mrb[0].mxu0
        %v7450 = vadd.f32 %v7314, %v7449
        %v7451 = vpop.f32.mrb[0].mxu0
        %7452 = vmatprep.mubr.bf16.mxu0 %v3027
        %7453 = vmatmul.mubr.bf16.gmra.mrb[0].mxu0 %v3026
        %v7454 = vpop.f32.mrb[0].mxu0
        %v7455 = vadd.f32 %v7319, %v7454
        %v7456 = vpop.f32.mrb[0].mxu0
        %v7457 = vpop.f32.mrb[0].mxu0
        %v7458 = vadd.f32 %v7322, %v7457
        %v7459 = vpop.f32.mrb[0].mxu0
        %7460 = vmatprep.mubr.bf16.mxu0 %v3063
        %7461 = vmatmul.mubr.bf16.gmra.mrb[0].mxu0 %v3062
        %v7462 = vpop.f32.mrb[0].mxu0
        %v7463 = vadd.f32 %v7327, %v7462
        %v7464 = vpop.f32.mrb[0].mxu0
        %v7465 = vpop.f32.mrb[0].mxu0
        %v7466 = vadd.f32 %v7330, %v7465
        %v7467 = vpop.f32.mrb[0].mxu0
        %7468 = vmatprep.mubr.bf16.mxu0 %v3099
        %7469 = vmatmul.mubr.bf16.gmra.mrb[0].mxu0 %v3098
        %v7470 = vpop.f32.mrb[0].mxu0
        %v7471 = vadd.f32 %v7335, %v7470
        %v7472 = vpop.f32.mrb[0].mxu0
        %v7473 = vpop.f32.mrb[0].mxu0
        %v7474 = vpop.f32.mrb[0].mxu0
        %7475 = vdwg.mxu0
        %7476 = vmatprep.subr.bf16.mxu0 0
        %7477 = vmatpush1.bf16.msra.mxu0 %v4980
        %7478 = vmatprep.subr.bf16.mxu0 0
        %7479 = vmatpush1.bf16.msra.mxu0 %v4981
        %7480 = vmatprep.subr.bf16.mxu0 0
        %7481 = vmatpush1.bf16.msra.mxu0 %v4982
        %7482 = vmatprep.subr.bf16.mxu0 0
        %7483 = vmatpush1.bf16.msra.mxu0 %v4983
        %7484 = vmatprep.subr.bf16.mxu0 0
        %7485 = vmatpush1.bf16.msra.mxu0 %v4984
        %7486 = vmatprep.subr.bf16.mxu0 0
        %7487 = vmatpush1.bf16.msra.mxu0 %v4985
        %7488 = vmatprep.subr.bf16.mxu0 0
        %7489 = vmatpush1.bf16.msra.mxu0 %v4986
        %7490 = vmatprep.subr.bf16.mxu0 0
        %7491 = vmatpush1.bf16.msra.mxu0 %v4987
        %7492 = vmatprep.subr.bf16.mxu0 0
        %7493 = vmatpush1.bf16.msra.mxu0 %v4988
        %7494 = vmatprep.subr.bf16.mxu0 0
        %7495 = vmatpush1.bf16.msra.mxu0 %v4989
        %7496 = vmatprep.subr.bf16.mxu0 0
        %7497 = vmatpush1.bf16.msra.mxu0 %v4990
        %7498 = vmatprep.subr.bf16.mxu0 0
        %7499 = vmatpush1.bf16.msra.mxu0 %v4991
        %7500 = vmatprep.subr.bf16.mxu0 0
        %7501 = vmatpush1.bf16.msra.mxu0 %v4992
        %7502 = vmatprep.subr.bf16.mxu0 0
        %7503 = vmatpush1.bf16.msra.mxu0 %v4993
        %7504 = vmatprep.subr.bf16.mxu0 0
        %7505 = vmatpush1.bf16.msra.mxu0 %v4994
        %7506 = vmatprep.subr.bf16.mxu0 0
        %7507 = vmatpush1.bf16.msra.mxu0 %v4995
        %7508 = vmatprep.mubr.bf16.mxu0 %v2669
        %7509 = vmatmul.mubr.bf16.gmra.mrb[0].mxu0 %v2668
        %v7510 = vpop.f32.mrb[0].mxu0
        %v7511 = vadd.f32 %v7375, %v7510
        %v7512 = vpop.f32.mrb[0].mxu0
        %v7513 = vpop.f32.mrb[0].mxu0
        %v7514 = vadd.f32 %v7378, %v7513
        %v7515 = vpop.f32.mrb[0].mxu0
        %7516 = vmatprep.mubr.bf16.mxu0 %v2705
        %7517 = vmatmul.mubr.bf16.gmra.mrb[0].mxu0 %v2704
        %v7518 = vpop.f32.mrb[0].mxu0
        %v7519 = vadd.f32 %v7383, %v7518
        %v7520 = vpop.f32.mrb[0].mxu0
        %v7521 = vpop.f32.mrb[0].mxu0
        %v7522 = vadd.f32 %v7386, %v7521
        %v7523 = vpop.f32.mrb[0].mxu0
        %7524 = vmatprep.mubr.bf16.mxu0 %v2741
        %7525 = vmatmul.mubr.bf16.gmra.mrb[0].mxu0 %v2740
        %v7526 = vpop.f32.mrb[0].mxu0
        %v7527 = vadd.f32 %v7391, %v7526
        %v7528 = vpop.f32.mrb[0].mxu0
        %v7529 = vpop.f32.mrb[0].mxu0
        %v7530 = vadd.f32 %v7394, %v7529
        %v7531 = vpop.f32.mrb[0].mxu0
        %7532 = vmatprep.mubr.bf16.mxu0 %v2777
        %7533 = vmatmul.mubr.bf16.gmra.mrb[0].mxu0 %v2776
        %v7534 = vpop.f32.mrb[0].mxu0
        %v7535 = vadd.f32 %v7399, %v7534
        %v7536 = vpop.f32.mrb[0].mxu0
        %v7537 = vpop.f32.mrb[0].mxu0
        %v7538 = vadd.f32 %v7402, %v7537
        %v7539 = vpop.f32.mrb[0].mxu0
        %7540 = vmatprep.mubr.bf16.mxu0 %v2813
        %7541 = vmatmul.mubr.bf16.gmra.mrb[0].mxu0 %v2812
        %v7542 = vpop.f32.mrb[0].mxu0
        %v7543 = vadd.f32 %v7407, %v7542
        %v7544 = vpop.f32.mrb[0].mxu0
        %v7545 = vpop.f32.mrb[0].mxu0
        %v7546 = vadd.f32 %v7410, %v7545
        %v7547 = vpop.f32.mrb[0].mxu0
        %7548 = vmatprep.mubr.bf16.mxu0 %v2849
        %7549 = vmatmul.mubr.bf16.gmra.mrb[0].mxu0 %v2848
        %v7550 = vpop.f32.mrb[0].mxu0
        %v7551 = vadd.f32 %v7415, %v7550
        %v7552 = vpop.f32.mrb[0].mxu0
        %v7553 = vpop.f32.mrb[0].mxu0
        %v7554 = vadd.f32 %v7418, %v7553
        %v7555 = vpop.f32.mrb[0].mxu0
        %7556 = vmatprep.mubr.bf16.mxu0 %v2885
        %7557 = vmatmul.mubr.bf16.gmra.mrb[0].mxu0 %v2884
        %v7558 = vpop.f32.mrb[0].mxu0
        %v7559 = vadd.f32 %v7423, %v7558
        %v7560 = vpop.f32.mrb[0].mxu0
        %v7561 = vpop.f32.mrb[0].mxu0
        %v7562 = vadd.f32 %v7426, %v7561
        %v7563 = vpop.f32.mrb[0].mxu0
        %7564 = vmatprep.mubr.bf16.mxu0 %v2921
        %7565 = vmatmul.mubr.bf16.gmra.mrb[0].mxu0 %v2920
        %v7566 = vpop.f32.mrb[0].mxu0
        %v7567 = vadd.f32 %v7431, %v7566
        %v7568 = vpop.f32.mrb[0].mxu0
        %v7569 = vpop.f32.mrb[0].mxu0
        %v7570 = vadd.f32 %v7434, %v7569
        %v7571 = vpop.f32.mrb[0].mxu0
        %7572 = vmatprep.mubr.bf16.mxu0 %v2957
        %7573 = vmatmul.mubr.bf16.gmra.mrb[0].mxu0 %v2956
        %v7574 = vpop.f32.mrb[0].mxu0
        %v7575 = vadd.f32 %v7439, %v7574
        %v7576 = vpop.f32.mrb[0].mxu0
        %v7577 = vpop.f32.mrb[0].mxu0
        %v7578 = vadd.f32 %v7442, %v7577
        %v7579 = vpop.f32.mrb[0].mxu0
        %7580 = vmatprep.mubr.bf16.mxu0 %v2993
        %7581 = vmatmul.mubr.bf16.gmra.mrb[0].mxu0 %v2992
        %v7582 = vpop.f32.mrb[0].mxu0
        %v7583 = vadd.f32 %v7447, %v7582
        %v7584 = vpop.f32.mrb[0].mxu0
        %v7585 = vpop.f32.mrb[0].mxu0
        %v7586 = vadd.f32 %v7450, %v7585
        %v7587 = vpop.f32.mrb[0].mxu0
        %7588 = vmatprep.mubr.bf16.mxu0 %v3029
        %7589 = vmatmul.mubr.bf16.gmra.mrb[0].mxu0 %v3028
        %v7590 = vpop.f32.mrb[0].mxu0
        %v7591 = vadd.f32 %v7455, %v7590
        %v7592 = vpop.f32.mrb[0].mxu0
        %v7593 = vpop.f32.mrb[0].mxu0
        %v7594 = vadd.f32 %v7458, %v7593
        %v7595 = vpop.f32.mrb[0].mxu0
        %7596 = vmatprep.mubr.bf16.mxu0 %v3065
        %7597 = vmatmul.mubr.bf16.gmra.mrb[0].mxu0 %v3064
        %v7598 = vpop.f32.mrb[0].mxu0
        %v7599 = vadd.f32 %v7463, %v7598
        %v7600 = vpop.f32.mrb[0].mxu0
        %v7601 = vpop.f32.mrb[0].mxu0
        %v7602 = vadd.f32 %v7466, %v7601
        %v7603 = vpop.f32.mrb[0].mxu0
        %7604 = vmatprep.mubr.bf16.mxu0 %v3101
        %7605 = vmatmul.mubr.bf16.gmra.mrb[0].mxu0 %v3100
        %v7606 = vpop.f32.mrb[0].mxu0
        %v7607 = vadd.f32 %v7471, %v7606
        %v7608 = vpop.f32.mrb[0].mxu0
        %v7609 = vpop.f32.mrb[0].mxu0
        %v7610 = vpop.f32.mrb[0].mxu0
        %7611 = vdwg.mxu0
        %7612 = vmatprep.subr.bf16.mxu0 0
        %7613 = vmatpush1.bf16.msra.mxu0 %v4996
        %7614 = vmatprep.subr.bf16.mxu0 0
        %7615 = vmatpush1.bf16.msra.mxu0 %v4997
        %7616 = vmatprep.subr.bf16.mxu0 0
        %7617 = vmatpush1.bf16.msra.mxu0 %v4998
        %7618 = vmatprep.subr.bf16.mxu0 0
        %7619 = vmatpush1.bf16.msra.mxu0 %v4999
        %7620 = vmatprep.subr.bf16.mxu0 0
        %7621 = vmatpush1.bf16.msra.mxu0 %v5000
        %7622 = vmatprep.subr.bf16.mxu0 0
        %7623 = vmatpush1.bf16.msra.mxu0 %v5001
        %7624 = vmatprep.subr.bf16.mxu0 0
        %7625 = vmatpush1.bf16.msra.mxu0 %v5002
        %7626 = vmatprep.subr.bf16.mxu0 0
        %7627 = vmatpush1.bf16.msra.mxu0 %v5003
        %7628 = vmatprep.subr.bf16.mxu0 0
        %7629 = vmatpush1.bf16.msra.mxu0 %v5004
        %7630 = vmatprep.subr.bf16.mxu0 0
        %7631 = vmatpush1.bf16.msra.mxu0 %v5005
        %7632 = vmatprep.subr.bf16.mxu0 0
        %7633 = vmatpush1.bf16.msra.mxu0 %v5006
        %7634 = vmatprep.subr.bf16.mxu0 0
        %7635 = vmatpush1.bf16.msra.mxu0 %v5007
        %7636 = vmatprep.subr.bf16.mxu0 0
        %7637 = vmatpush1.bf16.msra.mxu0 %v5008
        %7638 = vmatprep.subr.bf16.mxu0 0
        %7639 = vmatpush1.bf16.msra.mxu0 %v5009
        %7640 = vmatprep.subr.bf16.mxu0 0
        %7641 = vmatpush1.bf16.msra.mxu0 %v5010
        %7642 = vmatprep.subr.bf16.mxu0 0
        %7643 = vmatpush1.bf16.msra.mxu0 %v5011
        %7644 = vmatprep.mubr.bf16.mxu0 %v2671
        %7645 = vmatmul.mubr.bf16.gmra.mrb[0].mxu0 %v2670
        %v7646 = vpop.f32.mrb[0].mxu0
        %v7647 = vadd.f32 %v7511, %v7646
        %v7648 = vpop.f32.mrb[0].mxu0
        %v7649 = vpop.f32.mrb[0].mxu0
        %v7650 = vadd.f32 %v7514, %v7649
        %v7651 = vpop.f32.mrb[0].mxu0
        %7652 = vmatprep.mubr.bf16.mxu0 %v2707
        %7653 = vmatmul.mubr.bf16.gmra.mrb[0].mxu0 %v2706
        %v7654 = vpop.f32.mrb[0].mxu0
        %v7655 = vadd.f32 %v7519, %v7654
        %v7656 = vpop.f32.mrb[0].mxu0
        %v7657 = vpop.f32.mrb[0].mxu0
        %v7658 = vadd.f32 %v7522, %v7657
        %v7659 = vpop.f32.mrb[0].mxu0
        %7660 = vmatprep.mubr.bf16.mxu0 %v2743
        %7661 = vmatmul.mubr.bf16.gmra.mrb[0].mxu0 %v2742
        %v7662 = vpop.f32.mrb[0].mxu0
        %v7663 = vadd.f32 %v7527, %v7662
        %v7664 = vpop.f32.mrb[0].mxu0
        %v7665 = vpop.f32.mrb[0].mxu0
        %v7666 = vadd.f32 %v7530, %v7665
        %v7667 = vpop.f32.mrb[0].mxu0
        %7668 = vmatprep.mubr.bf16.mxu0 %v2779
        %7669 = vmatmul.mubr.bf16.gmra.mrb[0].mxu0 %v2778
        %v7670 = vpop.f32.mrb[0].mxu0
        %v7671 = vadd.f32 %v7535, %v7670
        %v7672 = vpop.f32.mrb[0].mxu0
        %v7673 = vpop.f32.mrb[0].mxu0
        %v7674 = vadd.f32 %v7538, %v7673
        %v7675 = vpop.f32.mrb[0].mxu0
        %7676 = vmatprep.mubr.bf16.mxu0 %v2815
        %7677 = vmatmul.mubr.bf16.gmra.mrb[0].mxu0 %v2814
        %v7678 = vpop.f32.mrb[0].mxu0
        %v7679 = vadd.f32 %v7543, %v7678
        %v7680 = vpop.f32.mrb[0].mxu0
        %v7681 = vpop.f32.mrb[0].mxu0
        %v7682 = vadd.f32 %v7546, %v7681
        %v7683 = vpop.f32.mrb[0].mxu0
        %7684 = vmatprep.mubr.bf16.mxu0 %v2851
        %7685 = vmatmul.mubr.bf16.gmra.mrb[0].mxu0 %v2850
        %v7686 = vpop.f32.mrb[0].mxu0
        %v7687 = vadd.f32 %v7551, %v7686
        %v7688 = vpop.f32.mrb[0].mxu0
        %v7689 = vpop.f32.mrb[0].mxu0
        %v7690 = vadd.f32 %v7554, %v7689
        %v7691 = vpop.f32.mrb[0].mxu0
        %7692 = vmatprep.mubr.bf16.mxu0 %v2887
        %7693 = vmatmul.mubr.bf16.gmra.mrb[0].mxu0 %v2886
        %v7694 = vpop.f32.mrb[0].mxu0
        %v7695 = vadd.f32 %v7559, %v7694
        %v7696 = vpop.f32.mrb[0].mxu0
        %v7697 = vpop.f32.mrb[0].mxu0
        %v7698 = vadd.f32 %v7562, %v7697
        %v7699 = vpop.f32.mrb[0].mxu0
        %7700 = vmatprep.mubr.bf16.mxu0 %v2923
        %7701 = vmatmul.mubr.bf16.gmra.mrb[0].mxu0 %v2922
        %v7702 = vpop.f32.mrb[0].mxu0
        %v7703 = vadd.f32 %v7567, %v7702
        %v7704 = vpop.f32.mrb[0].mxu0
        %v7705 = vpop.f32.mrb[0].mxu0
        %v7706 = vadd.f32 %v7570, %v7705
        %v7707 = vpop.f32.mrb[0].mxu0
        %7708 = vmatprep.mubr.bf16.mxu0 %v2959
        %7709 = vmatmul.mubr.bf16.gmra.mrb[0].mxu0 %v2958
        %v7710 = vpop.f32.mrb[0].mxu0
        %v7711 = vadd.f32 %v7575, %v7710
        %v7712 = vpop.f32.mrb[0].mxu0
        %v7713 = vpop.f32.mrb[0].mxu0
        %v7714 = vadd.f32 %v7578, %v7713
        %v7715 = vpop.f32.mrb[0].mxu0
        %7716 = vmatprep.mubr.bf16.mxu0 %v2995
        %7717 = vmatmul.mubr.bf16.gmra.mrb[0].mxu0 %v2994
        %v7718 = vpop.f32.mrb[0].mxu0
        %v7719 = vadd.f32 %v7583, %v7718
        %v7720 = vpop.f32.mrb[0].mxu0
        %v7721 = vpop.f32.mrb[0].mxu0
        %v7722 = vadd.f32 %v7586, %v7721
        %v7723 = vpop.f32.mrb[0].mxu0
        %7724 = vmatprep.mubr.bf16.mxu0 %v3031
        %7725 = vmatmul.mubr.bf16.gmra.mrb[0].mxu0 %v3030
        %v7726 = vpop.f32.mrb[0].mxu0
        %v7727 = vadd.f32 %v7591, %v7726
        %v7728 = vpop.f32.mrb[0].mxu0
        %v7729 = vpop.f32.mrb[0].mxu0
        %v7730 = vadd.f32 %v7594, %v7729
        %v7731 = vpop.f32.mrb[0].mxu0
        %7732 = vmatprep.mubr.bf16.mxu0 %v3067
        %7733 = vmatmul.mubr.bf16.gmra.mrb[0].mxu0 %v3066
        %v7734 = vpop.f32.mrb[0].mxu0
        %v7735 = vadd.f32 %v7599, %v7734
        %v7736 = vpop.f32.mrb[0].mxu0
        %v7737 = vpop.f32.mrb[0].mxu0
        %v7738 = vadd.f32 %v7602, %v7737
        %v7739 = vpop.f32.mrb[0].mxu0
        %7740 = vmatprep.mubr.bf16.mxu0 %v3103
        %7741 = vmatmul.mubr.bf16.gmra.mrb[0].mxu0 %v3102
        %v7742 = vpop.f32.mrb[0].mxu0
        %v7743 = vadd.f32 %v7607, %v7742
        %v7744 = vpop.f32.mrb[0].mxu0
        %v7745 = vpop.f32.mrb[0].mxu0
        %v7746 = vpop.f32.mrb[0].mxu0
        %7747 = vdwg.mxu0
        %v7748 = vmax.f32 %v7647, 0.0
        %v7749 = vmax.f32 %v7650, 0.0
        %v7750 = vmax.f32 %v7655, 0.0
        %v7751 = vmax.f32 %v7658, 0.0
        %v7752 = vmax.f32 %v7663, 0.0
        %v7753 = vmax.f32 %v7666, 0.0
        %v7754 = vmax.f32 %v7671, 0.0
        %v7755 = vmax.f32 %v7674, 0.0
        %v7756 = vmax.f32 %v7679, 0.0
        %v7757 = vmax.f32 %v7682, 0.0
        %v7758 = vmax.f32 %v7687, 0.0
        %v7759 = vmax.f32 %v7690, 0.0
        %v7760 = vmax.f32 %v7695, 0.0
        %v7761 = vmax.f32 %v7698, 0.0
        %v7762 = vmax.f32 %v7703, 0.0
        %v7763 = vmax.f32 %v7706, 0.0
        %v7764 = vmax.f32 %v7711, 0.0
        %v7765 = vmax.f32 %v7714, 0.0
        %v7766 = vmax.f32 %v7719, 0.0
        %v7767 = vmax.f32 %v7722, 0.0
        %v7768 = vmax.f32 %v7727, 0.0
        %v7769 = vmax.f32 %v7730, 0.0
        %v7770 = vmax.f32 %v7735, 0.0
        %v7771 = vmax.f32 %v7738, 0.0
        %v7772 = vmax.f32 %v7743, 0.0
        %7773 = vst [vmem:[%s251] sm:$0xff] %v7748
        %7774 = vst [vmem:[%s251 + $0x8] sm:$0xff] %v7749
        %7775 = vst [vmem:[%s251 + $0x10] sm:$0xff] %v7750
        %7776 = vst [vmem:[%s251 + $0x18] sm:$0xff] %v7751
        %7777 = vst [vmem:[%s251 + $0x20] sm:$0xff] %v7752
        %7778 = vst [vmem:[%s251 + $0x28] sm:$0xff] %v7753
        %7779 = vst [vmem:[%s251 + $0x30] sm:$0xff] %v7754
        %7780 = vst [vmem:[%s251 + $0x38] sm:$0xff] %v7755
        %7781 = vst [vmem:[%s251 + $0x40] sm:$0xff] %v7756
        %7782 = vst [vmem:[%s251 + $0x48] sm:$0xff] %v7757
        %7783 = vst [vmem:[%s251 + $0x50] sm:$0xff] %v7758
        %7784 = vst [vmem:[%s251 + $0x58] sm:$0xff] %v7759
        %7785 = vst [vmem:[%s251 + $0x60] sm:$0xff] %v7760
        %7786 = vst [vmem:[%s251 + $0x68] sm:$0xff] %v7761
        %7787 = vst [vmem:[%s251 + $0x70] sm:$0xff] %v7762
        %7788 = vst [vmem:[%s251 + $0x78] sm:$0xff] %v7763
        %7789 = vst [vmem:[%s251 + $0x80] sm:$0xff] %v7764
        %7790 = vst [vmem:[%s251 + $0x88] sm:$0xff] %v7765
        %7791 = vst [vmem:[%s251 + $0x90] sm:$0xff] %v7766
        %7792 = vst [vmem:[%s251 + $0x98] sm:$0xff] %v7767
        %7793 = vst [vmem:[%s251 + $0xa0] sm:$0xff] %v7768
        %7794 = vst [vmem:[%s251 + $0xa8] sm:$0xff] %v7769
        %7795 = vst [vmem:[%s251 + $0xb0] sm:$0xff] %v7770
        %7796 = vst [vmem:[%s251 + $0xb8] sm:$0xff] %v7771
        %7797 = vst [vmem:[%s251 + $0xc0] sm:$0xf] %v7772
        %s7798 = sand.u32 %s118, 1
        %s7799 = sand.u32 %s118, 1
        %s7800 = smul.addr %s7799, 200
        %s7801 = scalar_lea.vmem [#allocation7], %s7800
        // Predicated region
        $region45: #{tpu_custom_call.1} parent=31 // pred_check
          %p7802 = pneg %p128
        $region46: #{tpu_custom_call.1} parent=31 // pred_check_branch
          %7804 = sbr.rel (%p7802) target = $region48
        $region47: #{tpu_custom_call.1} parent=31 // pred_region
          %s7805 = smul.addr %s22, 100
          %s7806 = sadd.s32 %s23, %s7805
          %s7807 = smul.addr %s7806, 8
          %s7808 = scalar_lea.vmem %s3, %s7807
          // Predicated region
          $region49: #{tpu_custom_call.1} parent=47 // pred_check
            _
          $region50: #{tpu_custom_call.1} parent=47 // pred_check_branch
            %7810 = sbr.rel (0) target = $region52
          $region51: #{tpu_custom_call.1} parent=47 // pred_region
            // Predicated region
            $region53: #{tpu_custom_call.1} parent=51 // pred_check
              _
            $region54: #{tpu_custom_call.1} parent=51 // pred_check_branch
              %7812 = sbr.rel (0) target = $region56
            $region55: #{tpu_custom_call.1} parent=51 // pred_region
              // Predicated region
              $region68: #{tpu_custom_call.1} parent=55 // pred_check
                _
              $region69: #{tpu_custom_call.1} parent=55 // pred_check_branch
                %7875 = sbr.rel (0) target = $region71
              $region70: #{tpu_custom_call.1} parent=55 // pred_region
                loop: start=0, step=1, limit=1
                $region72: #{tpu_custom_call.1} parent=70 // loop_pre_header
                  _
                $region73: #{tpu_custom_call.1} parent=70 // loop_header
                  %s7877 = sphi 0, %s7881
                  %p7878 = scmp.ge.s32.totalorder %s7877, 1
                  %s7882 = sphi %s7801, %s7801
                  %s7883 = sphi %s7808, %s7808
                $region74: #{tpu_custom_call.1} parent=70 // loop_header_branch
                  %7880 = sbr.rel (%p7878) target = $region78
                $region75: #{tpu_custom_call.1} parent=70 // loop_body
                  %v7884 = vld [vmem:[%s7882] sm:$0xff]
                  %7885 = vst [vmem:[%s7883] sm:$0xff] %v7884
                  %v7886 = vld [vmem:[%s7882 + $0x8] sm:$0xff]
                  %7887 = vst [vmem:[%s7883 + $0x20] sm:$0xff] %v7886
                  %v7888 = vld [vmem:[%s7882 + $0x10] sm:$0xff]
                  %7889 = vst [vmem:[%s7883 + $0x40] sm:$0xff] %v7888
                  %v7890 = vld [vmem:[%s7882 + $0x18] sm:$0xff]
                  %7891 = vst [vmem:[%s7883 + $0x60] sm:$0xff] %v7890
                  %v7892 = vld [vmem:[%s7882 + $0x20] sm:$0xff]
                  %7893 = vst [vmem:[%s7883 + $0x80] sm:$0xff] %v7892
                  %v7894 = vld [vmem:[%s7882 + $0x28] sm:$0xff]
                  %7895 = vst [vmem:[%s7883 + $0xa0] sm:$0xff] %v7894
                  %v7896 = vld [vmem:[%s7882 + $0x30] sm:$0xff]
                  %7897 = vst [vmem:[%s7883 + $0xc0] sm:$0xff] %v7896
                  %v7898 = vld [vmem:[%s7882 + $0x38] sm:$0xff]
                  %7899 = vst [vmem:[%s7883 + $0xe0] sm:$0xff] %v7898
                  %v7900 = vld [vmem:[%s7882 + $0x40] sm:$0xff]
                  %7901 = vst [vmem:[%s7883 + $0x100] sm:$0xff] %v7900
                  %v7902 = vld [vmem:[%s7882 + $0x48] sm:$0xff]
                  %7903 = vst [vmem:[%s7883 + $0x120] sm:$0xff] %v7902
                  %v7904 = vld [vmem:[%s7882 + $0x50] sm:$0xff]
                  %7905 = vst [vmem:[%s7883 + $0x140] sm:$0xff] %v7904
                  %v7906 = vld [vmem:[%s7882 + $0x58] sm:$0xff]
                  %7907 = vst [vmem:[%s7883 + $0x160] sm:$0xff] %v7906
                  %v7908 = vld [vmem:[%s7882 + $0x60] sm:$0xff]
                  %7909 = vst [vmem:[%s7883 + $0x180] sm:$0xff] %v7908
                  %v7910 = vld [vmem:[%s7882 + $0x68] sm:$0xff]
                  %7911 = vst [vmem:[%s7883 + $0x1a0] sm:$0xff] %v7910
                  %v7912 = vld [vmem:[%s7882 + $0x70] sm:$0xff]
                  %7913 = vst [vmem:[%s7883 + $0x1c0] sm:$0xff] %v7912
                  %v7914 = vld [vmem:[%s7882 + $0x78] sm:$0xff]
                  %7915 = vst [vmem:[%s7883 + $0x1e0] sm:$0xff] %v7914
                  %v7916 = vld [vmem:[%s7882 + $0x80] sm:$0xff]
                  %7917 = vst [vmem:[%s7883 + $0x200] sm:$0xff] %v7916
                  %v7918 = vld [vmem:[%s7882 + $0x88] sm:$0xff]
                  %7919 = vst [vmem:[%s7883 + $0x220] sm:$0xff] %v7918
                  %v7920 = vld [vmem:[%s7882 + $0x90] sm:$0xff]
                  %7921 = vst [vmem:[%s7883 + $0x240] sm:$0xff] %v7920
                  %v7922 = vld [vmem:[%s7882 + $0x98] sm:$0xff]
                  %7923 = vst [vmem:[%s7883 + $0x260] sm:$0xff] %v7922
                  %v7924 = vld [vmem:[%s7882 + $0xa0] sm:$0xff]
                  %7925 = vst [vmem:[%s7883 + $0x280] sm:$0xff] %v7924
                  %v7926 = vld [vmem:[%s7882 + $0xa8] sm:$0xff]
                  %7927 = vst [vmem:[%s7883 + $0x2a0] sm:$0xff] %v7926
                  %v7928 = vld [vmem:[%s7882 + $0xb0] sm:$0xff]
                  %7929 = vst [vmem:[%s7883 + $0x2c0] sm:$0xff] %v7928
                  %v7930 = vld [vmem:[%s7882 + $0xb8] sm:$0xff]
                  %7931 = vst [vmem:[%s7883 + $0x2e0] sm:$0xff] %v7930
                  %v7932 = vld [vmem:[%s7882 + $0xc0] sm:$0xff]
                  %7933 = vst [vmem:[%s7883 + $0x300] sm:$0xff] %v7932
                $region76: #{tpu_custom_call.1} parent=70 // loop_footer
                  %s7881 = sadd.s32 1, %s7877
                $region77: #{tpu_custom_call.1} parent=70 // loop_footer_branch
                  %7876 = sbr.rel target = $region73
                $region78: #{tpu_custom_call.1} parent=70 // loop_exit
                  _
              $region71: #{tpu_custom_call.1} parent=55 // pred_fallthru
                _
              // Predicated region
              $region79: #{tpu_custom_call.1} parent=55 // pred_check
                _
              $region80: #{tpu_custom_call.1} parent=55 // pred_check_branch
                %7935 = sbr.rel target = $region82
              $region81: #{tpu_custom_call.1} parent=55 // pred_region
                _
              $region82: #{tpu_custom_call.1} parent=55 // pred_fallthru
                _
            $region56: #{tpu_custom_call.1} parent=51 // pred_fallthru
              _
            // Predicated region
            $region57: #{tpu_custom_call.1} parent=51 // pred_check
              _
            $region58: #{tpu_custom_call.1} parent=51 // pred_check_branch
              %7814 = sbr.rel target = $region60
            $region59: #{tpu_custom_call.1} parent=51 // pred_region
              loop: start=0, step=1, limit=1
              $region61: #{tpu_custom_call.1} parent=59 // loop_pre_header
                _
              $region62: #{tpu_custom_call.1} parent=59 // loop_header
                %s7817 = sphi 0, %s7821
                %p7818 = scmp.ge.s32.totalorder %s7817, 1
                %s7822 = sphi %s7801, %s7801
                %s7823 = sphi %s7808, %s7808
              $region63: #{tpu_custom_call.1} parent=59 // loop_header_branch
                %7820 = sbr.rel (%p7818) target = $region67
              $region64: #{tpu_custom_call.1} parent=59 // loop_body
                %v7824 = vld [vmem:[%s7822] sm:$0xff]
                %7825 = vst [vmem:[%s7823] sm:$0xff] %v7824
                %v7826 = vld [vmem:[%s7822 + $0x8] sm:$0xff]
                %7827 = vst [vmem:[%s7823 + $0x20] sm:$0xff] %v7826
                %v7828 = vld [vmem:[%s7822 + $0x10] sm:$0xff]
                %7829 = vst [vmem:[%s7823 + $0x40] sm:$0xff] %v7828
                %v7830 = vld [vmem:[%s7822 + $0x18] sm:$0xff]
                %7831 = vst [vmem:[%s7823 + $0x60] sm:$0xff] %v7830
                %v7832 = vld [vmem:[%s7822 + $0x20] sm:$0xff]
                %7833 = vst [vmem:[%s7823 + $0x80] sm:$0xff] %v7832
                %v7834 = vld [vmem:[%s7822 + $0x28] sm:$0xff]
                %7835 = vst [vmem:[%s7823 + $0xa0] sm:$0xff] %v7834
                %v7836 = vld [vmem:[%s7822 + $0x30] sm:$0xff]
                %7837 = vst [vmem:[%s7823 + $0xc0] sm:$0xff] %v7836
                %v7838 = vld [vmem:[%s7822 + $0x38] sm:$0xff]
                %7839 = vst [vmem:[%s7823 + $0xe0] sm:$0xff] %v7838
                %v7840 = vld [vmem:[%s7822 + $0x40] sm:$0xff]
                %7841 = vst [vmem:[%s7823 + $0x100] sm:$0xff] %v7840
                %v7842 = vld [vmem:[%s7822 + $0x48] sm:$0xff]
                %7843 = vst [vmem:[%s7823 + $0x120] sm:$0xff] %v7842
                %v7844 = vld [vmem:[%s7822 + $0x50] sm:$0xff]
                %7845 = vst [vmem:[%s7823 + $0x140] sm:$0xff] %v7844
                %v7846 = vld [vmem:[%s7822 + $0x58] sm:$0xff]
                %7847 = vst [vmem:[%s7823 + $0x160] sm:$0xff] %v7846
                %v7848 = vld [vmem:[%s7822 + $0x60] sm:$0xff]
                %7849 = vst [vmem:[%s7823 + $0x180] sm:$0xff] %v7848
                %v7850 = vld [vmem:[%s7822 + $0x68] sm:$0xff]
                %7851 = vst [vmem:[%s7823 + $0x1a0] sm:$0xff] %v7850
                %v7852 = vld [vmem:[%s7822 + $0x70] sm:$0xff]
                %7853 = vst [vmem:[%s7823 + $0x1c0] sm:$0xff] %v7852
                %v7854 = vld [vmem:[%s7822 + $0x78] sm:$0xff]
                %7855 = vst [vmem:[%s7823 + $0x1e0] sm:$0xff] %v7854
                %v7856 = vld [vmem:[%s7822 + $0x80] sm:$0xff]
                %7857 = vst [vmem:[%s7823 + $0x200] sm:$0xff] %v7856
                %v7858 = vld [vmem:[%s7822 + $0x88] sm:$0xff]
                %7859 = vst [vmem:[%s7823 + $0x220] sm:$0xff] %v7858
                %v7860 = vld [vmem:[%s7822 + $0x90] sm:$0xff]
                %7861 = vst [vmem:[%s7823 + $0x240] sm:$0xff] %v7860
                %v7862 = vld [vmem:[%s7822 + $0x98] sm:$0xff]
                %7863 = vst [vmem:[%s7823 + $0x260] sm:$0xff] %v7862
                %v7864 = vld [vmem:[%s7822 + $0xa0] sm:$0xff]
                %7865 = vst [vmem:[%s7823 + $0x280] sm:$0xff] %v7864
                %v7866 = vld [vmem:[%s7822 + $0xa8] sm:$0xff]
                %7867 = vst [vmem:[%s7823 + $0x2a0] sm:$0xff] %v7866
                %v7868 = vld [vmem:[%s7822 + $0xb0] sm:$0xff]
                %7869 = vst [vmem:[%s7823 + $0x2c0] sm:$0xff] %v7868
                %v7870 = vld [vmem:[%s7822 + $0xb8] sm:$0xff]
                %7871 = vst [vmem:[%s7823 + $0x2e0] sm:$0xff] %v7870
                %v7872 = vld [vmem:[%s7822 + $0xc0] sm:$0xff]
                %7873 = vst [vmem:[%s7823 + $0x300] sm:$0xff] %v7872
              $region65: #{tpu_custom_call.1} parent=59 // loop_footer
                %s7821 = sadd.s32 1, %s7817
              $region66: #{tpu_custom_call.1} parent=59 // loop_footer_branch
                %7816 = sbr.rel target = $region62
              $region67: #{tpu_custom_call.1} parent=59 // loop_exit
                _
            $region60: #{tpu_custom_call.1} parent=51 // pred_fallthru
              _
          $region52: #{tpu_custom_call.1} parent=47 // pred_fallthru
            _
          %7936 = vnop
        $region48: #{tpu_custom_call.1} parent=31 // pred_fallthru
          _
      $region32: #{tpu_custom_call.1} parent=5 // pred_fallthru
        _
      %p7937 = scmp.le.s32.totalorder 2, %s13
      // Predicated region
      $region83: #{tpu_custom_call.1} parent=5 // pred_check
        %p7938 = pneg %p7937
      $region84: #{tpu_custom_call.1} parent=5 // pred_check_branch
        %7940 = sbr.rel (%p7938) target = $region86
      $region85: #{tpu_custom_call.1} parent=5 // pred_region
        %s7941 = ssub.s32 %s13, 2
        // Predicated region
        $region87: #{tpu_custom_call.1} parent=85 // pred_check
          %p7942 = pneg %p134
        $region88: #{tpu_custom_call.1} parent=85 // pred_check_branch
          %7944 = sbr.rel (%p7942) target = $region90
        $region89: #{tpu_custom_call.1} parent=85 // pred_region
          %s7945 = sand.u32 %s119, 1
          %s7946 = sand.u32 %s119, 1
          %s7947 = smul.addr %s7946, 200
          %s7948 = scalar_lea.vmem [#allocation7], %s7947
        $region90: #{tpu_custom_call.1} parent=85 // pred_fallthru
          _
      $region86: #{tpu_custom_call.1} parent=5 // pred_fallthru
        _
    $region6: #{tpu_custom_call.1} parent=1 // loop_footer
      %s17 = sadd.s32 1, %s13
    $region7: #{tpu_custom_call.1} parent=1 // loop_footer_branch
      %12 = sbr.rel target = $region3
    $region8: #{tpu_custom_call.1} parent=1 // loop_exit
      _
    %7949 = vsyncpa [#allocation3], 1
    %s7950 = scalar_lea.sflag [#allocation3], 1
    %7951 = vsyncpa %s7950, 1
    %7952 = vsyncpa [#allocation5], 1
    %s7953 = scalar_lea.sflag [#allocation5], 1
    %7954 = vsyncpa %s7953, 1

</llo_original>
